<compile_context>
chip_gen: v5e
topology: v5e:2x2
jax: 0.10.0
libtpu: 0.0.40
codegen_flags: <defaults>
</compile_context>

<pallas_src>
import jax
import jax.numpy as jnp
from jax import lax
from jax.experimental import pallas as pl
from jax.experimental.pallas import tpu as pltpu

IN_FEATURES = 100000
OUT_FEATURES = 10
N_SPLITS = 2                      # one K-half per grid step (one per TC on v7x)
K_HALF = 50048                    # multiple of 128; 2 * 50048 = 100096 >= K
K_PAD = N_SPLITS * K_HALF         # padded K of the stored weight

assert K_HALF % 128 == 0
assert pl.cdiv(IN_FEATURES, K_HALF) == N_SPLITS


def _linear_kernel(x_ref, w_ref, o_ref):
    """One K-half: o[i] = W_half @ x_half.T  (bf16 MXU, f32 accumulation)."""
    i = pl.program_id(0)

    # The last x block is partial (covers [50048, 100096) of a 100000-long
    # axis); zero its 96 garbage tail lanes in place.  Only the final
    # 128-lane window is touched, and only on the last grid step.
    @pl.when(i == pl.num_programs(0) - 1)
    def _():
        start = K_HALF - 128                                  # 49920, aligned
        col = ((N_SPLITS - 1) * K_HALF + start
               + lax.broadcasted_iota(jnp.int32, (1, 128), 1))
        tail = x_ref[:, pl.ds(start, 128)]
        x_ref[:, pl.ds(start, 128)] = jnp.where(col < IN_FEATURES, tail, 0.0)

    x_bf = x_ref[...].astype(jnp.bfloat16)        # (B, K_HALF), tiny cast
    w_bf = w_ref[...]                             # (N, K_HALF) bf16, 0-padded

    # (N, B) partial; both operands contract over their lane (last) dim.
    part = lax.dot_general(
        w_bf, x_bf,
        dimension_numbers=(((1,), (1,)), ((), ())),
        preferred_element_type=jnp.float32,
    )
    o_ref[0] = part                               # (N, B) f32


def prepare_weight(weight):
    """One-time parameter prep: zero-pad K to 100096 and cast to bfloat16."""
    w = jnp.pad(weight.astype(jnp.float32), ((0, 0), (0, K_PAD - IN_FEATURES)))
    return w.astype(jnp.bfloat16)


@jax.jit
def linear_forward(x, weight_prepped):
    """y = x @ W.T ;  x: (B, 100000) f32, weight_prepped: (10, 100096) bf16."""
    batch = x.shape[0]
    # TODO(synk): if batch grows large, add a 'parallel' batch grid axis with a
    # fixed row block (~128-256) so per-buffer VMEM stays bounded on v7x.

    cost = pl.CostEstimate(
        flops=2 * batch * IN_FEATURES * OUT_FEATURES,
        transcendentals=0,
        bytes_accessed=(batch * IN_FEATURES * 4            # x (f32)
                        + OUT_FEATURES * K_PAD * 2         # weight (bf16)
                        + N_SPLITS * OUT_FEATURES * batch * 4),
    )

    partials = pl.pallas_call(
        _linear_kernel,
        out_shape=jax.ShapeDtypeStruct((N_SPLITS, OUT_FEATURES, batch),
                                       jnp.float32),
        grid_spec=pltpu.PrefetchScalarGridSpec(
            num_scalar_prefetch=0,
            grid=(N_SPLITS,),
            in_specs=[
                # x half: all batch rows, lane-dense K_HALF columns.
                pl.BlockSpec((batch, K_HALF), lambda i: (0, i)),
                # weight half: native (N, K) layout, lane-dense, fully in-bounds.
                pl.BlockSpec((OUT_FEATURES, K_HALF), lambda i: (0, i)),
            ],
            # Each step owns its own partial-output block -> no cross-step
            # dependence, so the axis is 'parallel' (dual-TC sharding on v7x).
            out_specs=pl.BlockSpec((1, OUT_FEATURES, batch),
                                   lambda i: (i, 0, 0)),
        ),
        compiler_params=pltpu.CompilerParams(
            dimension_semantics=("parallel",),
            vmem_limit_bytes=32 * 1024 * 1024,
        ),
        cost_estimate=cost,
    )(x, weight_prepped)

    # Tiny epilogue: sum the two K-half partials and put batch first.
    return jnp.sum(partials, axis=0).T.astype(x.dtype)


if __name__ == "__main__":
    key = jax.random.PRNGKey(0)
    kx, kw = jax.random.split(key)

    batch = 2
    # PyTorch nn.Linear init: U(-1/sqrt(K), 1/sqrt(K)), native (N, K) layout.
    bound = 1.0 / jnp.sqrt(jnp.float32(IN_FEATURES))
    weight = jax.random.uniform(
        kw, (OUT_FEATURES, IN_FEATURES), dtype=jnp.float32,
        minval=-bound, maxval=bound,
    )
    x = jax.random.normal(kx, (batch, IN_FEATURES), dtype=jnp.float32)

    weight_prepped = prepare_weight(weight)        # one-time parameter prep

    y = linear_forward(x, weight_prepped)
    y = jax.block_until_ready(y)
    assert y.shape == (batch, OUT_FEATURES)

    # Kernel-exactness check vs a reference seeing the same bf16 operands.
    y_bf16_ref = jnp.dot(x.astype(jnp.bfloat16),
                         weight_prepped[:, :IN_FEATURES].T,
                         preferred_element_type=jnp.float32)
    assert jnp.allclose(y, y_bf16_ref, atol=1e-3, rtol=1e-3), \
        "mismatch vs bf16-matched reference"

    # Sanity check vs the full-f32 reference (bf16 quantization error budget).
    y_f32_ref = x @ weight.T
    assert jnp.allclose(y, y_f32_ref, atol=2e-2, rtol=2e-2), \
        "mismatch vs f32 reference"

    print("KERNEL_OK")
</pallas_src>

<mosaic_0001>
module attributes {stable_mosaic.version = 11 : i64} {
  func.func @_linear_kernel(%arg0: i32, %arg1: memref<2x50048xf32, #tpu.memory_space<vmem>>, %arg2: memref<10x50048xbf16, #tpu.memory_space<vmem>>, %arg3: memref<1x10x2xf32, #tpu.memory_space<vmem>>) attributes {dimension_semantics = [#tpu.dimension_semantics<parallel>], iteration_bounds = array<i64: 2>, scalar_prefetch = 0 : i64, scratch_operands = 0 : i64, tpu.core_type = #tpu.core_type<tc>, window_params = [{transform_indices = @transform_0, window_bounds = array<i64: 2, 50048>}, {transform_indices = @transform_1, window_bounds = array<i64: 10, 50048>}, {transform_indices = @transform_2, window_bounds = array<i64: 1, 10, 2>}]} {
    %c1_i32 = arith.constant 1 : i32
    %0 = arith.cmpi eq, %arg0, %c1_i32 : i32
    %1 = arith.extui %0 : i1 to i32
    %c0_i32 = arith.constant 0 : i32
    %2 = arith.cmpi ne, %1, %c0_i32 : i32
    scf.if %2 {
      %10 = tpu.iota {dimensions = array<i32: 1>} : vector<1x128xi32>
      %c99968_i32 = arith.constant 99968 : i32
      %11 = vector.broadcast %c99968_i32 : i32 to vector<1x128xi32>
      %12 = arith.addi %11, %10 : vector<1x128xi32>
      %c0_6 = arith.constant 0 : index
      %c49920 = arith.constant 49920 : index
      %13 = vector.load %arg1[%c0_6, %c49920] : memref<2x50048xf32, #tpu.memory_space<vmem>>, vector<2x128xf32>
      %c100000_i32 = arith.constant 100000 : i32
      %14 = vector.broadcast %c100000_i32 : i32 to vector<1x128xi32>
      %15 = arith.cmpi slt, %12, %14 : vector<1x128xi32>
      %cst_7 = arith.constant 0.000000e+00 : f32
      %16 = vector.shape_cast %15 : vector<1x128xi1> to vector<1x128xi1>
      %17 = vector.broadcast %16 : vector<1x128xi1> to vector<2x128xi1>
      %18 = vector.broadcast %cst_7 : f32 to vector<2x128xf32>
      %19 = arith.select %17, %13, %18 : vector<2x128xi1>, vector<2x128xf32>
      %c0_8 = arith.constant 0 : index
      %c49920_9 = arith.constant 49920 : index
      %20 = vector.load %arg1[%c0_8, %c49920_9] : memref<2x50048xf32, #tpu.memory_space<vmem>>, vector<2x128xf32>
      tpu.vector_store %arg1[%c0_8, %c49920_9], %19 {strides = array<i32>} : memref<2x50048xf32, #tpu.memory_space<vmem>>, vector<2x128xf32>,
    } else {
    }
    %c0 = arith.constant 0 : index
    %c0_0 = arith.constant 0 : index
    %3 = vector.load %arg1[%c0, %c0_0] : memref<2x50048xf32, #tpu.memory_space<vmem>>, vector<2x50048xf32>
    %4 = arith.truncf %3 : vector<2x50048xf32> to vector<2x50048xbf16>
    %c0_1 = arith.constant 0 : index
    %c0_2 = arith.constant 0 : index
    %5 = vector.load %arg2[%c0_1, %c0_2] : memref<10x50048xbf16, #tpu.memory_space<vmem>>, vector<10x50048xbf16>
    %cst = arith.constant dense<0.000000e+00> : vector<10x2xf32>
    %6 = tpu.matmul %5, %4, %cst {dimension_numbers = #tpu.dot_dimension_numbers<[1], [1], [0], [0], [0, 0, 1, 0], [], []>} : vector<10x50048xbf16>, vector<2x50048xbf16>, vector<10x2xf32> -> vector<10x2xf32>
    %c0_3 = arith.constant 0 : index
    %c0_4 = arith.constant 0 : index
    %c0_5 = arith.constant 0 : index
    %7 = vector.load %arg3[%c0_3, %c0_4, %c0_5] : memref<1x10x2xf32, #tpu.memory_space<vmem>>, vector<1x10x2xf32>
    %8 = vector.shape_cast %7 : vector<1x10x2xf32> to vector<10x2xf32>
    %9 = vector.shape_cast %6 : vector<10x2xf32> to vector<1x10x2xf32>
    tpu.vector_store %arg3[%c0_3, %c0_4, %c0_5], %9 {strides = array<i32>} : memref<1x10x2xf32, #tpu.memory_space<vmem>>, vector<1x10x2xf32>,
    return
  }
  func.func @transform_0(%arg0: i32) -> (i32, i32) {
    %c0_i32 = arith.constant 0 : i32
    %c0_i32_0 = arith.constant 0 : i32
    return %c0_i32, %arg0 : i32, i32
  }
  func.func @transform_1(%arg0: i32) -> (i32, i32) {
    %c0_i32 = arith.constant 0 : i32
    %c0_i32_0 = arith.constant 0 : i32
    return %c0_i32, %arg0 : i32, i32
  }
  func.func @transform_2(%arg0: i32) -> (i32, i32, i32) {
    %c0_i32 = arith.constant 0 : i32
    %c0_i32_0 = arith.constant 0 : i32
    %c0_i32_1 = arith.constant 0 : i32
    return %arg0, %c0_i32, %c0_i32_0 : i32, i32, i32
  }
}

</mosaic_0001>

<llo_original>
// kernel: linear_forward.1
$region0: #{linear_forward.1}
  #allocation0 [shape = 'u32[]', space=smem, size = 0x4, offset = 0x4, fixed_abs, tag = 'smem constant byte address 0x4 - core index']
  #allocation1 [shape = 'u32[72,128]{1,0:T(1,128)}', space=vmem, size = 0x9000, scoped, tag = 'internal scratch']
  %s0 = inlined_call_operand.hbm [shape: f32[2,100000], index: 0, kind: input, shape index: {}]
  %s1 = inlined_call_operand.hbm [shape: bf16[10,100096], index: 1, kind: input, shape index: {}]
  %s2 = inlined_call_operand.vmem [shape: f32[2,10,2], index: 2, kind: output, shape index: {}]
  %s3 = sld [smem:[#allocation0]]
  $region53: #{linear_forward.1} parent=0
    _
  %s5 = ssub.s32 1, %s3
  %s6 = scalar_select 0, %s5, %s3
  $region1: #{linear_forward.1} parent=0
    #allocation2 [shape = 'u8[800768]{0}', space=vmem, size = 0xc3800, scoped, tag = 'input window, operand 0']
    #allocation3 [shape = 's32[2]{0}', space=sflag, size = 0x8, scoped, tag = 'scoped memory for linear_forward.1']
    #allocation4 [shape = 'u8[3203072]{0}', space=vmem, size = 0x30e000, scoped, tag = 'input window, operand 1']
    #allocation5 [shape = 's32[2]{0}', space=sflag, size = 0x8, scoped, tag = 'scoped memory for linear_forward.1']
    %7 = vsyncpa [#allocation3], 0
    %s8 = scalar_lea.sflag [#allocation3], 1
    %9 = vsyncpa %s8, 0
    %10 = vsyncpa [#allocation5], 0
    %s11 = scalar_lea.sflag [#allocation5], 1
    %12 = vsyncpa %s11, 0
    loop: start=0, step=1, limit=4
    $region2: #{linear_forward.1} parent=1 // loop_pre_header
      _
    $region3: #{linear_forward.1} parent=1 // loop_header
      %s14 = sphi 0, %s18
      %p15 = scmp.ge.s32.totalorder %s14, 4
      %s24 = sphi 0, %s26
      %s27 = sphi 0, %s24
      %s28 = sphi 0, %s27
      %s44 = sphi 0, %s28
      %s50 = sphi 0, %s52
      %s53 = sphi 0, %s50
      %s54 = sphi 0, %s53
      %s70 = sphi 0, %s54
      %s76 = sphi 0, %s78
      %s79 = sphi 0, %s76
      %s80 = sphi 0, %s79
      %s96 = sphi 0, %s80
    $region4: #{linear_forward.1} parent=1 // loop_header_branch
      %17 = sbr.rel (%p15) target = $region8
    $region5: #{linear_forward.1} parent=1 // loop_body
      %s19 = ssub.s32 %s14, 1
      %s20 = ssub.s32 %s14, 2
      %s21 = sadd.s32 %s14, 1
      %s22 = ssub.s32 %s14, %s21
      %p23 = scmp.eq.s32.totalorder %s22, 0
      %s25 = sadd.s32 %s24, 1
      %s26 = scalar_select %p23, %s24, %s25
      %p29 = pneg %p23
      %p30 = scmp.eq.s32.totalorder %s14, 1
      %p31 = por %p29, %p30
      %p32 = scmp.ne.s32.totalorder %s24, %s27
      %p33 = scmp.eq.s32.totalorder %s14, 0
      %p34 = por %p32, %p33
      %p35 = scmp.ne.s32.totalorder %s24, %s27
      %p36 = scmp.eq.s32.totalorder %s19, 1
      %p37 = por %p35, %p36
      %p38 = scmp.ne.s32.totalorder %s27, %s28
      %p39 = scmp.eq.s32.totalorder %s19, 0
      %p40 = por %p38, %p39
      %p41 = scmp.ne.s32.totalorder %s27, %s28
      %p42 = scmp.eq.s32.totalorder %s20, 1
      %p43 = por %p41, %p42
      %p45 = scmp.ne.s32.totalorder %s28, %s44
      %p46 = scmp.eq.s32.totalorder %s20, 0
      %p47 = por %p45, %p46
      %s48 = ssub.s32 %s14, %s21
      %p49 = scmp.eq.s32.totalorder %s48, 0
      %s51 = sadd.s32 %s50, 1
      %s52 = scalar_select %p49, %s50, %s51
      %p55 = pneg %p49
      %p56 = scmp.eq.s32.totalorder %s14, 1
      %p57 = por %p55, %p56
      %p58 = scmp.ne.s32.totalorder %s50, %s53
      %p59 = scmp.eq.s32.totalorder %s14, 0
      %p60 = por %p58, %p59
      %p61 = scmp.ne.s32.totalorder %s50, %s53
      %p62 = scmp.eq.s32.totalorder %s19, 1
      %p63 = por %p61, %p62
      %p64 = scmp.ne.s32.totalorder %s53, %s54
      %p65 = scmp.eq.s32.totalorder %s19, 0
      %p66 = por %p64, %p65
      %p67 = scmp.ne.s32.totalorder %s53, %s54
      %p68 = scmp.eq.s32.totalorder %s20, 1
      %p69 = por %p67, %p68
      %p71 = scmp.ne.s32.totalorder %s54, %s70
      %p72 = scmp.eq.s32.totalorder %s20, 0
      %p73 = por %p71, %p72
      %s74 = ssub.s32 %s14, %s21
      %p75 = scmp.eq.s32.totalorder %s74, 0
      %s77 = sadd.s32 %s76, 1
      %s78 = scalar_select %p75, %s76, %s77
      %p81 = pneg %p75
      %p82 = scmp.eq.s32.totalorder %s14, 1
      %p83 = por %p81, %p82
      %p84 = scmp.ne.s32.totalorder %s76, %s79
      %p85 = scmp.eq.s32.totalorder %s14, 0
      %p86 = por %p84, %p85
      %p87 = scmp.ne.s32.totalorder %s76, %s79
      %p88 = scmp.eq.s32.totalorder %s19, 1
      %p89 = por %p87, %p88
      %p90 = scmp.ne.s32.totalorder %s79, %s80
      %p91 = scmp.eq.s32.totalorder %s19, 0
      %p92 = por %p90, %p91
      %p93 = scmp.ne.s32.totalorder %s79, %s80
      %p94 = scmp.eq.s32.totalorder %s20, 1
      %p95 = por %p93, %p94
      %p97 = scmp.ne.s32.totalorder %s80, %s96
      %p98 = scmp.eq.s32.totalorder %s20, 0
      %p99 = por %p97, %p98
      %p100 = scmp.le.s32.totalorder 1, %s14
      %p101 = scmp.lt.s32.totalorder %s14, 3
      %p102 = pnand %p100, %p101
      %p103 = pneg %p102
      // Predicated region
      $region9: #{linear_forward.1} parent=5 // pred_check
        _
      $region10: #{linear_forward.1} parent=5 // pred_check_branch
        %105 = sbr.rel (%p102) target = $region12
      $region11: #{linear_forward.1} parent=5 // pred_region
        %s106 = ssub.s32 %s14, 1
      $region12: #{linear_forward.1} parent=5 // pred_fallthru
        _
      %p107 = scmp.lt.s32.totalorder %s14, 2
      // Predicated region
      $region13: #{linear_forward.1} parent=5 // pred_check
        %p108 = pneg %p107
      $region14: #{linear_forward.1} parent=5 // pred_check_branch
        %110 = sbr.rel (%p108) target = $region16
      $region15: #{linear_forward.1} parent=5 // pred_region
        // Predicated region
        $region17: #{linear_forward.1} parent=15 // pred_check
          %p111 = pneg %p34
        $region18: #{linear_forward.1} parent=15 // pred_check_branch
          %113 = sbr.rel (%p111) target = $region20
        $region19: #{linear_forward.1} parent=15 // pred_region
          %s114 = sand.u32 %s24, 1
          %s115 = scalar_lea.sflag [#allocation3], %s114
          %s116 = sand.u32 %s24, 1
          %s117 = smul.addr %s116, 782
          %s118 = scalar_lea.vmem [#allocation2], %s117
          %s119 = smul.u32 391, %s14
          %121 = vsyncadd %s115, 0
          %s122 = smul.addr %s119, 2
          %s123 = scalar_lea.hbm %s0, %s122
          %s125 = sshll.u32 %s123, 4
          %s126 = int_to_ptr.hbm [resolvable:$true] %s125
          %s127 = sshll.u32 %s118, 4
          %s128 = int_to_ptr.vmem [resolvable:$true] %s127
          %130 = dma.hbm_to_vmem [thread:$0]  %s126, 12512, %s128, %s115
        $region20: #{linear_forward.1} parent=15 // pred_fallthru
          _
        // Predicated region
        $region21: #{linear_forward.1} parent=15 // pred_check
          %p131 = pneg %p60
        $region22: #{linear_forward.1} parent=15 // pred_check_branch
          %133 = sbr.rel (%p131) target = $region24
        $region23: #{linear_forward.1} parent=15 // pred_region
          %s134 = sand.u32 %s50, 1
          %s135 = scalar_lea.sflag [#allocation5], %s134
          %s136 = sand.u32 %s50, 1
          %s137 = smul.addr %s136, 3128
          %s138 = scalar_lea.vmem [#allocation4], %s137
          %s139 = smul.u32 391, %s14
          %141 = vsyncadd %s135, 0
          %s142 = smul.addr %s139, 4
          %s143 = scalar_lea.hbm %s1, %s142
          %s144 = sshll.u32 %s143, 4
          %s145 = int_to_ptr.hbm [resolvable:$true] %s144
          %s146 = sshll.u32 %s138, 4
          %s147 = int_to_ptr.vmem [resolvable:$true] %s146
          %152 = dma.hbm_to_vmem [thread:$0]  %s145, 50048, %s147, %s135, 50048, 25024, 1564
        $region24: #{linear_forward.1} parent=15 // pred_fallthru
          _
      $region16: #{linear_forward.1} parent=5 // pred_fallthru
        _
      %p153 = scmp.le.s32.totalorder 1, %s14
      %p154 = scmp.lt.s32.totalorder %s14, 3
      %p155 = pnand %p153, %p154
      %p156 = pneg %p155
      // Predicated region
      $region25: #{linear_forward.1} parent=5 // pred_check
        _
      $region26: #{linear_forward.1} parent=5 // pred_check_branch
        %158 = sbr.rel (%p155) target = $region28
      $region27: #{linear_forward.1} parent=5 // pred_region
        %s159 = ssub.s32 %s14, 1
        %s160 = sand.u32 %s27, 1
        %s161 = scalar_lea.sflag [#allocation3], %s160
        %s162 = sand.u32 %s27, 1
        %s163 = smul.addr %s162, 782
        %s164 = scalar_lea.vmem [#allocation2], %s163
        // Predicated region
        $region29: #{linear_forward.1} parent=27 // pred_check
          %p165 = pneg %p40
        $region30: #{linear_forward.1} parent=27 // pred_check_branch
          %167 = sbr.rel (%p165) target = $region32
        $region31: #{linear_forward.1} parent=27 // pred_region
          %169 = dma.done %s161, 12512
        $region32: #{linear_forward.1} parent=27 // pred_fallthru
          _
        %s170 = sand.u32 %s53, 1
        %s171 = scalar_lea.sflag [#allocation5], %s170
        %s172 = sand.u32 %s53, 1
        %s173 = smul.addr %s172, 3128
        %s174 = scalar_lea.vmem [#allocation4], %s173
        // Predicated region
        $region33: #{linear_forward.1} parent=27 // pred_check
          %p175 = pneg %p66
        $region34: #{linear_forward.1} parent=27 // pred_check_branch
          %177 = sbr.rel (%p175) target = $region36
        $region35: #{linear_forward.1} parent=27 // pred_region
          %179 = dma.done %s171, 50048
        $region36: #{linear_forward.1} parent=27 // pred_fallthru
          _
        %s180 = sand.u32 %s27, 1
        %s181 = scalar_lea.sflag [#allocation3], %s180
        %s182 = sand.u32 %s27, 1
        %s183 = smul.addr %s182, 782
        %s184 = scalar_lea.vmem [#allocation2], %s183
        %p185 = pneg %p40
        %p186 = pneg %p37
        %s187 = sand.u32 %s53, 1
        %s188 = scalar_lea.sflag [#allocation5], %s187
        %s189 = sand.u32 %s53, 1
        %s190 = smul.addr %s189, 3128
        %s191 = scalar_lea.vmem [#allocation4], %s190
        %p192 = pneg %p66
        %p193 = pneg %p63
        %p194 = pneg %p92
        %p195 = pneg %p89
        %p196 = scmp.lt.s32.totalorder %s19, 1
        %s197 = scalar_select %p196, %s19, 1
        %s198 = smul.addr %s197, 2
        %s199 = smul.addr %s198, 8
        %s200 = scalar_lea.vmem %s2, %s199
        %s201 = smul.u32 391, %s19
        %s202 = smul.u32 391, %s19
        %p203 = scmp.lt.s32.totalorder %s19, 1
        %s204 = scalar_select %p203, %s19, 1
        %s205 = smul.addr %s204, 2
        %s206 = smul.addr %s205, 8
        %s207 = scalar_lea.vmem %s2, %s206
        %p209 = scmp.eq.s32.totalorder %s19, 1
        // Predicated region
        $region37: #{linear_forward.1} parent=27 // pred_check
          %p210 = pneg %p209
        $region38: #{linear_forward.1} parent=27 // pred_check_branch
          %212 = sbr.rel (%p210) target = $region40
        $region39: #{linear_forward.1} parent=27 // pred_region
          %v213 = vlaneseq
          %v214 = vand.u32 %v213, 127
          %v215 = vadd.s32 %v214, 99968
          %v216 = vld [vmem:[%s164 + $0x30c] sm:$0x3]
          %vm217 = vcmp.lt.s32.totalorder %v215, 100000
          %v218 = vsel %vm217, 1, 0
          %vm219 = vcmp.eq.s32.totalorder %v218, 1
          %v220 = vsel %vm219, %v216, 0.0
          %221 = vst [vmem:[%s164 + $0x30c] sm:$0x3] %v220
        $region40: #{linear_forward.1} parent=27 // pred_fallthru
          _
        %v222 = vld [vmem:[%s164] sm:$0xff]
        %v223 = vld [vmem:[%s164 + $0x8] sm:$0xff]
        %v224 = vld [vmem:[%s164 + $0x10] sm:$0xff]
        %v225 = vld [vmem:[%s164 + $0x18] sm:$0xff]
        %v226 = vld [vmem:[%s164 + $0x20] sm:$0xff]
        %v227 = vld [vmem:[%s164 + $0x28] sm:$0xff]
        %v228 = vld [vmem:[%s164 + $0x30] sm:$0xff]
        %v229 = vld [vmem:[%s164 + $0x38] sm:$0xff]
        %v230 = vld [vmem:[%s164 + $0x40] sm:$0xff]
        %v231 = vld [vmem:[%s164 + $0x48] sm:$0xff]
        %v232 = vld [vmem:[%s164 + $0x50] sm:$0xff]
        %v233 = vld [vmem:[%s164 + $0x58] sm:$0xff]
        %v234 = vld [vmem:[%s164 + $0x60] sm:$0xff]
        %v235 = vld [vmem:[%s164 + $0x68] sm:$0xff]
        %v236 = vld [vmem:[%s164 + $0x70] sm:$0xff]
        %v237 = vld [vmem:[%s164 + $0x78] sm:$0xff]
        %v238 = vld [vmem:[%s164 + $0x80] sm:$0xff]
        %v239 = vld [vmem:[%s164 + $0x88] sm:$0xff]
        %v240 = vld [vmem:[%s164 + $0x90] sm:$0xff]
        %v241 = vld [vmem:[%s164 + $0x98] sm:$0xff]
        %v242 = vld [vmem:[%s164 + $0xa0] sm:$0xff]
        %v243 = vld [vmem:[%s164 + $0xa8] sm:$0xff]
        %v244 = vld [vmem:[%s164 + $0xb0] sm:$0xff]
        %v245 = vld [vmem:[%s164 + $0xb8] sm:$0xff]
        %v246 = vld [vmem:[%s164 + $0xc0] sm:$0xff]
        %v247 = vld [vmem:[%s164 + $0xc8] sm:$0xff]
        %v248 = vld [vmem:[%s164 + $0xd0] sm:$0xff]
        %v249 = vld [vmem:[%s164 + $0xd8] sm:$0xff]
        %v250 = vld [vmem:[%s164 + $0xe0] sm:$0xff]
        %v251 = vld [vmem:[%s164 + $0xe8] sm:$0xff]
        %v252 = vld [vmem:[%s164 + $0xf0] sm:$0xff]
        %v253 = vld [vmem:[%s164 + $0xf8] sm:$0xff]
        %v254 = vld [vmem:[%s164 + $0x100] sm:$0xff]
        %v255 = vld [vmem:[%s164 + $0x108] sm:$0xff]
        %v256 = vld [vmem:[%s164 + $0x110] sm:$0xff]
        %v257 = vld [vmem:[%s164 + $0x118] sm:$0xff]
        %v258 = vld [vmem:[%s164 + $0x120] sm:$0xff]
        %v259 = vld [vmem:[%s164 + $0x128] sm:$0xff]
        %v260 = vld [vmem:[%s164 + $0x130] sm:$0xff]
        %v261 = vld [vmem:[%s164 + $0x138] sm:$0xff]
        %v262 = vld [vmem:[%s164 + $0x140] sm:$0xff]
        %v263 = vld [vmem:[%s164 + $0x148] sm:$0xff]
        %v264 = vld [vmem:[%s164 + $0x150] sm:$0xff]
        %v265 = vld [vmem:[%s164 + $0x158] sm:$0xff]
        %v266 = vld [vmem:[%s164 + $0x160] sm:$0xff]
        %v267 = vld [vmem:[%s164 + $0x168] sm:$0xff]
        %v268 = vld [vmem:[%s164 + $0x170] sm:$0xff]
        %v269 = vld [vmem:[%s164 + $0x178] sm:$0xff]
        %v270 = vld [vmem:[%s164 + $0x180] sm:$0xff]
        %v271 = vld [vmem:[%s164 + $0x188] sm:$0xff]
        %v272 = vld [vmem:[%s164 + $0x190] sm:$0xff]
        %v273 = vld [vmem:[%s164 + $0x198] sm:$0xff]
        %v274 = vld [vmem:[%s164 + $0x1a0] sm:$0xff]
        %v275 = vld [vmem:[%s164 + $0x1a8] sm:$0xff]
        %v276 = vld [vmem:[%s164 + $0x1b0] sm:$0xff]
        %v277 = vld [vmem:[%s164 + $0x1b8] sm:$0xff]
        %v278 = vld [vmem:[%s164 + $0x1c0] sm:$0xff]
        %v279 = vld [vmem:[%s164 + $0x1c8] sm:$0xff]
        %v280 = vld [vmem:[%s164 + $0x1d0] sm:$0xff]
        %v281 = vld [vmem:[%s164 + $0x1d8] sm:$0xff]
        %v282 = vld [vmem:[%s164 + $0x1e0] sm:$0xff]
        %v283 = vld [vmem:[%s164 + $0x1e8] sm:$0xff]
        %v284 = vld [vmem:[%s164 + $0x1f0] sm:$0xff]
        %v285 = vld [vmem:[%s164 + $0x1f8] sm:$0xff]
        %v286 = vld [vmem:[%s164 + $0x200] sm:$0xff]
        %v287 = vld [vmem:[%s164 + $0x208] sm:$0xff]
        %v288 = vld [vmem:[%s164 + $0x210] sm:$0xff]
        %v289 = vld [vmem:[%s164 + $0x218] sm:$0xff]
        %v290 = vld [vmem:[%s164 + $0x220] sm:$0xff]
        %v291 = vld [vmem:[%s164 + $0x228] sm:$0xff]
        %v292 = vld [vmem:[%s164 + $0x230] sm:$0xff]
        %v293 = vld [vmem:[%s164 + $0x238] sm:$0xff]
        %v294 = vld [vmem:[%s164 + $0x240] sm:$0xff]
        %v295 = vld [vmem:[%s164 + $0x248] sm:$0xff]
        %v296 = vld [vmem:[%s164 + $0x250] sm:$0xff]
        %v297 = vld [vmem:[%s164 + $0x258] sm:$0xff]
        %v298 = vld [vmem:[%s164 + $0x260] sm:$0xff]
        %v299 = vld [vmem:[%s164 + $0x268] sm:$0xff]
        %v300 = vld [vmem:[%s164 + $0x270] sm:$0xff]
        %v301 = vld [vmem:[%s164 + $0x278] sm:$0xff]
        %v302 = vld [vmem:[%s164 + $0x280] sm:$0xff]
        %v303 = vld [vmem:[%s164 + $0x288] sm:$0xff]
        %v304 = vld [vmem:[%s164 + $0x290] sm:$0xff]
        %v305 = vld [vmem:[%s164 + $0x298] sm:$0xff]
        %v306 = vld [vmem:[%s164 + $0x2a0] sm:$0xff]
        %v307 = vld [vmem:[%s164 + $0x2a8] sm:$0xff]
        %v308 = vld [vmem:[%s164 + $0x2b0] sm:$0xff]
        %v309 = vld [vmem:[%s164 + $0x2b8] sm:$0xff]
        %v310 = vld [vmem:[%s164 + $0x2c0] sm:$0xff]
        %v311 = vld [vmem:[%s164 + $0x2c8] sm:$0xff]
        %v312 = vld [vmem:[%s164 + $0x2d0] sm:$0xff]
        %v313 = vld [vmem:[%s164 + $0x2d8] sm:$0xff]
        %v314 = vld [vmem:[%s164 + $0x2e0] sm:$0xff]
        %v315 = vld [vmem:[%s164 + $0x2e8] sm:$0xff]
        %v316 = vld [vmem:[%s164 + $0x2f0] sm:$0xff]
        %v317 = vld [vmem:[%s164 + $0x2f8] sm:$0xff]
        %v318 = vld [vmem:[%s164 + $0x300] sm:$0xff]
        %v319 = vld [vmem:[%s164 + $0x308] sm:$0x3f]
        %418 = vst [vmem:[#allocation1] ss:$4 sm:$0xff] %v222
        %s419 = scalar_lea.vmem [#allocation1], 32
        %420 = vst [vmem:[%s419] ss:$4 sm:$0xff] %v223
        %v421 = vld.sshfl [vmem:[#allocation1] sm:$0xff pattern:$0x73625140]
        %v422 = vld.sshfl [vmem:[#allocation1 + $0x8] sm:$0xff pattern:$0x73625140]
        %v423 = vld.sshfl [vmem:[#allocation1 + $0x10] sm:$0xff pattern:$0x73625140]
        %v424 = vld.sshfl [vmem:[#allocation1 + $0x18] sm:$0xff pattern:$0x73625140]
        %v425 = vld.sshfl [vmem:[#allocation1 + $0x20] sm:$0xff pattern:$0x73625140]
        %v426 = vld.sshfl [vmem:[#allocation1 + $0x28] sm:$0xff pattern:$0x73625140]
        %v427 = vld.sshfl [vmem:[#allocation1 + $0x30] sm:$0xff pattern:$0x73625140]
        %v428 = vld.sshfl [vmem:[#allocation1 + $0x38] sm:$0xff pattern:$0x73625140]
        %429 = vst [vmem:[#allocation1] ss:$4 sm:$0xff] %v224
        %430 = vst [vmem:[%s419] ss:$4 sm:$0xff] %v225
        %v431 = vld.sshfl [vmem:[#allocation1] sm:$0xff pattern:$0x73625140]
        %v432 = vld.sshfl [vmem:[#allocation1 + $0x8] sm:$0xff pattern:$0x73625140]
        %v433 = vld.sshfl [vmem:[#allocation1 + $0x10] sm:$0xff pattern:$0x73625140]
        %v434 = vld.sshfl [vmem:[#allocation1 + $0x18] sm:$0xff pattern:$0x73625140]
        %v435 = vld.sshfl [vmem:[#allocation1 + $0x20] sm:$0xff pattern:$0x73625140]
        %v436 = vld.sshfl [vmem:[#allocation1 + $0x28] sm:$0xff pattern:$0x73625140]
        %v437 = vld.sshfl [vmem:[#allocation1 + $0x30] sm:$0xff pattern:$0x73625140]
        %v438 = vld.sshfl [vmem:[#allocation1 + $0x38] sm:$0xff pattern:$0x73625140]
        %439 = vst [vmem:[#allocation1] ss:$4 sm:$0xff] %v226
        %440 = vst [vmem:[%s419] ss:$4 sm:$0xff] %v227
        %v441 = vld.sshfl [vmem:[#allocation1] sm:$0xff pattern:$0x73625140]
        %v442 = vld.sshfl [vmem:[#allocation1 + $0x8] sm:$0xff pattern:$0x73625140]
        %v443 = vld.sshfl [vmem:[#allocation1 + $0x10] sm:$0xff pattern:$0x73625140]
        %v444 = vld.sshfl [vmem:[#allocation1 + $0x18] sm:$0xff pattern:$0x73625140]
        %v445 = vld.sshfl [vmem:[#allocation1 + $0x20] sm:$0xff pattern:$0x73625140]
        %v446 = vld.sshfl [vmem:[#allocation1 + $0x28] sm:$0xff pattern:$0x73625140]
        %v447 = vld.sshfl [vmem:[#allocation1 + $0x30] sm:$0xff pattern:$0x73625140]
        %v448 = vld.sshfl [vmem:[#allocation1 + $0x38] sm:$0xff pattern:$0x73625140]
        %449 = vst [vmem:[#allocation1] ss:$4 sm:$0xff] %v228
        %450 = vst [vmem:[%s419] ss:$4 sm:$0xff] %v229
        %v451 = vld.sshfl [vmem:[#allocation1] sm:$0xff pattern:$0x73625140]
        %v452 = vld.sshfl [vmem:[#allocation1 + $0x8] sm:$0xff pattern:$0x73625140]
        %v453 = vld.sshfl [vmem:[#allocation1 + $0x10] sm:$0xff pattern:$0x73625140]
        %v454 = vld.sshfl [vmem:[#allocation1 + $0x18] sm:$0xff pattern:$0x73625140]
        %v455 = vld.sshfl [vmem:[#allocation1 + $0x20] sm:$0xff pattern:$0x73625140]
        %v456 = vld.sshfl [vmem:[#allocation1 + $0x28] sm:$0xff pattern:$0x73625140]
        %v457 = vld.sshfl [vmem:[#allocation1 + $0x30] sm:$0xff pattern:$0x73625140]
        %v458 = vld.sshfl [vmem:[#allocation1 + $0x38] sm:$0xff pattern:$0x73625140]
        %459 = vst [vmem:[#allocation1] ss:$4 sm:$0xff] %v230
        %460 = vst [vmem:[%s419] ss:$4 sm:$0xff] %v231
        %v461 = vld.sshfl [vmem:[#allocation1] sm:$0xff pattern:$0x73625140]
        %v462 = vld.sshfl [vmem:[#allocation1 + $0x8] sm:$0xff pattern:$0x73625140]
        %v463 = vld.sshfl [vmem:[#allocation1 + $0x10] sm:$0xff pattern:$0x73625140]
        %v464 = vld.sshfl [vmem:[#allocation1 + $0x18] sm:$0xff pattern:$0x73625140]
        %v465 = vld.sshfl [vmem:[#allocation1 + $0x20] sm:$0xff pattern:$0x73625140]
        %v466 = vld.sshfl [vmem:[#allocation1 + $0x28] sm:$0xff pattern:$0x73625140]
        %v467 = vld.sshfl [vmem:[#allocation1 + $0x30] sm:$0xff pattern:$0x73625140]
        %v468 = vld.sshfl [vmem:[#allocation1 + $0x38] sm:$0xff pattern:$0x73625140]
        %469 = vst [vmem:[#allocation1] ss:$4 sm:$0xff] %v232
        %470 = vst [vmem:[%s419] ss:$4 sm:$0xff] %v233
        %v471 = vld.sshfl [vmem:[#allocation1] sm:$0xff pattern:$0x73625140]
        %v472 = vld.sshfl [vmem:[#allocation1 + $0x8] sm:$0xff pattern:$0x73625140]
        %v473 = vld.sshfl [vmem:[#allocation1 + $0x10] sm:$0xff pattern:$0x73625140]
        %v474 = vld.sshfl [vmem:[#allocation1 + $0x18] sm:$0xff pattern:$0x73625140]
        %v475 = vld.sshfl [vmem:[#allocation1 + $0x20] sm:$0xff pattern:$0x73625140]
        %v476 = vld.sshfl [vmem:[#allocation1 + $0x28] sm:$0xff pattern:$0x73625140]
        %v477 = vld.sshfl [vmem:[#allocation1 + $0x30] sm:$0xff pattern:$0x73625140]
        %v478 = vld.sshfl [vmem:[#allocation1 + $0x38] sm:$0xff pattern:$0x73625140]
        %479 = vst [vmem:[#allocation1] ss:$4 sm:$0xff] %v234
        %480 = vst [vmem:[%s419] ss:$4 sm:$0xff] %v235
        %v481 = vld.sshfl [vmem:[#allocation1] sm:$0xff pattern:$0x73625140]
        %v482 = vld.sshfl [vmem:[#allocation1 + $0x8] sm:$0xff pattern:$0x73625140]
        %v483 = vld.sshfl [vmem:[#allocation1 + $0x10] sm:$0xff pattern:$0x73625140]
        %v484 = vld.sshfl [vmem:[#allocation1 + $0x18] sm:$0xff pattern:$0x73625140]
        %v485 = vld.sshfl [vmem:[#allocation1 + $0x20] sm:$0xff pattern:$0x73625140]
        %v486 = vld.sshfl [vmem:[#allocation1 + $0x28] sm:$0xff pattern:$0x73625140]
        %v487 = vld.sshfl [vmem:[#allocation1 + $0x30] sm:$0xff pattern:$0x73625140]
        %v488 = vld.sshfl [vmem:[#allocation1 + $0x38] sm:$0xff pattern:$0x73625140]
        %489 = vst [vmem:[#allocation1] ss:$4 sm:$0xff] %v236
        %490 = vst [vmem:[%s419] ss:$4 sm:$0xff] %v237
        %v491 = vld.sshfl [vmem:[#allocation1] sm:$0xff pattern:$0x73625140]
        %v492 = vld.sshfl [vmem:[#allocation1 + $0x8] sm:$0xff pattern:$0x73625140]
        %v493 = vld.sshfl [vmem:[#allocation1 + $0x10] sm:$0xff pattern:$0x73625140]
        %v494 = vld.sshfl [vmem:[#allocation1 + $0x18] sm:$0xff pattern:$0x73625140]
        %v495 = vld.sshfl [vmem:[#allocation1 + $0x20] sm:$0xff pattern:$0x73625140]
        %v496 = vld.sshfl [vmem:[#allocation1 + $0x28] sm:$0xff pattern:$0x73625140]
        %v497 = vld.sshfl [vmem:[#allocation1 + $0x30] sm:$0xff pattern:$0x73625140]
        %v498 = vld.sshfl [vmem:[#allocation1 + $0x38] sm:$0xff pattern:$0x73625140]
        %499 = vst [vmem:[#allocation1] ss:$4 sm:$0xff] %v238
        %500 = vst [vmem:[%s419] ss:$4 sm:$0xff] %v239
        %v501 = vld.sshfl [vmem:[#allocation1] sm:$0xff pattern:$0x73625140]
        %v502 = vld.sshfl [vmem:[#allocation1 + $0x8] sm:$0xff pattern:$0x73625140]
        %v503 = vld.sshfl [vmem:[#allocation1 + $0x10] sm:$0xff pattern:$0x73625140]
        %v504 = vld.sshfl [vmem:[#allocation1 + $0x18] sm:$0xff pattern:$0x73625140]
        %v505 = vld.sshfl [vmem:[#allocation1 + $0x20] sm:$0xff pattern:$0x73625140]
        %v506 = vld.sshfl [vmem:[#allocation1 + $0x28] sm:$0xff pattern:$0x73625140]
        %v507 = vld.sshfl [vmem:[#allocation1 + $0x30] sm:$0xff pattern:$0x73625140]
        %v508 = vld.sshfl [vmem:[#allocation1 + $0x38] sm:$0xff pattern:$0x73625140]
        %509 = vst [vmem:[#allocation1] ss:$4 sm:$0xff] %v240
        %510 = vst [vmem:[%s419] ss:$4 sm:$0xff] %v241
        %v511 = vld.sshfl [vmem:[#allocation1] sm:$0xff pattern:$0x73625140]
        %v512 = vld.sshfl [vmem:[#allocation1 + $0x8] sm:$0xff pattern:$0x73625140]
        %v513 = vld.sshfl [vmem:[#allocation1 + $0x10] sm:$0xff pattern:$0x73625140]
        %v514 = vld.sshfl [vmem:[#allocation1 + $0x18] sm:$0xff pattern:$0x73625140]
        %v515 = vld.sshfl [vmem:[#allocation1 + $0x20] sm:$0xff pattern:$0x73625140]
        %v516 = vld.sshfl [vmem:[#allocation1 + $0x28] sm:$0xff pattern:$0x73625140]
        %v517 = vld.sshfl [vmem:[#allocation1 + $0x30] sm:$0xff pattern:$0x73625140]
        %v518 = vld.sshfl [vmem:[#allocation1 + $0x38] sm:$0xff pattern:$0x73625140]
        %519 = vst [vmem:[#allocation1] ss:$4 sm:$0xff] %v242
        %520 = vst [vmem:[%s419] ss:$4 sm:$0xff] %v243
        %v521 = vld.sshfl [vmem:[#allocation1] sm:$0xff pattern:$0x73625140]
        %v522 = vld.sshfl [vmem:[#allocation1 + $0x8] sm:$0xff pattern:$0x73625140]
        %v523 = vld.sshfl [vmem:[#allocation1 + $0x10] sm:$0xff pattern:$0x73625140]
        %v524 = vld.sshfl [vmem:[#allocation1 + $0x18] sm:$0xff pattern:$0x73625140]
        %v525 = vld.sshfl [vmem:[#allocation1 + $0x20] sm:$0xff pattern:$0x73625140]
        %v526 = vld.sshfl [vmem:[#allocation1 + $0x28] sm:$0xff pattern:$0x73625140]
        %v527 = vld.sshfl [vmem:[#allocation1 + $0x30] sm:$0xff pattern:$0x73625140]
        %v528 = vld.sshfl [vmem:[#allocation1 + $0x38] sm:$0xff pattern:$0x73625140]
        %529 = vst [vmem:[#allocation1] ss:$4 sm:$0xff] %v244
        %530 = vst [vmem:[%s419] ss:$4 sm:$0xff] %v245
        %v531 = vld.sshfl [vmem:[#allocation1] sm:$0xff pattern:$0x73625140]
        %v532 = vld.sshfl [vmem:[#allocation1 + $0x8] sm:$0xff pattern:$0x73625140]
        %v533 = vld.sshfl [vmem:[#allocation1 + $0x10] sm:$0xff pattern:$0x73625140]
        %v534 = vld.sshfl [vmem:[#allocation1 + $0x18] sm:$0xff pattern:$0x73625140]
        %v535 = vld.sshfl [vmem:[#allocation1 + $0x20] sm:$0xff pattern:$0x73625140]
        %v536 = vld.sshfl [vmem:[#allocation1 + $0x28] sm:$0xff pattern:$0x73625140]
        %v537 = vld.sshfl [vmem:[#allocation1 + $0x30] sm:$0xff pattern:$0x73625140]
        %v538 = vld.sshfl [vmem:[#allocation1 + $0x38] sm:$0xff pattern:$0x73625140]
        %539 = vst [vmem:[#allocation1] ss:$4 sm:$0xff] %v246
        %540 = vst [vmem:[%s419] ss:$4 sm:$0xff] %v247
        %v541 = vld.sshfl [vmem:[#allocation1] sm:$0xff pattern:$0x73625140]
        %v542 = vld.sshfl [vmem:[#allocation1 + $0x8] sm:$0xff pattern:$0x73625140]
        %v543 = vld.sshfl [vmem:[#allocation1 + $0x10] sm:$0xff pattern:$0x73625140]
        %v544 = vld.sshfl [vmem:[#allocation1 + $0x18] sm:$0xff pattern:$0x73625140]
        %v545 = vld.sshfl [vmem:[#allocation1 + $0x20] sm:$0xff pattern:$0x73625140]
        %v546 = vld.sshfl [vmem:[#allocation1 + $0x28] sm:$0xff pattern:$0x73625140]
        %v547 = vld.sshfl [vmem:[#allocation1 + $0x30] sm:$0xff pattern:$0x73625140]
        %v548 = vld.sshfl [vmem:[#allocation1 + $0x38] sm:$0xff pattern:$0x73625140]
        %549 = vst [vmem:[#allocation1] ss:$4 sm:$0xff] %v248
        %550 = vst [vmem:[%s419] ss:$4 sm:$0xff] %v249
        %v551 = vld.sshfl [vmem:[#allocation1] sm:$0xff pattern:$0x73625140]
        %v552 = vld.sshfl [vmem:[#allocation1 + $0x8] sm:$0xff pattern:$0x73625140]
        %v553 = vld.sshfl [vmem:[#allocation1 + $0x10] sm:$0xff pattern:$0x73625140]
        %v554 = vld.sshfl [vmem:[#allocation1 + $0x18] sm:$0xff pattern:$0x73625140]
        %v555 = vld.sshfl [vmem:[#allocation1 + $0x20] sm:$0xff pattern:$0x73625140]
        %v556 = vld.sshfl [vmem:[#allocation1 + $0x28] sm:$0xff pattern:$0x73625140]
        %v557 = vld.sshfl [vmem:[#allocation1 + $0x30] sm:$0xff pattern:$0x73625140]
        %v558 = vld.sshfl [vmem:[#allocation1 + $0x38] sm:$0xff pattern:$0x73625140]
        %559 = vst [vmem:[#allocation1] ss:$4 sm:$0xff] %v250
        %560 = vst [vmem:[%s419] ss:$4 sm:$0xff] %v251
        %v561 = vld.sshfl [vmem:[#allocation1] sm:$0xff pattern:$0x73625140]
        %v562 = vld.sshfl [vmem:[#allocation1 + $0x8] sm:$0xff pattern:$0x73625140]
        %v563 = vld.sshfl [vmem:[#allocation1 + $0x10] sm:$0xff pattern:$0x73625140]
        %v564 = vld.sshfl [vmem:[#allocation1 + $0x18] sm:$0xff pattern:$0x73625140]
        %v565 = vld.sshfl [vmem:[#allocation1 + $0x20] sm:$0xff pattern:$0x73625140]
        %v566 = vld.sshfl [vmem:[#allocation1 + $0x28] sm:$0xff pattern:$0x73625140]
        %v567 = vld.sshfl [vmem:[#allocation1 + $0x30] sm:$0xff pattern:$0x73625140]
        %v568 = vld.sshfl [vmem:[#allocation1 + $0x38] sm:$0xff pattern:$0x73625140]
        %569 = vst [vmem:[#allocation1] ss:$4 sm:$0xff] %v252
        %570 = vst [vmem:[%s419] ss:$4 sm:$0xff] %v253
        %v571 = vld.sshfl [vmem:[#allocation1] sm:$0xff pattern:$0x73625140]
        %v572 = vld.sshfl [vmem:[#allocation1 + $0x8] sm:$0xff pattern:$0x73625140]
        %v573 = vld.sshfl [vmem:[#allocation1 + $0x10] sm:$0xff pattern:$0x73625140]
        %v574 = vld.sshfl [vmem:[#allocation1 + $0x18] sm:$0xff pattern:$0x73625140]
        %v575 = vld.sshfl [vmem:[#allocation1 + $0x20] sm:$0xff pattern:$0x73625140]
        %v576 = vld.sshfl [vmem:[#allocation1 + $0x28] sm:$0xff pattern:$0x73625140]
        %v577 = vld.sshfl [vmem:[#allocation1 + $0x30] sm:$0xff pattern:$0x73625140]
        %v578 = vld.sshfl [vmem:[#allocation1 + $0x38] sm:$0xff pattern:$0x73625140]
        %579 = vst [vmem:[#allocation1] ss:$4 sm:$0xff] %v254
        %580 = vst [vmem:[%s419] ss:$4 sm:$0xff] %v255
        %v581 = vld.sshfl [vmem:[#allocation1] sm:$0xff pattern:$0x73625140]
        %v582 = vld.sshfl [vmem:[#allocation1 + $0x8] sm:$0xff pattern:$0x73625140]
        %v583 = vld.sshfl [vmem:[#allocation1 + $0x10] sm:$0xff pattern:$0x73625140]
        %v584 = vld.sshfl [vmem:[#allocation1 + $0x18] sm:$0xff pattern:$0x73625140]
        %v585 = vld.sshfl [vmem:[#allocation1 + $0x20] sm:$0xff pattern:$0x73625140]
        %v586 = vld.sshfl [vmem:[#allocation1 + $0x28] sm:$0xff pattern:$0x73625140]
        %v587 = vld.sshfl [vmem:[#allocation1 + $0x30] sm:$0xff pattern:$0x73625140]
        %v588 = vld.sshfl [vmem:[#allocation1 + $0x38] sm:$0xff pattern:$0x73625140]
        %589 = vst [vmem:[#allocation1] ss:$4 sm:$0xff] %v256
        %590 = vst [vmem:[%s419] ss:$4 sm:$0xff] %v257
        %v591 = vld.sshfl [vmem:[#allocation1] sm:$0xff pattern:$0x73625140]
        %v592 = vld.sshfl [vmem:[#allocation1 + $0x8] sm:$0xff pattern:$0x73625140]
        %v593 = vld.sshfl [vmem:[#allocation1 + $0x10] sm:$0xff pattern:$0x73625140]
        %v594 = vld.sshfl [vmem:[#allocation1 + $0x18] sm:$0xff pattern:$0x73625140]
        %v595 = vld.sshfl [vmem:[#allocation1 + $0x20] sm:$0xff pattern:$0x73625140]
        %v596 = vld.sshfl [vmem:[#allocation1 + $0x28] sm:$0xff pattern:$0x73625140]
        %v597 = vld.sshfl [vmem:[#allocation1 + $0x30] sm:$0xff pattern:$0x73625140]
        %v598 = vld.sshfl [vmem:[#allocation1 + $0x38] sm:$0xff pattern:$0x73625140]
        %599 = vst [vmem:[#allocation1] ss:$4 sm:$0xff] %v258
        %600 = vst [vmem:[%s419] ss:$4 sm:$0xff] %v259
        %v601 = vld.sshfl [vmem:[#allocation1] sm:$0xff pattern:$0x73625140]
        %v602 = vld.sshfl [vmem:[#allocation1 + $0x8] sm:$0xff pattern:$0x73625140]
        %v603 = vld.sshfl [vmem:[#allocation1 + $0x10] sm:$0xff pattern:$0x73625140]
        %v604 = vld.sshfl [vmem:[#allocation1 + $0x18] sm:$0xff pattern:$0x73625140]
        %v605 = vld.sshfl [vmem:[#allocation1 + $0x20] sm:$0xff pattern:$0x73625140]
        %v606 = vld.sshfl [vmem:[#allocation1 + $0x28] sm:$0xff pattern:$0x73625140]
        %v607 = vld.sshfl [vmem:[#allocation1 + $0x30] sm:$0xff pattern:$0x73625140]
        %v608 = vld.sshfl [vmem:[#allocation1 + $0x38] sm:$0xff pattern:$0x73625140]
        %609 = vst [vmem:[#allocation1] ss:$4 sm:$0xff] %v260
        %610 = vst [vmem:[%s419] ss:$4 sm:$0xff] %v261
        %v611 = vld.sshfl [vmem:[#allocation1] sm:$0xff pattern:$0x73625140]
        %v612 = vld.sshfl [vmem:[#allocation1 + $0x8] sm:$0xff pattern:$0x73625140]
        %v613 = vld.sshfl [vmem:[#allocation1 + $0x10] sm:$0xff pattern:$0x73625140]
        %v614 = vld.sshfl [vmem:[#allocation1 + $0x18] sm:$0xff pattern:$0x73625140]
        %v615 = vld.sshfl [vmem:[#allocation1 + $0x20] sm:$0xff pattern:$0x73625140]
        %v616 = vld.sshfl [vmem:[#allocation1 + $0x28] sm:$0xff pattern:$0x73625140]
        %v617 = vld.sshfl [vmem:[#allocation1 + $0x30] sm:$0xff pattern:$0x73625140]
        %v618 = vld.sshfl [vmem:[#allocation1 + $0x38] sm:$0xff pattern:$0x73625140]
        %619 = vst [vmem:[#allocation1] ss:$4 sm:$0xff] %v262
        %620 = vst [vmem:[%s419] ss:$4 sm:$0xff] %v263
        %v621 = vld.sshfl [vmem:[#allocation1] sm:$0xff pattern:$0x73625140]
        %v622 = vld.sshfl [vmem:[#allocation1 + $0x8] sm:$0xff pattern:$0x73625140]
        %v623 = vld.sshfl [vmem:[#allocation1 + $0x10] sm:$0xff pattern:$0x73625140]
        %v624 = vld.sshfl [vmem:[#allocation1 + $0x18] sm:$0xff pattern:$0x73625140]
        %v625 = vld.sshfl [vmem:[#allocation1 + $0x20] sm:$0xff pattern:$0x73625140]
        %v626 = vld.sshfl [vmem:[#allocation1 + $0x28] sm:$0xff pattern:$0x73625140]
        %v627 = vld.sshfl [vmem:[#allocation1 + $0x30] sm:$0xff pattern:$0x73625140]
        %v628 = vld.sshfl [vmem:[#allocation1 + $0x38] sm:$0xff pattern:$0x73625140]
        %629 = vst [vmem:[#allocation1] ss:$4 sm:$0xff] %v264
        %630 = vst [vmem:[%s419] ss:$4 sm:$0xff] %v265
        %v631 = vld.sshfl [vmem:[#allocation1] sm:$0xff pattern:$0x73625140]
        %v632 = vld.sshfl [vmem:[#allocation1 + $0x8] sm:$0xff pattern:$0x73625140]
        %v633 = vld.sshfl [vmem:[#allocation1 + $0x10] sm:$0xff pattern:$0x73625140]
        %v634 = vld.sshfl [vmem:[#allocation1 + $0x18] sm:$0xff pattern:$0x73625140]
        %v635 = vld.sshfl [vmem:[#allocation1 + $0x20] sm:$0xff pattern:$0x73625140]
        %v636 = vld.sshfl [vmem:[#allocation1 + $0x28] sm:$0xff pattern:$0x73625140]
        %v637 = vld.sshfl [vmem:[#allocation1 + $0x30] sm:$0xff pattern:$0x73625140]
        %v638 = vld.sshfl [vmem:[#allocation1 + $0x38] sm:$0xff pattern:$0x73625140]
        %639 = vst [vmem:[#allocation1] ss:$4 sm:$0xff] %v266
        %640 = vst [vmem:[%s419] ss:$4 sm:$0xff] %v267
        %v641 = vld.sshfl [vmem:[#allocation1] sm:$0xff pattern:$0x73625140]
        %v642 = vld.sshfl [vmem:[#allocation1 + $0x8] sm:$0xff pattern:$0x73625140]
        %v643 = vld.sshfl [vmem:[#allocation1 + $0x10] sm:$0xff pattern:$0x73625140]
        %v644 = vld.sshfl [vmem:[#allocation1 + $0x18] sm:$0xff pattern:$0x73625140]
        %v645 = vld.sshfl [vmem:[#allocation1 + $0x20] sm:$0xff pattern:$0x73625140]
        %v646 = vld.sshfl [vmem:[#allocation1 + $0x28] sm:$0xff pattern:$0x73625140]
        %v647 = vld.sshfl [vmem:[#allocation1 + $0x30] sm:$0xff pattern:$0x73625140]
        %v648 = vld.sshfl [vmem:[#allocation1 + $0x38] sm:$0xff pattern:$0x73625140]
        %649 = vst [vmem:[#allocation1] ss:$4 sm:$0xff] %v268
        %650 = vst [vmem:[%s419] ss:$4 sm:$0xff] %v269
        %v651 = vld.sshfl [vmem:[#allocation1] sm:$0xff pattern:$0x73625140]
        %v652 = vld.sshfl [vmem:[#allocation1 + $0x8] sm:$0xff pattern:$0x73625140]
        %v653 = vld.sshfl [vmem:[#allocation1 + $0x10] sm:$0xff pattern:$0x73625140]
        %v654 = vld.sshfl [vmem:[#allocation1 + $0x18] sm:$0xff pattern:$0x73625140]
        %v655 = vld.sshfl [vmem:[#allocation1 + $0x20] sm:$0xff pattern:$0x73625140]
        %v656 = vld.sshfl [vmem:[#allocation1 + $0x28] sm:$0xff pattern:$0x73625140]
        %v657 = vld.sshfl [vmem:[#allocation1 + $0x30] sm:$0xff pattern:$0x73625140]
        %v658 = vld.sshfl [vmem:[#allocation1 + $0x38] sm:$0xff pattern:$0x73625140]
        %659 = vst [vmem:[#allocation1] ss:$4 sm:$0xff] %v270
        %660 = vst [vmem:[%s419] ss:$4 sm:$0xff] %v271
        %v661 = vld.sshfl [vmem:[#allocation1] sm:$0xff pattern:$0x73625140]
        %v662 = vld.sshfl [vmem:[#allocation1 + $0x8] sm:$0xff pattern:$0x73625140]
        %v663 = vld.sshfl [vmem:[#allocation1 + $0x10] sm:$0xff pattern:$0x73625140]
        %v664 = vld.sshfl [vmem:[#allocation1 + $0x18] sm:$0xff pattern:$0x73625140]
        %v665 = vld.sshfl [vmem:[#allocation1 + $0x20] sm:$0xff pattern:$0x73625140]
        %v666 = vld.sshfl [vmem:[#allocation1 + $0x28] sm:$0xff pattern:$0x73625140]
        %v667 = vld.sshfl [vmem:[#allocation1 + $0x30] sm:$0xff pattern:$0x73625140]
        %v668 = vld.sshfl [vmem:[#allocation1 + $0x38] sm:$0xff pattern:$0x73625140]
        %669 = vst [vmem:[#allocation1] ss:$4 sm:$0xff] %v272
        %670 = vst [vmem:[%s419] ss:$4 sm:$0xff] %v273
        %v671 = vld.sshfl [vmem:[#allocation1] sm:$0xff pattern:$0x73625140]
        %v672 = vld.sshfl [vmem:[#allocation1 + $0x8] sm:$0xff pattern:$0x73625140]
        %v673 = vld.sshfl [vmem:[#allocation1 + $0x10] sm:$0xff pattern:$0x73625140]
        %v674 = vld.sshfl [vmem:[#allocation1 + $0x18] sm:$0xff pattern:$0x73625140]
        %v675 = vld.sshfl [vmem:[#allocation1 + $0x20] sm:$0xff pattern:$0x73625140]
        %v676 = vld.sshfl [vmem:[#allocation1 + $0x28] sm:$0xff pattern:$0x73625140]
        %v677 = vld.sshfl [vmem:[#allocation1 + $0x30] sm:$0xff pattern:$0x73625140]
        %v678 = vld.sshfl [vmem:[#allocation1 + $0x38] sm:$0xff pattern:$0x73625140]
        %679 = vst [vmem:[#allocation1] ss:$4 sm:$0xff] %v274
        %680 = vst [vmem:[%s419] ss:$4 sm:$0xff] %v275
        %v681 = vld.sshfl [vmem:[#allocation1] sm:$0xff pattern:$0x73625140]
        %v682 = vld.sshfl [vmem:[#allocation1 + $0x8] sm:$0xff pattern:$0x73625140]
        %v683 = vld.sshfl [vmem:[#allocation1 + $0x10] sm:$0xff pattern:$0x73625140]
        %v684 = vld.sshfl [vmem:[#allocation1 + $0x18] sm:$0xff pattern:$0x73625140]
        %v685 = vld.sshfl [vmem:[#allocation1 + $0x20] sm:$0xff pattern:$0x73625140]
        %v686 = vld.sshfl [vmem:[#allocation1 + $0x28] sm:$0xff pattern:$0x73625140]
        %v687 = vld.sshfl [vmem:[#allocation1 + $0x30] sm:$0xff pattern:$0x73625140]
        %v688 = vld.sshfl [vmem:[#allocation1 + $0x38] sm:$0xff pattern:$0x73625140]
        %689 = vst [vmem:[#allocation1] ss:$4 sm:$0xff] %v276
        %690 = vst [vmem:[%s419] ss:$4 sm:$0xff] %v277
        %v691 = vld.sshfl [vmem:[#allocation1] sm:$0xff pattern:$0x73625140]
        %v692 = vld.sshfl [vmem:[#allocation1 + $0x8] sm:$0xff pattern:$0x73625140]
        %v693 = vld.sshfl [vmem:[#allocation1 + $0x10] sm:$0xff pattern:$0x73625140]
        %v694 = vld.sshfl [vmem:[#allocation1 + $0x18] sm:$0xff pattern:$0x73625140]
        %v695 = vld.sshfl [vmem:[#allocation1 + $0x20] sm:$0xff pattern:$0x73625140]
        %v696 = vld.sshfl [vmem:[#allocation1 + $0x28] sm:$0xff pattern:$0x73625140]
        %v697 = vld.sshfl [vmem:[#allocation1 + $0x30] sm:$0xff pattern:$0x73625140]
        %v698 = vld.sshfl [vmem:[#allocation1 + $0x38] sm:$0xff pattern:$0x73625140]
        %699 = vst [vmem:[#allocation1] ss:$4 sm:$0xff] %v278
        %700 = vst [vmem:[%s419] ss:$4 sm:$0xff] %v279
        %v701 = vld.sshfl [vmem:[#allocation1] sm:$0xff pattern:$0x73625140]
        %v702 = vld.sshfl [vmem:[#allocation1 + $0x8] sm:$0xff pattern:$0x73625140]
        %v703 = vld.sshfl [vmem:[#allocation1 + $0x10] sm:$0xff pattern:$0x73625140]
        %v704 = vld.sshfl [vmem:[#allocation1 + $0x18] sm:$0xff pattern:$0x73625140]
        %v705 = vld.sshfl [vmem:[#allocation1 + $0x20] sm:$0xff pattern:$0x73625140]
        %v706 = vld.sshfl [vmem:[#allocation1 + $0x28] sm:$0xff pattern:$0x73625140]
        %v707 = vld.sshfl [vmem:[#allocation1 + $0x30] sm:$0xff pattern:$0x73625140]
        %v708 = vld.sshfl [vmem:[#allocation1 + $0x38] sm:$0xff pattern:$0x73625140]
        %709 = vst [vmem:[#allocation1] ss:$4 sm:$0xff] %v280
        %710 = vst [vmem:[%s419] ss:$4 sm:$0xff] %v281
        %v711 = vld.sshfl [vmem:[#allocation1] sm:$0xff pattern:$0x73625140]
        %v712 = vld.sshfl [vmem:[#allocation1 + $0x8] sm:$0xff pattern:$0x73625140]
        %v713 = vld.sshfl [vmem:[#allocation1 + $0x10] sm:$0xff pattern:$0x73625140]
        %v714 = vld.sshfl [vmem:[#allocation1 + $0x18] sm:$0xff pattern:$0x73625140]
        %v715 = vld.sshfl [vmem:[#allocation1 + $0x20] sm:$0xff pattern:$0x73625140]
        %v716 = vld.sshfl [vmem:[#allocation1 + $0x28] sm:$0xff pattern:$0x73625140]
        %v717 = vld.sshfl [vmem:[#allocation1 + $0x30] sm:$0xff pattern:$0x73625140]
        %v718 = vld.sshfl [vmem:[#allocation1 + $0x38] sm:$0xff pattern:$0x73625140]
        %719 = vst [vmem:[#allocation1] ss:$4 sm:$0xff] %v282
        %720 = vst [vmem:[%s419] ss:$4 sm:$0xff] %v283
        %v721 = vld.sshfl [vmem:[#allocation1] sm:$0xff pattern:$0x73625140]
        %v722 = vld.sshfl [vmem:[#allocation1 + $0x8] sm:$0xff pattern:$0x73625140]
        %v723 = vld.sshfl [vmem:[#allocation1 + $0x10] sm:$0xff pattern:$0x73625140]
        %v724 = vld.sshfl [vmem:[#allocation1 + $0x18] sm:$0xff pattern:$0x73625140]
        %v725 = vld.sshfl [vmem:[#allocation1 + $0x20] sm:$0xff pattern:$0x73625140]
        %v726 = vld.sshfl [vmem:[#allocation1 + $0x28] sm:$0xff pattern:$0x73625140]
        %v727 = vld.sshfl [vmem:[#allocation1 + $0x30] sm:$0xff pattern:$0x73625140]
        %v728 = vld.sshfl [vmem:[#allocation1 + $0x38] sm:$0xff pattern:$0x73625140]
        %729 = vst [vmem:[#allocation1] ss:$4 sm:$0xff] %v284
        %730 = vst [vmem:[%s419] ss:$4 sm:$0xff] %v285
        %v731 = vld.sshfl [vmem:[#allocation1] sm:$0xff pattern:$0x73625140]
        %v732 = vld.sshfl [vmem:[#allocation1 + $0x8] sm:$0xff pattern:$0x73625140]
        %v733 = vld.sshfl [vmem:[#allocation1 + $0x10] sm:$0xff pattern:$0x73625140]
        %v734 = vld.sshfl [vmem:[#allocation1 + $0x18] sm:$0xff pattern:$0x73625140]
        %v735 = vld.sshfl [vmem:[#allocation1 + $0x20] sm:$0xff pattern:$0x73625140]
        %v736 = vld.sshfl [vmem:[#allocation1 + $0x28] sm:$0xff pattern:$0x73625140]
        %v737 = vld.sshfl [vmem:[#allocation1 + $0x30] sm:$0xff pattern:$0x73625140]
        %v738 = vld.sshfl [vmem:[#allocation1 + $0x38] sm:$0xff pattern:$0x73625140]
        %739 = vst [vmem:[#allocation1] ss:$4 sm:$0xff] %v286
        %740 = vst [vmem:[%s419] ss:$4 sm:$0xff] %v287
        %v741 = vld.sshfl [vmem:[#allocation1] sm:$0xff pattern:$0x73625140]
        %v742 = vld.sshfl [vmem:[#allocation1 + $0x8] sm:$0xff pattern:$0x73625140]
        %v743 = vld.sshfl [vmem:[#allocation1 + $0x10] sm:$0xff pattern:$0x73625140]
        %v744 = vld.sshfl [vmem:[#allocation1 + $0x18] sm:$0xff pattern:$0x73625140]
        %v745 = vld.sshfl [vmem:[#allocation1 + $0x20] sm:$0xff pattern:$0x73625140]
        %v746 = vld.sshfl [vmem:[#allocation1 + $0x28] sm:$0xff pattern:$0x73625140]
        %v747 = vld.sshfl [vmem:[#allocation1 + $0x30] sm:$0xff pattern:$0x73625140]
        %v748 = vld.sshfl [vmem:[#allocation1 + $0x38] sm:$0xff pattern:$0x73625140]
        %749 = vst [vmem:[#allocation1] ss:$4 sm:$0xff] %v288
        %750 = vst [vmem:[%s419] ss:$4 sm:$0xff] %v289
        %v751 = vld.sshfl [vmem:[#allocation1] sm:$0xff pattern:$0x73625140]
        %v752 = vld.sshfl [vmem:[#allocation1 + $0x8] sm:$0xff pattern:$0x73625140]
        %v753 = vld.sshfl [vmem:[#allocation1 + $0x10] sm:$0xff pattern:$0x73625140]
        %v754 = vld.sshfl [vmem:[#allocation1 + $0x18] sm:$0xff pattern:$0x73625140]
        %v755 = vld.sshfl [vmem:[#allocation1 + $0x20] sm:$0xff pattern:$0x73625140]
        %v756 = vld.sshfl [vmem:[#allocation1 + $0x28] sm:$0xff pattern:$0x73625140]
        %v757 = vld.sshfl [vmem:[#allocation1 + $0x30] sm:$0xff pattern:$0x73625140]
        %v758 = vld.sshfl [vmem:[#allocation1 + $0x38] sm:$0xff pattern:$0x73625140]
        %759 = vst [vmem:[#allocation1] ss:$4 sm:$0xff] %v290
        %760 = vst [vmem:[%s419] ss:$4 sm:$0xff] %v291
        %v761 = vld.sshfl [vmem:[#allocation1] sm:$0xff pattern:$0x73625140]
        %v762 = vld.sshfl [vmem:[#allocation1 + $0x8] sm:$0xff pattern:$0x73625140]
        %v763 = vld.sshfl [vmem:[#allocation1 + $0x10] sm:$0xff pattern:$0x73625140]
        %v764 = vld.sshfl [vmem:[#allocation1 + $0x18] sm:$0xff pattern:$0x73625140]
        %v765 = vld.sshfl [vmem:[#allocation1 + $0x20] sm:$0xff pattern:$0x73625140]
        %v766 = vld.sshfl [vmem:[#allocation1 + $0x28] sm:$0xff pattern:$0x73625140]
        %v767 = vld.sshfl [vmem:[#allocation1 + $0x30] sm:$0xff pattern:$0x73625140]
        %v768 = vld.sshfl [vmem:[#allocation1 + $0x38] sm:$0xff pattern:$0x73625140]
        %769 = vst [vmem:[#allocation1] ss:$4 sm:$0xff] %v292
        %770 = vst [vmem:[%s419] ss:$4 sm:$0xff] %v293
        %v771 = vld.sshfl [vmem:[#allocation1] sm:$0xff pattern:$0x73625140]
        %v772 = vld.sshfl [vmem:[#allocation1 + $0x8] sm:$0xff pattern:$0x73625140]
        %v773 = vld.sshfl [vmem:[#allocation1 + $0x10] sm:$0xff pattern:$0x73625140]
        %v774 = vld.sshfl [vmem:[#allocation1 + $0x18] sm:$0xff pattern:$0x73625140]
        %v775 = vld.sshfl [vmem:[#allocation1 + $0x20] sm:$0xff pattern:$0x73625140]
        %v776 = vld.sshfl [vmem:[#allocation1 + $0x28] sm:$0xff pattern:$0x73625140]
        %v777 = vld.sshfl [vmem:[#allocation1 + $0x30] sm:$0xff pattern:$0x73625140]
        %v778 = vld.sshfl [vmem:[#allocation1 + $0x38] sm:$0xff pattern:$0x73625140]
        %779 = vst [vmem:[#allocation1] ss:$4 sm:$0xff] %v294
        %780 = vst [vmem:[%s419] ss:$4 sm:$0xff] %v295
        %v781 = vld.sshfl [vmem:[#allocation1] sm:$0xff pattern:$0x73625140]
        %v782 = vld.sshfl [vmem:[#allocation1 + $0x8] sm:$0xff pattern:$0x73625140]
        %v783 = vld.sshfl [vmem:[#allocation1 + $0x10] sm:$0xff pattern:$0x73625140]
        %v784 = vld.sshfl [vmem:[#allocation1 + $0x18] sm:$0xff pattern:$0x73625140]
        %v785 = vld.sshfl [vmem:[#allocation1 + $0x20] sm:$0xff pattern:$0x73625140]
        %v786 = vld.sshfl [vmem:[#allocation1 + $0x28] sm:$0xff pattern:$0x73625140]
        %v787 = vld.sshfl [vmem:[#allocation1 + $0x30] sm:$0xff pattern:$0x73625140]
        %v788 = vld.sshfl [vmem:[#allocation1 + $0x38] sm:$0xff pattern:$0x73625140]
        %789 = vst [vmem:[#allocation1] ss:$4 sm:$0xff] %v296
        %790 = vst [vmem:[%s419] ss:$4 sm:$0xff] %v297
        %v791 = vld.sshfl [vmem:[#allocation1] sm:$0xff pattern:$0x73625140]
        %v792 = vld.sshfl [vmem:[#allocation1 + $0x8] sm:$0xff pattern:$0x73625140]
        %v793 = vld.sshfl [vmem:[#allocation1 + $0x10] sm:$0xff pattern:$0x73625140]
        %v794 = vld.sshfl [vmem:[#allocation1 + $0x18] sm:$0xff pattern:$0x73625140]
        %v795 = vld.sshfl [vmem:[#allocation1 + $0x20] sm:$0xff pattern:$0x73625140]
        %v796 = vld.sshfl [vmem:[#allocation1 + $0x28] sm:$0xff pattern:$0x73625140]
        %v797 = vld.sshfl [vmem:[#allocation1 + $0x30] sm:$0xff pattern:$0x73625140]
        %v798 = vld.sshfl [vmem:[#allocation1 + $0x38] sm:$0xff pattern:$0x73625140]
        %799 = vst [vmem:[#allocation1] ss:$4 sm:$0xff] %v298
        %800 = vst [vmem:[%s419] ss:$4 sm:$0xff] %v299
        %v801 = vld.sshfl [vmem:[#allocation1] sm:$0xff pattern:$0x73625140]
        %v802 = vld.sshfl [vmem:[#allocation1 + $0x8] sm:$0xff pattern:$0x73625140]
        %v803 = vld.sshfl [vmem:[#allocation1 + $0x10] sm:$0xff pattern:$0x73625140]
        %v804 = vld.sshfl [vmem:[#allocation1 + $0x18] sm:$0xff pattern:$0x73625140]
        %v805 = vld.sshfl [vmem:[#allocation1 + $0x20] sm:$0xff pattern:$0x73625140]
        %v806 = vld.sshfl [vmem:[#allocation1 + $0x28] sm:$0xff pattern:$0x73625140]
        %v807 = vld.sshfl [vmem:[#allocation1 + $0x30] sm:$0xff pattern:$0x73625140]
        %v808 = vld.sshfl [vmem:[#allocation1 + $0x38] sm:$0xff pattern:$0x73625140]
        %809 = vst [vmem:[#allocation1] ss:$4 sm:$0xff] %v300
        %810 = vst [vmem:[%s419] ss:$4 sm:$0xff] %v301
        %v811 = vld.sshfl [vmem:[#allocation1] sm:$0xff pattern:$0x73625140]
        %v812 = vld.sshfl [vmem:[#allocation1 + $0x8] sm:$0xff pattern:$0x73625140]
        %v813 = vld.sshfl [vmem:[#allocation1 + $0x10] sm:$0xff pattern:$0x73625140]
        %v814 = vld.sshfl [vmem:[#allocation1 + $0x18] sm:$0xff pattern:$0x73625140]
        %v815 = vld.sshfl [vmem:[#allocation1 + $0x20] sm:$0xff pattern:$0x73625140]
        %v816 = vld.sshfl [vmem:[#allocation1 + $0x28] sm:$0xff pattern:$0x73625140]
        %v817 = vld.sshfl [vmem:[#allocation1 + $0x30] sm:$0xff pattern:$0x73625140]
        %v818 = vld.sshfl [vmem:[#allocation1 + $0x38] sm:$0xff pattern:$0x73625140]
        %819 = vst [vmem:[#allocation1] ss:$4 sm:$0xff] %v302
        %820 = vst [vmem:[%s419] ss:$4 sm:$0xff] %v303
        %v821 = vld.sshfl [vmem:[#allocation1] sm:$0xff pattern:$0x73625140]
        %v822 = vld.sshfl [vmem:[#allocation1 + $0x8] sm:$0xff pattern:$0x73625140]
        %v823 = vld.sshfl [vmem:[#allocation1 + $0x10] sm:$0xff pattern:$0x73625140]
        %v824 = vld.sshfl [vmem:[#allocation1 + $0x18] sm:$0xff pattern:$0x73625140]
        %v825 = vld.sshfl [vmem:[#allocation1 + $0x20] sm:$0xff pattern:$0x73625140]
        %v826 = vld.sshfl [vmem:[#allocation1 + $0x28] sm:$0xff pattern:$0x73625140]
        %v827 = vld.sshfl [vmem:[#allocation1 + $0x30] sm:$0xff pattern:$0x73625140]
        %v828 = vld.sshfl [vmem:[#allocation1 + $0x38] sm:$0xff pattern:$0x73625140]
        %829 = vst [vmem:[#allocation1] ss:$4 sm:$0xff] %v304
        %830 = vst [vmem:[%s419] ss:$4 sm:$0xff] %v305
        %v831 = vld.sshfl [vmem:[#allocation1] sm:$0xff pattern:$0x73625140]
        %v832 = vld.sshfl [vmem:[#allocation1 + $0x8] sm:$0xff pattern:$0x73625140]
        %v833 = vld.sshfl [vmem:[#allocation1 + $0x10] sm:$0xff pattern:$0x73625140]
        %v834 = vld.sshfl [vmem:[#allocation1 + $0x18] sm:$0xff pattern:$0x73625140]
        %v835 = vld.sshfl [vmem:[#allocation1 + $0x20] sm:$0xff pattern:$0x73625140]
        %v836 = vld.sshfl [vmem:[#allocation1 + $0x28] sm:$0xff pattern:$0x73625140]
        %v837 = vld.sshfl [vmem:[#allocation1 + $0x30] sm:$0xff pattern:$0x73625140]
        %v838 = vld.sshfl [vmem:[#allocation1 + $0x38] sm:$0xff pattern:$0x73625140]
        %839 = vst [vmem:[#allocation1] ss:$4 sm:$0xff] %v306
        %840 = vst [vmem:[%s419] ss:$4 sm:$0xff] %v307
        %v841 = vld.sshfl [vmem:[#allocation1] sm:$0xff pattern:$0x73625140]
        %v842 = vld.sshfl [vmem:[#allocation1 + $0x8] sm:$0xff pattern:$0x73625140]
        %v843 = vld.sshfl [vmem:[#allocation1 + $0x10] sm:$0xff pattern:$0x73625140]
        %v844 = vld.sshfl [vmem:[#allocation1 + $0x18] sm:$0xff pattern:$0x73625140]
        %v845 = vld.sshfl [vmem:[#allocation1 + $0x20] sm:$0xff pattern:$0x73625140]
        %v846 = vld.sshfl [vmem:[#allocation1 + $0x28] sm:$0xff pattern:$0x73625140]
        %v847 = vld.sshfl [vmem:[#allocation1 + $0x30] sm:$0xff pattern:$0x73625140]
        %v848 = vld.sshfl [vmem:[#allocation1 + $0x38] sm:$0xff pattern:$0x73625140]
        %849 = vst [vmem:[#allocation1] ss:$4 sm:$0xff] %v308
        %850 = vst [vmem:[%s419] ss:$4 sm:$0xff] %v309
        %v851 = vld.sshfl [vmem:[#allocation1] sm:$0xff pattern:$0x73625140]
        %v852 = vld.sshfl [vmem:[#allocation1 + $0x8] sm:$0xff pattern:$0x73625140]
        %v853 = vld.sshfl [vmem:[#allocation1 + $0x10] sm:$0xff pattern:$0x73625140]
        %v854 = vld.sshfl [vmem:[#allocation1 + $0x18] sm:$0xff pattern:$0x73625140]
        %v855 = vld.sshfl [vmem:[#allocation1 + $0x20] sm:$0xff pattern:$0x73625140]
        %v856 = vld.sshfl [vmem:[#allocation1 + $0x28] sm:$0xff pattern:$0x73625140]
        %v857 = vld.sshfl [vmem:[#allocation1 + $0x30] sm:$0xff pattern:$0x73625140]
        %v858 = vld.sshfl [vmem:[#allocation1 + $0x38] sm:$0xff pattern:$0x73625140]
        %859 = vst [vmem:[#allocation1] ss:$4 sm:$0xff] %v310
        %860 = vst [vmem:[%s419] ss:$4 sm:$0xff] %v311
        %v861 = vld.sshfl [vmem:[#allocation1] sm:$0xff pattern:$0x73625140]
        %v862 = vld.sshfl [vmem:[#allocation1 + $0x8] sm:$0xff pattern:$0x73625140]
        %v863 = vld.sshfl [vmem:[#allocation1 + $0x10] sm:$0xff pattern:$0x73625140]
        %v864 = vld.sshfl [vmem:[#allocation1 + $0x18] sm:$0xff pattern:$0x73625140]
        %v865 = vld.sshfl [vmem:[#allocation1 + $0x20] sm:$0xff pattern:$0x73625140]
        %v866 = vld.sshfl [vmem:[#allocation1 + $0x28] sm:$0xff pattern:$0x73625140]
        %v867 = vld.sshfl [vmem:[#allocation1 + $0x30] sm:$0xff pattern:$0x73625140]
        %v868 = vld.sshfl [vmem:[#allocation1 + $0x38] sm:$0xff pattern:$0x73625140]
        %869 = vst [vmem:[#allocation1] ss:$4 sm:$0xff] %v312
        %870 = vst [vmem:[%s419] ss:$4 sm:$0xff] %v313
        %v871 = vld.sshfl [vmem:[#allocation1] sm:$0xff pattern:$0x73625140]
        %v872 = vld.sshfl [vmem:[#allocation1 + $0x8] sm:$0xff pattern:$0x73625140]
        %v873 = vld.sshfl [vmem:[#allocation1 + $0x10] sm:$0xff pattern:$0x73625140]
        %v874 = vld.sshfl [vmem:[#allocation1 + $0x18] sm:$0xff pattern:$0x73625140]
        %v875 = vld.sshfl [vmem:[#allocation1 + $0x20] sm:$0xff pattern:$0x73625140]
        %v876 = vld.sshfl [vmem:[#allocation1 + $0x28] sm:$0xff pattern:$0x73625140]
        %v877 = vld.sshfl [vmem:[#allocation1 + $0x30] sm:$0xff pattern:$0x73625140]
        %v878 = vld.sshfl [vmem:[#allocation1 + $0x38] sm:$0xff pattern:$0x73625140]
        %879 = vst [vmem:[#allocation1] ss:$4 sm:$0xff] %v314
        %880 = vst [vmem:[%s419] ss:$4 sm:$0xff] %v315
        %v881 = vld.sshfl [vmem:[#allocation1] sm:$0xff pattern:$0x73625140]
        %v882 = vld.sshfl [vmem:[#allocation1 + $0x8] sm:$0xff pattern:$0x73625140]
        %v883 = vld.sshfl [vmem:[#allocation1 + $0x10] sm:$0xff pattern:$0x73625140]
        %v884 = vld.sshfl [vmem:[#allocation1 + $0x18] sm:$0xff pattern:$0x73625140]
        %v885 = vld.sshfl [vmem:[#allocation1 + $0x20] sm:$0xff pattern:$0x73625140]
        %v886 = vld.sshfl [vmem:[#allocation1 + $0x28] sm:$0xff pattern:$0x73625140]
        %v887 = vld.sshfl [vmem:[#allocation1 + $0x30] sm:$0xff pattern:$0x73625140]
        %v888 = vld.sshfl [vmem:[#allocation1 + $0x38] sm:$0xff pattern:$0x73625140]
        %889 = vst [vmem:[#allocation1] ss:$4 sm:$0xff] %v316
        %890 = vst [vmem:[%s419] ss:$4 sm:$0xff] %v317
        %v891 = vld.sshfl [vmem:[#allocation1] sm:$0xff pattern:$0x73625140]
        %v892 = vld.sshfl [vmem:[#allocation1 + $0x8] sm:$0xff pattern:$0x73625140]
        %v893 = vld.sshfl [vmem:[#allocation1 + $0x10] sm:$0xff pattern:$0x73625140]
        %v894 = vld.sshfl [vmem:[#allocation1 + $0x18] sm:$0xff pattern:$0x73625140]
        %v895 = vld.sshfl [vmem:[#allocation1 + $0x20] sm:$0xff pattern:$0x73625140]
        %v896 = vld.sshfl [vmem:[#allocation1 + $0x28] sm:$0xff pattern:$0x73625140]
        %v897 = vld.sshfl [vmem:[#allocation1 + $0x30] sm:$0xff pattern:$0x73625140]
        %v898 = vld.sshfl [vmem:[#allocation1 + $0x38] sm:$0xff pattern:$0x73625140]
        %899 = vst [vmem:[#allocation1] ss:$4 sm:$0xff] %v318
        %900 = vst [vmem:[%s419] ss:$4 sm:$0xff] %v319
        %v901 = vld.sshfl [vmem:[#allocation1] sm:$0xff pattern:$0x73625140]
        %v902 = vld.sshfl [vmem:[#allocation1 + $0x8] sm:$0xff pattern:$0x73625140]
        %v903 = vld.sshfl [vmem:[#allocation1 + $0x10] sm:$0xff pattern:$0x73625140]
        %v904 = vld.sshfl [vmem:[#allocation1 + $0x18] sm:$0xff pattern:$0x73625140]
        %v905 = vld.sshfl [vmem:[#allocation1 + $0x20] sm:$0xff pattern:$0x73625140]
        %v906 = vld.sshfl [vmem:[#allocation1 + $0x28] sm:$0xff pattern:$0x73625140]
        %v907 = vld.sshfl [vmem:[#allocation1 + $0x30] sm:$0xff pattern:$0x73625140]
        %v1299 = vpack.c.bf16 %v421, %v421
        %v1300 = vpack.c.bf16 %v422, %v422
        %v1301 = vpack.c.bf16 %v423, %v423
        %v1302 = vpack.c.bf16 %v424, %v424
        %v1303 = vpack.c.bf16 %v425, %v425
        %v1304 = vpack.c.bf16 %v426, %v426
        %v1305 = vpack.c.bf16 %v427, %v427
        %v1306 = vpack.c.bf16 %v428, %v428
        %v1307 = vpack.c.bf16 %v431, %v431
        %v1308 = vpack.c.bf16 %v432, %v432
        %v1309 = vpack.c.bf16 %v433, %v433
        %v1310 = vpack.c.bf16 %v434, %v434
        %v1311 = vpack.c.bf16 %v435, %v435
        %v1312 = vpack.c.bf16 %v436, %v436
        %v1313 = vpack.c.bf16 %v437, %v437
        %v1314 = vpack.c.bf16 %v438, %v438
        %v1315 = vpack.c.bf16 %v441, %v441
        %v1316 = vpack.c.bf16 %v442, %v442
        %v1317 = vpack.c.bf16 %v443, %v443
        %v1318 = vpack.c.bf16 %v444, %v444
        %v1319 = vpack.c.bf16 %v445, %v445
        %v1320 = vpack.c.bf16 %v446, %v446
        %v1321 = vpack.c.bf16 %v447, %v447
        %v1322 = vpack.c.bf16 %v448, %v448
        %v1323 = vpack.c.bf16 %v451, %v451
        %v1324 = vpack.c.bf16 %v452, %v452
        %v1325 = vpack.c.bf16 %v453, %v453
        %v1326 = vpack.c.bf16 %v454, %v454
        %v1327 = vpack.c.bf16 %v455, %v455
        %v1328 = vpack.c.bf16 %v456, %v456
        %v1329 = vpack.c.bf16 %v457, %v457
        %v1330 = vpack.c.bf16 %v458, %v458
        %v1331 = vpack.c.bf16 %v461, %v461
        %v1332 = vpack.c.bf16 %v462, %v462
        %v1333 = vpack.c.bf16 %v463, %v463
        %v1334 = vpack.c.bf16 %v464, %v464
        %v1335 = vpack.c.bf16 %v465, %v465
        %v1336 = vpack.c.bf16 %v466, %v466
        %v1337 = vpack.c.bf16 %v467, %v467
        %v1338 = vpack.c.bf16 %v468, %v468
        %v1339 = vpack.c.bf16 %v471, %v471
        %v1340 = vpack.c.bf16 %v472, %v472
        %v1341 = vpack.c.bf16 %v473, %v473
        %v1342 = vpack.c.bf16 %v474, %v474
        %v1343 = vpack.c.bf16 %v475, %v475
        %v1344 = vpack.c.bf16 %v476, %v476
        %v1345 = vpack.c.bf16 %v477, %v477
        %v1346 = vpack.c.bf16 %v478, %v478
        %v1347 = vpack.c.bf16 %v481, %v481
        %v1348 = vpack.c.bf16 %v482, %v482
        %v1349 = vpack.c.bf16 %v483, %v483
        %v1350 = vpack.c.bf16 %v484, %v484
        %v1351 = vpack.c.bf16 %v485, %v485
        %v1352 = vpack.c.bf16 %v486, %v486
        %v1353 = vpack.c.bf16 %v487, %v487
        %v1354 = vpack.c.bf16 %v488, %v488
        %v1355 = vpack.c.bf16 %v491, %v491
        %v1356 = vpack.c.bf16 %v492, %v492
        %v1357 = vpack.c.bf16 %v493, %v493
        %v1358 = vpack.c.bf16 %v494, %v494
        %v1359 = vpack.c.bf16 %v495, %v495
        %v1360 = vpack.c.bf16 %v496, %v496
        %v1361 = vpack.c.bf16 %v497, %v497
        %v1362 = vpack.c.bf16 %v498, %v498
        %v1363 = vpack.c.bf16 %v501, %v501
        %v1364 = vpack.c.bf16 %v502, %v502
        %v1365 = vpack.c.bf16 %v503, %v503
        %v1366 = vpack.c.bf16 %v504, %v504
        %v1367 = vpack.c.bf16 %v505, %v505
        %v1368 = vpack.c.bf16 %v506, %v506
        %v1369 = vpack.c.bf16 %v507, %v507
        %v1370 = vpack.c.bf16 %v508, %v508
        %v1371 = vpack.c.bf16 %v511, %v511
        %v1372 = vpack.c.bf16 %v512, %v512
        %v1373 = vpack.c.bf16 %v513, %v513
        %v1374 = vpack.c.bf16 %v514, %v514
        %v1375 = vpack.c.bf16 %v515, %v515
        %v1376 = vpack.c.bf16 %v516, %v516
        %v1377 = vpack.c.bf16 %v517, %v517
        %v1378 = vpack.c.bf16 %v518, %v518
        %v1379 = vpack.c.bf16 %v521, %v521
        %v1380 = vpack.c.bf16 %v522, %v522
        %v1381 = vpack.c.bf16 %v523, %v523
        %v1382 = vpack.c.bf16 %v524, %v524
        %v1383 = vpack.c.bf16 %v525, %v525
        %v1384 = vpack.c.bf16 %v526, %v526
        %v1385 = vpack.c.bf16 %v527, %v527
        %v1386 = vpack.c.bf16 %v528, %v528
        %v1387 = vpack.c.bf16 %v531, %v531
        %v1388 = vpack.c.bf16 %v532, %v532
        %v1389 = vpack.c.bf16 %v533, %v533
        %v1390 = vpack.c.bf16 %v534, %v534
        %v1391 = vpack.c.bf16 %v535, %v535
        %v1392 = vpack.c.bf16 %v536, %v536
        %v1393 = vpack.c.bf16 %v537, %v537
        %v1394 = vpack.c.bf16 %v538, %v538
        %v1395 = vpack.c.bf16 %v541, %v541
        %v1396 = vpack.c.bf16 %v542, %v542
        %v1397 = vpack.c.bf16 %v543, %v543
        %v1398 = vpack.c.bf16 %v544, %v544
        %v1399 = vpack.c.bf16 %v545, %v545
        %v1400 = vpack.c.bf16 %v546, %v546
        %v1401 = vpack.c.bf16 %v547, %v547
        %v1402 = vpack.c.bf16 %v548, %v548
        %v1403 = vpack.c.bf16 %v551, %v551
        %v1404 = vpack.c.bf16 %v552, %v552
        %v1405 = vpack.c.bf16 %v553, %v553
        %v1406 = vpack.c.bf16 %v554, %v554
        %v1407 = vpack.c.bf16 %v555, %v555
        %v1408 = vpack.c.bf16 %v556, %v556
        %v1409 = vpack.c.bf16 %v557, %v557
        %v1410 = vpack.c.bf16 %v558, %v558
        %v1411 = vpack.c.bf16 %v561, %v561
        %v1412 = vpack.c.bf16 %v562, %v562
        %v1413 = vpack.c.bf16 %v563, %v563
        %v1414 = vpack.c.bf16 %v564, %v564
        %v1415 = vpack.c.bf16 %v565, %v565
        %v1416 = vpack.c.bf16 %v566, %v566
        %v1417 = vpack.c.bf16 %v567, %v567
        %v1418 = vpack.c.bf16 %v568, %v568
        %v1419 = vpack.c.bf16 %v571, %v571
        %v1420 = vpack.c.bf16 %v572, %v572
        %v1421 = vpack.c.bf16 %v573, %v573
        %v1422 = vpack.c.bf16 %v574, %v574
        %v1423 = vpack.c.bf16 %v575, %v575
        %v1424 = vpack.c.bf16 %v576, %v576
        %v1425 = vpack.c.bf16 %v577, %v577
        %v1426 = vpack.c.bf16 %v578, %v578
        %v1427 = vpack.c.bf16 %v581, %v581
        %v1428 = vpack.c.bf16 %v582, %v582
        %v1429 = vpack.c.bf16 %v583, %v583
        %v1430 = vpack.c.bf16 %v584, %v584
        %v1431 = vpack.c.bf16 %v585, %v585
        %v1432 = vpack.c.bf16 %v586, %v586
        %v1433 = vpack.c.bf16 %v587, %v587
        %v1434 = vpack.c.bf16 %v588, %v588
        %v1435 = vpack.c.bf16 %v591, %v591
        %v1436 = vpack.c.bf16 %v592, %v592
        %v1437 = vpack.c.bf16 %v593, %v593
        %v1438 = vpack.c.bf16 %v594, %v594
        %v1439 = vpack.c.bf16 %v595, %v595
        %v1440 = vpack.c.bf16 %v596, %v596
        %v1441 = vpack.c.bf16 %v597, %v597
        %v1442 = vpack.c.bf16 %v598, %v598
        %v1443 = vpack.c.bf16 %v601, %v601
        %v1444 = vpack.c.bf16 %v602, %v602
        %v1445 = vpack.c.bf16 %v603, %v603
        %v1446 = vpack.c.bf16 %v604, %v604
        %v1447 = vpack.c.bf16 %v605, %v605
        %v1448 = vpack.c.bf16 %v606, %v606
        %v1449 = vpack.c.bf16 %v607, %v607
        %v1450 = vpack.c.bf16 %v608, %v608
        %v1451 = vpack.c.bf16 %v611, %v611
        %v1452 = vpack.c.bf16 %v612, %v612
        %v1453 = vpack.c.bf16 %v613, %v613
        %v1454 = vpack.c.bf16 %v614, %v614
        %v1455 = vpack.c.bf16 %v615, %v615
        %v1456 = vpack.c.bf16 %v616, %v616
        %v1457 = vpack.c.bf16 %v617, %v617
        %v1458 = vpack.c.bf16 %v618, %v618
        %v1459 = vpack.c.bf16 %v621, %v621
        %v1460 = vpack.c.bf16 %v622, %v622
        %v1461 = vpack.c.bf16 %v623, %v623
        %v1462 = vpack.c.bf16 %v624, %v624
        %v1463 = vpack.c.bf16 %v625, %v625
        %v1464 = vpack.c.bf16 %v626, %v626
        %v1465 = vpack.c.bf16 %v627, %v627
        %v1466 = vpack.c.bf16 %v628, %v628
        %v1467 = vpack.c.bf16 %v631, %v631
        %v1468 = vpack.c.bf16 %v632, %v632
        %v1469 = vpack.c.bf16 %v633, %v633
        %v1470 = vpack.c.bf16 %v634, %v634
        %v1471 = vpack.c.bf16 %v635, %v635
        %v1472 = vpack.c.bf16 %v636, %v636
        %v1473 = vpack.c.bf16 %v637, %v637
        %v1474 = vpack.c.bf16 %v638, %v638
        %v1475 = vpack.c.bf16 %v641, %v641
        %v1476 = vpack.c.bf16 %v642, %v642
        %v1477 = vpack.c.bf16 %v643, %v643
        %v1478 = vpack.c.bf16 %v644, %v644
        %v1479 = vpack.c.bf16 %v645, %v645
        %v1480 = vpack.c.bf16 %v646, %v646
        %v1481 = vpack.c.bf16 %v647, %v647
        %v1482 = vpack.c.bf16 %v648, %v648
        %v1483 = vpack.c.bf16 %v651, %v651
        %v1484 = vpack.c.bf16 %v652, %v652
        %v1485 = vpack.c.bf16 %v653, %v653
        %v1486 = vpack.c.bf16 %v654, %v654
        %v1487 = vpack.c.bf16 %v655, %v655
        %v1488 = vpack.c.bf16 %v656, %v656
        %v1489 = vpack.c.bf16 %v657, %v657
        %v1490 = vpack.c.bf16 %v658, %v658
        %v1491 = vpack.c.bf16 %v661, %v661
        %v1492 = vpack.c.bf16 %v662, %v662
        %v1493 = vpack.c.bf16 %v663, %v663
        %v1494 = vpack.c.bf16 %v664, %v664
        %v1495 = vpack.c.bf16 %v665, %v665
        %v1496 = vpack.c.bf16 %v666, %v666
        %v1497 = vpack.c.bf16 %v667, %v667
        %v1498 = vpack.c.bf16 %v668, %v668
        %v1499 = vpack.c.bf16 %v671, %v671
        %v1500 = vpack.c.bf16 %v672, %v672
        %v1501 = vpack.c.bf16 %v673, %v673
        %v1502 = vpack.c.bf16 %v674, %v674
        %v1503 = vpack.c.bf16 %v675, %v675
        %v1504 = vpack.c.bf16 %v676, %v676
        %v1505 = vpack.c.bf16 %v677, %v677
        %v1506 = vpack.c.bf16 %v678, %v678
        %v1507 = vpack.c.bf16 %v681, %v681
        %v1508 = vpack.c.bf16 %v682, %v682
        %v1509 = vpack.c.bf16 %v683, %v683
        %v1510 = vpack.c.bf16 %v684, %v684
        %v1511 = vpack.c.bf16 %v685, %v685
        %v1512 = vpack.c.bf16 %v686, %v686
        %v1513 = vpack.c.bf16 %v687, %v687
        %v1514 = vpack.c.bf16 %v688, %v688
        %v1515 = vpack.c.bf16 %v691, %v691
        %v1516 = vpack.c.bf16 %v692, %v692
        %v1517 = vpack.c.bf16 %v693, %v693
        %v1518 = vpack.c.bf16 %v694, %v694
        %v1519 = vpack.c.bf16 %v695, %v695
        %v1520 = vpack.c.bf16 %v696, %v696
        %v1521 = vpack.c.bf16 %v697, %v697
        %v1522 = vpack.c.bf16 %v698, %v698
        %v1523 = vpack.c.bf16 %v701, %v701
        %v1524 = vpack.c.bf16 %v702, %v702
        %v1525 = vpack.c.bf16 %v703, %v703
        %v1526 = vpack.c.bf16 %v704, %v704
        %v1527 = vpack.c.bf16 %v705, %v705
        %v1528 = vpack.c.bf16 %v706, %v706
        %v1529 = vpack.c.bf16 %v707, %v707
        %v1530 = vpack.c.bf16 %v708, %v708
        %v1531 = vpack.c.bf16 %v711, %v711
        %v1532 = vpack.c.bf16 %v712, %v712
        %v1533 = vpack.c.bf16 %v713, %v713
        %v1534 = vpack.c.bf16 %v714, %v714
        %v1535 = vpack.c.bf16 %v715, %v715
        %v1536 = vpack.c.bf16 %v716, %v716
        %v1537 = vpack.c.bf16 %v717, %v717
        %v1538 = vpack.c.bf16 %v718, %v718
        %v1539 = vpack.c.bf16 %v721, %v721
        %v1540 = vpack.c.bf16 %v722, %v722
        %v1541 = vpack.c.bf16 %v723, %v723
        %v1542 = vpack.c.bf16 %v724, %v724
        %v1543 = vpack.c.bf16 %v725, %v725
        %v1544 = vpack.c.bf16 %v726, %v726
        %v1545 = vpack.c.bf16 %v727, %v727
        %v1546 = vpack.c.bf16 %v728, %v728
        %v1547 = vpack.c.bf16 %v731, %v731
        %v1548 = vpack.c.bf16 %v732, %v732
        %v1549 = vpack.c.bf16 %v733, %v733
        %v1550 = vpack.c.bf16 %v734, %v734
        %v1551 = vpack.c.bf16 %v735, %v735
        %v1552 = vpack.c.bf16 %v736, %v736
        %v1553 = vpack.c.bf16 %v737, %v737
        %v1554 = vpack.c.bf16 %v738, %v738
        %v1555 = vpack.c.bf16 %v741, %v741
        %v1556 = vpack.c.bf16 %v742, %v742
        %v1557 = vpack.c.bf16 %v743, %v743
        %v1558 = vpack.c.bf16 %v744, %v744
        %v1559 = vpack.c.bf16 %v745, %v745
        %v1560 = vpack.c.bf16 %v746, %v746
        %v1561 = vpack.c.bf16 %v747, %v747
        %v1562 = vpack.c.bf16 %v748, %v748
        %v1563 = vpack.c.bf16 %v751, %v751
        %v1564 = vpack.c.bf16 %v752, %v752
        %v1565 = vpack.c.bf16 %v753, %v753
        %v1566 = vpack.c.bf16 %v754, %v754
        %v1567 = vpack.c.bf16 %v755, %v755
        %v1568 = vpack.c.bf16 %v756, %v756
        %v1569 = vpack.c.bf16 %v757, %v757
        %v1570 = vpack.c.bf16 %v758, %v758
        %v1571 = vpack.c.bf16 %v761, %v761
        %v1572 = vpack.c.bf16 %v762, %v762
        %v1573 = vpack.c.bf16 %v763, %v763
        %v1574 = vpack.c.bf16 %v764, %v764
        %v1575 = vpack.c.bf16 %v765, %v765
        %v1576 = vpack.c.bf16 %v766, %v766
        %v1577 = vpack.c.bf16 %v767, %v767
        %v1578 = vpack.c.bf16 %v768, %v768
        %v1579 = vpack.c.bf16 %v771, %v771
        %v1580 = vpack.c.bf16 %v772, %v772
        %v1581 = vpack.c.bf16 %v773, %v773
        %v1582 = vpack.c.bf16 %v774, %v774
        %v1583 = vpack.c.bf16 %v775, %v775
        %v1584 = vpack.c.bf16 %v776, %v776
        %v1585 = vpack.c.bf16 %v777, %v777
        %v1586 = vpack.c.bf16 %v778, %v778
        %v1587 = vpack.c.bf16 %v781, %v781
        %v1588 = vpack.c.bf16 %v782, %v782
        %v1589 = vpack.c.bf16 %v783, %v783
        %v1590 = vpack.c.bf16 %v784, %v784
        %v1591 = vpack.c.bf16 %v785, %v785
        %v1592 = vpack.c.bf16 %v786, %v786
        %v1593 = vpack.c.bf16 %v787, %v787
        %v1594 = vpack.c.bf16 %v788, %v788
        %v1595 = vpack.c.bf16 %v791, %v791
        %v1596 = vpack.c.bf16 %v792, %v792
        %v1597 = vpack.c.bf16 %v793, %v793
        %v1598 = vpack.c.bf16 %v794, %v794
        %v1599 = vpack.c.bf16 %v795, %v795
        %v1600 = vpack.c.bf16 %v796, %v796
        %v1601 = vpack.c.bf16 %v797, %v797
        %v1602 = vpack.c.bf16 %v798, %v798
        %v1603 = vpack.c.bf16 %v801, %v801
        %v1604 = vpack.c.bf16 %v802, %v802
        %v1605 = vpack.c.bf16 %v803, %v803
        %v1606 = vpack.c.bf16 %v804, %v804
        %v1607 = vpack.c.bf16 %v805, %v805
        %v1608 = vpack.c.bf16 %v806, %v806
        %v1609 = vpack.c.bf16 %v807, %v807
        %v1610 = vpack.c.bf16 %v808, %v808
        %v1611 = vpack.c.bf16 %v811, %v811
        %v1612 = vpack.c.bf16 %v812, %v812
        %v1613 = vpack.c.bf16 %v813, %v813
        %v1614 = vpack.c.bf16 %v814, %v814
        %v1615 = vpack.c.bf16 %v815, %v815
        %v1616 = vpack.c.bf16 %v816, %v816
        %v1617 = vpack.c.bf16 %v817, %v817
        %v1618 = vpack.c.bf16 %v818, %v818
        %v1619 = vpack.c.bf16 %v821, %v821
        %v1620 = vpack.c.bf16 %v822, %v822
        %v1621 = vpack.c.bf16 %v823, %v823
        %v1622 = vpack.c.bf16 %v824, %v824
        %v1623 = vpack.c.bf16 %v825, %v825
        %v1624 = vpack.c.bf16 %v826, %v826
        %v1625 = vpack.c.bf16 %v827, %v827
        %v1626 = vpack.c.bf16 %v828, %v828
        %v1627 = vpack.c.bf16 %v831, %v831
        %v1628 = vpack.c.bf16 %v832, %v832
        %v1629 = vpack.c.bf16 %v833, %v833
        %v1630 = vpack.c.bf16 %v834, %v834
        %v1631 = vpack.c.bf16 %v835, %v835
        %v1632 = vpack.c.bf16 %v836, %v836
        %v1633 = vpack.c.bf16 %v837, %v837
        %v1634 = vpack.c.bf16 %v838, %v838
        %v1635 = vpack.c.bf16 %v841, %v841
        %v1636 = vpack.c.bf16 %v842, %v842
        %v1637 = vpack.c.bf16 %v843, %v843
        %v1638 = vpack.c.bf16 %v844, %v844
        %v1639 = vpack.c.bf16 %v845, %v845
        %v1640 = vpack.c.bf16 %v846, %v846
        %v1641 = vpack.c.bf16 %v847, %v847
        %v1642 = vpack.c.bf16 %v848, %v848
        %v1643 = vpack.c.bf16 %v851, %v851
        %v1644 = vpack.c.bf16 %v852, %v852
        %v1645 = vpack.c.bf16 %v853, %v853
        %v1646 = vpack.c.bf16 %v854, %v854
        %v1647 = vpack.c.bf16 %v855, %v855
        %v1648 = vpack.c.bf16 %v856, %v856
        %v1649 = vpack.c.bf16 %v857, %v857
        %v1650 = vpack.c.bf16 %v858, %v858
        %v1651 = vpack.c.bf16 %v861, %v861
        %v1652 = vpack.c.bf16 %v862, %v862
        %v1653 = vpack.c.bf16 %v863, %v863
        %v1654 = vpack.c.bf16 %v864, %v864
        %v1655 = vpack.c.bf16 %v865, %v865
        %v1656 = vpack.c.bf16 %v866, %v866
        %v1657 = vpack.c.bf16 %v867, %v867
        %v1658 = vpack.c.bf16 %v868, %v868
        %v1659 = vpack.c.bf16 %v871, %v871
        %v1660 = vpack.c.bf16 %v872, %v872
        %v1661 = vpack.c.bf16 %v873, %v873
        %v1662 = vpack.c.bf16 %v874, %v874
        %v1663 = vpack.c.bf16 %v875, %v875
        %v1664 = vpack.c.bf16 %v876, %v876
        %v1665 = vpack.c.bf16 %v877, %v877
        %v1666 = vpack.c.bf16 %v878, %v878
        %v1667 = vpack.c.bf16 %v881, %v881
        %v1668 = vpack.c.bf16 %v882, %v882
        %v1669 = vpack.c.bf16 %v883, %v883
        %v1670 = vpack.c.bf16 %v884, %v884
        %v1671 = vpack.c.bf16 %v885, %v885
        %v1672 = vpack.c.bf16 %v886, %v886
        %v1673 = vpack.c.bf16 %v887, %v887
        %v1674 = vpack.c.bf16 %v888, %v888
        %v1675 = vpack.c.bf16 %v891, %v891
        %v1676 = vpack.c.bf16 %v892, %v892
        %v1677 = vpack.c.bf16 %v893, %v893
        %v1678 = vpack.c.bf16 %v894, %v894
        %v1679 = vpack.c.bf16 %v895, %v895
        %v1680 = vpack.c.bf16 %v896, %v896
        %v1681 = vpack.c.bf16 %v897, %v897
        %v1682 = vpack.c.bf16 %v898, %v898
        %v1683 = vpack.c.bf16 %v901, %v901
        %v1684 = vpack.c.bf16 %v902, %v902
        %v1685 = vpack.c.bf16 %v903, %v903
        %v1686 = vpack.c.bf16 %v904, %v904
        %v1687 = vpack.c.bf16 %v905, %v905
        %v1688 = vpack.c.bf16 %v906, %v906
        %v1689 = vpack.c.bf16 %v907, %v907
        %v1690 = vld [vmem:[%s174] sm:$0xff]
        %v1691 = vld [vmem:[%s174 + $0x8] sm:$0xff]
        %v1692 = vld [vmem:[%s174 + $0x10] sm:$0xff]
        %v1693 = vld [vmem:[%s174 + $0x18] sm:$0xff]
        %v1694 = vld [vmem:[%s174 + $0x20] sm:$0xff]
        %v1695 = vld [vmem:[%s174 + $0x28] sm:$0xff]
        %v1696 = vld [vmem:[%s174 + $0x30] sm:$0xff]
        %v1697 = vld [vmem:[%s174 + $0x38] sm:$0xff]
        %v1698 = vld [vmem:[%s174 + $0x40] sm:$0xff]
        %v1699 = vld [vmem:[%s174 + $0x48] sm:$0xff]
        %v1700 = vld [vmem:[%s174 + $0x50] sm:$0xff]
        %v1701 = vld [vmem:[%s174 + $0x58] sm:$0xff]
        %v1702 = vld [vmem:[%s174 + $0x60] sm:$0xff]
        %v1703 = vld [vmem:[%s174 + $0x68] sm:$0xff]
        %v1704 = vld [vmem:[%s174 + $0x70] sm:$0xff]
        %v1705 = vld [vmem:[%s174 + $0x78] sm:$0xff]
        %v1706 = vld [vmem:[%s174 + $0x80] sm:$0xff]
        %v1707 = vld [vmem:[%s174 + $0x88] sm:$0xff]
        %v1708 = vld [vmem:[%s174 + $0x90] sm:$0xff]
        %v1709 = vld [vmem:[%s174 + $0x98] sm:$0xff]
        %v1710 = vld [vmem:[%s174 + $0xa0] sm:$0xff]
        %v1711 = vld [vmem:[%s174 + $0xa8] sm:$0xff]
        %v1712 = vld [vmem:[%s174 + $0xb0] sm:$0xff]
        %v1713 = vld [vmem:[%s174 + $0xb8] sm:$0xff]
        %v1714 = vld [vmem:[%s174 + $0xc0] sm:$0xff]
        %v1715 = vld [vmem:[%s174 + $0xc8] sm:$0xff]
        %v1716 = vld [vmem:[%s174 + $0xd0] sm:$0xff]
        %v1717 = vld [vmem:[%s174 + $0xd8] sm:$0xff]
        %v1718 = vld [vmem:[%s174 + $0xe0] sm:$0xff]
        %v1719 = vld [vmem:[%s174 + $0xe8] sm:$0xff]
        %v1720 = vld [vmem:[%s174 + $0xf0] sm:$0xff]
        %v1721 = vld [vmem:[%s174 + $0xf8] sm:$0xff]
        %v1722 = vld [vmem:[%s174 + $0x100] sm:$0xff]
        %v1723 = vld [vmem:[%s174 + $0x108] sm:$0xff]
        %v1724 = vld [vmem:[%s174 + $0x110] sm:$0xff]
        %v1725 = vld [vmem:[%s174 + $0x118] sm:$0xff]
        %v1726 = vld [vmem:[%s174 + $0x120] sm:$0xff]
        %v1727 = vld [vmem:[%s174 + $0x128] sm:$0xff]
        %v1728 = vld [vmem:[%s174 + $0x130] sm:$0xff]
        %v1729 = vld [vmem:[%s174 + $0x138] sm:$0xff]
        %v1730 = vld [vmem:[%s174 + $0x140] sm:$0xff]
        %v1731 = vld [vmem:[%s174 + $0x148] sm:$0xff]
        %v1732 = vld [vmem:[%s174 + $0x150] sm:$0xff]
        %v1733 = vld [vmem:[%s174 + $0x158] sm:$0xff]
        %v1734 = vld [vmem:[%s174 + $0x160] sm:$0xff]
        %v1735 = vld [vmem:[%s174 + $0x168] sm:$0xff]
        %v1736 = vld [vmem:[%s174 + $0x170] sm:$0xff]
        %v1737 = vld [vmem:[%s174 + $0x178] sm:$0xff]
        %v1738 = vld [vmem:[%s174 + $0x180] sm:$0xff]
        %v1739 = vld [vmem:[%s174 + $0x188] sm:$0xff]
        %v1740 = vld [vmem:[%s174 + $0x190] sm:$0xff]
        %v1741 = vld [vmem:[%s174 + $0x198] sm:$0xff]
        %v1742 = vld [vmem:[%s174 + $0x1a0] sm:$0xff]
        %v1743 = vld [vmem:[%s174 + $0x1a8] sm:$0xff]
        %v1744 = vld [vmem:[%s174 + $0x1b0] sm:$0xff]
        %v1745 = vld [vmem:[%s174 + $0x1b8] sm:$0xff]
        %v1746 = vld [vmem:[%s174 + $0x1c0] sm:$0xff]
        %v1747 = vld [vmem:[%s174 + $0x1c8] sm:$0xff]
        %v1748 = vld [vmem:[%s174 + $0x1d0] sm:$0xff]
        %v1749 = vld [vmem:[%s174 + $0x1d8] sm:$0xff]
        %v1750 = vld [vmem:[%s174 + $0x1e0] sm:$0xff]
        %v1751 = vld [vmem:[%s174 + $0x1e8] sm:$0xff]
        %v1752 = vld [vmem:[%s174 + $0x1f0] sm:$0xff]
        %v1753 = vld [vmem:[%s174 + $0x1f8] sm:$0xff]
        %v1754 = vld [vmem:[%s174 + $0x200] sm:$0xff]
        %v1755 = vld [vmem:[%s174 + $0x208] sm:$0xff]
        %v1756 = vld [vmem:[%s174 + $0x210] sm:$0xff]
        %v1757 = vld [vmem:[%s174 + $0x218] sm:$0xff]
        %v1758 = vld [vmem:[%s174 + $0x220] sm:$0xff]
        %v1759 = vld [vmem:[%s174 + $0x228] sm:$0xff]
        %v1760 = vld [vmem:[%s174 + $0x230] sm:$0xff]
        %v1761 = vld [vmem:[%s174 + $0x238] sm:$0xff]
        %v1762 = vld [vmem:[%s174 + $0x240] sm:$0xff]
        %v1763 = vld [vmem:[%s174 + $0x248] sm:$0xff]
        %v1764 = vld [vmem:[%s174 + $0x250] sm:$0xff]
        %v1765 = vld [vmem:[%s174 + $0x258] sm:$0xff]
        %v1766 = vld [vmem:[%s174 + $0x260] sm:$0xff]
        %v1767 = vld [vmem:[%s174 + $0x268] sm:$0xff]
        %v1768 = vld [vmem:[%s174 + $0x270] sm:$0xff]
        %v1769 = vld [vmem:[%s174 + $0x278] sm:$0xff]
        %v1770 = vld [vmem:[%s174 + $0x280] sm:$0xff]
        %v1771 = vld [vmem:[%s174 + $0x288] sm:$0xff]
        %v1772 = vld [vmem:[%s174 + $0x290] sm:$0xff]
        %v1773 = vld [vmem:[%s174 + $0x298] sm:$0xff]
        %v1774 = vld [vmem:[%s174 + $0x2a0] sm:$0xff]
        %v1775 = vld [vmem:[%s174 + $0x2a8] sm:$0xff]
        %v1776 = vld [vmem:[%s174 + $0x2b0] sm:$0xff]
        %v1777 = vld [vmem:[%s174 + $0x2b8] sm:$0xff]
        %v1778 = vld [vmem:[%s174 + $0x2c0] sm:$0xff]
        %v1779 = vld [vmem:[%s174 + $0x2c8] sm:$0xff]
        %v1780 = vld [vmem:[%s174 + $0x2d0] sm:$0xff]
        %v1781 = vld [vmem:[%s174 + $0x2d8] sm:$0xff]
        %v1782 = vld [vmem:[%s174 + $0x2e0] sm:$0xff]
        %v1783 = vld [vmem:[%s174 + $0x2e8] sm:$0xff]
        %v1784 = vld [vmem:[%s174 + $0x2f0] sm:$0xff]
        %v1785 = vld [vmem:[%s174 + $0x2f8] sm:$0xff]
        %v1786 = vld [vmem:[%s174 + $0x300] sm:$0xff]
        %v1787 = vld [vmem:[%s174 + $0x308] sm:$0xff]
        %v1788 = vld [vmem:[%s174 + $0x310] sm:$0xff]
        %v1789 = vld [vmem:[%s174 + $0x318] sm:$0xff]
        %v1790 = vld [vmem:[%s174 + $0x320] sm:$0xff]
        %v1791 = vld [vmem:[%s174 + $0x328] sm:$0xff]
        %v1792 = vld [vmem:[%s174 + $0x330] sm:$0xff]
        %v1793 = vld [vmem:[%s174 + $0x338] sm:$0xff]
        %v1794 = vld [vmem:[%s174 + $0x340] sm:$0xff]
        %v1795 = vld [vmem:[%s174 + $0x348] sm:$0xff]
        %v1796 = vld [vmem:[%s174 + $0x350] sm:$0xff]
        %v1797 = vld [vmem:[%s174 + $0x358] sm:$0xff]
        %v1798 = vld [vmem:[%s174 + $0x360] sm:$0xff]
        %v1799 = vld [vmem:[%s174 + $0x368] sm:$0xff]
        %v1800 = vld [vmem:[%s174 + $0x370] sm:$0xff]
        %v1801 = vld [vmem:[%s174 + $0x378] sm:$0xff]
        %v1802 = vld [vmem:[%s174 + $0x380] sm:$0xff]
        %v1803 = vld [vmem:[%s174 + $0x388] sm:$0xff]
        %v1804 = vld [vmem:[%s174 + $0x390] sm:$0xff]
        %v1805 = vld [vmem:[%s174 + $0x398] sm:$0xff]
        %v1806 = vld [vmem:[%s174 + $0x3a0] sm:$0xff]
        %v1807 = vld [vmem:[%s174 + $0x3a8] sm:$0xff]
        %v1808 = vld [vmem:[%s174 + $0x3b0] sm:$0xff]
        %v1809 = vld [vmem:[%s174 + $0x3b8] sm:$0xff]
        %v1810 = vld [vmem:[%s174 + $0x3c0] sm:$0xff]
        %v1811 = vld [vmem:[%s174 + $0x3c8] sm:$0xff]
        %v1812 = vld [vmem:[%s174 + $0x3d0] sm:$0xff]
        %v1813 = vld [vmem:[%s174 + $0x3d8] sm:$0xff]
        %v1814 = vld [vmem:[%s174 + $0x3e0] sm:$0xff]
        %v1815 = vld [vmem:[%s174 + $0x3e8] sm:$0xff]
        %v1816 = vld [vmem:[%s174 + $0x3f0] sm:$0xff]
        %v1817 = vld [vmem:[%s174 + $0x3f8] sm:$0xff]
        %v1818 = vld [vmem:[%s174 + $0x400] sm:$0xff]
        %v1819 = vld [vmem:[%s174 + $0x408] sm:$0xff]
        %v1820 = vld [vmem:[%s174 + $0x410] sm:$0xff]
        %v1821 = vld [vmem:[%s174 + $0x418] sm:$0xff]
        %v1822 = vld [vmem:[%s174 + $0x420] sm:$0xff]
        %v1823 = vld [vmem:[%s174 + $0x428] sm:$0xff]
        %v1824 = vld [vmem:[%s174 + $0x430] sm:$0xff]
        %v1825 = vld [vmem:[%s174 + $0x438] sm:$0xff]
        %v1826 = vld [vmem:[%s174 + $0x440] sm:$0xff]
        %v1827 = vld [vmem:[%s174 + $0x448] sm:$0xff]
        %v1828 = vld [vmem:[%s174 + $0x450] sm:$0xff]
        %v1829 = vld [vmem:[%s174 + $0x458] sm:$0xff]
        %v1830 = vld [vmem:[%s174 + $0x460] sm:$0xff]
        %v1831 = vld [vmem:[%s174 + $0x468] sm:$0xff]
        %v1832 = vld [vmem:[%s174 + $0x470] sm:$0xff]
        %v1833 = vld [vmem:[%s174 + $0x478] sm:$0xff]
        %v1834 = vld [vmem:[%s174 + $0x480] sm:$0xff]
        %v1835 = vld [vmem:[%s174 + $0x488] sm:$0xff]
        %v1836 = vld [vmem:[%s174 + $0x490] sm:$0xff]
        %v1837 = vld [vmem:[%s174 + $0x498] sm:$0xff]
        %v1838 = vld [vmem:[%s174 + $0x4a0] sm:$0xff]
        %v1839 = vld [vmem:[%s174 + $0x4a8] sm:$0xff]
        %v1840 = vld [vmem:[%s174 + $0x4b0] sm:$0xff]
        %v1841 = vld [vmem:[%s174 + $0x4b8] sm:$0xff]
        %v1842 = vld [vmem:[%s174 + $0x4c0] sm:$0xff]
        %v1843 = vld [vmem:[%s174 + $0x4c8] sm:$0xff]
        %v1844 = vld [vmem:[%s174 + $0x4d0] sm:$0xff]
        %v1845 = vld [vmem:[%s174 + $0x4d8] sm:$0xff]
        %v1846 = vld [vmem:[%s174 + $0x4e0] sm:$0xff]
        %v1847 = vld [vmem:[%s174 + $0x4e8] sm:$0xff]
        %v1848 = vld [vmem:[%s174 + $0x4f0] sm:$0xff]
        %v1849 = vld [vmem:[%s174 + $0x4f8] sm:$0xff]
        %v1850 = vld [vmem:[%s174 + $0x500] sm:$0xff]
        %v1851 = vld [vmem:[%s174 + $0x508] sm:$0xff]
        %v1852 = vld [vmem:[%s174 + $0x510] sm:$0xff]
        %v1853 = vld [vmem:[%s174 + $0x518] sm:$0xff]
        %v1854 = vld [vmem:[%s174 + $0x520] sm:$0xff]
        %v1855 = vld [vmem:[%s174 + $0x528] sm:$0xff]
        %v1856 = vld [vmem:[%s174 + $0x530] sm:$0xff]
        %v1857 = vld [vmem:[%s174 + $0x538] sm:$0xff]
        %v1858 = vld [vmem:[%s174 + $0x540] sm:$0xff]
        %v1859 = vld [vmem:[%s174 + $0x548] sm:$0xff]
        %v1860 = vld [vmem:[%s174 + $0x550] sm:$0xff]
        %v1861 = vld [vmem:[%s174 + $0x558] sm:$0xff]
        %v1862 = vld [vmem:[%s174 + $0x560] sm:$0xff]
        %v1863 = vld [vmem:[%s174 + $0x568] sm:$0xff]
        %v1864 = vld [vmem:[%s174 + $0x570] sm:$0xff]
        %v1865 = vld [vmem:[%s174 + $0x578] sm:$0xff]
        %v1866 = vld [vmem:[%s174 + $0x580] sm:$0xff]
        %v1867 = vld [vmem:[%s174 + $0x588] sm:$0xff]
        %v1868 = vld [vmem:[%s174 + $0x590] sm:$0xff]
        %v1869 = vld [vmem:[%s174 + $0x598] sm:$0xff]
        %v1870 = vld [vmem:[%s174 + $0x5a0] sm:$0xff]
        %v1871 = vld [vmem:[%s174 + $0x5a8] sm:$0xff]
        %v1872 = vld [vmem:[%s174 + $0x5b0] sm:$0xff]
        %v1873 = vld [vmem:[%s174 + $0x5b8] sm:$0xff]
        %v1874 = vld [vmem:[%s174 + $0x5c0] sm:$0xff]
        %v1875 = vld [vmem:[%s174 + $0x5c8] sm:$0xff]
        %v1876 = vld [vmem:[%s174 + $0x5d0] sm:$0xff]
        %v1877 = vld [vmem:[%s174 + $0x5d8] sm:$0xff]
        %v1878 = vld [vmem:[%s174 + $0x5e0] sm:$0xff]
        %v1879 = vld [vmem:[%s174 + $0x5e8] sm:$0xff]
        %v1880 = vld [vmem:[%s174 + $0x5f0] sm:$0xff]
        %v1881 = vld [vmem:[%s174 + $0x5f8] sm:$0xff]
        %v1882 = vld [vmem:[%s174 + $0x600] sm:$0xff]
        %v1883 = vld [vmem:[%s174 + $0x608] sm:$0xff]
        %v1884 = vld [vmem:[%s174 + $0x610] sm:$0xff]
        %v1885 = vld [vmem:[%s174 + $0x618] sm:$0xf]
        %v1886 = vld [vmem:[%s174 + $0x61c] sm:$0x11]
        %v1887 = vld [vmem:[%s174 + $0x624] sm:$0x11]
        %v1888 = vld [vmem:[%s174 + $0x62c] sm:$0x11]
        %v1889 = vld [vmem:[%s174 + $0x634] sm:$0x11]
        %v1890 = vld [vmem:[%s174 + $0x63c] sm:$0x11]
        %v1891 = vld [vmem:[%s174 + $0x644] sm:$0x11]
        %v1892 = vld [vmem:[%s174 + $0x64c] sm:$0x11]
        %v1893 = vld [vmem:[%s174 + $0x654] sm:$0x11]
        %v1894 = vld [vmem:[%s174 + $0x65c] sm:$0x11]
        %v1895 = vld [vmem:[%s174 + $0x664] sm:$0x11]
        %v1896 = vld [vmem:[%s174 + $0x66c] sm:$0x11]
        %v1897 = vld [vmem:[%s174 + $0x674] sm:$0x11]
        %v1898 = vld [vmem:[%s174 + $0x67c] sm:$0x11]
        %v1899 = vld [vmem:[%s174 + $0x684] sm:$0x11]
        %v1900 = vld [vmem:[%s174 + $0x68c] sm:$0x11]
        %v1901 = vld [vmem:[%s174 + $0x694] sm:$0x11]
        %v1902 = vld [vmem:[%s174 + $0x69c] sm:$0x11]
        %v1903 = vld [vmem:[%s174 + $0x6a4] sm:$0x11]
        %v1904 = vld [vmem:[%s174 + $0x6ac] sm:$0x11]
        %v1905 = vld [vmem:[%s174 + $0x6b4] sm:$0x11]
        %v1906 = vld [vmem:[%s174 + $0x6bc] sm:$0x11]
        %v1907 = vld [vmem:[%s174 + $0x6c4] sm:$0x11]
        %v1908 = vld [vmem:[%s174 + $0x6cc] sm:$0x11]
        %v1909 = vld [vmem:[%s174 + $0x6d4] sm:$0x11]
        %v1910 = vld [vmem:[%s174 + $0x6dc] sm:$0x11]
        %v1911 = vld [vmem:[%s174 + $0x6e4] sm:$0x11]
        %v1912 = vld [vmem:[%s174 + $0x6ec] sm:$0x11]
        %v1913 = vld [vmem:[%s174 + $0x6f4] sm:$0x11]
        %v1914 = vld [vmem:[%s174 + $0x6fc] sm:$0x11]
        %v1915 = vld [vmem:[%s174 + $0x704] sm:$0x11]
        %v1916 = vld [vmem:[%s174 + $0x70c] sm:$0x11]
        %v1917 = vld [vmem:[%s174 + $0x714] sm:$0x11]
        %v1918 = vld [vmem:[%s174 + $0x71c] sm:$0x11]
        %v1919 = vld [vmem:[%s174 + $0x724] sm:$0x11]
        %v1920 = vld [vmem:[%s174 + $0x72c] sm:$0x11]
        %v1921 = vld [vmem:[%s174 + $0x734] sm:$0x11]
        %v1922 = vld [vmem:[%s174 + $0x73c] sm:$0x11]
        %v1923 = vld [vmem:[%s174 + $0x744] sm:$0x11]
        %v1924 = vld [vmem:[%s174 + $0x74c] sm:$0x11]
        %v1925 = vld [vmem:[%s174 + $0x754] sm:$0x11]
        %v1926 = vld [vmem:[%s174 + $0x75c] sm:$0x11]
        %v1927 = vld [vmem:[%s174 + $0x764] sm:$0x11]
        %v1928 = vld [vmem:[%s174 + $0x76c] sm:$0x11]
        %v1929 = vld [vmem:[%s174 + $0x774] sm:$0x11]
        %v1930 = vld [vmem:[%s174 + $0x77c] sm:$0x11]
        %v1931 = vld [vmem:[%s174 + $0x784] sm:$0x11]
        %v1932 = vld [vmem:[%s174 + $0x78c] sm:$0x11]
        %v1933 = vld [vmem:[%s174 + $0x794] sm:$0x11]
        %v1934 = vld [vmem:[%s174 + $0x79c] sm:$0x11]
        %v1935 = vld [vmem:[%s174 + $0x7a4] sm:$0x11]
        %v1936 = vld [vmem:[%s174 + $0x7ac] sm:$0x11]
        %v1937 = vld [vmem:[%s174 + $0x7b4] sm:$0x11]
        %v1938 = vld [vmem:[%s174 + $0x7bc] sm:$0x11]
        %v1939 = vld [vmem:[%s174 + $0x7c4] sm:$0x11]
        %v1940 = vld [vmem:[%s174 + $0x7cc] sm:$0x11]
        %v1941 = vld [vmem:[%s174 + $0x7d4] sm:$0x11]
        %v1942 = vld [vmem:[%s174 + $0x7dc] sm:$0x11]
        %v1943 = vld [vmem:[%s174 + $0x7e4] sm:$0x11]
        %v1944 = vld [vmem:[%s174 + $0x7ec] sm:$0x11]
        %v1945 = vld [vmem:[%s174 + $0x7f4] sm:$0x11]
        %v1946 = vld [vmem:[%s174 + $0x7fc] sm:$0x11]
        %v1947 = vld [vmem:[%s174 + $0x804] sm:$0x11]
        %v1948 = vld [vmem:[%s174 + $0x80c] sm:$0x11]
        %v1949 = vld [vmem:[%s174 + $0x814] sm:$0x11]
        %v1950 = vld [vmem:[%s174 + $0x81c] sm:$0x11]
        %v1951 = vld [vmem:[%s174 + $0x824] sm:$0x11]
        %v1952 = vld [vmem:[%s174 + $0x82c] sm:$0x11]
        %v1953 = vld [vmem:[%s174 + $0x834] sm:$0x11]
        %v1954 = vld [vmem:[%s174 + $0x83c] sm:$0x11]
        %v1955 = vld [vmem:[%s174 + $0x844] sm:$0x11]
        %v1956 = vld [vmem:[%s174 + $0x84c] sm:$0x11]
        %v1957 = vld [vmem:[%s174 + $0x854] sm:$0x11]
        %v1958 = vld [vmem:[%s174 + $0x85c] sm:$0x11]
        %v1959 = vld [vmem:[%s174 + $0x864] sm:$0x11]
        %v1960 = vld [vmem:[%s174 + $0x86c] sm:$0x11]
        %v1961 = vld [vmem:[%s174 + $0x874] sm:$0x11]
        %v1962 = vld [vmem:[%s174 + $0x87c] sm:$0x11]
        %v1963 = vld [vmem:[%s174 + $0x884] sm:$0x11]
        %v1964 = vld [vmem:[%s174 + $0x88c] sm:$0x11]
        %v1965 = vld [vmem:[%s174 + $0x894] sm:$0x11]
        %v1966 = vld [vmem:[%s174 + $0x89c] sm:$0x11]
        %v1967 = vld [vmem:[%s174 + $0x8a4] sm:$0x11]
        %v1968 = vld [vmem:[%s174 + $0x8ac] sm:$0x11]
        %v1969 = vld [vmem:[%s174 + $0x8b4] sm:$0x11]
        %v1970 = vld [vmem:[%s174 + $0x8bc] sm:$0x11]
        %v1971 = vld [vmem:[%s174 + $0x8c4] sm:$0x11]
        %v1972 = vld [vmem:[%s174 + $0x8cc] sm:$0x11]
        %v1973 = vld [vmem:[%s174 + $0x8d4] sm:$0x11]
        %v1974 = vld [vmem:[%s174 + $0x8dc] sm:$0x11]
        %v1975 = vld [vmem:[%s174 + $0x8e4] sm:$0x11]
        %v1976 = vld [vmem:[%s174 + $0x8ec] sm:$0x11]
        %v1977 = vld [vmem:[%s174 + $0x8f4] sm:$0x11]
        %v1978 = vld [vmem:[%s174 + $0x8fc] sm:$0x11]
        %v1979 = vld [vmem:[%s174 + $0x904] sm:$0x11]
        %v1980 = vld [vmem:[%s174 + $0x90c] sm:$0x11]
        %v1981 = vld [vmem:[%s174 + $0x914] sm:$0x11]
        %v1982 = vld [vmem:[%s174 + $0x91c] sm:$0x11]
        %v1983 = vld [vmem:[%s174 + $0x924] sm:$0x11]
        %v1984 = vld [vmem:[%s174 + $0x92c] sm:$0x11]
        %v1985 = vld [vmem:[%s174 + $0x934] sm:$0x11]
        %v1986 = vld [vmem:[%s174 + $0x93c] sm:$0x11]
        %v1987 = vld [vmem:[%s174 + $0x944] sm:$0x11]
        %v1988 = vld [vmem:[%s174 + $0x94c] sm:$0x11]
        %v1989 = vld [vmem:[%s174 + $0x954] sm:$0x11]
        %v1990 = vld [vmem:[%s174 + $0x95c] sm:$0x11]
        %v1991 = vld [vmem:[%s174 + $0x964] sm:$0x11]
        %v1992 = vld [vmem:[%s174 + $0x96c] sm:$0x11]
        %v1993 = vld [vmem:[%s174 + $0x974] sm:$0x11]
        %v1994 = vld [vmem:[%s174 + $0x97c] sm:$0x11]
        %v1995 = vld [vmem:[%s174 + $0x984] sm:$0x11]
        %v1996 = vld [vmem:[%s174 + $0x98c] sm:$0x11]
        %v1997 = vld [vmem:[%s174 + $0x994] sm:$0x11]
        %v1998 = vld [vmem:[%s174 + $0x99c] sm:$0x11]
        %v1999 = vld [vmem:[%s174 + $0x9a4] sm:$0x11]
        %v2000 = vld [vmem:[%s174 + $0x9ac] sm:$0x11]
        %v2001 = vld [vmem:[%s174 + $0x9b4] sm:$0x11]
        %v2002 = vld [vmem:[%s174 + $0x9bc] sm:$0x11]
        %v2003 = vld [vmem:[%s174 + $0x9c4] sm:$0x11]
        %v2004 = vld [vmem:[%s174 + $0x9cc] sm:$0x11]
        %v2005 = vld [vmem:[%s174 + $0x9d4] sm:$0x11]
        %v2006 = vld [vmem:[%s174 + $0x9dc] sm:$0x11]
        %v2007 = vld [vmem:[%s174 + $0x9e4] sm:$0x11]
        %v2008 = vld [vmem:[%s174 + $0x9ec] sm:$0x11]
        %v2009 = vld [vmem:[%s174 + $0x9f4] sm:$0x11]
        %v2010 = vld [vmem:[%s174 + $0x9fc] sm:$0x11]
        %v2011 = vld [vmem:[%s174 + $0xa04] sm:$0x11]
        %v2012 = vld [vmem:[%s174 + $0xa0c] sm:$0x11]
        %v2013 = vld [vmem:[%s174 + $0xa14] sm:$0x11]
        %v2014 = vld [vmem:[%s174 + $0xa1c] sm:$0x11]
        %v2015 = vld [vmem:[%s174 + $0xa24] sm:$0x11]
        %v2016 = vld [vmem:[%s174 + $0xa2c] sm:$0x11]
        %v2017 = vld [vmem:[%s174 + $0xa34] sm:$0x11]
        %v2018 = vld [vmem:[%s174 + $0xa3c] sm:$0x11]
        %v2019 = vld [vmem:[%s174 + $0xa44] sm:$0x11]
        %v2020 = vld [vmem:[%s174 + $0xa4c] sm:$0x11]
        %v2021 = vld [vmem:[%s174 + $0xa54] sm:$0x11]
        %v2022 = vld [vmem:[%s174 + $0xa5c] sm:$0x11]
        %v2023 = vld [vmem:[%s174 + $0xa64] sm:$0x11]
        %v2024 = vld [vmem:[%s174 + $0xa6c] sm:$0x11]
        %v2025 = vld [vmem:[%s174 + $0xa74] sm:$0x11]
        %v2026 = vld [vmem:[%s174 + $0xa7c] sm:$0x11]
        %v2027 = vld [vmem:[%s174 + $0xa84] sm:$0x11]
        %v2028 = vld [vmem:[%s174 + $0xa8c] sm:$0x11]
        %v2029 = vld [vmem:[%s174 + $0xa94] sm:$0x11]
        %v2030 = vld [vmem:[%s174 + $0xa9c] sm:$0x11]
        %v2031 = vld [vmem:[%s174 + $0xaa4] sm:$0x11]
        %v2032 = vld [vmem:[%s174 + $0xaac] sm:$0x11]
        %v2033 = vld [vmem:[%s174 + $0xab4] sm:$0x11]
        %v2034 = vld [vmem:[%s174 + $0xabc] sm:$0x11]
        %v2035 = vld [vmem:[%s174 + $0xac4] sm:$0x11]
        %v2036 = vld [vmem:[%s174 + $0xacc] sm:$0x11]
        %v2037 = vld [vmem:[%s174 + $0xad4] sm:$0x11]
        %v2038 = vld [vmem:[%s174 + $0xadc] sm:$0x11]
        %v2039 = vld [vmem:[%s174 + $0xae4] sm:$0x11]
        %v2040 = vld [vmem:[%s174 + $0xaec] sm:$0x11]
        %v2041 = vld [vmem:[%s174 + $0xaf4] sm:$0x11]
        %v2042 = vld [vmem:[%s174 + $0xafc] sm:$0x11]
        %v2043 = vld [vmem:[%s174 + $0xb04] sm:$0x11]
        %v2044 = vld [vmem:[%s174 + $0xb0c] sm:$0x11]
        %v2045 = vld [vmem:[%s174 + $0xb14] sm:$0x11]
        %v2046 = vld [vmem:[%s174 + $0xb1c] sm:$0x11]
        %v2047 = vld [vmem:[%s174 + $0xb24] sm:$0x11]
        %v2048 = vld [vmem:[%s174 + $0xb2c] sm:$0x11]
        %v2049 = vld [vmem:[%s174 + $0xb34] sm:$0x11]
        %v2050 = vld [vmem:[%s174 + $0xb3c] sm:$0x11]
        %v2051 = vld [vmem:[%s174 + $0xb44] sm:$0x11]
        %v2052 = vld [vmem:[%s174 + $0xb4c] sm:$0x11]
        %v2053 = vld [vmem:[%s174 + $0xb54] sm:$0x11]
        %v2054 = vld [vmem:[%s174 + $0xb5c] sm:$0x11]
        %v2055 = vld [vmem:[%s174 + $0xb64] sm:$0x11]
        %v2056 = vld [vmem:[%s174 + $0xb6c] sm:$0x11]
        %v2057 = vld [vmem:[%s174 + $0xb74] sm:$0x11]
        %v2058 = vld [vmem:[%s174 + $0xb7c] sm:$0x11]
        %v2059 = vld [vmem:[%s174 + $0xb84] sm:$0x11]
        %v2060 = vld [vmem:[%s174 + $0xb8c] sm:$0x11]
        %v2061 = vld [vmem:[%s174 + $0xb94] sm:$0x11]
        %v2062 = vld [vmem:[%s174 + $0xb9c] sm:$0x11]
        %v2063 = vld [vmem:[%s174 + $0xba4] sm:$0x11]
        %v2064 = vld [vmem:[%s174 + $0xbac] sm:$0x11]
        %v2065 = vld [vmem:[%s174 + $0xbb4] sm:$0x11]
        %v2066 = vld [vmem:[%s174 + $0xbbc] sm:$0x11]
        %v2067 = vld [vmem:[%s174 + $0xbc4] sm:$0x11]
        %v2068 = vld [vmem:[%s174 + $0xbcc] sm:$0x11]
        %v2069 = vld [vmem:[%s174 + $0xbd4] sm:$0x11]
        %v2070 = vld [vmem:[%s174 + $0xbdc] sm:$0x11]
        %v2071 = vld [vmem:[%s174 + $0xbe4] sm:$0x11]
        %v2072 = vld [vmem:[%s174 + $0xbec] sm:$0x11]
        %v2073 = vld [vmem:[%s174 + $0xbf4] sm:$0x11]
        %v2074 = vld [vmem:[%s174 + $0xbfc] sm:$0x11]
        %v2075 = vld [vmem:[%s174 + $0xc04] sm:$0x11]
        %v2076 = vld [vmem:[%s174 + $0xc0c] sm:$0x11]
        %v2077 = vld [vmem:[%s174 + $0xc14] sm:$0x11]
        %v2078 = vld [vmem:[%s174 + $0xc1c] sm:$0x11]
        %v2079 = vld [vmem:[%s174 + $0xc24] sm:$0x11]
        %v2080 = vld [vmem:[%s174 + $0xc2c] sm:$0x11]
        %v2081 = vld [vmem:[%s174 + $0xc34] sm:$0x1]
        %v2474 = vunpack.c.l.b16 %v1690
        %v2475 = vunpack.c.h.b16 %v1690
        %v2476 = vunpack.c.l.b16 %v1691
        %v2477 = vunpack.c.h.b16 %v1691
        %v2478 = vunpack.c.l.b16 %v1692
        %v2479 = vunpack.c.h.b16 %v1692
        %v2480 = vunpack.c.l.b16 %v1693
        %v2481 = vunpack.c.h.b16 %v1693
        %v2482 = vunpack.c.l.b16 %v1694
        %v2483 = vunpack.c.h.b16 %v1694
        %v2484 = vunpack.c.l.b16 %v1695
        %v2485 = vunpack.c.h.b16 %v1695
        %v2486 = vunpack.c.l.b16 %v1696
        %v2487 = vunpack.c.h.b16 %v1696
        %v2488 = vunpack.c.l.b16 %v1697
        %v2489 = vunpack.c.h.b16 %v1697
        %v2490 = vunpack.c.l.b16 %v1698
        %v2491 = vunpack.c.h.b16 %v1698
        %v2492 = vunpack.c.l.b16 %v1699
        %v2493 = vunpack.c.h.b16 %v1699
        %v2494 = vunpack.c.l.b16 %v1700
        %v2495 = vunpack.c.h.b16 %v1700
        %v2496 = vunpack.c.l.b16 %v1701
        %v2497 = vunpack.c.h.b16 %v1701
        %v2498 = vunpack.c.l.b16 %v1702
        %v2499 = vunpack.c.h.b16 %v1702
        %v2500 = vunpack.c.l.b16 %v1703
        %v2501 = vunpack.c.h.b16 %v1703
        %v2502 = vunpack.c.l.b16 %v1704
        %v2503 = vunpack.c.h.b16 %v1704
        %v2504 = vunpack.c.l.b16 %v1705
        %v2505 = vunpack.c.h.b16 %v1705
        %v2506 = vunpack.c.l.b16 %v1706
        %v2507 = vunpack.c.h.b16 %v1706
        %v2508 = vunpack.c.l.b16 %v1707
        %v2509 = vunpack.c.h.b16 %v1707
        %v2510 = vunpack.c.l.b16 %v1708
        %v2511 = vunpack.c.h.b16 %v1708
        %v2512 = vunpack.c.l.b16 %v1709
        %v2513 = vunpack.c.h.b16 %v1709
        %v2514 = vunpack.c.l.b16 %v1710
        %v2515 = vunpack.c.h.b16 %v1710
        %v2516 = vunpack.c.l.b16 %v1711
        %v2517 = vunpack.c.h.b16 %v1711
        %v2518 = vunpack.c.l.b16 %v1712
        %v2519 = vunpack.c.h.b16 %v1712
        %v2520 = vunpack.c.l.b16 %v1713
        %v2521 = vunpack.c.h.b16 %v1713
        %v2522 = vunpack.c.l.b16 %v1714
        %v2523 = vunpack.c.h.b16 %v1714
        %v2524 = vunpack.c.l.b16 %v1715
        %v2525 = vunpack.c.h.b16 %v1715
        %v2526 = vunpack.c.l.b16 %v1716
        %v2527 = vunpack.c.h.b16 %v1716
        %v2528 = vunpack.c.l.b16 %v1717
        %v2529 = vunpack.c.h.b16 %v1717
        %v2530 = vunpack.c.l.b16 %v1718
        %v2531 = vunpack.c.h.b16 %v1718
        %v2532 = vunpack.c.l.b16 %v1719
        %v2533 = vunpack.c.h.b16 %v1719
        %v2534 = vunpack.c.l.b16 %v1720
        %v2535 = vunpack.c.h.b16 %v1720
        %v2536 = vunpack.c.l.b16 %v1721
        %v2537 = vunpack.c.h.b16 %v1721
        %v2538 = vunpack.c.l.b16 %v1722
        %v2539 = vunpack.c.h.b16 %v1722
        %v2540 = vunpack.c.l.b16 %v1723
        %v2541 = vunpack.c.h.b16 %v1723
        %v2542 = vunpack.c.l.b16 %v1724
        %v2543 = vunpack.c.h.b16 %v1724
        %v2544 = vunpack.c.l.b16 %v1725
        %v2545 = vunpack.c.h.b16 %v1725
        %v2546 = vunpack.c.l.b16 %v1726
        %v2547 = vunpack.c.h.b16 %v1726
        %v2548 = vunpack.c.l.b16 %v1727
        %v2549 = vunpack.c.h.b16 %v1727
        %v2550 = vunpack.c.l.b16 %v1728
        %v2551 = vunpack.c.h.b16 %v1728
        %v2552 = vunpack.c.l.b16 %v1729
        %v2553 = vunpack.c.h.b16 %v1729
        %v2554 = vunpack.c.l.b16 %v1730
        %v2555 = vunpack.c.h.b16 %v1730
        %v2556 = vunpack.c.l.b16 %v1731
        %v2557 = vunpack.c.h.b16 %v1731
        %v2558 = vunpack.c.l.b16 %v1732
        %v2559 = vunpack.c.h.b16 %v1732
        %v2560 = vunpack.c.l.b16 %v1733
        %v2561 = vunpack.c.h.b16 %v1733
        %v2562 = vunpack.c.l.b16 %v1734
        %v2563 = vunpack.c.h.b16 %v1734
        %v2564 = vunpack.c.l.b16 %v1735
        %v2565 = vunpack.c.h.b16 %v1735
        %v2566 = vunpack.c.l.b16 %v1736
        %v2567 = vunpack.c.h.b16 %v1736
        %v2568 = vunpack.c.l.b16 %v1737
        %v2569 = vunpack.c.h.b16 %v1737
        %v2570 = vunpack.c.l.b16 %v1738
        %v2571 = vunpack.c.h.b16 %v1738
        %v2572 = vunpack.c.l.b16 %v1739
        %v2573 = vunpack.c.h.b16 %v1739
        %v2574 = vunpack.c.l.b16 %v1740
        %v2575 = vunpack.c.h.b16 %v1740
        %v2576 = vunpack.c.l.b16 %v1741
        %v2577 = vunpack.c.h.b16 %v1741
        %v2578 = vunpack.c.l.b16 %v1742
        %v2579 = vunpack.c.h.b16 %v1742
        %v2580 = vunpack.c.l.b16 %v1743
        %v2581 = vunpack.c.h.b16 %v1743
        %v2582 = vunpack.c.l.b16 %v1744
        %v2583 = vunpack.c.h.b16 %v1744
        %v2584 = vunpack.c.l.b16 %v1745
        %v2585 = vunpack.c.h.b16 %v1745
        %v2586 = vunpack.c.l.b16 %v1746
        %v2587 = vunpack.c.h.b16 %v1746
        %v2588 = vunpack.c.l.b16 %v1747
        %v2589 = vunpack.c.h.b16 %v1747
        %v2590 = vunpack.c.l.b16 %v1748
        %v2591 = vunpack.c.h.b16 %v1748
        %v2592 = vunpack.c.l.b16 %v1749
        %v2593 = vunpack.c.h.b16 %v1749
        %v2594 = vunpack.c.l.b16 %v1750
        %v2595 = vunpack.c.h.b16 %v1750
        %v2596 = vunpack.c.l.b16 %v1751
        %v2597 = vunpack.c.h.b16 %v1751
        %v2598 = vunpack.c.l.b16 %v1752
        %v2599 = vunpack.c.h.b16 %v1752
        %v2600 = vunpack.c.l.b16 %v1753
        %v2601 = vunpack.c.h.b16 %v1753
        %v2602 = vunpack.c.l.b16 %v1754
        %v2603 = vunpack.c.h.b16 %v1754
        %v2604 = vunpack.c.l.b16 %v1755
        %v2605 = vunpack.c.h.b16 %v1755
        %v2606 = vunpack.c.l.b16 %v1756
        %v2607 = vunpack.c.h.b16 %v1756
        %v2608 = vunpack.c.l.b16 %v1757
        %v2609 = vunpack.c.h.b16 %v1757
        %v2610 = vunpack.c.l.b16 %v1758
        %v2611 = vunpack.c.h.b16 %v1758
        %v2612 = vunpack.c.l.b16 %v1759
        %v2613 = vunpack.c.h.b16 %v1759
        %v2614 = vunpack.c.l.b16 %v1760
        %v2615 = vunpack.c.h.b16 %v1760
        %v2616 = vunpack.c.l.b16 %v1761
        %v2617 = vunpack.c.h.b16 %v1761
        %v2618 = vunpack.c.l.b16 %v1762
        %v2619 = vunpack.c.h.b16 %v1762
        %v2620 = vunpack.c.l.b16 %v1763
        %v2621 = vunpack.c.h.b16 %v1763
        %v2622 = vunpack.c.l.b16 %v1764
        %v2623 = vunpack.c.h.b16 %v1764
        %v2624 = vunpack.c.l.b16 %v1765
        %v2625 = vunpack.c.h.b16 %v1765
        %v2626 = vunpack.c.l.b16 %v1766
        %v2627 = vunpack.c.h.b16 %v1766
        %v2628 = vunpack.c.l.b16 %v1767
        %v2629 = vunpack.c.h.b16 %v1767
        %v2630 = vunpack.c.l.b16 %v1768
        %v2631 = vunpack.c.h.b16 %v1768
        %v2632 = vunpack.c.l.b16 %v1769
        %v2633 = vunpack.c.h.b16 %v1769
        %v2634 = vunpack.c.l.b16 %v1770
        %v2635 = vunpack.c.h.b16 %v1770
        %v2636 = vunpack.c.l.b16 %v1771
        %v2637 = vunpack.c.h.b16 %v1771
        %v2638 = vunpack.c.l.b16 %v1772
        %v2639 = vunpack.c.h.b16 %v1772
        %v2640 = vunpack.c.l.b16 %v1773
        %v2641 = vunpack.c.h.b16 %v1773
        %v2642 = vunpack.c.l.b16 %v1774
        %v2643 = vunpack.c.h.b16 %v1774
        %v2644 = vunpack.c.l.b16 %v1775
        %v2645 = vunpack.c.h.b16 %v1775
        %v2646 = vunpack.c.l.b16 %v1776
        %v2647 = vunpack.c.h.b16 %v1776
        %v2648 = vunpack.c.l.b16 %v1777
        %v2649 = vunpack.c.h.b16 %v1777
        %v2650 = vunpack.c.l.b16 %v1778
        %v2651 = vunpack.c.h.b16 %v1778
        %v2652 = vunpack.c.l.b16 %v1779
        %v2653 = vunpack.c.h.b16 %v1779
        %v2654 = vunpack.c.l.b16 %v1780
        %v2655 = vunpack.c.h.b16 %v1780
        %v2656 = vunpack.c.l.b16 %v1781
        %v2657 = vunpack.c.h.b16 %v1781
        %v2658 = vunpack.c.l.b16 %v1782
        %v2659 = vunpack.c.h.b16 %v1782
        %v2660 = vunpack.c.l.b16 %v1783
        %v2661 = vunpack.c.h.b16 %v1783
        %v2662 = vunpack.c.l.b16 %v1784
        %v2663 = vunpack.c.h.b16 %v1784
        %v2664 = vunpack.c.l.b16 %v1785
        %v2665 = vunpack.c.h.b16 %v1785
        %v2666 = vunpack.c.l.b16 %v1786
        %v2667 = vunpack.c.h.b16 %v1786
        %v2668 = vunpack.c.l.b16 %v1787
        %v2669 = vunpack.c.h.b16 %v1787
        %v2670 = vunpack.c.l.b16 %v1788
        %v2671 = vunpack.c.h.b16 %v1788
        %v2672 = vunpack.c.l.b16 %v1789
        %v2673 = vunpack.c.h.b16 %v1789
        %v2674 = vunpack.c.l.b16 %v1790
        %v2675 = vunpack.c.h.b16 %v1790
        %v2676 = vunpack.c.l.b16 %v1791
        %v2677 = vunpack.c.h.b16 %v1791
        %v2678 = vunpack.c.l.b16 %v1792
        %v2679 = vunpack.c.h.b16 %v1792
        %v2680 = vunpack.c.l.b16 %v1793
        %v2681 = vunpack.c.h.b16 %v1793
        %v2682 = vunpack.c.l.b16 %v1794
        %v2683 = vunpack.c.h.b16 %v1794
        %v2684 = vunpack.c.l.b16 %v1795
        %v2685 = vunpack.c.h.b16 %v1795
        %v2686 = vunpack.c.l.b16 %v1796
        %v2687 = vunpack.c.h.b16 %v1796
        %v2688 = vunpack.c.l.b16 %v1797
        %v2689 = vunpack.c.h.b16 %v1797
        %v2690 = vunpack.c.l.b16 %v1798
        %v2691 = vunpack.c.h.b16 %v1798
        %v2692 = vunpack.c.l.b16 %v1799
        %v2693 = vunpack.c.h.b16 %v1799
        %v2694 = vunpack.c.l.b16 %v1800
        %v2695 = vunpack.c.h.b16 %v1800
        %v2696 = vunpack.c.l.b16 %v1801
        %v2697 = vunpack.c.h.b16 %v1801
        %v2698 = vunpack.c.l.b16 %v1802
        %v2699 = vunpack.c.h.b16 %v1802
        %v2700 = vunpack.c.l.b16 %v1803
        %v2701 = vunpack.c.h.b16 %v1803
        %v2702 = vunpack.c.l.b16 %v1804
        %v2703 = vunpack.c.h.b16 %v1804
        %v2704 = vunpack.c.l.b16 %v1805
        %v2705 = vunpack.c.h.b16 %v1805
        %v2706 = vunpack.c.l.b16 %v1806
        %v2707 = vunpack.c.h.b16 %v1806
        %v2708 = vunpack.c.l.b16 %v1807
        %v2709 = vunpack.c.h.b16 %v1807
        %v2710 = vunpack.c.l.b16 %v1808
        %v2711 = vunpack.c.h.b16 %v1808
        %v2712 = vunpack.c.l.b16 %v1809
        %v2713 = vunpack.c.h.b16 %v1809
        %v2714 = vunpack.c.l.b16 %v1810
        %v2715 = vunpack.c.h.b16 %v1810
        %v2716 = vunpack.c.l.b16 %v1811
        %v2717 = vunpack.c.h.b16 %v1811
        %v2718 = vunpack.c.l.b16 %v1812
        %v2719 = vunpack.c.h.b16 %v1812
        %v2720 = vunpack.c.l.b16 %v1813
        %v2721 = vunpack.c.h.b16 %v1813
        %v2722 = vunpack.c.l.b16 %v1814
        %v2723 = vunpack.c.h.b16 %v1814
        %v2724 = vunpack.c.l.b16 %v1815
        %v2725 = vunpack.c.h.b16 %v1815
        %v2726 = vunpack.c.l.b16 %v1816
        %v2727 = vunpack.c.h.b16 %v1816
        %v2728 = vunpack.c.l.b16 %v1817
        %v2729 = vunpack.c.h.b16 %v1817
        %v2730 = vunpack.c.l.b16 %v1818
        %v2731 = vunpack.c.h.b16 %v1818
        %v2732 = vunpack.c.l.b16 %v1819
        %v2733 = vunpack.c.h.b16 %v1819
        %v2734 = vunpack.c.l.b16 %v1820
        %v2735 = vunpack.c.h.b16 %v1820
        %v2736 = vunpack.c.l.b16 %v1821
        %v2737 = vunpack.c.h.b16 %v1821
        %v2738 = vunpack.c.l.b16 %v1822
        %v2739 = vunpack.c.h.b16 %v1822
        %v2740 = vunpack.c.l.b16 %v1823
        %v2741 = vunpack.c.h.b16 %v1823
        %v2742 = vunpack.c.l.b16 %v1824
        %v2743 = vunpack.c.h.b16 %v1824
        %v2744 = vunpack.c.l.b16 %v1825
        %v2745 = vunpack.c.h.b16 %v1825
        %v2746 = vunpack.c.l.b16 %v1826
        %v2747 = vunpack.c.h.b16 %v1826
        %v2748 = vunpack.c.l.b16 %v1827
        %v2749 = vunpack.c.h.b16 %v1827
        %v2750 = vunpack.c.l.b16 %v1828
        %v2751 = vunpack.c.h.b16 %v1828
        %v2752 = vunpack.c.l.b16 %v1829
        %v2753 = vunpack.c.h.b16 %v1829
        %v2754 = vunpack.c.l.b16 %v1830
        %v2755 = vunpack.c.h.b16 %v1830
        %v2756 = vunpack.c.l.b16 %v1831
        %v2757 = vunpack.c.h.b16 %v1831
        %v2758 = vunpack.c.l.b16 %v1832
        %v2759 = vunpack.c.h.b16 %v1832
        %v2760 = vunpack.c.l.b16 %v1833
        %v2761 = vunpack.c.h.b16 %v1833
        %v2762 = vunpack.c.l.b16 %v1834
        %v2763 = vunpack.c.h.b16 %v1834
        %v2764 = vunpack.c.l.b16 %v1835
        %v2765 = vunpack.c.h.b16 %v1835
        %v2766 = vunpack.c.l.b16 %v1836
        %v2767 = vunpack.c.h.b16 %v1836
        %v2768 = vunpack.c.l.b16 %v1837
        %v2769 = vunpack.c.h.b16 %v1837
        %v2770 = vunpack.c.l.b16 %v1838
        %v2771 = vunpack.c.h.b16 %v1838
        %v2772 = vunpack.c.l.b16 %v1839
        %v2773 = vunpack.c.h.b16 %v1839
        %v2774 = vunpack.c.l.b16 %v1840
        %v2775 = vunpack.c.h.b16 %v1840
        %v2776 = vunpack.c.l.b16 %v1841
        %v2777 = vunpack.c.h.b16 %v1841
        %v2778 = vunpack.c.l.b16 %v1842
        %v2779 = vunpack.c.h.b16 %v1842
        %v2780 = vunpack.c.l.b16 %v1843
        %v2781 = vunpack.c.h.b16 %v1843
        %v2782 = vunpack.c.l.b16 %v1844
        %v2783 = vunpack.c.h.b16 %v1844
        %v2784 = vunpack.c.l.b16 %v1845
        %v2785 = vunpack.c.h.b16 %v1845
        %v2786 = vunpack.c.l.b16 %v1846
        %v2787 = vunpack.c.h.b16 %v1846
        %v2788 = vunpack.c.l.b16 %v1847
        %v2789 = vunpack.c.h.b16 %v1847
        %v2790 = vunpack.c.l.b16 %v1848
        %v2791 = vunpack.c.h.b16 %v1848
        %v2792 = vunpack.c.l.b16 %v1849
        %v2793 = vunpack.c.h.b16 %v1849
        %v2794 = vunpack.c.l.b16 %v1850
        %v2795 = vunpack.c.h.b16 %v1850
        %v2796 = vunpack.c.l.b16 %v1851
        %v2797 = vunpack.c.h.b16 %v1851
        %v2798 = vunpack.c.l.b16 %v1852
        %v2799 = vunpack.c.h.b16 %v1852
        %v2800 = vunpack.c.l.b16 %v1853
        %v2801 = vunpack.c.h.b16 %v1853
        %v2802 = vunpack.c.l.b16 %v1854
        %v2803 = vunpack.c.h.b16 %v1854
        %v2804 = vunpack.c.l.b16 %v1855
        %v2805 = vunpack.c.h.b16 %v1855
        %v2806 = vunpack.c.l.b16 %v1856
        %v2807 = vunpack.c.h.b16 %v1856
        %v2808 = vunpack.c.l.b16 %v1857
        %v2809 = vunpack.c.h.b16 %v1857
        %v2810 = vunpack.c.l.b16 %v1858
        %v2811 = vunpack.c.h.b16 %v1858
        %v2812 = vunpack.c.l.b16 %v1859
        %v2813 = vunpack.c.h.b16 %v1859
        %v2814 = vunpack.c.l.b16 %v1860
        %v2815 = vunpack.c.h.b16 %v1860
        %v2816 = vunpack.c.l.b16 %v1861
        %v2817 = vunpack.c.h.b16 %v1861
        %v2818 = vunpack.c.l.b16 %v1862
        %v2819 = vunpack.c.h.b16 %v1862
        %v2820 = vunpack.c.l.b16 %v1863
        %v2821 = vunpack.c.h.b16 %v1863
        %v2822 = vunpack.c.l.b16 %v1864
        %v2823 = vunpack.c.h.b16 %v1864
        %v2824 = vunpack.c.l.b16 %v1865
        %v2825 = vunpack.c.h.b16 %v1865
        %v2826 = vunpack.c.l.b16 %v1866
        %v2827 = vunpack.c.h.b16 %v1866
        %v2828 = vunpack.c.l.b16 %v1867
        %v2829 = vunpack.c.h.b16 %v1867
        %v2830 = vunpack.c.l.b16 %v1868
        %v2831 = vunpack.c.h.b16 %v1868
        %v2832 = vunpack.c.l.b16 %v1869
        %v2833 = vunpack.c.h.b16 %v1869
        %v2834 = vunpack.c.l.b16 %v1870
        %v2835 = vunpack.c.h.b16 %v1870
        %v2836 = vunpack.c.l.b16 %v1871
        %v2837 = vunpack.c.h.b16 %v1871
        %v2838 = vunpack.c.l.b16 %v1872
        %v2839 = vunpack.c.h.b16 %v1872
        %v2840 = vunpack.c.l.b16 %v1873
        %v2841 = vunpack.c.h.b16 %v1873
        %v2842 = vunpack.c.l.b16 %v1874
        %v2843 = vunpack.c.h.b16 %v1874
        %v2844 = vunpack.c.l.b16 %v1875
        %v2845 = vunpack.c.h.b16 %v1875
        %v2846 = vunpack.c.l.b16 %v1876
        %v2847 = vunpack.c.h.b16 %v1876
        %v2848 = vunpack.c.l.b16 %v1877
        %v2849 = vunpack.c.h.b16 %v1877
        %v2850 = vunpack.c.l.b16 %v1878
        %v2851 = vunpack.c.h.b16 %v1878
        %v2852 = vunpack.c.l.b16 %v1879
        %v2853 = vunpack.c.h.b16 %v1879
        %v2854 = vunpack.c.l.b16 %v1880
        %v2855 = vunpack.c.h.b16 %v1880
        %v2856 = vunpack.c.l.b16 %v1881
        %v2857 = vunpack.c.h.b16 %v1881
        %v2858 = vunpack.c.l.b16 %v1882
        %v2859 = vunpack.c.h.b16 %v1882
        %v2860 = vunpack.c.l.b16 %v1883
        %v2861 = vunpack.c.h.b16 %v1883
        %v2862 = vunpack.c.l.b16 %v1884
        %v2863 = vunpack.c.h.b16 %v1884
        %v2864 = vunpack.c.l.b16 %v1885
        %v2865 = vunpack.c.l.b16 %v1886
        %v2866 = vunpack.c.h.b16 %v1886
        %v2867 = vunpack.c.l.b16 %v1887
        %v2868 = vunpack.c.h.b16 %v1887
        %v2869 = vunpack.c.l.b16 %v1888
        %v2870 = vunpack.c.h.b16 %v1888
        %v2871 = vunpack.c.l.b16 %v1889
        %v2872 = vunpack.c.h.b16 %v1889
        %v2873 = vunpack.c.l.b16 %v1890
        %v2874 = vunpack.c.h.b16 %v1890
        %v2875 = vunpack.c.l.b16 %v1891
        %v2876 = vunpack.c.h.b16 %v1891
        %v2877 = vunpack.c.l.b16 %v1892
        %v2878 = vunpack.c.h.b16 %v1892
        %v2879 = vunpack.c.l.b16 %v1893
        %v2880 = vunpack.c.h.b16 %v1893
        %v2881 = vunpack.c.l.b16 %v1894
        %v2882 = vunpack.c.h.b16 %v1894
        %v2883 = vunpack.c.l.b16 %v1895
        %v2884 = vunpack.c.h.b16 %v1895
        %v2885 = vunpack.c.l.b16 %v1896
        %v2886 = vunpack.c.h.b16 %v1896
        %v2887 = vunpack.c.l.b16 %v1897
        %v2888 = vunpack.c.h.b16 %v1897
        %v2889 = vunpack.c.l.b16 %v1898
        %v2890 = vunpack.c.h.b16 %v1898
        %v2891 = vunpack.c.l.b16 %v1899
        %v2892 = vunpack.c.h.b16 %v1899
        %v2893 = vunpack.c.l.b16 %v1900
        %v2894 = vunpack.c.h.b16 %v1900
        %v2895 = vunpack.c.l.b16 %v1901
        %v2896 = vunpack.c.h.b16 %v1901
        %v2897 = vunpack.c.l.b16 %v1902
        %v2898 = vunpack.c.h.b16 %v1902
        %v2899 = vunpack.c.l.b16 %v1903
        %v2900 = vunpack.c.h.b16 %v1903
        %v2901 = vunpack.c.l.b16 %v1904
        %v2902 = vunpack.c.h.b16 %v1904
        %v2903 = vunpack.c.l.b16 %v1905
        %v2904 = vunpack.c.h.b16 %v1905
        %v2905 = vunpack.c.l.b16 %v1906
        %v2906 = vunpack.c.h.b16 %v1906
        %v2907 = vunpack.c.l.b16 %v1907
        %v2908 = vunpack.c.h.b16 %v1907
        %v2909 = vunpack.c.l.b16 %v1908
        %v2910 = vunpack.c.h.b16 %v1908
        %v2911 = vunpack.c.l.b16 %v1909
        %v2912 = vunpack.c.h.b16 %v1909
        %v2913 = vunpack.c.l.b16 %v1910
        %v2914 = vunpack.c.h.b16 %v1910
        %v2915 = vunpack.c.l.b16 %v1911
        %v2916 = vunpack.c.h.b16 %v1911
        %v2917 = vunpack.c.l.b16 %v1912
        %v2918 = vunpack.c.h.b16 %v1912
        %v2919 = vunpack.c.l.b16 %v1913
        %v2920 = vunpack.c.h.b16 %v1913
        %v2921 = vunpack.c.l.b16 %v1914
        %v2922 = vunpack.c.h.b16 %v1914
        %v2923 = vunpack.c.l.b16 %v1915
        %v2924 = vunpack.c.h.b16 %v1915
        %v2925 = vunpack.c.l.b16 %v1916
        %v2926 = vunpack.c.h.b16 %v1916
        %v2927 = vunpack.c.l.b16 %v1917
        %v2928 = vunpack.c.h.b16 %v1917
        %v2929 = vunpack.c.l.b16 %v1918
        %v2930 = vunpack.c.h.b16 %v1918
        %v2931 = vunpack.c.l.b16 %v1919
        %v2932 = vunpack.c.h.b16 %v1919
        %v2933 = vunpack.c.l.b16 %v1920
        %v2934 = vunpack.c.h.b16 %v1920
        %v2935 = vunpack.c.l.b16 %v1921
        %v2936 = vunpack.c.h.b16 %v1921
        %v2937 = vunpack.c.l.b16 %v1922
        %v2938 = vunpack.c.h.b16 %v1922
        %v2939 = vunpack.c.l.b16 %v1923
        %v2940 = vunpack.c.h.b16 %v1923
        %v2941 = vunpack.c.l.b16 %v1924
        %v2942 = vunpack.c.h.b16 %v1924
        %v2943 = vunpack.c.l.b16 %v1925
        %v2944 = vunpack.c.h.b16 %v1925
        %v2945 = vunpack.c.l.b16 %v1926
        %v2946 = vunpack.c.h.b16 %v1926
        %v2947 = vunpack.c.l.b16 %v1927
        %v2948 = vunpack.c.h.b16 %v1927
        %v2949 = vunpack.c.l.b16 %v1928
        %v2950 = vunpack.c.h.b16 %v1928
        %v2951 = vunpack.c.l.b16 %v1929
        %v2952 = vunpack.c.h.b16 %v1929
        %v2953 = vunpack.c.l.b16 %v1930
        %v2954 = vunpack.c.h.b16 %v1930
        %v2955 = vunpack.c.l.b16 %v1931
        %v2956 = vunpack.c.h.b16 %v1931
        %v2957 = vunpack.c.l.b16 %v1932
        %v2958 = vunpack.c.h.b16 %v1932
        %v2959 = vunpack.c.l.b16 %v1933
        %v2960 = vunpack.c.h.b16 %v1933
        %v2961 = vunpack.c.l.b16 %v1934
        %v2962 = vunpack.c.h.b16 %v1934
        %v2963 = vunpack.c.l.b16 %v1935
        %v2964 = vunpack.c.h.b16 %v1935
        %v2965 = vunpack.c.l.b16 %v1936
        %v2966 = vunpack.c.h.b16 %v1936
        %v2967 = vunpack.c.l.b16 %v1937
        %v2968 = vunpack.c.h.b16 %v1937
        %v2969 = vunpack.c.l.b16 %v1938
        %v2970 = vunpack.c.h.b16 %v1938
        %v2971 = vunpack.c.l.b16 %v1939
        %v2972 = vunpack.c.h.b16 %v1939
        %v2973 = vunpack.c.l.b16 %v1940
        %v2974 = vunpack.c.h.b16 %v1940
        %v2975 = vunpack.c.l.b16 %v1941
        %v2976 = vunpack.c.h.b16 %v1941
        %v2977 = vunpack.c.l.b16 %v1942
        %v2978 = vunpack.c.h.b16 %v1942
        %v2979 = vunpack.c.l.b16 %v1943
        %v2980 = vunpack.c.h.b16 %v1943
        %v2981 = vunpack.c.l.b16 %v1944
        %v2982 = vunpack.c.h.b16 %v1944
        %v2983 = vunpack.c.l.b16 %v1945
        %v2984 = vunpack.c.h.b16 %v1945
        %v2985 = vunpack.c.l.b16 %v1946
        %v2986 = vunpack.c.h.b16 %v1946
        %v2987 = vunpack.c.l.b16 %v1947
        %v2988 = vunpack.c.h.b16 %v1947
        %v2989 = vunpack.c.l.b16 %v1948
        %v2990 = vunpack.c.h.b16 %v1948
        %v2991 = vunpack.c.l.b16 %v1949
        %v2992 = vunpack.c.h.b16 %v1949
        %v2993 = vunpack.c.l.b16 %v1950
        %v2994 = vunpack.c.h.b16 %v1950
        %v2995 = vunpack.c.l.b16 %v1951
        %v2996 = vunpack.c.h.b16 %v1951
        %v2997 = vunpack.c.l.b16 %v1952
        %v2998 = vunpack.c.h.b16 %v1952
        %v2999 = vunpack.c.l.b16 %v1953
        %v3000 = vunpack.c.h.b16 %v1953
        %v3001 = vunpack.c.l.b16 %v1954
        %v3002 = vunpack.c.h.b16 %v1954
        %v3003 = vunpack.c.l.b16 %v1955
        %v3004 = vunpack.c.h.b16 %v1955
        %v3005 = vunpack.c.l.b16 %v1956
        %v3006 = vunpack.c.h.b16 %v1956
        %v3007 = vunpack.c.l.b16 %v1957
        %v3008 = vunpack.c.h.b16 %v1957
        %v3009 = vunpack.c.l.b16 %v1958
        %v3010 = vunpack.c.h.b16 %v1958
        %v3011 = vunpack.c.l.b16 %v1959
        %v3012 = vunpack.c.h.b16 %v1959
        %v3013 = vunpack.c.l.b16 %v1960
        %v3014 = vunpack.c.h.b16 %v1960
        %v3015 = vunpack.c.l.b16 %v1961
        %v3016 = vunpack.c.h.b16 %v1961
        %v3017 = vunpack.c.l.b16 %v1962
        %v3018 = vunpack.c.h.b16 %v1962
        %v3019 = vunpack.c.l.b16 %v1963
        %v3020 = vunpack.c.h.b16 %v1963
        %v3021 = vunpack.c.l.b16 %v1964
        %v3022 = vunpack.c.h.b16 %v1964
        %v3023 = vunpack.c.l.b16 %v1965
        %v3024 = vunpack.c.h.b16 %v1965
        %v3025 = vunpack.c.l.b16 %v1966
        %v3026 = vunpack.c.h.b16 %v1966
        %v3027 = vunpack.c.l.b16 %v1967
        %v3028 = vunpack.c.h.b16 %v1967
        %v3029 = vunpack.c.l.b16 %v1968
        %v3030 = vunpack.c.h.b16 %v1968
        %v3031 = vunpack.c.l.b16 %v1969
        %v3032 = vunpack.c.h.b16 %v1969
        %v3033 = vunpack.c.l.b16 %v1970
        %v3034 = vunpack.c.h.b16 %v1970
        %v3035 = vunpack.c.l.b16 %v1971
        %v3036 = vunpack.c.h.b16 %v1971
        %v3037 = vunpack.c.l.b16 %v1972
        %v3038 = vunpack.c.h.b16 %v1972
        %v3039 = vunpack.c.l.b16 %v1973
        %v3040 = vunpack.c.h.b16 %v1973
        %v3041 = vunpack.c.l.b16 %v1974
        %v3042 = vunpack.c.h.b16 %v1974
        %v3043 = vunpack.c.l.b16 %v1975
        %v3044 = vunpack.c.h.b16 %v1975
        %v3045 = vunpack.c.l.b16 %v1976
        %v3046 = vunpack.c.h.b16 %v1976
        %v3047 = vunpack.c.l.b16 %v1977
        %v3048 = vunpack.c.h.b16 %v1977
        %v3049 = vunpack.c.l.b16 %v1978
        %v3050 = vunpack.c.h.b16 %v1978
        %v3051 = vunpack.c.l.b16 %v1979
        %v3052 = vunpack.c.h.b16 %v1979
        %v3053 = vunpack.c.l.b16 %v1980
        %v3054 = vunpack.c.h.b16 %v1980
        %v3055 = vunpack.c.l.b16 %v1981
        %v3056 = vunpack.c.h.b16 %v1981
        %v3057 = vunpack.c.l.b16 %v1982
        %v3058 = vunpack.c.h.b16 %v1982
        %v3059 = vunpack.c.l.b16 %v1983
        %v3060 = vunpack.c.h.b16 %v1983
        %v3061 = vunpack.c.l.b16 %v1984
        %v3062 = vunpack.c.h.b16 %v1984
        %v3063 = vunpack.c.l.b16 %v1985
        %v3064 = vunpack.c.h.b16 %v1985
        %v3065 = vunpack.c.l.b16 %v1986
        %v3066 = vunpack.c.h.b16 %v1986
        %v3067 = vunpack.c.l.b16 %v1987
        %v3068 = vunpack.c.h.b16 %v1987
        %v3069 = vunpack.c.l.b16 %v1988
        %v3070 = vunpack.c.h.b16 %v1988
        %v3071 = vunpack.c.l.b16 %v1989
        %v3072 = vunpack.c.h.b16 %v1989
        %v3073 = vunpack.c.l.b16 %v1990
        %v3074 = vunpack.c.h.b16 %v1990
        %v3075 = vunpack.c.l.b16 %v1991
        %v3076 = vunpack.c.h.b16 %v1991
        %v3077 = vunpack.c.l.b16 %v1992
        %v3078 = vunpack.c.h.b16 %v1992
        %v3079 = vunpack.c.l.b16 %v1993
        %v3080 = vunpack.c.h.b16 %v1993
        %v3081 = vunpack.c.l.b16 %v1994
        %v3082 = vunpack.c.h.b16 %v1994
        %v3083 = vunpack.c.l.b16 %v1995
        %v3084 = vunpack.c.h.b16 %v1995
        %v3085 = vunpack.c.l.b16 %v1996
        %v3086 = vunpack.c.h.b16 %v1996
        %v3087 = vunpack.c.l.b16 %v1997
        %v3088 = vunpack.c.h.b16 %v1997
        %v3089 = vunpack.c.l.b16 %v1998
        %v3090 = vunpack.c.h.b16 %v1998
        %v3091 = vunpack.c.l.b16 %v1999
        %v3092 = vunpack.c.h.b16 %v1999
        %v3093 = vunpack.c.l.b16 %v2000
        %v3094 = vunpack.c.h.b16 %v2000
        %v3095 = vunpack.c.l.b16 %v2001
        %v3096 = vunpack.c.h.b16 %v2001
        %v3097 = vunpack.c.l.b16 %v2002
        %v3098 = vunpack.c.h.b16 %v2002
        %v3099 = vunpack.c.l.b16 %v2003
        %v3100 = vunpack.c.h.b16 %v2003
        %v3101 = vunpack.c.l.b16 %v2004
        %v3102 = vunpack.c.h.b16 %v2004
        %v3103 = vunpack.c.l.b16 %v2005
        %v3104 = vunpack.c.h.b16 %v2005
        %v3105 = vunpack.c.l.b16 %v2006
        %v3106 = vunpack.c.h.b16 %v2006
        %v3107 = vunpack.c.l.b16 %v2007
        %v3108 = vunpack.c.h.b16 %v2007
        %v3109 = vunpack.c.l.b16 %v2008
        %v3110 = vunpack.c.h.b16 %v2008
        %v3111 = vunpack.c.l.b16 %v2009
        %v3112 = vunpack.c.h.b16 %v2009
        %v3113 = vunpack.c.l.b16 %v2010
        %v3114 = vunpack.c.h.b16 %v2010
        %v3115 = vunpack.c.l.b16 %v2011
        %v3116 = vunpack.c.h.b16 %v2011
        %v3117 = vunpack.c.l.b16 %v2012
        %v3118 = vunpack.c.h.b16 %v2012
        %v3119 = vunpack.c.l.b16 %v2013
        %v3120 = vunpack.c.h.b16 %v2013
        %v3121 = vunpack.c.l.b16 %v2014
        %v3122 = vunpack.c.h.b16 %v2014
        %v3123 = vunpack.c.l.b16 %v2015
        %v3124 = vunpack.c.h.b16 %v2015
        %v3125 = vunpack.c.l.b16 %v2016
        %v3126 = vunpack.c.h.b16 %v2016
        %v3127 = vunpack.c.l.b16 %v2017
        %v3128 = vunpack.c.h.b16 %v2017
        %v3129 = vunpack.c.l.b16 %v2018
        %v3130 = vunpack.c.h.b16 %v2018
        %v3131 = vunpack.c.l.b16 %v2019
        %v3132 = vunpack.c.h.b16 %v2019
        %v3133 = vunpack.c.l.b16 %v2020
        %v3134 = vunpack.c.h.b16 %v2020
        %v3135 = vunpack.c.l.b16 %v2021
        %v3136 = vunpack.c.h.b16 %v2021
        %v3137 = vunpack.c.l.b16 %v2022
        %v3138 = vunpack.c.h.b16 %v2022
        %v3139 = vunpack.c.l.b16 %v2023
        %v3140 = vunpack.c.h.b16 %v2023
        %v3141 = vunpack.c.l.b16 %v2024
        %v3142 = vunpack.c.h.b16 %v2024
        %v3143 = vunpack.c.l.b16 %v2025
        %v3144 = vunpack.c.h.b16 %v2025
        %v3145 = vunpack.c.l.b16 %v2026
        %v3146 = vunpack.c.h.b16 %v2026
        %v3147 = vunpack.c.l.b16 %v2027
        %v3148 = vunpack.c.h.b16 %v2027
        %v3149 = vunpack.c.l.b16 %v2028
        %v3150 = vunpack.c.h.b16 %v2028
        %v3151 = vunpack.c.l.b16 %v2029
        %v3152 = vunpack.c.h.b16 %v2029
        %v3153 = vunpack.c.l.b16 %v2030
        %v3154 = vunpack.c.h.b16 %v2030
        %v3155 = vunpack.c.l.b16 %v2031
        %v3156 = vunpack.c.h.b16 %v2031
        %v3157 = vunpack.c.l.b16 %v2032
        %v3158 = vunpack.c.h.b16 %v2032
        %v3159 = vunpack.c.l.b16 %v2033
        %v3160 = vunpack.c.h.b16 %v2033
        %v3161 = vunpack.c.l.b16 %v2034
        %v3162 = vunpack.c.h.b16 %v2034
        %v3163 = vunpack.c.l.b16 %v2035
        %v3164 = vunpack.c.h.b16 %v2035
        %v3165 = vunpack.c.l.b16 %v2036
        %v3166 = vunpack.c.h.b16 %v2036
        %v3167 = vunpack.c.l.b16 %v2037
        %v3168 = vunpack.c.h.b16 %v2037
        %v3169 = vunpack.c.l.b16 %v2038
        %v3170 = vunpack.c.h.b16 %v2038
        %v3171 = vunpack.c.l.b16 %v2039
        %v3172 = vunpack.c.h.b16 %v2039
        %v3173 = vunpack.c.l.b16 %v2040
        %v3174 = vunpack.c.h.b16 %v2040
        %v3175 = vunpack.c.l.b16 %v2041
        %v3176 = vunpack.c.h.b16 %v2041
        %v3177 = vunpack.c.l.b16 %v2042
        %v3178 = vunpack.c.h.b16 %v2042
        %v3179 = vunpack.c.l.b16 %v2043
        %v3180 = vunpack.c.h.b16 %v2043
        %v3181 = vunpack.c.l.b16 %v2044
        %v3182 = vunpack.c.h.b16 %v2044
        %v3183 = vunpack.c.l.b16 %v2045
        %v3184 = vunpack.c.h.b16 %v2045
        %v3185 = vunpack.c.l.b16 %v2046
        %v3186 = vunpack.c.h.b16 %v2046
        %v3187 = vunpack.c.l.b16 %v2047
        %v3188 = vunpack.c.h.b16 %v2047
        %v3189 = vunpack.c.l.b16 %v2048
        %v3190 = vunpack.c.h.b16 %v2048
        %v3191 = vunpack.c.l.b16 %v2049
        %v3192 = vunpack.c.h.b16 %v2049
        %v3193 = vunpack.c.l.b16 %v2050
        %v3194 = vunpack.c.h.b16 %v2050
        %v3195 = vunpack.c.l.b16 %v2051
        %v3196 = vunpack.c.h.b16 %v2051
        %v3197 = vunpack.c.l.b16 %v2052
        %v3198 = vunpack.c.h.b16 %v2052
        %v3199 = vunpack.c.l.b16 %v2053
        %v3200 = vunpack.c.h.b16 %v2053
        %v3201 = vunpack.c.l.b16 %v2054
        %v3202 = vunpack.c.h.b16 %v2054
        %v3203 = vunpack.c.l.b16 %v2055
        %v3204 = vunpack.c.h.b16 %v2055
        %v3205 = vunpack.c.l.b16 %v2056
        %v3206 = vunpack.c.h.b16 %v2056
        %v3207 = vunpack.c.l.b16 %v2057
        %v3208 = vunpack.c.h.b16 %v2057
        %v3209 = vunpack.c.l.b16 %v2058
        %v3210 = vunpack.c.h.b16 %v2058
        %v3211 = vunpack.c.l.b16 %v2059
        %v3212 = vunpack.c.h.b16 %v2059
        %v3213 = vunpack.c.l.b16 %v2060
        %v3214 = vunpack.c.h.b16 %v2060
        %v3215 = vunpack.c.l.b16 %v2061
        %v3216 = vunpack.c.h.b16 %v2061
        %v3217 = vunpack.c.l.b16 %v2062
        %v3218 = vunpack.c.h.b16 %v2062
        %v3219 = vunpack.c.l.b16 %v2063
        %v3220 = vunpack.c.h.b16 %v2063
        %v3221 = vunpack.c.l.b16 %v2064
        %v3222 = vunpack.c.h.b16 %v2064
        %v3223 = vunpack.c.l.b16 %v2065
        %v3224 = vunpack.c.h.b16 %v2065
        %v3225 = vunpack.c.l.b16 %v2066
        %v3226 = vunpack.c.h.b16 %v2066
        %v3227 = vunpack.c.l.b16 %v2067
        %v3228 = vunpack.c.h.b16 %v2067
        %v3229 = vunpack.c.l.b16 %v2068
        %v3230 = vunpack.c.h.b16 %v2068
        %v3231 = vunpack.c.l.b16 %v2069
        %v3232 = vunpack.c.h.b16 %v2069
        %v3233 = vunpack.c.l.b16 %v2070
        %v3234 = vunpack.c.h.b16 %v2070
        %v3235 = vunpack.c.l.b16 %v2071
        %v3236 = vunpack.c.h.b16 %v2071
        %v3237 = vunpack.c.l.b16 %v2072
        %v3238 = vunpack.c.h.b16 %v2072
        %v3239 = vunpack.c.l.b16 %v2073
        %v3240 = vunpack.c.h.b16 %v2073
        %v3241 = vunpack.c.l.b16 %v2074
        %v3242 = vunpack.c.h.b16 %v2074
        %v3243 = vunpack.c.l.b16 %v2075
        %v3244 = vunpack.c.h.b16 %v2075
        %v3245 = vunpack.c.l.b16 %v2076
        %v3246 = vunpack.c.h.b16 %v2076
        %v3247 = vunpack.c.l.b16 %v2077
        %v3248 = vunpack.c.h.b16 %v2077
        %v3249 = vunpack.c.l.b16 %v2078
        %v3250 = vunpack.c.h.b16 %v2078
        %v3251 = vunpack.c.l.b16 %v2079
        %v3252 = vunpack.c.h.b16 %v2079
        %v3253 = vunpack.c.l.b16 %v2080
        %v3254 = vunpack.c.h.b16 %v2080
        %v3255 = vunpack.c.l.b16 %v2081
        %v3256 = vpack.c.b16 %v2865, %v2474
        %v3257 = vpack.c.b16 %v2866, %v2475
        %v3258 = vpack.c.b16 %v2867, %v2476
        %v3259 = vpack.c.b16 %v2868, %v2477
        %v3260 = vpack.c.b16 %v2869, %v2478
        %v3261 = vpack.c.b16 %v2870, %v2479
        %v3262 = vpack.c.b16 %v2871, %v2480
        %v3263 = vpack.c.b16 %v2872, %v2481
        %v3264 = vpack.c.b16 %v2873, %v2482
        %v3265 = vpack.c.b16 %v2874, %v2483
        %v3266 = vpack.c.b16 %v2875, %v2484
        %v3267 = vpack.c.b16 %v2876, %v2485
        %v3268 = vpack.c.b16 %v2877, %v2486
        %v3269 = vpack.c.b16 %v2878, %v2487
        %v3270 = vpack.c.b16 %v2879, %v2488
        %v3271 = vpack.c.b16 %v2880, %v2489
        %v3272 = vpack.c.b16 %v2881, %v2490
        %v3273 = vpack.c.b16 %v2882, %v2491
        %v3274 = vpack.c.b16 %v2883, %v2492
        %v3275 = vpack.c.b16 %v2884, %v2493
        %v3276 = vpack.c.b16 %v2885, %v2494
        %v3277 = vpack.c.b16 %v2886, %v2495
        %v3278 = vpack.c.b16 %v2887, %v2496
        %v3279 = vpack.c.b16 %v2888, %v2497
        %v3280 = vpack.c.b16 %v2889, %v2498
        %v3281 = vpack.c.b16 %v2890, %v2499
        %v3282 = vpack.c.b16 %v2891, %v2500
        %v3283 = vpack.c.b16 %v2892, %v2501
        %v3284 = vpack.c.b16 %v2893, %v2502
        %v3285 = vpack.c.b16 %v2894, %v2503
        %v3286 = vpack.c.b16 %v2895, %v2504
        %v3287 = vpack.c.b16 %v2896, %v2505
        %v3288 = vpack.c.b16 %v2897, %v2506
        %v3289 = vpack.c.b16 %v2898, %v2507
        %v3290 = vpack.c.b16 %v2899, %v2508
        %v3291 = vpack.c.b16 %v2900, %v2509
        %v3292 = vpack.c.b16 %v2901, %v2510
        %v3293 = vpack.c.b16 %v2902, %v2511
        %v3294 = vpack.c.b16 %v2903, %v2512
        %v3295 = vpack.c.b16 %v2904, %v2513
        %v3296 = vpack.c.b16 %v2905, %v2514
        %v3297 = vpack.c.b16 %v2906, %v2515
        %v3298 = vpack.c.b16 %v2907, %v2516
        %v3299 = vpack.c.b16 %v2908, %v2517
        %v3300 = vpack.c.b16 %v2909, %v2518
        %v3301 = vpack.c.b16 %v2910, %v2519
        %v3302 = vpack.c.b16 %v2911, %v2520
        %v3303 = vpack.c.b16 %v2912, %v2521
        %v3304 = vpack.c.b16 %v2913, %v2522
        %v3305 = vpack.c.b16 %v2914, %v2523
        %v3306 = vpack.c.b16 %v2915, %v2524
        %v3307 = vpack.c.b16 %v2916, %v2525
        %v3308 = vpack.c.b16 %v2917, %v2526
        %v3309 = vpack.c.b16 %v2918, %v2527
        %v3310 = vpack.c.b16 %v2919, %v2528
        %v3311 = vpack.c.b16 %v2920, %v2529
        %v3312 = vpack.c.b16 %v2921, %v2530
        %v3313 = vpack.c.b16 %v2922, %v2531
        %v3314 = vpack.c.b16 %v2923, %v2532
        %v3315 = vpack.c.b16 %v2924, %v2533
        %v3316 = vpack.c.b16 %v2925, %v2534
        %v3317 = vpack.c.b16 %v2926, %v2535
        %v3318 = vpack.c.b16 %v2927, %v2536
        %v3319 = vpack.c.b16 %v2928, %v2537
        %v3320 = vpack.c.b16 %v2929, %v2538
        %v3321 = vpack.c.b16 %v2930, %v2539
        %v3322 = vpack.c.b16 %v2931, %v2540
        %v3323 = vpack.c.b16 %v2932, %v2541
        %v3324 = vpack.c.b16 %v2933, %v2542
        %v3325 = vpack.c.b16 %v2934, %v2543
        %v3326 = vpack.c.b16 %v2935, %v2544
        %v3327 = vpack.c.b16 %v2936, %v2545
        %v3328 = vpack.c.b16 %v2937, %v2546
        %v3329 = vpack.c.b16 %v2938, %v2547
        %v3330 = vpack.c.b16 %v2939, %v2548
        %v3331 = vpack.c.b16 %v2940, %v2549
        %v3332 = vpack.c.b16 %v2941, %v2550
        %v3333 = vpack.c.b16 %v2942, %v2551
        %v3334 = vpack.c.b16 %v2943, %v2552
        %v3335 = vpack.c.b16 %v2944, %v2553
        %v3336 = vpack.c.b16 %v2945, %v2554
        %v3337 = vpack.c.b16 %v2946, %v2555
        %v3338 = vpack.c.b16 %v2947, %v2556
        %v3339 = vpack.c.b16 %v2948, %v2557
        %v3340 = vpack.c.b16 %v2949, %v2558
        %v3341 = vpack.c.b16 %v2950, %v2559
        %v3342 = vpack.c.b16 %v2951, %v2560
        %v3343 = vpack.c.b16 %v2952, %v2561
        %v3344 = vpack.c.b16 %v2953, %v2562
        %v3345 = vpack.c.b16 %v2954, %v2563
        %v3346 = vpack.c.b16 %v2955, %v2564
        %v3347 = vpack.c.b16 %v2956, %v2565
        %v3348 = vpack.c.b16 %v2957, %v2566
        %v3349 = vpack.c.b16 %v2958, %v2567
        %v3350 = vpack.c.b16 %v2959, %v2568
        %v3351 = vpack.c.b16 %v2960, %v2569
        %v3352 = vpack.c.b16 %v2961, %v2570
        %v3353 = vpack.c.b16 %v2962, %v2571
        %v3354 = vpack.c.b16 %v2963, %v2572
        %v3355 = vpack.c.b16 %v2964, %v2573
        %v3356 = vpack.c.b16 %v2965, %v2574
        %v3357 = vpack.c.b16 %v2966, %v2575
        %v3358 = vpack.c.b16 %v2967, %v2576
        %v3359 = vpack.c.b16 %v2968, %v2577
        %v3360 = vpack.c.b16 %v2969, %v2578
        %v3361 = vpack.c.b16 %v2970, %v2579
        %v3362 = vpack.c.b16 %v2971, %v2580
        %v3363 = vpack.c.b16 %v2972, %v2581
        %v3364 = vpack.c.b16 %v2973, %v2582
        %v3365 = vpack.c.b16 %v2974, %v2583
        %v3366 = vpack.c.b16 %v2975, %v2584
        %v3367 = vpack.c.b16 %v2976, %v2585
        %v3368 = vpack.c.b16 %v2977, %v2586
        %v3369 = vpack.c.b16 %v2978, %v2587
        %v3370 = vpack.c.b16 %v2979, %v2588
        %v3371 = vpack.c.b16 %v2980, %v2589
        %v3372 = vpack.c.b16 %v2981, %v2590
        %v3373 = vpack.c.b16 %v2982, %v2591
        %v3374 = vpack.c.b16 %v2983, %v2592
        %v3375 = vpack.c.b16 %v2984, %v2593
        %v3376 = vpack.c.b16 %v2985, %v2594
        %v3377 = vpack.c.b16 %v2986, %v2595
        %v3378 = vpack.c.b16 %v2987, %v2596
        %v3379 = vpack.c.b16 %v2988, %v2597
        %v3380 = vpack.c.b16 %v2989, %v2598
        %v3381 = vpack.c.b16 %v2990, %v2599
        %v3382 = vpack.c.b16 %v2991, %v2600
        %v3383 = vpack.c.b16 %v2992, %v2601
        %v3384 = vpack.c.b16 %v2993, %v2602
        %v3385 = vpack.c.b16 %v2994, %v2603
        %v3386 = vpack.c.b16 %v2995, %v2604
        %v3387 = vpack.c.b16 %v2996, %v2605
        %v3388 = vpack.c.b16 %v2997, %v2606
        %v3389 = vpack.c.b16 %v2998, %v2607
        %v3390 = vpack.c.b16 %v2999, %v2608
        %v3391 = vpack.c.b16 %v3000, %v2609
        %v3392 = vpack.c.b16 %v3001, %v2610
        %v3393 = vpack.c.b16 %v3002, %v2611
        %v3394 = vpack.c.b16 %v3003, %v2612
        %v3395 = vpack.c.b16 %v3004, %v2613
        %v3396 = vpack.c.b16 %v3005, %v2614
        %v3397 = vpack.c.b16 %v3006, %v2615
        %v3398 = vpack.c.b16 %v3007, %v2616
        %v3399 = vpack.c.b16 %v3008, %v2617
        %v3400 = vpack.c.b16 %v3009, %v2618
        %v3401 = vpack.c.b16 %v3010, %v2619
        %v3402 = vpack.c.b16 %v3011, %v2620
        %v3403 = vpack.c.b16 %v3012, %v2621
        %v3404 = vpack.c.b16 %v3013, %v2622
        %v3405 = vpack.c.b16 %v3014, %v2623
        %v3406 = vpack.c.b16 %v3015, %v2624
        %v3407 = vpack.c.b16 %v3016, %v2625
        %v3408 = vpack.c.b16 %v3017, %v2626
        %v3409 = vpack.c.b16 %v3018, %v2627
        %v3410 = vpack.c.b16 %v3019, %v2628
        %v3411 = vpack.c.b16 %v3020, %v2629
        %v3412 = vpack.c.b16 %v3021, %v2630
        %v3413 = vpack.c.b16 %v3022, %v2631
        %v3414 = vpack.c.b16 %v3023, %v2632
        %v3415 = vpack.c.b16 %v3024, %v2633
        %v3416 = vpack.c.b16 %v3025, %v2634
        %v3417 = vpack.c.b16 %v3026, %v2635
        %v3418 = vpack.c.b16 %v3027, %v2636
        %v3419 = vpack.c.b16 %v3028, %v2637
        %v3420 = vpack.c.b16 %v3029, %v2638
        %v3421 = vpack.c.b16 %v3030, %v2639
        %v3422 = vpack.c.b16 %v3031, %v2640
        %v3423 = vpack.c.b16 %v3032, %v2641
        %v3424 = vpack.c.b16 %v3033, %v2642
        %v3425 = vpack.c.b16 %v3034, %v2643
        %v3426 = vpack.c.b16 %v3035, %v2644
        %v3427 = vpack.c.b16 %v3036, %v2645
        %v3428 = vpack.c.b16 %v3037, %v2646
        %v3429 = vpack.c.b16 %v3038, %v2647
        %v3430 = vpack.c.b16 %v3039, %v2648
        %v3431 = vpack.c.b16 %v3040, %v2649
        %v3432 = vpack.c.b16 %v3041, %v2650
        %v3433 = vpack.c.b16 %v3042, %v2651
        %v3434 = vpack.c.b16 %v3043, %v2652
        %v3435 = vpack.c.b16 %v3044, %v2653
        %v3436 = vpack.c.b16 %v3045, %v2654
        %v3437 = vpack.c.b16 %v3046, %v2655
        %v3438 = vpack.c.b16 %v3047, %v2656
        %v3439 = vpack.c.b16 %v3048, %v2657
        %v3440 = vpack.c.b16 %v3049, %v2658
        %v3441 = vpack.c.b16 %v3050, %v2659
        %v3442 = vpack.c.b16 %v3051, %v2660
        %v3443 = vpack.c.b16 %v3052, %v2661
        %v3444 = vpack.c.b16 %v3053, %v2662
        %v3445 = vpack.c.b16 %v3054, %v2663
        %v3446 = vpack.c.b16 %v3055, %v2664
        %v3447 = vpack.c.b16 %v3056, %v2665
        %v3448 = vpack.c.b16 %v3057, %v2666
        %v3449 = vpack.c.b16 %v3058, %v2667
        %v3450 = vpack.c.b16 %v3059, %v2668
        %v3451 = vpack.c.b16 %v3060, %v2669
        %v3452 = vpack.c.b16 %v3061, %v2670
        %v3453 = vpack.c.b16 %v3062, %v2671
        %v3454 = vpack.c.b16 %v3063, %v2672
        %v3455 = vpack.c.b16 %v3064, %v2673
        %v3456 = vpack.c.b16 %v3065, %v2674
        %v3457 = vpack.c.b16 %v3066, %v2675
        %v3458 = vpack.c.b16 %v3067, %v2676
        %v3459 = vpack.c.b16 %v3068, %v2677
        %v3460 = vpack.c.b16 %v3069, %v2678
        %v3461 = vpack.c.b16 %v3070, %v2679
        %v3462 = vpack.c.b16 %v3071, %v2680
        %v3463 = vpack.c.b16 %v3072, %v2681
        %v3464 = vpack.c.b16 %v3073, %v2682
        %v3465 = vpack.c.b16 %v3074, %v2683
        %v3466 = vpack.c.b16 %v3075, %v2684
        %v3467 = vpack.c.b16 %v3076, %v2685
        %v3468 = vpack.c.b16 %v3077, %v2686
        %v3469 = vpack.c.b16 %v3078, %v2687
        %v3470 = vpack.c.b16 %v3079, %v2688
        %v3471 = vpack.c.b16 %v3080, %v2689
        %v3472 = vpack.c.b16 %v3081, %v2690
        %v3473 = vpack.c.b16 %v3082, %v2691
        %v3474 = vpack.c.b16 %v3083, %v2692
        %v3475 = vpack.c.b16 %v3084, %v2693
        %v3476 = vpack.c.b16 %v3085, %v2694
        %v3477 = vpack.c.b16 %v3086, %v2695
        %v3478 = vpack.c.b16 %v3087, %v2696
        %v3479 = vpack.c.b16 %v3088, %v2697
        %v3480 = vpack.c.b16 %v3089, %v2698
        %v3481 = vpack.c.b16 %v3090, %v2699
        %v3482 = vpack.c.b16 %v3091, %v2700
        %v3483 = vpack.c.b16 %v3092, %v2701
        %v3484 = vpack.c.b16 %v3093, %v2702
        %v3485 = vpack.c.b16 %v3094, %v2703
        %v3486 = vpack.c.b16 %v3095, %v2704
        %v3487 = vpack.c.b16 %v3096, %v2705
        %v3488 = vpack.c.b16 %v3097, %v2706
        %v3489 = vpack.c.b16 %v3098, %v2707
        %v3490 = vpack.c.b16 %v3099, %v2708
        %v3491 = vpack.c.b16 %v3100, %v2709
        %v3492 = vpack.c.b16 %v3101, %v2710
        %v3493 = vpack.c.b16 %v3102, %v2711
        %v3494 = vpack.c.b16 %v3103, %v2712
        %v3495 = vpack.c.b16 %v3104, %v2713
        %v3496 = vpack.c.b16 %v3105, %v2714
        %v3497 = vpack.c.b16 %v3106, %v2715
        %v3498 = vpack.c.b16 %v3107, %v2716
        %v3499 = vpack.c.b16 %v3108, %v2717
        %v3500 = vpack.c.b16 %v3109, %v2718
        %v3501 = vpack.c.b16 %v3110, %v2719
        %v3502 = vpack.c.b16 %v3111, %v2720
        %v3503 = vpack.c.b16 %v3112, %v2721
        %v3504 = vpack.c.b16 %v3113, %v2722
        %v3505 = vpack.c.b16 %v3114, %v2723
        %v3506 = vpack.c.b16 %v3115, %v2724
        %v3507 = vpack.c.b16 %v3116, %v2725
        %v3508 = vpack.c.b16 %v3117, %v2726
        %v3509 = vpack.c.b16 %v3118, %v2727
        %v3510 = vpack.c.b16 %v3119, %v2728
        %v3511 = vpack.c.b16 %v3120, %v2729
        %v3512 = vpack.c.b16 %v3121, %v2730
        %v3513 = vpack.c.b16 %v3122, %v2731
        %v3514 = vpack.c.b16 %v3123, %v2732
        %v3515 = vpack.c.b16 %v3124, %v2733
        %v3516 = vpack.c.b16 %v3125, %v2734
        %v3517 = vpack.c.b16 %v3126, %v2735
        %v3518 = vpack.c.b16 %v3127, %v2736
        %v3519 = vpack.c.b16 %v3128, %v2737
        %v3520 = vpack.c.b16 %v3129, %v2738
        %v3521 = vpack.c.b16 %v3130, %v2739
        %v3522 = vpack.c.b16 %v3131, %v2740
        %v3523 = vpack.c.b16 %v3132, %v2741
        %v3524 = vpack.c.b16 %v3133, %v2742
        %v3525 = vpack.c.b16 %v3134, %v2743
        %v3526 = vpack.c.b16 %v3135, %v2744
        %v3527 = vpack.c.b16 %v3136, %v2745
        %v3528 = vpack.c.b16 %v3137, %v2746
        %v3529 = vpack.c.b16 %v3138, %v2747
        %v3530 = vpack.c.b16 %v3139, %v2748
        %v3531 = vpack.c.b16 %v3140, %v2749
        %v3532 = vpack.c.b16 %v3141, %v2750
        %v3533 = vpack.c.b16 %v3142, %v2751
        %v3534 = vpack.c.b16 %v3143, %v2752
        %v3535 = vpack.c.b16 %v3144, %v2753
        %v3536 = vpack.c.b16 %v3145, %v2754
        %v3537 = vpack.c.b16 %v3146, %v2755
        %v3538 = vpack.c.b16 %v3147, %v2756
        %v3539 = vpack.c.b16 %v3148, %v2757
        %v3540 = vpack.c.b16 %v3149, %v2758
        %v3541 = vpack.c.b16 %v3150, %v2759
        %v3542 = vpack.c.b16 %v3151, %v2760
        %v3543 = vpack.c.b16 %v3152, %v2761
        %v3544 = vpack.c.b16 %v3153, %v2762
        %v3545 = vpack.c.b16 %v3154, %v2763
        %v3546 = vpack.c.b16 %v3155, %v2764
        %v3547 = vpack.c.b16 %v3156, %v2765
        %v3548 = vpack.c.b16 %v3157, %v2766
        %v3549 = vpack.c.b16 %v3158, %v2767
        %v3550 = vpack.c.b16 %v3159, %v2768
        %v3551 = vpack.c.b16 %v3160, %v2769
        %v3552 = vpack.c.b16 %v3161, %v2770
        %v3553 = vpack.c.b16 %v3162, %v2771
        %v3554 = vpack.c.b16 %v3163, %v2772
        %v3555 = vpack.c.b16 %v3164, %v2773
        %v3556 = vpack.c.b16 %v3165, %v2774
        %v3557 = vpack.c.b16 %v3166, %v2775
        %v3558 = vpack.c.b16 %v3167, %v2776
        %v3559 = vpack.c.b16 %v3168, %v2777
        %v3560 = vpack.c.b16 %v3169, %v2778
        %v3561 = vpack.c.b16 %v3170, %v2779
        %v3562 = vpack.c.b16 %v3171, %v2780
        %v3563 = vpack.c.b16 %v3172, %v2781
        %v3564 = vpack.c.b16 %v3173, %v2782
        %v3565 = vpack.c.b16 %v3174, %v2783
        %v3566 = vpack.c.b16 %v3175, %v2784
        %v3567 = vpack.c.b16 %v3176, %v2785
        %v3568 = vpack.c.b16 %v3177, %v2786
        %v3569 = vpack.c.b16 %v3178, %v2787
        %v3570 = vpack.c.b16 %v3179, %v2788
        %v3571 = vpack.c.b16 %v3180, %v2789
        %v3572 = vpack.c.b16 %v3181, %v2790
        %v3573 = vpack.c.b16 %v3182, %v2791
        %v3574 = vpack.c.b16 %v3183, %v2792
        %v3575 = vpack.c.b16 %v3184, %v2793
        %v3576 = vpack.c.b16 %v3185, %v2794
        %v3577 = vpack.c.b16 %v3186, %v2795
        %v3578 = vpack.c.b16 %v3187, %v2796
        %v3579 = vpack.c.b16 %v3188, %v2797
        %v3580 = vpack.c.b16 %v3189, %v2798
        %v3581 = vpack.c.b16 %v3190, %v2799
        %v3582 = vpack.c.b16 %v3191, %v2800
        %v3583 = vpack.c.b16 %v3192, %v2801
        %v3584 = vpack.c.b16 %v3193, %v2802
        %v3585 = vpack.c.b16 %v3194, %v2803
        %v3586 = vpack.c.b16 %v3195, %v2804
        %v3587 = vpack.c.b16 %v3196, %v2805
        %v3588 = vpack.c.b16 %v3197, %v2806
        %v3589 = vpack.c.b16 %v3198, %v2807
        %v3590 = vpack.c.b16 %v3199, %v2808
        %v3591 = vpack.c.b16 %v3200, %v2809
        %v3592 = vpack.c.b16 %v3201, %v2810
        %v3593 = vpack.c.b16 %v3202, %v2811
        %v3594 = vpack.c.b16 %v3203, %v2812
        %v3595 = vpack.c.b16 %v3204, %v2813
        %v3596 = vpack.c.b16 %v3205, %v2814
        %v3597 = vpack.c.b16 %v3206, %v2815
        %v3598 = vpack.c.b16 %v3207, %v2816
        %v3599 = vpack.c.b16 %v3208, %v2817
        %v3600 = vpack.c.b16 %v3209, %v2818
        %v3601 = vpack.c.b16 %v3210, %v2819
        %v3602 = vpack.c.b16 %v3211, %v2820
        %v3603 = vpack.c.b16 %v3212, %v2821
        %v3604 = vpack.c.b16 %v3213, %v2822
        %v3605 = vpack.c.b16 %v3214, %v2823
        %v3606 = vpack.c.b16 %v3215, %v2824
        %v3607 = vpack.c.b16 %v3216, %v2825
        %v3608 = vpack.c.b16 %v3217, %v2826
        %v3609 = vpack.c.b16 %v3218, %v2827
        %v3610 = vpack.c.b16 %v3219, %v2828
        %v3611 = vpack.c.b16 %v3220, %v2829
        %v3612 = vpack.c.b16 %v3221, %v2830
        %v3613 = vpack.c.b16 %v3222, %v2831
        %v3614 = vpack.c.b16 %v3223, %v2832
        %v3615 = vpack.c.b16 %v3224, %v2833
        %v3616 = vpack.c.b16 %v3225, %v2834
        %v3617 = vpack.c.b16 %v3226, %v2835
        %v3618 = vpack.c.b16 %v3227, %v2836
        %v3619 = vpack.c.b16 %v3228, %v2837
        %v3620 = vpack.c.b16 %v3229, %v2838
        %v3621 = vpack.c.b16 %v3230, %v2839
        %v3622 = vpack.c.b16 %v3231, %v2840
        %v3623 = vpack.c.b16 %v3232, %v2841
        %v3624 = vpack.c.b16 %v3233, %v2842
        %v3625 = vpack.c.b16 %v3234, %v2843
        %v3626 = vpack.c.b16 %v3235, %v2844
        %v3627 = vpack.c.b16 %v3236, %v2845
        %v3628 = vpack.c.b16 %v3237, %v2846
        %v3629 = vpack.c.b16 %v3238, %v2847
        %v3630 = vpack.c.b16 %v3239, %v2848
        %v3631 = vpack.c.b16 %v3240, %v2849
        %v3632 = vpack.c.b16 %v3241, %v2850
        %v3633 = vpack.c.b16 %v3242, %v2851
        %v3634 = vpack.c.b16 %v3243, %v2852
        %v3635 = vpack.c.b16 %v3244, %v2853
        %v3636 = vpack.c.b16 %v3245, %v2854
        %v3637 = vpack.c.b16 %v3246, %v2855
        %v3638 = vpack.c.b16 %v3247, %v2856
        %v3639 = vpack.c.b16 %v3248, %v2857
        %v3640 = vpack.c.b16 %v3249, %v2858
        %v3641 = vpack.c.b16 %v3250, %v2859
        %v3642 = vpack.c.b16 %v3251, %v2860
        %v3643 = vpack.c.b16 %v3252, %v2861
        %v3644 = vpack.c.b16 %v3253, %v2862
        %v3645 = vpack.c.b16 %v3254, %v2863
        %v3646 = vpack.c.b16 %v3255, %v2864
        %4038 = vmatpush.bf16.xpose.msra.mxu0 0
        %4039 = vmatpush.bf16.xpose.msra.mxu0 0
        %4040 = vmatpush.bf16.xpose.msra.mxu0 0
        %4041 = vmatpush.bf16.xpose.msra.mxu0 0
        %4042 = vmatpush.bf16.xpose.msra.mxu0 0
        %4043 = vmatpush.bf16.xpose.msra.mxu0 0
        %4044 = vmatpush.bf16.xpose.msra.mxu0 0
        %4045 = vmatpush.bf16.xpose.msra.mxu0 %v1299
        %4046 = vmatmul.bf16.gmra.mxu0 %v3256
        %v4047 = vpop.f32.mrf.mxu0
        %v4048 = vadd.f32 0.0, %v4047
        %v4049 = vpop.f32.mrf.mxu0
        %v4050 = vadd.f32 0.0, %v4049
        %4051 = vdwg.mxu0
        %4052 = vmatpush.bf16.xpose.msra.mxu0 0
        %4053 = vmatpush.bf16.xpose.msra.mxu0 0
        %4054 = vmatpush.bf16.xpose.msra.mxu0 0
        %4055 = vmatpush.bf16.xpose.msra.mxu0 0
        %4056 = vmatpush.bf16.xpose.msra.mxu0 0
        %4057 = vmatpush.bf16.xpose.msra.mxu0 0
        %4058 = vmatpush.bf16.xpose.msra.mxu0 0
        %4059 = vmatpush.bf16.xpose.msra.mxu0 %v1300
        %4060 = vmatmul.bf16.gmra.mxu0 %v3257
        %v4061 = vpop.f32.mrf.mxu0
        %v4062 = vadd.f32 %v4048, %v4061
        %v4063 = vpop.f32.mrf.mxu0
        %v4064 = vadd.f32 %v4050, %v4063
        %4065 = vdwg.mxu0
        %4066 = vmatpush.bf16.xpose.msra.mxu0 0
        %4067 = vmatpush.bf16.xpose.msra.mxu0 0
        %4068 = vmatpush.bf16.xpose.msra.mxu0 0
        %4069 = vmatpush.bf16.xpose.msra.mxu0 0
        %4070 = vmatpush.bf16.xpose.msra.mxu0 0
        %4071 = vmatpush.bf16.xpose.msra.mxu0 0
        %4072 = vmatpush.bf16.xpose.msra.mxu0 0
        %4073 = vmatpush.bf16.xpose.msra.mxu0 %v1301
        %4074 = vmatmul.bf16.gmra.mxu0 %v3258
        %v4075 = vpop.f32.mrf.mxu0
        %v4076 = vadd.f32 %v4062, %v4075
        %v4077 = vpop.f32.mrf.mxu0
        %v4078 = vadd.f32 %v4064, %v4077
        %4079 = vdwg.mxu0
        %4080 = vmatpush.bf16.xpose.msra.mxu0 0
        %4081 = vmatpush.bf16.xpose.msra.mxu0 0
        %4082 = vmatpush.bf16.xpose.msra.mxu0 0
        %4083 = vmatpush.bf16.xpose.msra.mxu0 0
        %4084 = vmatpush.bf16.xpose.msra.mxu0 0
        %4085 = vmatpush.bf16.xpose.msra.mxu0 0
        %4086 = vmatpush.bf16.xpose.msra.mxu0 0
        %4087 = vmatpush.bf16.xpose.msra.mxu0 %v1302
        %4088 = vmatmul.bf16.gmra.mxu0 %v3259
        %v4089 = vpop.f32.mrf.mxu0
        %v4090 = vadd.f32 %v4076, %v4089
        %v4091 = vpop.f32.mrf.mxu0
        %v4092 = vadd.f32 %v4078, %v4091
        %4093 = vdwg.mxu0
        %4094 = vmatpush.bf16.xpose.msra.mxu0 0
        %4095 = vmatpush.bf16.xpose.msra.mxu0 0
        %4096 = vmatpush.bf16.xpose.msra.mxu0 0
        %4097 = vmatpush.bf16.xpose.msra.mxu0 0
        %4098 = vmatpush.bf16.xpose.msra.mxu0 0
        %4099 = vmatpush.bf16.xpose.msra.mxu0 0
        %4100 = vmatpush.bf16.xpose.msra.mxu0 0
        %4101 = vmatpush.bf16.xpose.msra.mxu0 %v1303
        %4102 = vmatmul.bf16.gmra.mxu0 %v3260
        %v4103 = vpop.f32.mrf.mxu0
        %v4104 = vadd.f32 %v4090, %v4103
        %v4105 = vpop.f32.mrf.mxu0
        %v4106 = vadd.f32 %v4092, %v4105
        %4107 = vdwg.mxu0
        %4108 = vmatpush.bf16.xpose.msra.mxu0 0
        %4109 = vmatpush.bf16.xpose.msra.mxu0 0
        %4110 = vmatpush.bf16.xpose.msra.mxu0 0
        %4111 = vmatpush.bf16.xpose.msra.mxu0 0
        %4112 = vmatpush.bf16.xpose.msra.mxu0 0
        %4113 = vmatpush.bf16.xpose.msra.mxu0 0
        %4114 = vmatpush.bf16.xpose.msra.mxu0 0
        %4115 = vmatpush.bf16.xpose.msra.mxu0 %v1304
        %4116 = vmatmul.bf16.gmra.mxu0 %v3261
        %v4117 = vpop.f32.mrf.mxu0
        %v4118 = vadd.f32 %v4104, %v4117
        %v4119 = vpop.f32.mrf.mxu0
        %v4120 = vadd.f32 %v4106, %v4119
        %4121 = vdwg.mxu0
        %4122 = vmatpush.bf16.xpose.msra.mxu0 0
        %4123 = vmatpush.bf16.xpose.msra.mxu0 0
        %4124 = vmatpush.bf16.xpose.msra.mxu0 0
        %4125 = vmatpush.bf16.xpose.msra.mxu0 0
        %4126 = vmatpush.bf16.xpose.msra.mxu0 0
        %4127 = vmatpush.bf16.xpose.msra.mxu0 0
        %4128 = vmatpush.bf16.xpose.msra.mxu0 0
        %4129 = vmatpush.bf16.xpose.msra.mxu0 %v1305
        %4130 = vmatmul.bf16.gmra.mxu0 %v3262
        %v4131 = vpop.f32.mrf.mxu0
        %v4132 = vadd.f32 %v4118, %v4131
        %v4133 = vpop.f32.mrf.mxu0
        %v4134 = vadd.f32 %v4120, %v4133
        %4135 = vdwg.mxu0
        %4136 = vmatpush.bf16.xpose.msra.mxu0 0
        %4137 = vmatpush.bf16.xpose.msra.mxu0 0
        %4138 = vmatpush.bf16.xpose.msra.mxu0 0
        %4139 = vmatpush.bf16.xpose.msra.mxu0 0
        %4140 = vmatpush.bf16.xpose.msra.mxu0 0
        %4141 = vmatpush.bf16.xpose.msra.mxu0 0
        %4142 = vmatpush.bf16.xpose.msra.mxu0 0
        %4143 = vmatpush.bf16.xpose.msra.mxu0 %v1306
        %4144 = vmatmul.bf16.gmra.mxu0 %v3263
        %v4145 = vpop.f32.mrf.mxu0
        %v4146 = vadd.f32 %v4132, %v4145
        %v4147 = vpop.f32.mrf.mxu0
        %v4148 = vadd.f32 %v4134, %v4147
        %4149 = vdwg.mxu0
        %4150 = vmatpush.bf16.xpose.msra.mxu0 0
        %4151 = vmatpush.bf16.xpose.msra.mxu0 0
        %4152 = vmatpush.bf16.xpose.msra.mxu0 0
        %4153 = vmatpush.bf16.xpose.msra.mxu0 0
        %4154 = vmatpush.bf16.xpose.msra.mxu0 0
        %4155 = vmatpush.bf16.xpose.msra.mxu0 0
        %4156 = vmatpush.bf16.xpose.msra.mxu0 0
        %4157 = vmatpush.bf16.xpose.msra.mxu0 %v1307
        %4158 = vmatmul.bf16.gmra.mxu0 %v3264
        %v4159 = vpop.f32.mrf.mxu0
        %v4160 = vadd.f32 %v4146, %v4159
        %v4161 = vpop.f32.mrf.mxu0
        %v4162 = vadd.f32 %v4148, %v4161
        %4163 = vdwg.mxu0
        %4164 = vmatpush.bf16.xpose.msra.mxu0 0
        %4165 = vmatpush.bf16.xpose.msra.mxu0 0
        %4166 = vmatpush.bf16.xpose.msra.mxu0 0
        %4167 = vmatpush.bf16.xpose.msra.mxu0 0
        %4168 = vmatpush.bf16.xpose.msra.mxu0 0
        %4169 = vmatpush.bf16.xpose.msra.mxu0 0
        %4170 = vmatpush.bf16.xpose.msra.mxu0 0
        %4171 = vmatpush.bf16.xpose.msra.mxu0 %v1308
        %4172 = vmatmul.bf16.gmra.mxu0 %v3265
        %v4173 = vpop.f32.mrf.mxu0
        %v4174 = vadd.f32 %v4160, %v4173
        %v4175 = vpop.f32.mrf.mxu0
        %v4176 = vadd.f32 %v4162, %v4175
        %4177 = vdwg.mxu0
        %4178 = vmatpush.bf16.xpose.msra.mxu0 0
        %4179 = vmatpush.bf16.xpose.msra.mxu0 0
        %4180 = vmatpush.bf16.xpose.msra.mxu0 0
        %4181 = vmatpush.bf16.xpose.msra.mxu0 0
        %4182 = vmatpush.bf16.xpose.msra.mxu0 0
        %4183 = vmatpush.bf16.xpose.msra.mxu0 0
        %4184 = vmatpush.bf16.xpose.msra.mxu0 0
        %4185 = vmatpush.bf16.xpose.msra.mxu0 %v1309
        %4186 = vmatmul.bf16.gmra.mxu0 %v3266
        %v4187 = vpop.f32.mrf.mxu0
        %v4188 = vadd.f32 %v4174, %v4187
        %v4189 = vpop.f32.mrf.mxu0
        %v4190 = vadd.f32 %v4176, %v4189
        %4191 = vdwg.mxu0
        %4192 = vmatpush.bf16.xpose.msra.mxu0 0
        %4193 = vmatpush.bf16.xpose.msra.mxu0 0
        %4194 = vmatpush.bf16.xpose.msra.mxu0 0
        %4195 = vmatpush.bf16.xpose.msra.mxu0 0
        %4196 = vmatpush.bf16.xpose.msra.mxu0 0
        %4197 = vmatpush.bf16.xpose.msra.mxu0 0
        %4198 = vmatpush.bf16.xpose.msra.mxu0 0
        %4199 = vmatpush.bf16.xpose.msra.mxu0 %v1310
        %4200 = vmatmul.bf16.gmra.mxu0 %v3267
        %v4201 = vpop.f32.mrf.mxu0
        %v4202 = vadd.f32 %v4188, %v4201
        %v4203 = vpop.f32.mrf.mxu0
        %v4204 = vadd.f32 %v4190, %v4203
        %4205 = vdwg.mxu0
        %4206 = vmatpush.bf16.xpose.msra.mxu0 0
        %4207 = vmatpush.bf16.xpose.msra.mxu0 0
        %4208 = vmatpush.bf16.xpose.msra.mxu0 0
        %4209 = vmatpush.bf16.xpose.msra.mxu0 0
        %4210 = vmatpush.bf16.xpose.msra.mxu0 0
        %4211 = vmatpush.bf16.xpose.msra.mxu0 0
        %4212 = vmatpush.bf16.xpose.msra.mxu0 0
        %4213 = vmatpush.bf16.xpose.msra.mxu0 %v1311
        %4214 = vmatmul.bf16.gmra.mxu0 %v3268
        %v4215 = vpop.f32.mrf.mxu0
        %v4216 = vadd.f32 %v4202, %v4215
        %v4217 = vpop.f32.mrf.mxu0
        %v4218 = vadd.f32 %v4204, %v4217
        %4219 = vdwg.mxu0
        %4220 = vmatpush.bf16.xpose.msra.mxu0 0
        %4221 = vmatpush.bf16.xpose.msra.mxu0 0
        %4222 = vmatpush.bf16.xpose.msra.mxu0 0
        %4223 = vmatpush.bf16.xpose.msra.mxu0 0
        %4224 = vmatpush.bf16.xpose.msra.mxu0 0
        %4225 = vmatpush.bf16.xpose.msra.mxu0 0
        %4226 = vmatpush.bf16.xpose.msra.mxu0 0
        %4227 = vmatpush.bf16.xpose.msra.mxu0 %v1312
        %4228 = vmatmul.bf16.gmra.mxu0 %v3269
        %v4229 = vpop.f32.mrf.mxu0
        %v4230 = vadd.f32 %v4216, %v4229
        %v4231 = vpop.f32.mrf.mxu0
        %v4232 = vadd.f32 %v4218, %v4231
        %4233 = vdwg.mxu0
        %4234 = vmatpush.bf16.xpose.msra.mxu0 0
        %4235 = vmatpush.bf16.xpose.msra.mxu0 0
        %4236 = vmatpush.bf16.xpose.msra.mxu0 0
        %4237 = vmatpush.bf16.xpose.msra.mxu0 0
        %4238 = vmatpush.bf16.xpose.msra.mxu0 0
        %4239 = vmatpush.bf16.xpose.msra.mxu0 0
        %4240 = vmatpush.bf16.xpose.msra.mxu0 0
        %4241 = vmatpush.bf16.xpose.msra.mxu0 %v1313
        %4242 = vmatmul.bf16.gmra.mxu0 %v3270
        %v4243 = vpop.f32.mrf.mxu0
        %v4244 = vadd.f32 %v4230, %v4243
        %v4245 = vpop.f32.mrf.mxu0
        %v4246 = vadd.f32 %v4232, %v4245
        %4247 = vdwg.mxu0
        %4248 = vmatpush.bf16.xpose.msra.mxu0 0
        %4249 = vmatpush.bf16.xpose.msra.mxu0 0
        %4250 = vmatpush.bf16.xpose.msra.mxu0 0
        %4251 = vmatpush.bf16.xpose.msra.mxu0 0
        %4252 = vmatpush.bf16.xpose.msra.mxu0 0
        %4253 = vmatpush.bf16.xpose.msra.mxu0 0
        %4254 = vmatpush.bf16.xpose.msra.mxu0 0
        %4255 = vmatpush.bf16.xpose.msra.mxu0 %v1314
        %4256 = vmatmul.bf16.gmra.mxu0 %v3271
        %v4257 = vpop.f32.mrf.mxu0
        %v4258 = vadd.f32 %v4244, %v4257
        %v4259 = vpop.f32.mrf.mxu0
        %v4260 = vadd.f32 %v4246, %v4259
        %4261 = vdwg.mxu0
        %4262 = vmatpush.bf16.xpose.msra.mxu0 0
        %4263 = vmatpush.bf16.xpose.msra.mxu0 0
        %4264 = vmatpush.bf16.xpose.msra.mxu0 0
        %4265 = vmatpush.bf16.xpose.msra.mxu0 0
        %4266 = vmatpush.bf16.xpose.msra.mxu0 0
        %4267 = vmatpush.bf16.xpose.msra.mxu0 0
        %4268 = vmatpush.bf16.xpose.msra.mxu0 0
        %4269 = vmatpush.bf16.xpose.msra.mxu0 %v1315
        %4270 = vmatmul.bf16.gmra.mxu0 %v3272
        %v4271 = vpop.f32.mrf.mxu0
        %v4272 = vadd.f32 %v4258, %v4271
        %v4273 = vpop.f32.mrf.mxu0
        %v4274 = vadd.f32 %v4260, %v4273
        %4275 = vdwg.mxu0
        %4276 = vmatpush.bf16.xpose.msra.mxu0 0
        %4277 = vmatpush.bf16.xpose.msra.mxu0 0
        %4278 = vmatpush.bf16.xpose.msra.mxu0 0
        %4279 = vmatpush.bf16.xpose.msra.mxu0 0
        %4280 = vmatpush.bf16.xpose.msra.mxu0 0
        %4281 = vmatpush.bf16.xpose.msra.mxu0 0
        %4282 = vmatpush.bf16.xpose.msra.mxu0 0
        %4283 = vmatpush.bf16.xpose.msra.mxu0 %v1316
        %4284 = vmatmul.bf16.gmra.mxu0 %v3273
        %v4285 = vpop.f32.mrf.mxu0
        %v4286 = vadd.f32 %v4272, %v4285
        %v4287 = vpop.f32.mrf.mxu0
        %v4288 = vadd.f32 %v4274, %v4287
        %4289 = vdwg.mxu0
        %4290 = vmatpush.bf16.xpose.msra.mxu0 0
        %4291 = vmatpush.bf16.xpose.msra.mxu0 0
        %4292 = vmatpush.bf16.xpose.msra.mxu0 0
        %4293 = vmatpush.bf16.xpose.msra.mxu0 0
        %4294 = vmatpush.bf16.xpose.msra.mxu0 0
        %4295 = vmatpush.bf16.xpose.msra.mxu0 0
        %4296 = vmatpush.bf16.xpose.msra.mxu0 0
        %4297 = vmatpush.bf16.xpose.msra.mxu0 %v1317
        %4298 = vmatmul.bf16.gmra.mxu0 %v3274
        %v4299 = vpop.f32.mrf.mxu0
        %v4300 = vadd.f32 %v4286, %v4299
        %v4301 = vpop.f32.mrf.mxu0
        %v4302 = vadd.f32 %v4288, %v4301
        %4303 = vdwg.mxu0
        %4304 = vmatpush.bf16.xpose.msra.mxu0 0
        %4305 = vmatpush.bf16.xpose.msra.mxu0 0
        %4306 = vmatpush.bf16.xpose.msra.mxu0 0
        %4307 = vmatpush.bf16.xpose.msra.mxu0 0
        %4308 = vmatpush.bf16.xpose.msra.mxu0 0
        %4309 = vmatpush.bf16.xpose.msra.mxu0 0
        %4310 = vmatpush.bf16.xpose.msra.mxu0 0
        %4311 = vmatpush.bf16.xpose.msra.mxu0 %v1318
        %4312 = vmatmul.bf16.gmra.mxu0 %v3275
        %v4313 = vpop.f32.mrf.mxu0
        %v4314 = vadd.f32 %v4300, %v4313
        %v4315 = vpop.f32.mrf.mxu0
        %v4316 = vadd.f32 %v4302, %v4315
        %4317 = vdwg.mxu0
        %4318 = vmatpush.bf16.xpose.msra.mxu0 0
        %4319 = vmatpush.bf16.xpose.msra.mxu0 0
        %4320 = vmatpush.bf16.xpose.msra.mxu0 0
        %4321 = vmatpush.bf16.xpose.msra.mxu0 0
        %4322 = vmatpush.bf16.xpose.msra.mxu0 0
        %4323 = vmatpush.bf16.xpose.msra.mxu0 0
        %4324 = vmatpush.bf16.xpose.msra.mxu0 0
        %4325 = vmatpush.bf16.xpose.msra.mxu0 %v1319
        %4326 = vmatmul.bf16.gmra.mxu0 %v3276
        %v4327 = vpop.f32.mrf.mxu0
        %v4328 = vadd.f32 %v4314, %v4327
        %v4329 = vpop.f32.mrf.mxu0
        %v4330 = vadd.f32 %v4316, %v4329
        %4331 = vdwg.mxu0
        %4332 = vmatpush.bf16.xpose.msra.mxu0 0
        %4333 = vmatpush.bf16.xpose.msra.mxu0 0
        %4334 = vmatpush.bf16.xpose.msra.mxu0 0
        %4335 = vmatpush.bf16.xpose.msra.mxu0 0
        %4336 = vmatpush.bf16.xpose.msra.mxu0 0
        %4337 = vmatpush.bf16.xpose.msra.mxu0 0
        %4338 = vmatpush.bf16.xpose.msra.mxu0 0
        %4339 = vmatpush.bf16.xpose.msra.mxu0 %v1320
        %4340 = vmatmul.bf16.gmra.mxu0 %v3277
        %v4341 = vpop.f32.mrf.mxu0
        %v4342 = vadd.f32 %v4328, %v4341
        %v4343 = vpop.f32.mrf.mxu0
        %v4344 = vadd.f32 %v4330, %v4343
        %4345 = vdwg.mxu0
        %4346 = vmatpush.bf16.xpose.msra.mxu0 0
        %4347 = vmatpush.bf16.xpose.msra.mxu0 0
        %4348 = vmatpush.bf16.xpose.msra.mxu0 0
        %4349 = vmatpush.bf16.xpose.msra.mxu0 0
        %4350 = vmatpush.bf16.xpose.msra.mxu0 0
        %4351 = vmatpush.bf16.xpose.msra.mxu0 0
        %4352 = vmatpush.bf16.xpose.msra.mxu0 0
        %4353 = vmatpush.bf16.xpose.msra.mxu0 %v1321
        %4354 = vmatmul.bf16.gmra.mxu0 %v3278
        %v4355 = vpop.f32.mrf.mxu0
        %v4356 = vadd.f32 %v4342, %v4355
        %v4357 = vpop.f32.mrf.mxu0
        %v4358 = vadd.f32 %v4344, %v4357
        %4359 = vdwg.mxu0
        %4360 = vmatpush.bf16.xpose.msra.mxu0 0
        %4361 = vmatpush.bf16.xpose.msra.mxu0 0
        %4362 = vmatpush.bf16.xpose.msra.mxu0 0
        %4363 = vmatpush.bf16.xpose.msra.mxu0 0
        %4364 = vmatpush.bf16.xpose.msra.mxu0 0
        %4365 = vmatpush.bf16.xpose.msra.mxu0 0
        %4366 = vmatpush.bf16.xpose.msra.mxu0 0
        %4367 = vmatpush.bf16.xpose.msra.mxu0 %v1322
        %4368 = vmatmul.bf16.gmra.mxu0 %v3279
        %v4369 = vpop.f32.mrf.mxu0
        %v4370 = vadd.f32 %v4356, %v4369
        %v4371 = vpop.f32.mrf.mxu0
        %v4372 = vadd.f32 %v4358, %v4371
        %4373 = vdwg.mxu0
        %4374 = vmatpush.bf16.xpose.msra.mxu0 0
        %4375 = vmatpush.bf16.xpose.msra.mxu0 0
        %4376 = vmatpush.bf16.xpose.msra.mxu0 0
        %4377 = vmatpush.bf16.xpose.msra.mxu0 0
        %4378 = vmatpush.bf16.xpose.msra.mxu0 0
        %4379 = vmatpush.bf16.xpose.msra.mxu0 0
        %4380 = vmatpush.bf16.xpose.msra.mxu0 0
        %4381 = vmatpush.bf16.xpose.msra.mxu0 %v1323
        %4382 = vmatmul.bf16.gmra.mxu0 %v3280
        %v4383 = vpop.f32.mrf.mxu0
        %v4384 = vadd.f32 %v4370, %v4383
        %v4385 = vpop.f32.mrf.mxu0
        %v4386 = vadd.f32 %v4372, %v4385
        %4387 = vdwg.mxu0
        %4388 = vmatpush.bf16.xpose.msra.mxu0 0
        %4389 = vmatpush.bf16.xpose.msra.mxu0 0
        %4390 = vmatpush.bf16.xpose.msra.mxu0 0
        %4391 = vmatpush.bf16.xpose.msra.mxu0 0
        %4392 = vmatpush.bf16.xpose.msra.mxu0 0
        %4393 = vmatpush.bf16.xpose.msra.mxu0 0
        %4394 = vmatpush.bf16.xpose.msra.mxu0 0
        %4395 = vmatpush.bf16.xpose.msra.mxu0 %v1324
        %4396 = vmatmul.bf16.gmra.mxu0 %v3281
        %v4397 = vpop.f32.mrf.mxu0
        %v4398 = vadd.f32 %v4384, %v4397
        %v4399 = vpop.f32.mrf.mxu0
        %v4400 = vadd.f32 %v4386, %v4399
        %4401 = vdwg.mxu0
        %4402 = vmatpush.bf16.xpose.msra.mxu0 0
        %4403 = vmatpush.bf16.xpose.msra.mxu0 0
        %4404 = vmatpush.bf16.xpose.msra.mxu0 0
        %4405 = vmatpush.bf16.xpose.msra.mxu0 0
        %4406 = vmatpush.bf16.xpose.msra.mxu0 0
        %4407 = vmatpush.bf16.xpose.msra.mxu0 0
        %4408 = vmatpush.bf16.xpose.msra.mxu0 0
        %4409 = vmatpush.bf16.xpose.msra.mxu0 %v1325
        %4410 = vmatmul.bf16.gmra.mxu0 %v3282
        %v4411 = vpop.f32.mrf.mxu0
        %v4412 = vadd.f32 %v4398, %v4411
        %v4413 = vpop.f32.mrf.mxu0
        %v4414 = vadd.f32 %v4400, %v4413
        %4415 = vdwg.mxu0
        %4416 = vmatpush.bf16.xpose.msra.mxu0 0
        %4417 = vmatpush.bf16.xpose.msra.mxu0 0
        %4418 = vmatpush.bf16.xpose.msra.mxu0 0
        %4419 = vmatpush.bf16.xpose.msra.mxu0 0
        %4420 = vmatpush.bf16.xpose.msra.mxu0 0
        %4421 = vmatpush.bf16.xpose.msra.mxu0 0
        %4422 = vmatpush.bf16.xpose.msra.mxu0 0
        %4423 = vmatpush.bf16.xpose.msra.mxu0 %v1326
        %4424 = vmatmul.bf16.gmra.mxu0 %v3283
        %v4425 = vpop.f32.mrf.mxu0
        %v4426 = vadd.f32 %v4412, %v4425
        %v4427 = vpop.f32.mrf.mxu0
        %v4428 = vadd.f32 %v4414, %v4427
        %4429 = vdwg.mxu0
        %4430 = vmatpush.bf16.xpose.msra.mxu0 0
        %4431 = vmatpush.bf16.xpose.msra.mxu0 0
        %4432 = vmatpush.bf16.xpose.msra.mxu0 0
        %4433 = vmatpush.bf16.xpose.msra.mxu0 0
        %4434 = vmatpush.bf16.xpose.msra.mxu0 0
        %4435 = vmatpush.bf16.xpose.msra.mxu0 0
        %4436 = vmatpush.bf16.xpose.msra.mxu0 0
        %4437 = vmatpush.bf16.xpose.msra.mxu0 %v1327
        %4438 = vmatmul.bf16.gmra.mxu0 %v3284
        %v4439 = vpop.f32.mrf.mxu0
        %v4440 = vadd.f32 %v4426, %v4439
        %v4441 = vpop.f32.mrf.mxu0
        %v4442 = vadd.f32 %v4428, %v4441
        %4443 = vdwg.mxu0
        %4444 = vmatpush.bf16.xpose.msra.mxu0 0
        %4445 = vmatpush.bf16.xpose.msra.mxu0 0
        %4446 = vmatpush.bf16.xpose.msra.mxu0 0
        %4447 = vmatpush.bf16.xpose.msra.mxu0 0
        %4448 = vmatpush.bf16.xpose.msra.mxu0 0
        %4449 = vmatpush.bf16.xpose.msra.mxu0 0
        %4450 = vmatpush.bf16.xpose.msra.mxu0 0
        %4451 = vmatpush.bf16.xpose.msra.mxu0 %v1328
        %4452 = vmatmul.bf16.gmra.mxu0 %v3285
        %v4453 = vpop.f32.mrf.mxu0
        %v4454 = vadd.f32 %v4440, %v4453
        %v4455 = vpop.f32.mrf.mxu0
        %v4456 = vadd.f32 %v4442, %v4455
        %4457 = vdwg.mxu0
        %4458 = vmatpush.bf16.xpose.msra.mxu0 0
        %4459 = vmatpush.bf16.xpose.msra.mxu0 0
        %4460 = vmatpush.bf16.xpose.msra.mxu0 0
        %4461 = vmatpush.bf16.xpose.msra.mxu0 0
        %4462 = vmatpush.bf16.xpose.msra.mxu0 0
        %4463 = vmatpush.bf16.xpose.msra.mxu0 0
        %4464 = vmatpush.bf16.xpose.msra.mxu0 0
        %4465 = vmatpush.bf16.xpose.msra.mxu0 %v1329
        %4466 = vmatmul.bf16.gmra.mxu0 %v3286
        %v4467 = vpop.f32.mrf.mxu0
        %v4468 = vadd.f32 %v4454, %v4467
        %v4469 = vpop.f32.mrf.mxu0
        %v4470 = vadd.f32 %v4456, %v4469
        %4471 = vdwg.mxu0
        %4472 = vmatpush.bf16.xpose.msra.mxu0 0
        %4473 = vmatpush.bf16.xpose.msra.mxu0 0
        %4474 = vmatpush.bf16.xpose.msra.mxu0 0
        %4475 = vmatpush.bf16.xpose.msra.mxu0 0
        %4476 = vmatpush.bf16.xpose.msra.mxu0 0
        %4477 = vmatpush.bf16.xpose.msra.mxu0 0
        %4478 = vmatpush.bf16.xpose.msra.mxu0 0
        %4479 = vmatpush.bf16.xpose.msra.mxu0 %v1330
        %4480 = vmatmul.bf16.gmra.mxu0 %v3287
        %v4481 = vpop.f32.mrf.mxu0
        %v4482 = vadd.f32 %v4468, %v4481
        %v4483 = vpop.f32.mrf.mxu0
        %v4484 = vadd.f32 %v4470, %v4483
        %4485 = vdwg.mxu0
        %4486 = vmatpush.bf16.xpose.msra.mxu0 0
        %4487 = vmatpush.bf16.xpose.msra.mxu0 0
        %4488 = vmatpush.bf16.xpose.msra.mxu0 0
        %4489 = vmatpush.bf16.xpose.msra.mxu0 0
        %4490 = vmatpush.bf16.xpose.msra.mxu0 0
        %4491 = vmatpush.bf16.xpose.msra.mxu0 0
        %4492 = vmatpush.bf16.xpose.msra.mxu0 0
        %4493 = vmatpush.bf16.xpose.msra.mxu0 %v1331
        %4494 = vmatmul.bf16.gmra.mxu0 %v3288
        %v4495 = vpop.f32.mrf.mxu0
        %v4496 = vadd.f32 %v4482, %v4495
        %v4497 = vpop.f32.mrf.mxu0
        %v4498 = vadd.f32 %v4484, %v4497
        %4499 = vdwg.mxu0
        %4500 = vmatpush.bf16.xpose.msra.mxu0 0
        %4501 = vmatpush.bf16.xpose.msra.mxu0 0
        %4502 = vmatpush.bf16.xpose.msra.mxu0 0
        %4503 = vmatpush.bf16.xpose.msra.mxu0 0
        %4504 = vmatpush.bf16.xpose.msra.mxu0 0
        %4505 = vmatpush.bf16.xpose.msra.mxu0 0
        %4506 = vmatpush.bf16.xpose.msra.mxu0 0
        %4507 = vmatpush.bf16.xpose.msra.mxu0 %v1332
        %4508 = vmatmul.bf16.gmra.mxu0 %v3289
        %v4509 = vpop.f32.mrf.mxu0
        %v4510 = vadd.f32 %v4496, %v4509
        %v4511 = vpop.f32.mrf.mxu0
        %v4512 = vadd.f32 %v4498, %v4511
        %4513 = vdwg.mxu0
        %4514 = vmatpush.bf16.xpose.msra.mxu0 0
        %4515 = vmatpush.bf16.xpose.msra.mxu0 0
        %4516 = vmatpush.bf16.xpose.msra.mxu0 0
        %4517 = vmatpush.bf16.xpose.msra.mxu0 0
        %4518 = vmatpush.bf16.xpose.msra.mxu0 0
        %4519 = vmatpush.bf16.xpose.msra.mxu0 0
        %4520 = vmatpush.bf16.xpose.msra.mxu0 0
        %4521 = vmatpush.bf16.xpose.msra.mxu0 %v1333
        %4522 = vmatmul.bf16.gmra.mxu0 %v3290
        %v4523 = vpop.f32.mrf.mxu0
        %v4524 = vadd.f32 %v4510, %v4523
        %v4525 = vpop.f32.mrf.mxu0
        %v4526 = vadd.f32 %v4512, %v4525
        %4527 = vdwg.mxu0
        %4528 = vmatpush.bf16.xpose.msra.mxu0 0
        %4529 = vmatpush.bf16.xpose.msra.mxu0 0
        %4530 = vmatpush.bf16.xpose.msra.mxu0 0
        %4531 = vmatpush.bf16.xpose.msra.mxu0 0
        %4532 = vmatpush.bf16.xpose.msra.mxu0 0
        %4533 = vmatpush.bf16.xpose.msra.mxu0 0
        %4534 = vmatpush.bf16.xpose.msra.mxu0 0
        %4535 = vmatpush.bf16.xpose.msra.mxu0 %v1334
        %4536 = vmatmul.bf16.gmra.mxu0 %v3291
        %v4537 = vpop.f32.mrf.mxu0
        %v4538 = vadd.f32 %v4524, %v4537
        %v4539 = vpop.f32.mrf.mxu0
        %v4540 = vadd.f32 %v4526, %v4539
        %4541 = vdwg.mxu0
        %4542 = vmatpush.bf16.xpose.msra.mxu0 0
        %4543 = vmatpush.bf16.xpose.msra.mxu0 0
        %4544 = vmatpush.bf16.xpose.msra.mxu0 0
        %4545 = vmatpush.bf16.xpose.msra.mxu0 0
        %4546 = vmatpush.bf16.xpose.msra.mxu0 0
        %4547 = vmatpush.bf16.xpose.msra.mxu0 0
        %4548 = vmatpush.bf16.xpose.msra.mxu0 0
        %4549 = vmatpush.bf16.xpose.msra.mxu0 %v1335
        %4550 = vmatmul.bf16.gmra.mxu0 %v3292
        %v4551 = vpop.f32.mrf.mxu0
        %v4552 = vadd.f32 %v4538, %v4551
        %v4553 = vpop.f32.mrf.mxu0
        %v4554 = vadd.f32 %v4540, %v4553
        %4555 = vdwg.mxu0
        %4556 = vmatpush.bf16.xpose.msra.mxu0 0
        %4557 = vmatpush.bf16.xpose.msra.mxu0 0
        %4558 = vmatpush.bf16.xpose.msra.mxu0 0
        %4559 = vmatpush.bf16.xpose.msra.mxu0 0
        %4560 = vmatpush.bf16.xpose.msra.mxu0 0
        %4561 = vmatpush.bf16.xpose.msra.mxu0 0
        %4562 = vmatpush.bf16.xpose.msra.mxu0 0
        %4563 = vmatpush.bf16.xpose.msra.mxu0 %v1336
        %4564 = vmatmul.bf16.gmra.mxu0 %v3293
        %v4565 = vpop.f32.mrf.mxu0
        %v4566 = vadd.f32 %v4552, %v4565
        %v4567 = vpop.f32.mrf.mxu0
        %v4568 = vadd.f32 %v4554, %v4567
        %4569 = vdwg.mxu0
        %4570 = vmatpush.bf16.xpose.msra.mxu0 0
        %4571 = vmatpush.bf16.xpose.msra.mxu0 0
        %4572 = vmatpush.bf16.xpose.msra.mxu0 0
        %4573 = vmatpush.bf16.xpose.msra.mxu0 0
        %4574 = vmatpush.bf16.xpose.msra.mxu0 0
        %4575 = vmatpush.bf16.xpose.msra.mxu0 0
        %4576 = vmatpush.bf16.xpose.msra.mxu0 0
        %4577 = vmatpush.bf16.xpose.msra.mxu0 %v1337
        %4578 = vmatmul.bf16.gmra.mxu0 %v3294
        %v4579 = vpop.f32.mrf.mxu0
        %v4580 = vadd.f32 %v4566, %v4579
        %v4581 = vpop.f32.mrf.mxu0
        %v4582 = vadd.f32 %v4568, %v4581
        %4583 = vdwg.mxu0
        %4584 = vmatpush.bf16.xpose.msra.mxu0 0
        %4585 = vmatpush.bf16.xpose.msra.mxu0 0
        %4586 = vmatpush.bf16.xpose.msra.mxu0 0
        %4587 = vmatpush.bf16.xpose.msra.mxu0 0
        %4588 = vmatpush.bf16.xpose.msra.mxu0 0
        %4589 = vmatpush.bf16.xpose.msra.mxu0 0
        %4590 = vmatpush.bf16.xpose.msra.mxu0 0
        %4591 = vmatpush.bf16.xpose.msra.mxu0 %v1338
        %4592 = vmatmul.bf16.gmra.mxu0 %v3295
        %v4593 = vpop.f32.mrf.mxu0
        %v4594 = vadd.f32 %v4580, %v4593
        %v4595 = vpop.f32.mrf.mxu0
        %v4596 = vadd.f32 %v4582, %v4595
        %4597 = vdwg.mxu0
        %4598 = vmatpush.bf16.xpose.msra.mxu0 0
        %4599 = vmatpush.bf16.xpose.msra.mxu0 0
        %4600 = vmatpush.bf16.xpose.msra.mxu0 0
        %4601 = vmatpush.bf16.xpose.msra.mxu0 0
        %4602 = vmatpush.bf16.xpose.msra.mxu0 0
        %4603 = vmatpush.bf16.xpose.msra.mxu0 0
        %4604 = vmatpush.bf16.xpose.msra.mxu0 0
        %4605 = vmatpush.bf16.xpose.msra.mxu0 %v1339
        %4606 = vmatmul.bf16.gmra.mxu0 %v3296
        %v4607 = vpop.f32.mrf.mxu0
        %v4608 = vadd.f32 %v4594, %v4607
        %v4609 = vpop.f32.mrf.mxu0
        %v4610 = vadd.f32 %v4596, %v4609
        %4611 = vdwg.mxu0
        %4612 = vmatpush.bf16.xpose.msra.mxu0 0
        %4613 = vmatpush.bf16.xpose.msra.mxu0 0
        %4614 = vmatpush.bf16.xpose.msra.mxu0 0
        %4615 = vmatpush.bf16.xpose.msra.mxu0 0
        %4616 = vmatpush.bf16.xpose.msra.mxu0 0
        %4617 = vmatpush.bf16.xpose.msra.mxu0 0
        %4618 = vmatpush.bf16.xpose.msra.mxu0 0
        %4619 = vmatpush.bf16.xpose.msra.mxu0 %v1340
        %4620 = vmatmul.bf16.gmra.mxu0 %v3297
        %v4621 = vpop.f32.mrf.mxu0
        %v4622 = vadd.f32 %v4608, %v4621
        %v4623 = vpop.f32.mrf.mxu0
        %v4624 = vadd.f32 %v4610, %v4623
        %4625 = vdwg.mxu0
        %4626 = vmatpush.bf16.xpose.msra.mxu0 0
        %4627 = vmatpush.bf16.xpose.msra.mxu0 0
        %4628 = vmatpush.bf16.xpose.msra.mxu0 0
        %4629 = vmatpush.bf16.xpose.msra.mxu0 0
        %4630 = vmatpush.bf16.xpose.msra.mxu0 0
        %4631 = vmatpush.bf16.xpose.msra.mxu0 0
        %4632 = vmatpush.bf16.xpose.msra.mxu0 0
        %4633 = vmatpush.bf16.xpose.msra.mxu0 %v1341
        %4634 = vmatmul.bf16.gmra.mxu0 %v3298
        %v4635 = vpop.f32.mrf.mxu0
        %v4636 = vadd.f32 %v4622, %v4635
        %v4637 = vpop.f32.mrf.mxu0
        %v4638 = vadd.f32 %v4624, %v4637
        %4639 = vdwg.mxu0
        %4640 = vmatpush.bf16.xpose.msra.mxu0 0
        %4641 = vmatpush.bf16.xpose.msra.mxu0 0
        %4642 = vmatpush.bf16.xpose.msra.mxu0 0
        %4643 = vmatpush.bf16.xpose.msra.mxu0 0
        %4644 = vmatpush.bf16.xpose.msra.mxu0 0
        %4645 = vmatpush.bf16.xpose.msra.mxu0 0
        %4646 = vmatpush.bf16.xpose.msra.mxu0 0
        %4647 = vmatpush.bf16.xpose.msra.mxu0 %v1342
        %4648 = vmatmul.bf16.gmra.mxu0 %v3299
        %v4649 = vpop.f32.mrf.mxu0
        %v4650 = vadd.f32 %v4636, %v4649
        %v4651 = vpop.f32.mrf.mxu0
        %v4652 = vadd.f32 %v4638, %v4651
        %4653 = vdwg.mxu0
        %4654 = vmatpush.bf16.xpose.msra.mxu0 0
        %4655 = vmatpush.bf16.xpose.msra.mxu0 0
        %4656 = vmatpush.bf16.xpose.msra.mxu0 0
        %4657 = vmatpush.bf16.xpose.msra.mxu0 0
        %4658 = vmatpush.bf16.xpose.msra.mxu0 0
        %4659 = vmatpush.bf16.xpose.msra.mxu0 0
        %4660 = vmatpush.bf16.xpose.msra.mxu0 0
        %4661 = vmatpush.bf16.xpose.msra.mxu0 %v1343
        %4662 = vmatmul.bf16.gmra.mxu0 %v3300
        %v4663 = vpop.f32.mrf.mxu0
        %v4664 = vadd.f32 %v4650, %v4663
        %v4665 = vpop.f32.mrf.mxu0
        %v4666 = vadd.f32 %v4652, %v4665
        %4667 = vdwg.mxu0
        %4668 = vmatpush.bf16.xpose.msra.mxu0 0
        %4669 = vmatpush.bf16.xpose.msra.mxu0 0
        %4670 = vmatpush.bf16.xpose.msra.mxu0 0
        %4671 = vmatpush.bf16.xpose.msra.mxu0 0
        %4672 = vmatpush.bf16.xpose.msra.mxu0 0
        %4673 = vmatpush.bf16.xpose.msra.mxu0 0
        %4674 = vmatpush.bf16.xpose.msra.mxu0 0
        %4675 = vmatpush.bf16.xpose.msra.mxu0 %v1344
        %4676 = vmatmul.bf16.gmra.mxu0 %v3301
        %v4677 = vpop.f32.mrf.mxu0
        %v4678 = vadd.f32 %v4664, %v4677
        %v4679 = vpop.f32.mrf.mxu0
        %v4680 = vadd.f32 %v4666, %v4679
        %4681 = vdwg.mxu0
        %4682 = vmatpush.bf16.xpose.msra.mxu0 0
        %4683 = vmatpush.bf16.xpose.msra.mxu0 0
        %4684 = vmatpush.bf16.xpose.msra.mxu0 0
        %4685 = vmatpush.bf16.xpose.msra.mxu0 0
        %4686 = vmatpush.bf16.xpose.msra.mxu0 0
        %4687 = vmatpush.bf16.xpose.msra.mxu0 0
        %4688 = vmatpush.bf16.xpose.msra.mxu0 0
        %4689 = vmatpush.bf16.xpose.msra.mxu0 %v1345
        %4690 = vmatmul.bf16.gmra.mxu0 %v3302
        %v4691 = vpop.f32.mrf.mxu0
        %v4692 = vadd.f32 %v4678, %v4691
        %v4693 = vpop.f32.mrf.mxu0
        %v4694 = vadd.f32 %v4680, %v4693
        %4695 = vdwg.mxu0
        %4696 = vmatpush.bf16.xpose.msra.mxu0 0
        %4697 = vmatpush.bf16.xpose.msra.mxu0 0
        %4698 = vmatpush.bf16.xpose.msra.mxu0 0
        %4699 = vmatpush.bf16.xpose.msra.mxu0 0
        %4700 = vmatpush.bf16.xpose.msra.mxu0 0
        %4701 = vmatpush.bf16.xpose.msra.mxu0 0
        %4702 = vmatpush.bf16.xpose.msra.mxu0 0
        %4703 = vmatpush.bf16.xpose.msra.mxu0 %v1346
        %4704 = vmatmul.bf16.gmra.mxu0 %v3303
        %v4705 = vpop.f32.mrf.mxu0
        %v4706 = vadd.f32 %v4692, %v4705
        %v4707 = vpop.f32.mrf.mxu0
        %v4708 = vadd.f32 %v4694, %v4707
        %4709 = vdwg.mxu0
        %4710 = vmatpush.bf16.xpose.msra.mxu0 0
        %4711 = vmatpush.bf16.xpose.msra.mxu0 0
        %4712 = vmatpush.bf16.xpose.msra.mxu0 0
        %4713 = vmatpush.bf16.xpose.msra.mxu0 0
        %4714 = vmatpush.bf16.xpose.msra.mxu0 0
        %4715 = vmatpush.bf16.xpose.msra.mxu0 0
        %4716 = vmatpush.bf16.xpose.msra.mxu0 0
        %4717 = vmatpush.bf16.xpose.msra.mxu0 %v1347
        %4718 = vmatmul.bf16.gmra.mxu0 %v3304
        %v4719 = vpop.f32.mrf.mxu0
        %v4720 = vadd.f32 %v4706, %v4719
        %v4721 = vpop.f32.mrf.mxu0
        %v4722 = vadd.f32 %v4708, %v4721
        %4723 = vdwg.mxu0
        %4724 = vmatpush.bf16.xpose.msra.mxu0 0
        %4725 = vmatpush.bf16.xpose.msra.mxu0 0
        %4726 = vmatpush.bf16.xpose.msra.mxu0 0
        %4727 = vmatpush.bf16.xpose.msra.mxu0 0
        %4728 = vmatpush.bf16.xpose.msra.mxu0 0
        %4729 = vmatpush.bf16.xpose.msra.mxu0 0
        %4730 = vmatpush.bf16.xpose.msra.mxu0 0
        %4731 = vmatpush.bf16.xpose.msra.mxu0 %v1348
        %4732 = vmatmul.bf16.gmra.mxu0 %v3305
        %v4733 = vpop.f32.mrf.mxu0
        %v4734 = vadd.f32 %v4720, %v4733
        %v4735 = vpop.f32.mrf.mxu0
        %v4736 = vadd.f32 %v4722, %v4735
        %4737 = vdwg.mxu0
        %4738 = vmatpush.bf16.xpose.msra.mxu0 0
        %4739 = vmatpush.bf16.xpose.msra.mxu0 0
        %4740 = vmatpush.bf16.xpose.msra.mxu0 0
        %4741 = vmatpush.bf16.xpose.msra.mxu0 0
        %4742 = vmatpush.bf16.xpose.msra.mxu0 0
        %4743 = vmatpush.bf16.xpose.msra.mxu0 0
        %4744 = vmatpush.bf16.xpose.msra.mxu0 0
        %4745 = vmatpush.bf16.xpose.msra.mxu0 %v1349
        %4746 = vmatmul.bf16.gmra.mxu0 %v3306
        %v4747 = vpop.f32.mrf.mxu0
        %v4748 = vadd.f32 %v4734, %v4747
        %v4749 = vpop.f32.mrf.mxu0
        %v4750 = vadd.f32 %v4736, %v4749
        %4751 = vdwg.mxu0
        %4752 = vmatpush.bf16.xpose.msra.mxu0 0
        %4753 = vmatpush.bf16.xpose.msra.mxu0 0
        %4754 = vmatpush.bf16.xpose.msra.mxu0 0
        %4755 = vmatpush.bf16.xpose.msra.mxu0 0
        %4756 = vmatpush.bf16.xpose.msra.mxu0 0
        %4757 = vmatpush.bf16.xpose.msra.mxu0 0
        %4758 = vmatpush.bf16.xpose.msra.mxu0 0
        %4759 = vmatpush.bf16.xpose.msra.mxu0 %v1350
        %4760 = vmatmul.bf16.gmra.mxu0 %v3307
        %v4761 = vpop.f32.mrf.mxu0
        %v4762 = vadd.f32 %v4748, %v4761
        %v4763 = vpop.f32.mrf.mxu0
        %v4764 = vadd.f32 %v4750, %v4763
        %4765 = vdwg.mxu0
        %4766 = vmatpush.bf16.xpose.msra.mxu0 0
        %4767 = vmatpush.bf16.xpose.msra.mxu0 0
        %4768 = vmatpush.bf16.xpose.msra.mxu0 0
        %4769 = vmatpush.bf16.xpose.msra.mxu0 0
        %4770 = vmatpush.bf16.xpose.msra.mxu0 0
        %4771 = vmatpush.bf16.xpose.msra.mxu0 0
        %4772 = vmatpush.bf16.xpose.msra.mxu0 0
        %4773 = vmatpush.bf16.xpose.msra.mxu0 %v1351
        %4774 = vmatmul.bf16.gmra.mxu0 %v3308
        %v4775 = vpop.f32.mrf.mxu0
        %v4776 = vadd.f32 %v4762, %v4775
        %v4777 = vpop.f32.mrf.mxu0
        %v4778 = vadd.f32 %v4764, %v4777
        %4779 = vdwg.mxu0
        %4780 = vmatpush.bf16.xpose.msra.mxu0 0
        %4781 = vmatpush.bf16.xpose.msra.mxu0 0
        %4782 = vmatpush.bf16.xpose.msra.mxu0 0
        %4783 = vmatpush.bf16.xpose.msra.mxu0 0
        %4784 = vmatpush.bf16.xpose.msra.mxu0 0
        %4785 = vmatpush.bf16.xpose.msra.mxu0 0
        %4786 = vmatpush.bf16.xpose.msra.mxu0 0
        %4787 = vmatpush.bf16.xpose.msra.mxu0 %v1352
        %4788 = vmatmul.bf16.gmra.mxu0 %v3309
        %v4789 = vpop.f32.mrf.mxu0
        %v4790 = vadd.f32 %v4776, %v4789
        %v4791 = vpop.f32.mrf.mxu0
        %v4792 = vadd.f32 %v4778, %v4791
        %4793 = vdwg.mxu0
        %4794 = vmatpush.bf16.xpose.msra.mxu0 0
        %4795 = vmatpush.bf16.xpose.msra.mxu0 0
        %4796 = vmatpush.bf16.xpose.msra.mxu0 0
        %4797 = vmatpush.bf16.xpose.msra.mxu0 0
        %4798 = vmatpush.bf16.xpose.msra.mxu0 0
        %4799 = vmatpush.bf16.xpose.msra.mxu0 0
        %4800 = vmatpush.bf16.xpose.msra.mxu0 0
        %4801 = vmatpush.bf16.xpose.msra.mxu0 %v1353
        %4802 = vmatmul.bf16.gmra.mxu0 %v3310
        %v4803 = vpop.f32.mrf.mxu0
        %v4804 = vadd.f32 %v4790, %v4803
        %v4805 = vpop.f32.mrf.mxu0
        %v4806 = vadd.f32 %v4792, %v4805
        %4807 = vdwg.mxu0
        %4808 = vmatpush.bf16.xpose.msra.mxu0 0
        %4809 = vmatpush.bf16.xpose.msra.mxu0 0
        %4810 = vmatpush.bf16.xpose.msra.mxu0 0
        %4811 = vmatpush.bf16.xpose.msra.mxu0 0
        %4812 = vmatpush.bf16.xpose.msra.mxu0 0
        %4813 = vmatpush.bf16.xpose.msra.mxu0 0
        %4814 = vmatpush.bf16.xpose.msra.mxu0 0
        %4815 = vmatpush.bf16.xpose.msra.mxu0 %v1354
        %4816 = vmatmul.bf16.gmra.mxu0 %v3311
        %v4817 = vpop.f32.mrf.mxu0
        %v4818 = vadd.f32 %v4804, %v4817
        %v4819 = vpop.f32.mrf.mxu0
        %v4820 = vadd.f32 %v4806, %v4819
        %4821 = vdwg.mxu0
        %4822 = vmatpush.bf16.xpose.msra.mxu0 0
        %4823 = vmatpush.bf16.xpose.msra.mxu0 0
        %4824 = vmatpush.bf16.xpose.msra.mxu0 0
        %4825 = vmatpush.bf16.xpose.msra.mxu0 0
        %4826 = vmatpush.bf16.xpose.msra.mxu0 0
        %4827 = vmatpush.bf16.xpose.msra.mxu0 0
        %4828 = vmatpush.bf16.xpose.msra.mxu0 0
        %4829 = vmatpush.bf16.xpose.msra.mxu0 %v1355
        %4830 = vmatmul.bf16.gmra.mxu0 %v3312
        %v4831 = vpop.f32.mrf.mxu0
        %v4832 = vadd.f32 %v4818, %v4831
        %v4833 = vpop.f32.mrf.mxu0
        %v4834 = vadd.f32 %v4820, %v4833
        %4835 = vdwg.mxu0
        %4836 = vmatpush.bf16.xpose.msra.mxu0 0
        %4837 = vmatpush.bf16.xpose.msra.mxu0 0
        %4838 = vmatpush.bf16.xpose.msra.mxu0 0
        %4839 = vmatpush.bf16.xpose.msra.mxu0 0
        %4840 = vmatpush.bf16.xpose.msra.mxu0 0
        %4841 = vmatpush.bf16.xpose.msra.mxu0 0
        %4842 = vmatpush.bf16.xpose.msra.mxu0 0
        %4843 = vmatpush.bf16.xpose.msra.mxu0 %v1356
        %4844 = vmatmul.bf16.gmra.mxu0 %v3313
        %v4845 = vpop.f32.mrf.mxu0
        %v4846 = vadd.f32 %v4832, %v4845
        %v4847 = vpop.f32.mrf.mxu0
        %v4848 = vadd.f32 %v4834, %v4847
        %4849 = vdwg.mxu0
        %4850 = vmatpush.bf16.xpose.msra.mxu0 0
        %4851 = vmatpush.bf16.xpose.msra.mxu0 0
        %4852 = vmatpush.bf16.xpose.msra.mxu0 0
        %4853 = vmatpush.bf16.xpose.msra.mxu0 0
        %4854 = vmatpush.bf16.xpose.msra.mxu0 0
        %4855 = vmatpush.bf16.xpose.msra.mxu0 0
        %4856 = vmatpush.bf16.xpose.msra.mxu0 0
        %4857 = vmatpush.bf16.xpose.msra.mxu0 %v1357
        %4858 = vmatmul.bf16.gmra.mxu0 %v3314
        %v4859 = vpop.f32.mrf.mxu0
        %v4860 = vadd.f32 %v4846, %v4859
        %v4861 = vpop.f32.mrf.mxu0
        %v4862 = vadd.f32 %v4848, %v4861
        %4863 = vdwg.mxu0
        %4864 = vmatpush.bf16.xpose.msra.mxu0 0
        %4865 = vmatpush.bf16.xpose.msra.mxu0 0
        %4866 = vmatpush.bf16.xpose.msra.mxu0 0
        %4867 = vmatpush.bf16.xpose.msra.mxu0 0
        %4868 = vmatpush.bf16.xpose.msra.mxu0 0
        %4869 = vmatpush.bf16.xpose.msra.mxu0 0
        %4870 = vmatpush.bf16.xpose.msra.mxu0 0
        %4871 = vmatpush.bf16.xpose.msra.mxu0 %v1358
        %4872 = vmatmul.bf16.gmra.mxu0 %v3315
        %v4873 = vpop.f32.mrf.mxu0
        %v4874 = vadd.f32 %v4860, %v4873
        %v4875 = vpop.f32.mrf.mxu0
        %v4876 = vadd.f32 %v4862, %v4875
        %4877 = vdwg.mxu0
        %4878 = vmatpush.bf16.xpose.msra.mxu0 0
        %4879 = vmatpush.bf16.xpose.msra.mxu0 0
        %4880 = vmatpush.bf16.xpose.msra.mxu0 0
        %4881 = vmatpush.bf16.xpose.msra.mxu0 0
        %4882 = vmatpush.bf16.xpose.msra.mxu0 0
        %4883 = vmatpush.bf16.xpose.msra.mxu0 0
        %4884 = vmatpush.bf16.xpose.msra.mxu0 0
        %4885 = vmatpush.bf16.xpose.msra.mxu0 %v1359
        %4886 = vmatmul.bf16.gmra.mxu0 %v3316
        %v4887 = vpop.f32.mrf.mxu0
        %v4888 = vadd.f32 %v4874, %v4887
        %v4889 = vpop.f32.mrf.mxu0
        %v4890 = vadd.f32 %v4876, %v4889
        %4891 = vdwg.mxu0
        %4892 = vmatpush.bf16.xpose.msra.mxu0 0
        %4893 = vmatpush.bf16.xpose.msra.mxu0 0
        %4894 = vmatpush.bf16.xpose.msra.mxu0 0
        %4895 = vmatpush.bf16.xpose.msra.mxu0 0
        %4896 = vmatpush.bf16.xpose.msra.mxu0 0
        %4897 = vmatpush.bf16.xpose.msra.mxu0 0
        %4898 = vmatpush.bf16.xpose.msra.mxu0 0
        %4899 = vmatpush.bf16.xpose.msra.mxu0 %v1360
        %4900 = vmatmul.bf16.gmra.mxu0 %v3317
        %v4901 = vpop.f32.mrf.mxu0
        %v4902 = vadd.f32 %v4888, %v4901
        %v4903 = vpop.f32.mrf.mxu0
        %v4904 = vadd.f32 %v4890, %v4903
        %4905 = vdwg.mxu0
        %4906 = vmatpush.bf16.xpose.msra.mxu0 0
        %4907 = vmatpush.bf16.xpose.msra.mxu0 0
        %4908 = vmatpush.bf16.xpose.msra.mxu0 0
        %4909 = vmatpush.bf16.xpose.msra.mxu0 0
        %4910 = vmatpush.bf16.xpose.msra.mxu0 0
        %4911 = vmatpush.bf16.xpose.msra.mxu0 0
        %4912 = vmatpush.bf16.xpose.msra.mxu0 0
        %4913 = vmatpush.bf16.xpose.msra.mxu0 %v1361
        %4914 = vmatmul.bf16.gmra.mxu0 %v3318
        %v4915 = vpop.f32.mrf.mxu0
        %v4916 = vadd.f32 %v4902, %v4915
        %v4917 = vpop.f32.mrf.mxu0
        %v4918 = vadd.f32 %v4904, %v4917
        %4919 = vdwg.mxu0
        %4920 = vmatpush.bf16.xpose.msra.mxu0 0
        %4921 = vmatpush.bf16.xpose.msra.mxu0 0
        %4922 = vmatpush.bf16.xpose.msra.mxu0 0
        %4923 = vmatpush.bf16.xpose.msra.mxu0 0
        %4924 = vmatpush.bf16.xpose.msra.mxu0 0
        %4925 = vmatpush.bf16.xpose.msra.mxu0 0
        %4926 = vmatpush.bf16.xpose.msra.mxu0 0
        %4927 = vmatpush.bf16.xpose.msra.mxu0 %v1362
        %4928 = vmatmul.bf16.gmra.mxu0 %v3319
        %v4929 = vpop.f32.mrf.mxu0
        %v4930 = vadd.f32 %v4916, %v4929
        %v4931 = vpop.f32.mrf.mxu0
        %v4932 = vadd.f32 %v4918, %v4931
        %4933 = vdwg.mxu0
        %4934 = vmatpush.bf16.xpose.msra.mxu0 0
        %4935 = vmatpush.bf16.xpose.msra.mxu0 0
        %4936 = vmatpush.bf16.xpose.msra.mxu0 0
        %4937 = vmatpush.bf16.xpose.msra.mxu0 0
        %4938 = vmatpush.bf16.xpose.msra.mxu0 0
        %4939 = vmatpush.bf16.xpose.msra.mxu0 0
        %4940 = vmatpush.bf16.xpose.msra.mxu0 0
        %4941 = vmatpush.bf16.xpose.msra.mxu0 %v1363
        %4942 = vmatmul.bf16.gmra.mxu0 %v3320
        %v4943 = vpop.f32.mrf.mxu0
        %v4944 = vadd.f32 %v4930, %v4943
        %v4945 = vpop.f32.mrf.mxu0
        %v4946 = vadd.f32 %v4932, %v4945
        %4947 = vdwg.mxu0
        %4948 = vmatpush.bf16.xpose.msra.mxu0 0
        %4949 = vmatpush.bf16.xpose.msra.mxu0 0
        %4950 = vmatpush.bf16.xpose.msra.mxu0 0
        %4951 = vmatpush.bf16.xpose.msra.mxu0 0
        %4952 = vmatpush.bf16.xpose.msra.mxu0 0
        %4953 = vmatpush.bf16.xpose.msra.mxu0 0
        %4954 = vmatpush.bf16.xpose.msra.mxu0 0
        %4955 = vmatpush.bf16.xpose.msra.mxu0 %v1364
        %4956 = vmatmul.bf16.gmra.mxu0 %v3321
        %v4957 = vpop.f32.mrf.mxu0
        %v4958 = vadd.f32 %v4944, %v4957
        %v4959 = vpop.f32.mrf.mxu0
        %v4960 = vadd.f32 %v4946, %v4959
        %4961 = vdwg.mxu0
        %4962 = vmatpush.bf16.xpose.msra.mxu0 0
        %4963 = vmatpush.bf16.xpose.msra.mxu0 0
        %4964 = vmatpush.bf16.xpose.msra.mxu0 0
        %4965 = vmatpush.bf16.xpose.msra.mxu0 0
        %4966 = vmatpush.bf16.xpose.msra.mxu0 0
        %4967 = vmatpush.bf16.xpose.msra.mxu0 0
        %4968 = vmatpush.bf16.xpose.msra.mxu0 0
        %4969 = vmatpush.bf16.xpose.msra.mxu0 %v1365
        %4970 = vmatmul.bf16.gmra.mxu0 %v3322
        %v4971 = vpop.f32.mrf.mxu0
        %v4972 = vadd.f32 %v4958, %v4971
        %v4973 = vpop.f32.mrf.mxu0
        %v4974 = vadd.f32 %v4960, %v4973
        %4975 = vdwg.mxu0
        %4976 = vmatpush.bf16.xpose.msra.mxu0 0
        %4977 = vmatpush.bf16.xpose.msra.mxu0 0
        %4978 = vmatpush.bf16.xpose.msra.mxu0 0
        %4979 = vmatpush.bf16.xpose.msra.mxu0 0
        %4980 = vmatpush.bf16.xpose.msra.mxu0 0
        %4981 = vmatpush.bf16.xpose.msra.mxu0 0
        %4982 = vmatpush.bf16.xpose.msra.mxu0 0
        %4983 = vmatpush.bf16.xpose.msra.mxu0 %v1366
        %4984 = vmatmul.bf16.gmra.mxu0 %v3323
        %v4985 = vpop.f32.mrf.mxu0
        %v4986 = vadd.f32 %v4972, %v4985
        %v4987 = vpop.f32.mrf.mxu0
        %v4988 = vadd.f32 %v4974, %v4987
        %4989 = vdwg.mxu0
        %4990 = vmatpush.bf16.xpose.msra.mxu0 0
        %4991 = vmatpush.bf16.xpose.msra.mxu0 0
        %4992 = vmatpush.bf16.xpose.msra.mxu0 0
        %4993 = vmatpush.bf16.xpose.msra.mxu0 0
        %4994 = vmatpush.bf16.xpose.msra.mxu0 0
        %4995 = vmatpush.bf16.xpose.msra.mxu0 0
        %4996 = vmatpush.bf16.xpose.msra.mxu0 0
        %4997 = vmatpush.bf16.xpose.msra.mxu0 %v1367
        %4998 = vmatmul.bf16.gmra.mxu0 %v3324
        %v4999 = vpop.f32.mrf.mxu0
        %v5000 = vadd.f32 %v4986, %v4999
        %v5001 = vpop.f32.mrf.mxu0
        %v5002 = vadd.f32 %v4988, %v5001
        %5003 = vdwg.mxu0
        %5004 = vmatpush.bf16.xpose.msra.mxu0 0
        %5005 = vmatpush.bf16.xpose.msra.mxu0 0
        %5006 = vmatpush.bf16.xpose.msra.mxu0 0
        %5007 = vmatpush.bf16.xpose.msra.mxu0 0
        %5008 = vmatpush.bf16.xpose.msra.mxu0 0
        %5009 = vmatpush.bf16.xpose.msra.mxu0 0
        %5010 = vmatpush.bf16.xpose.msra.mxu0 0
        %5011 = vmatpush.bf16.xpose.msra.mxu0 %v1368
        %5012 = vmatmul.bf16.gmra.mxu0 %v3325
        %v5013 = vpop.f32.mrf.mxu0
        %v5014 = vadd.f32 %v5000, %v5013
        %v5015 = vpop.f32.mrf.mxu0
        %v5016 = vadd.f32 %v5002, %v5015
        %5017 = vdwg.mxu0
        %5018 = vmatpush.bf16.xpose.msra.mxu0 0
        %5019 = vmatpush.bf16.xpose.msra.mxu0 0
        %5020 = vmatpush.bf16.xpose.msra.mxu0 0
        %5021 = vmatpush.bf16.xpose.msra.mxu0 0
        %5022 = vmatpush.bf16.xpose.msra.mxu0 0
        %5023 = vmatpush.bf16.xpose.msra.mxu0 0
        %5024 = vmatpush.bf16.xpose.msra.mxu0 0
        %5025 = vmatpush.bf16.xpose.msra.mxu0 %v1369
        %5026 = vmatmul.bf16.gmra.mxu0 %v3326
        %v5027 = vpop.f32.mrf.mxu0
        %v5028 = vadd.f32 %v5014, %v5027
        %v5029 = vpop.f32.mrf.mxu0
        %v5030 = vadd.f32 %v5016, %v5029
        %5031 = vdwg.mxu0
        %5032 = vmatpush.bf16.xpose.msra.mxu0 0
        %5033 = vmatpush.bf16.xpose.msra.mxu0 0
        %5034 = vmatpush.bf16.xpose.msra.mxu0 0
        %5035 = vmatpush.bf16.xpose.msra.mxu0 0
        %5036 = vmatpush.bf16.xpose.msra.mxu0 0
        %5037 = vmatpush.bf16.xpose.msra.mxu0 0
        %5038 = vmatpush.bf16.xpose.msra.mxu0 0
        %5039 = vmatpush.bf16.xpose.msra.mxu0 %v1370
        %5040 = vmatmul.bf16.gmra.mxu0 %v3327
        %v5041 = vpop.f32.mrf.mxu0
        %v5042 = vadd.f32 %v5028, %v5041
        %v5043 = vpop.f32.mrf.mxu0
        %v5044 = vadd.f32 %v5030, %v5043
        %5045 = vdwg.mxu0
        %5046 = vmatpush.bf16.xpose.msra.mxu0 0
        %5047 = vmatpush.bf16.xpose.msra.mxu0 0
        %5048 = vmatpush.bf16.xpose.msra.mxu0 0
        %5049 = vmatpush.bf16.xpose.msra.mxu0 0
        %5050 = vmatpush.bf16.xpose.msra.mxu0 0
        %5051 = vmatpush.bf16.xpose.msra.mxu0 0
        %5052 = vmatpush.bf16.xpose.msra.mxu0 0
        %5053 = vmatpush.bf16.xpose.msra.mxu0 %v1371
        %5054 = vmatmul.bf16.gmra.mxu0 %v3328
        %v5055 = vpop.f32.mrf.mxu0
        %v5056 = vadd.f32 %v5042, %v5055
        %v5057 = vpop.f32.mrf.mxu0
        %v5058 = vadd.f32 %v5044, %v5057
        %5059 = vdwg.mxu0
        %5060 = vmatpush.bf16.xpose.msra.mxu0 0
        %5061 = vmatpush.bf16.xpose.msra.mxu0 0
        %5062 = vmatpush.bf16.xpose.msra.mxu0 0
        %5063 = vmatpush.bf16.xpose.msra.mxu0 0
        %5064 = vmatpush.bf16.xpose.msra.mxu0 0
        %5065 = vmatpush.bf16.xpose.msra.mxu0 0
        %5066 = vmatpush.bf16.xpose.msra.mxu0 0
        %5067 = vmatpush.bf16.xpose.msra.mxu0 %v1372
        %5068 = vmatmul.bf16.gmra.mxu0 %v3329
        %v5069 = vpop.f32.mrf.mxu0
        %v5070 = vadd.f32 %v5056, %v5069
        %v5071 = vpop.f32.mrf.mxu0
        %v5072 = vadd.f32 %v5058, %v5071
        %5073 = vdwg.mxu0
        %5074 = vmatpush.bf16.xpose.msra.mxu0 0
        %5075 = vmatpush.bf16.xpose.msra.mxu0 0
        %5076 = vmatpush.bf16.xpose.msra.mxu0 0
        %5077 = vmatpush.bf16.xpose.msra.mxu0 0
        %5078 = vmatpush.bf16.xpose.msra.mxu0 0
        %5079 = vmatpush.bf16.xpose.msra.mxu0 0
        %5080 = vmatpush.bf16.xpose.msra.mxu0 0
        %5081 = vmatpush.bf16.xpose.msra.mxu0 %v1373
        %5082 = vmatmul.bf16.gmra.mxu0 %v3330
        %v5083 = vpop.f32.mrf.mxu0
        %v5084 = vadd.f32 %v5070, %v5083
        %v5085 = vpop.f32.mrf.mxu0
        %v5086 = vadd.f32 %v5072, %v5085
        %5087 = vdwg.mxu0
        %5088 = vmatpush.bf16.xpose.msra.mxu0 0
        %5089 = vmatpush.bf16.xpose.msra.mxu0 0
        %5090 = vmatpush.bf16.xpose.msra.mxu0 0
        %5091 = vmatpush.bf16.xpose.msra.mxu0 0
        %5092 = vmatpush.bf16.xpose.msra.mxu0 0
        %5093 = vmatpush.bf16.xpose.msra.mxu0 0
        %5094 = vmatpush.bf16.xpose.msra.mxu0 0
        %5095 = vmatpush.bf16.xpose.msra.mxu0 %v1374
        %5096 = vmatmul.bf16.gmra.mxu0 %v3331
        %v5097 = vpop.f32.mrf.mxu0
        %v5098 = vadd.f32 %v5084, %v5097
        %v5099 = vpop.f32.mrf.mxu0
        %v5100 = vadd.f32 %v5086, %v5099
        %5101 = vdwg.mxu0
        %5102 = vmatpush.bf16.xpose.msra.mxu0 0
        %5103 = vmatpush.bf16.xpose.msra.mxu0 0
        %5104 = vmatpush.bf16.xpose.msra.mxu0 0
        %5105 = vmatpush.bf16.xpose.msra.mxu0 0
        %5106 = vmatpush.bf16.xpose.msra.mxu0 0
        %5107 = vmatpush.bf16.xpose.msra.mxu0 0
        %5108 = vmatpush.bf16.xpose.msra.mxu0 0
        %5109 = vmatpush.bf16.xpose.msra.mxu0 %v1375
        %5110 = vmatmul.bf16.gmra.mxu0 %v3332
        %v5111 = vpop.f32.mrf.mxu0
        %v5112 = vadd.f32 %v5098, %v5111
        %v5113 = vpop.f32.mrf.mxu0
        %v5114 = vadd.f32 %v5100, %v5113
        %5115 = vdwg.mxu0
        %5116 = vmatpush.bf16.xpose.msra.mxu0 0
        %5117 = vmatpush.bf16.xpose.msra.mxu0 0
        %5118 = vmatpush.bf16.xpose.msra.mxu0 0
        %5119 = vmatpush.bf16.xpose.msra.mxu0 0
        %5120 = vmatpush.bf16.xpose.msra.mxu0 0
        %5121 = vmatpush.bf16.xpose.msra.mxu0 0
        %5122 = vmatpush.bf16.xpose.msra.mxu0 0
        %5123 = vmatpush.bf16.xpose.msra.mxu0 %v1376
        %5124 = vmatmul.bf16.gmra.mxu0 %v3333
        %v5125 = vpop.f32.mrf.mxu0
        %v5126 = vadd.f32 %v5112, %v5125
        %v5127 = vpop.f32.mrf.mxu0
        %v5128 = vadd.f32 %v5114, %v5127
        %5129 = vdwg.mxu0
        %5130 = vmatpush.bf16.xpose.msra.mxu0 0
        %5131 = vmatpush.bf16.xpose.msra.mxu0 0
        %5132 = vmatpush.bf16.xpose.msra.mxu0 0
        %5133 = vmatpush.bf16.xpose.msra.mxu0 0
        %5134 = vmatpush.bf16.xpose.msra.mxu0 0
        %5135 = vmatpush.bf16.xpose.msra.mxu0 0
        %5136 = vmatpush.bf16.xpose.msra.mxu0 0
        %5137 = vmatpush.bf16.xpose.msra.mxu0 %v1377
        %5138 = vmatmul.bf16.gmra.mxu0 %v3334
        %v5139 = vpop.f32.mrf.mxu0
        %v5140 = vadd.f32 %v5126, %v5139
        %v5141 = vpop.f32.mrf.mxu0
        %v5142 = vadd.f32 %v5128, %v5141
        %5143 = vdwg.mxu0
        %5144 = vmatpush.bf16.xpose.msra.mxu0 0
        %5145 = vmatpush.bf16.xpose.msra.mxu0 0
        %5146 = vmatpush.bf16.xpose.msra.mxu0 0
        %5147 = vmatpush.bf16.xpose.msra.mxu0 0
        %5148 = vmatpush.bf16.xpose.msra.mxu0 0
        %5149 = vmatpush.bf16.xpose.msra.mxu0 0
        %5150 = vmatpush.bf16.xpose.msra.mxu0 0
        %5151 = vmatpush.bf16.xpose.msra.mxu0 %v1378
        %5152 = vmatmul.bf16.gmra.mxu0 %v3335
        %v5153 = vpop.f32.mrf.mxu0
        %v5154 = vadd.f32 %v5140, %v5153
        %v5155 = vpop.f32.mrf.mxu0
        %v5156 = vadd.f32 %v5142, %v5155
        %5157 = vdwg.mxu0
        %5158 = vmatpush.bf16.xpose.msra.mxu0 0
        %5159 = vmatpush.bf16.xpose.msra.mxu0 0
        %5160 = vmatpush.bf16.xpose.msra.mxu0 0
        %5161 = vmatpush.bf16.xpose.msra.mxu0 0
        %5162 = vmatpush.bf16.xpose.msra.mxu0 0
        %5163 = vmatpush.bf16.xpose.msra.mxu0 0
        %5164 = vmatpush.bf16.xpose.msra.mxu0 0
        %5165 = vmatpush.bf16.xpose.msra.mxu0 %v1379
        %5166 = vmatmul.bf16.gmra.mxu0 %v3336
        %v5167 = vpop.f32.mrf.mxu0
        %v5168 = vadd.f32 %v5154, %v5167
        %v5169 = vpop.f32.mrf.mxu0
        %v5170 = vadd.f32 %v5156, %v5169
        %5171 = vdwg.mxu0
        %5172 = vmatpush.bf16.xpose.msra.mxu0 0
        %5173 = vmatpush.bf16.xpose.msra.mxu0 0
        %5174 = vmatpush.bf16.xpose.msra.mxu0 0
        %5175 = vmatpush.bf16.xpose.msra.mxu0 0
        %5176 = vmatpush.bf16.xpose.msra.mxu0 0
        %5177 = vmatpush.bf16.xpose.msra.mxu0 0
        %5178 = vmatpush.bf16.xpose.msra.mxu0 0
        %5179 = vmatpush.bf16.xpose.msra.mxu0 %v1380
        %5180 = vmatmul.bf16.gmra.mxu0 %v3337
        %v5181 = vpop.f32.mrf.mxu0
        %v5182 = vadd.f32 %v5168, %v5181
        %v5183 = vpop.f32.mrf.mxu0
        %v5184 = vadd.f32 %v5170, %v5183
        %5185 = vdwg.mxu0
        %5186 = vmatpush.bf16.xpose.msra.mxu0 0
        %5187 = vmatpush.bf16.xpose.msra.mxu0 0
        %5188 = vmatpush.bf16.xpose.msra.mxu0 0
        %5189 = vmatpush.bf16.xpose.msra.mxu0 0
        %5190 = vmatpush.bf16.xpose.msra.mxu0 0
        %5191 = vmatpush.bf16.xpose.msra.mxu0 0
        %5192 = vmatpush.bf16.xpose.msra.mxu0 0
        %5193 = vmatpush.bf16.xpose.msra.mxu0 %v1381
        %5194 = vmatmul.bf16.gmra.mxu0 %v3338
        %v5195 = vpop.f32.mrf.mxu0
        %v5196 = vadd.f32 %v5182, %v5195
        %v5197 = vpop.f32.mrf.mxu0
        %v5198 = vadd.f32 %v5184, %v5197
        %5199 = vdwg.mxu0
        %5200 = vmatpush.bf16.xpose.msra.mxu0 0
        %5201 = vmatpush.bf16.xpose.msra.mxu0 0
        %5202 = vmatpush.bf16.xpose.msra.mxu0 0
        %5203 = vmatpush.bf16.xpose.msra.mxu0 0
        %5204 = vmatpush.bf16.xpose.msra.mxu0 0
        %5205 = vmatpush.bf16.xpose.msra.mxu0 0
        %5206 = vmatpush.bf16.xpose.msra.mxu0 0
        %5207 = vmatpush.bf16.xpose.msra.mxu0 %v1382
        %5208 = vmatmul.bf16.gmra.mxu0 %v3339
        %v5209 = vpop.f32.mrf.mxu0
        %v5210 = vadd.f32 %v5196, %v5209
        %v5211 = vpop.f32.mrf.mxu0
        %v5212 = vadd.f32 %v5198, %v5211
        %5213 = vdwg.mxu0
        %5214 = vmatpush.bf16.xpose.msra.mxu0 0
        %5215 = vmatpush.bf16.xpose.msra.mxu0 0
        %5216 = vmatpush.bf16.xpose.msra.mxu0 0
        %5217 = vmatpush.bf16.xpose.msra.mxu0 0
        %5218 = vmatpush.bf16.xpose.msra.mxu0 0
        %5219 = vmatpush.bf16.xpose.msra.mxu0 0
        %5220 = vmatpush.bf16.xpose.msra.mxu0 0
        %5221 = vmatpush.bf16.xpose.msra.mxu0 %v1383
        %5222 = vmatmul.bf16.gmra.mxu0 %v3340
        %v5223 = vpop.f32.mrf.mxu0
        %v5224 = vadd.f32 %v5210, %v5223
        %v5225 = vpop.f32.mrf.mxu0
        %v5226 = vadd.f32 %v5212, %v5225
        %5227 = vdwg.mxu0
        %5228 = vmatpush.bf16.xpose.msra.mxu0 0
        %5229 = vmatpush.bf16.xpose.msra.mxu0 0
        %5230 = vmatpush.bf16.xpose.msra.mxu0 0
        %5231 = vmatpush.bf16.xpose.msra.mxu0 0
        %5232 = vmatpush.bf16.xpose.msra.mxu0 0
        %5233 = vmatpush.bf16.xpose.msra.mxu0 0
        %5234 = vmatpush.bf16.xpose.msra.mxu0 0
        %5235 = vmatpush.bf16.xpose.msra.mxu0 %v1384
        %5236 = vmatmul.bf16.gmra.mxu0 %v3341
        %v5237 = vpop.f32.mrf.mxu0
        %v5238 = vadd.f32 %v5224, %v5237
        %v5239 = vpop.f32.mrf.mxu0
        %v5240 = vadd.f32 %v5226, %v5239
        %5241 = vdwg.mxu0
        %5242 = vmatpush.bf16.xpose.msra.mxu0 0
        %5243 = vmatpush.bf16.xpose.msra.mxu0 0
        %5244 = vmatpush.bf16.xpose.msra.mxu0 0
        %5245 = vmatpush.bf16.xpose.msra.mxu0 0
        %5246 = vmatpush.bf16.xpose.msra.mxu0 0
        %5247 = vmatpush.bf16.xpose.msra.mxu0 0
        %5248 = vmatpush.bf16.xpose.msra.mxu0 0
        %5249 = vmatpush.bf16.xpose.msra.mxu0 %v1385
        %5250 = vmatmul.bf16.gmra.mxu0 %v3342
        %v5251 = vpop.f32.mrf.mxu0
        %v5252 = vadd.f32 %v5238, %v5251
        %v5253 = vpop.f32.mrf.mxu0
        %v5254 = vadd.f32 %v5240, %v5253
        %5255 = vdwg.mxu0
        %5256 = vmatpush.bf16.xpose.msra.mxu0 0
        %5257 = vmatpush.bf16.xpose.msra.mxu0 0
        %5258 = vmatpush.bf16.xpose.msra.mxu0 0
        %5259 = vmatpush.bf16.xpose.msra.mxu0 0
        %5260 = vmatpush.bf16.xpose.msra.mxu0 0
        %5261 = vmatpush.bf16.xpose.msra.mxu0 0
        %5262 = vmatpush.bf16.xpose.msra.mxu0 0
        %5263 = vmatpush.bf16.xpose.msra.mxu0 %v1386
        %5264 = vmatmul.bf16.gmra.mxu0 %v3343
        %v5265 = vpop.f32.mrf.mxu0
        %v5266 = vadd.f32 %v5252, %v5265
        %v5267 = vpop.f32.mrf.mxu0
        %v5268 = vadd.f32 %v5254, %v5267
        %5269 = vdwg.mxu0
        %5270 = vmatpush.bf16.xpose.msra.mxu0 0
        %5271 = vmatpush.bf16.xpose.msra.mxu0 0
        %5272 = vmatpush.bf16.xpose.msra.mxu0 0
        %5273 = vmatpush.bf16.xpose.msra.mxu0 0
        %5274 = vmatpush.bf16.xpose.msra.mxu0 0
        %5275 = vmatpush.bf16.xpose.msra.mxu0 0
        %5276 = vmatpush.bf16.xpose.msra.mxu0 0
        %5277 = vmatpush.bf16.xpose.msra.mxu0 %v1387
        %5278 = vmatmul.bf16.gmra.mxu0 %v3344
        %v5279 = vpop.f32.mrf.mxu0
        %v5280 = vadd.f32 %v5266, %v5279
        %v5281 = vpop.f32.mrf.mxu0
        %v5282 = vadd.f32 %v5268, %v5281
        %5283 = vdwg.mxu0
        %5284 = vmatpush.bf16.xpose.msra.mxu0 0
        %5285 = vmatpush.bf16.xpose.msra.mxu0 0
        %5286 = vmatpush.bf16.xpose.msra.mxu0 0
        %5287 = vmatpush.bf16.xpose.msra.mxu0 0
        %5288 = vmatpush.bf16.xpose.msra.mxu0 0
        %5289 = vmatpush.bf16.xpose.msra.mxu0 0
        %5290 = vmatpush.bf16.xpose.msra.mxu0 0
        %5291 = vmatpush.bf16.xpose.msra.mxu0 %v1388
        %5292 = vmatmul.bf16.gmra.mxu0 %v3345
        %v5293 = vpop.f32.mrf.mxu0
        %v5294 = vadd.f32 %v5280, %v5293
        %v5295 = vpop.f32.mrf.mxu0
        %v5296 = vadd.f32 %v5282, %v5295
        %5297 = vdwg.mxu0
        %5298 = vmatpush.bf16.xpose.msra.mxu0 0
        %5299 = vmatpush.bf16.xpose.msra.mxu0 0
        %5300 = vmatpush.bf16.xpose.msra.mxu0 0
        %5301 = vmatpush.bf16.xpose.msra.mxu0 0
        %5302 = vmatpush.bf16.xpose.msra.mxu0 0
        %5303 = vmatpush.bf16.xpose.msra.mxu0 0
        %5304 = vmatpush.bf16.xpose.msra.mxu0 0
        %5305 = vmatpush.bf16.xpose.msra.mxu0 %v1389
        %5306 = vmatmul.bf16.gmra.mxu0 %v3346
        %v5307 = vpop.f32.mrf.mxu0
        %v5308 = vadd.f32 %v5294, %v5307
        %v5309 = vpop.f32.mrf.mxu0
        %v5310 = vadd.f32 %v5296, %v5309
        %5311 = vdwg.mxu0
        %5312 = vmatpush.bf16.xpose.msra.mxu0 0
        %5313 = vmatpush.bf16.xpose.msra.mxu0 0
        %5314 = vmatpush.bf16.xpose.msra.mxu0 0
        %5315 = vmatpush.bf16.xpose.msra.mxu0 0
        %5316 = vmatpush.bf16.xpose.msra.mxu0 0
        %5317 = vmatpush.bf16.xpose.msra.mxu0 0
        %5318 = vmatpush.bf16.xpose.msra.mxu0 0
        %5319 = vmatpush.bf16.xpose.msra.mxu0 %v1390
        %5320 = vmatmul.bf16.gmra.mxu0 %v3347
        %v5321 = vpop.f32.mrf.mxu0
        %v5322 = vadd.f32 %v5308, %v5321
        %v5323 = vpop.f32.mrf.mxu0
        %v5324 = vadd.f32 %v5310, %v5323
        %5325 = vdwg.mxu0
        %5326 = vmatpush.bf16.xpose.msra.mxu0 0
        %5327 = vmatpush.bf16.xpose.msra.mxu0 0
        %5328 = vmatpush.bf16.xpose.msra.mxu0 0
        %5329 = vmatpush.bf16.xpose.msra.mxu0 0
        %5330 = vmatpush.bf16.xpose.msra.mxu0 0
        %5331 = vmatpush.bf16.xpose.msra.mxu0 0
        %5332 = vmatpush.bf16.xpose.msra.mxu0 0
        %5333 = vmatpush.bf16.xpose.msra.mxu0 %v1391
        %5334 = vmatmul.bf16.gmra.mxu0 %v3348
        %v5335 = vpop.f32.mrf.mxu0
        %v5336 = vadd.f32 %v5322, %v5335
        %v5337 = vpop.f32.mrf.mxu0
        %v5338 = vadd.f32 %v5324, %v5337
        %5339 = vdwg.mxu0
        %5340 = vmatpush.bf16.xpose.msra.mxu0 0
        %5341 = vmatpush.bf16.xpose.msra.mxu0 0
        %5342 = vmatpush.bf16.xpose.msra.mxu0 0
        %5343 = vmatpush.bf16.xpose.msra.mxu0 0
        %5344 = vmatpush.bf16.xpose.msra.mxu0 0
        %5345 = vmatpush.bf16.xpose.msra.mxu0 0
        %5346 = vmatpush.bf16.xpose.msra.mxu0 0
        %5347 = vmatpush.bf16.xpose.msra.mxu0 %v1392
        %5348 = vmatmul.bf16.gmra.mxu0 %v3349
        %v5349 = vpop.f32.mrf.mxu0
        %v5350 = vadd.f32 %v5336, %v5349
        %v5351 = vpop.f32.mrf.mxu0
        %v5352 = vadd.f32 %v5338, %v5351
        %5353 = vdwg.mxu0
        %5354 = vmatpush.bf16.xpose.msra.mxu0 0
        %5355 = vmatpush.bf16.xpose.msra.mxu0 0
        %5356 = vmatpush.bf16.xpose.msra.mxu0 0
        %5357 = vmatpush.bf16.xpose.msra.mxu0 0
        %5358 = vmatpush.bf16.xpose.msra.mxu0 0
        %5359 = vmatpush.bf16.xpose.msra.mxu0 0
        %5360 = vmatpush.bf16.xpose.msra.mxu0 0
        %5361 = vmatpush.bf16.xpose.msra.mxu0 %v1393
        %5362 = vmatmul.bf16.gmra.mxu0 %v3350
        %v5363 = vpop.f32.mrf.mxu0
        %v5364 = vadd.f32 %v5350, %v5363
        %v5365 = vpop.f32.mrf.mxu0
        %v5366 = vadd.f32 %v5352, %v5365
        %5367 = vdwg.mxu0
        %5368 = vmatpush.bf16.xpose.msra.mxu0 0
        %5369 = vmatpush.bf16.xpose.msra.mxu0 0
        %5370 = vmatpush.bf16.xpose.msra.mxu0 0
        %5371 = vmatpush.bf16.xpose.msra.mxu0 0
        %5372 = vmatpush.bf16.xpose.msra.mxu0 0
        %5373 = vmatpush.bf16.xpose.msra.mxu0 0
        %5374 = vmatpush.bf16.xpose.msra.mxu0 0
        %5375 = vmatpush.bf16.xpose.msra.mxu0 %v1394
        %5376 = vmatmul.bf16.gmra.mxu0 %v3351
        %v5377 = vpop.f32.mrf.mxu0
        %v5378 = vadd.f32 %v5364, %v5377
        %v5379 = vpop.f32.mrf.mxu0
        %v5380 = vadd.f32 %v5366, %v5379
        %5381 = vdwg.mxu0
        %5382 = vmatpush.bf16.xpose.msra.mxu0 0
        %5383 = vmatpush.bf16.xpose.msra.mxu0 0
        %5384 = vmatpush.bf16.xpose.msra.mxu0 0
        %5385 = vmatpush.bf16.xpose.msra.mxu0 0
        %5386 = vmatpush.bf16.xpose.msra.mxu0 0
        %5387 = vmatpush.bf16.xpose.msra.mxu0 0
        %5388 = vmatpush.bf16.xpose.msra.mxu0 0
        %5389 = vmatpush.bf16.xpose.msra.mxu0 %v1395
        %5390 = vmatmul.bf16.gmra.mxu0 %v3352
        %v5391 = vpop.f32.mrf.mxu0
        %v5392 = vadd.f32 %v5378, %v5391
        %v5393 = vpop.f32.mrf.mxu0
        %v5394 = vadd.f32 %v5380, %v5393
        %5395 = vdwg.mxu0
        %5396 = vmatpush.bf16.xpose.msra.mxu0 0
        %5397 = vmatpush.bf16.xpose.msra.mxu0 0
        %5398 = vmatpush.bf16.xpose.msra.mxu0 0
        %5399 = vmatpush.bf16.xpose.msra.mxu0 0
        %5400 = vmatpush.bf16.xpose.msra.mxu0 0
        %5401 = vmatpush.bf16.xpose.msra.mxu0 0
        %5402 = vmatpush.bf16.xpose.msra.mxu0 0
        %5403 = vmatpush.bf16.xpose.msra.mxu0 %v1396
        %5404 = vmatmul.bf16.gmra.mxu0 %v3353
        %v5405 = vpop.f32.mrf.mxu0
        %v5406 = vadd.f32 %v5392, %v5405
        %v5407 = vpop.f32.mrf.mxu0
        %v5408 = vadd.f32 %v5394, %v5407
        %5409 = vdwg.mxu0
        %5410 = vmatpush.bf16.xpose.msra.mxu0 0
        %5411 = vmatpush.bf16.xpose.msra.mxu0 0
        %5412 = vmatpush.bf16.xpose.msra.mxu0 0
        %5413 = vmatpush.bf16.xpose.msra.mxu0 0
        %5414 = vmatpush.bf16.xpose.msra.mxu0 0
        %5415 = vmatpush.bf16.xpose.msra.mxu0 0
        %5416 = vmatpush.bf16.xpose.msra.mxu0 0
        %5417 = vmatpush.bf16.xpose.msra.mxu0 %v1397
        %5418 = vmatmul.bf16.gmra.mxu0 %v3354
        %v5419 = vpop.f32.mrf.mxu0
        %v5420 = vadd.f32 %v5406, %v5419
        %v5421 = vpop.f32.mrf.mxu0
        %v5422 = vadd.f32 %v5408, %v5421
        %5423 = vdwg.mxu0
        %5424 = vmatpush.bf16.xpose.msra.mxu0 0
        %5425 = vmatpush.bf16.xpose.msra.mxu0 0
        %5426 = vmatpush.bf16.xpose.msra.mxu0 0
        %5427 = vmatpush.bf16.xpose.msra.mxu0 0
        %5428 = vmatpush.bf16.xpose.msra.mxu0 0
        %5429 = vmatpush.bf16.xpose.msra.mxu0 0
        %5430 = vmatpush.bf16.xpose.msra.mxu0 0
        %5431 = vmatpush.bf16.xpose.msra.mxu0 %v1398
        %5432 = vmatmul.bf16.gmra.mxu0 %v3355
        %v5433 = vpop.f32.mrf.mxu0
        %v5434 = vadd.f32 %v5420, %v5433
        %v5435 = vpop.f32.mrf.mxu0
        %v5436 = vadd.f32 %v5422, %v5435
        %5437 = vdwg.mxu0
        %5438 = vmatpush.bf16.xpose.msra.mxu0 0
        %5439 = vmatpush.bf16.xpose.msra.mxu0 0
        %5440 = vmatpush.bf16.xpose.msra.mxu0 0
        %5441 = vmatpush.bf16.xpose.msra.mxu0 0
        %5442 = vmatpush.bf16.xpose.msra.mxu0 0
        %5443 = vmatpush.bf16.xpose.msra.mxu0 0
        %5444 = vmatpush.bf16.xpose.msra.mxu0 0
        %5445 = vmatpush.bf16.xpose.msra.mxu0 %v1399
        %5446 = vmatmul.bf16.gmra.mxu0 %v3356
        %v5447 = vpop.f32.mrf.mxu0
        %v5448 = vadd.f32 %v5434, %v5447
        %v5449 = vpop.f32.mrf.mxu0
        %v5450 = vadd.f32 %v5436, %v5449
        %5451 = vdwg.mxu0
        %5452 = vmatpush.bf16.xpose.msra.mxu0 0
        %5453 = vmatpush.bf16.xpose.msra.mxu0 0
        %5454 = vmatpush.bf16.xpose.msra.mxu0 0
        %5455 = vmatpush.bf16.xpose.msra.mxu0 0
        %5456 = vmatpush.bf16.xpose.msra.mxu0 0
        %5457 = vmatpush.bf16.xpose.msra.mxu0 0
        %5458 = vmatpush.bf16.xpose.msra.mxu0 0
        %5459 = vmatpush.bf16.xpose.msra.mxu0 %v1400
        %5460 = vmatmul.bf16.gmra.mxu0 %v3357
        %v5461 = vpop.f32.mrf.mxu0
        %v5462 = vadd.f32 %v5448, %v5461
        %v5463 = vpop.f32.mrf.mxu0
        %v5464 = vadd.f32 %v5450, %v5463
        %5465 = vdwg.mxu0
        %5466 = vmatpush.bf16.xpose.msra.mxu0 0
        %5467 = vmatpush.bf16.xpose.msra.mxu0 0
        %5468 = vmatpush.bf16.xpose.msra.mxu0 0
        %5469 = vmatpush.bf16.xpose.msra.mxu0 0
        %5470 = vmatpush.bf16.xpose.msra.mxu0 0
        %5471 = vmatpush.bf16.xpose.msra.mxu0 0
        %5472 = vmatpush.bf16.xpose.msra.mxu0 0
        %5473 = vmatpush.bf16.xpose.msra.mxu0 %v1401
        %5474 = vmatmul.bf16.gmra.mxu0 %v3358
        %v5475 = vpop.f32.mrf.mxu0
        %v5476 = vadd.f32 %v5462, %v5475
        %v5477 = vpop.f32.mrf.mxu0
        %v5478 = vadd.f32 %v5464, %v5477
        %5479 = vdwg.mxu0
        %5480 = vmatpush.bf16.xpose.msra.mxu0 0
        %5481 = vmatpush.bf16.xpose.msra.mxu0 0
        %5482 = vmatpush.bf16.xpose.msra.mxu0 0
        %5483 = vmatpush.bf16.xpose.msra.mxu0 0
        %5484 = vmatpush.bf16.xpose.msra.mxu0 0
        %5485 = vmatpush.bf16.xpose.msra.mxu0 0
        %5486 = vmatpush.bf16.xpose.msra.mxu0 0
        %5487 = vmatpush.bf16.xpose.msra.mxu0 %v1402
        %5488 = vmatmul.bf16.gmra.mxu0 %v3359
        %v5489 = vpop.f32.mrf.mxu0
        %v5490 = vadd.f32 %v5476, %v5489
        %v5491 = vpop.f32.mrf.mxu0
        %v5492 = vadd.f32 %v5478, %v5491
        %5493 = vdwg.mxu0
        %5494 = vmatpush.bf16.xpose.msra.mxu0 0
        %5495 = vmatpush.bf16.xpose.msra.mxu0 0
        %5496 = vmatpush.bf16.xpose.msra.mxu0 0
        %5497 = vmatpush.bf16.xpose.msra.mxu0 0
        %5498 = vmatpush.bf16.xpose.msra.mxu0 0
        %5499 = vmatpush.bf16.xpose.msra.mxu0 0
        %5500 = vmatpush.bf16.xpose.msra.mxu0 0
        %5501 = vmatpush.bf16.xpose.msra.mxu0 %v1403
        %5502 = vmatmul.bf16.gmra.mxu0 %v3360
        %v5503 = vpop.f32.mrf.mxu0
        %v5504 = vadd.f32 %v5490, %v5503
        %v5505 = vpop.f32.mrf.mxu0
        %v5506 = vadd.f32 %v5492, %v5505
        %5507 = vdwg.mxu0
        %5508 = vmatpush.bf16.xpose.msra.mxu0 0
        %5509 = vmatpush.bf16.xpose.msra.mxu0 0
        %5510 = vmatpush.bf16.xpose.msra.mxu0 0
        %5511 = vmatpush.bf16.xpose.msra.mxu0 0
        %5512 = vmatpush.bf16.xpose.msra.mxu0 0
        %5513 = vmatpush.bf16.xpose.msra.mxu0 0
        %5514 = vmatpush.bf16.xpose.msra.mxu0 0
        %5515 = vmatpush.bf16.xpose.msra.mxu0 %v1404
        %5516 = vmatmul.bf16.gmra.mxu0 %v3361
        %v5517 = vpop.f32.mrf.mxu0
        %v5518 = vadd.f32 %v5504, %v5517
        %v5519 = vpop.f32.mrf.mxu0
        %v5520 = vadd.f32 %v5506, %v5519
        %5521 = vdwg.mxu0
        %5522 = vmatpush.bf16.xpose.msra.mxu0 0
        %5523 = vmatpush.bf16.xpose.msra.mxu0 0
        %5524 = vmatpush.bf16.xpose.msra.mxu0 0
        %5525 = vmatpush.bf16.xpose.msra.mxu0 0
        %5526 = vmatpush.bf16.xpose.msra.mxu0 0
        %5527 = vmatpush.bf16.xpose.msra.mxu0 0
        %5528 = vmatpush.bf16.xpose.msra.mxu0 0
        %5529 = vmatpush.bf16.xpose.msra.mxu0 %v1405
        %5530 = vmatmul.bf16.gmra.mxu0 %v3362
        %v5531 = vpop.f32.mrf.mxu0
        %v5532 = vadd.f32 %v5518, %v5531
        %v5533 = vpop.f32.mrf.mxu0
        %v5534 = vadd.f32 %v5520, %v5533
        %5535 = vdwg.mxu0
        %5536 = vmatpush.bf16.xpose.msra.mxu0 0
        %5537 = vmatpush.bf16.xpose.msra.mxu0 0
        %5538 = vmatpush.bf16.xpose.msra.mxu0 0
        %5539 = vmatpush.bf16.xpose.msra.mxu0 0
        %5540 = vmatpush.bf16.xpose.msra.mxu0 0
        %5541 = vmatpush.bf16.xpose.msra.mxu0 0
        %5542 = vmatpush.bf16.xpose.msra.mxu0 0
        %5543 = vmatpush.bf16.xpose.msra.mxu0 %v1406
        %5544 = vmatmul.bf16.gmra.mxu0 %v3363
        %v5545 = vpop.f32.mrf.mxu0
        %v5546 = vadd.f32 %v5532, %v5545
        %v5547 = vpop.f32.mrf.mxu0
        %v5548 = vadd.f32 %v5534, %v5547
        %5549 = vdwg.mxu0
        %5550 = vmatpush.bf16.xpose.msra.mxu0 0
        %5551 = vmatpush.bf16.xpose.msra.mxu0 0
        %5552 = vmatpush.bf16.xpose.msra.mxu0 0
        %5553 = vmatpush.bf16.xpose.msra.mxu0 0
        %5554 = vmatpush.bf16.xpose.msra.mxu0 0
        %5555 = vmatpush.bf16.xpose.msra.mxu0 0
        %5556 = vmatpush.bf16.xpose.msra.mxu0 0
        %5557 = vmatpush.bf16.xpose.msra.mxu0 %v1407
        %5558 = vmatmul.bf16.gmra.mxu0 %v3364
        %v5559 = vpop.f32.mrf.mxu0
        %v5560 = vadd.f32 %v5546, %v5559
        %v5561 = vpop.f32.mrf.mxu0
        %v5562 = vadd.f32 %v5548, %v5561
        %5563 = vdwg.mxu0
        %5564 = vmatpush.bf16.xpose.msra.mxu0 0
        %5565 = vmatpush.bf16.xpose.msra.mxu0 0
        %5566 = vmatpush.bf16.xpose.msra.mxu0 0
        %5567 = vmatpush.bf16.xpose.msra.mxu0 0
        %5568 = vmatpush.bf16.xpose.msra.mxu0 0
        %5569 = vmatpush.bf16.xpose.msra.mxu0 0
        %5570 = vmatpush.bf16.xpose.msra.mxu0 0
        %5571 = vmatpush.bf16.xpose.msra.mxu0 %v1408
        %5572 = vmatmul.bf16.gmra.mxu0 %v3365
        %v5573 = vpop.f32.mrf.mxu0
        %v5574 = vadd.f32 %v5560, %v5573
        %v5575 = vpop.f32.mrf.mxu0
        %v5576 = vadd.f32 %v5562, %v5575
        %5577 = vdwg.mxu0
        %5578 = vmatpush.bf16.xpose.msra.mxu0 0
        %5579 = vmatpush.bf16.xpose.msra.mxu0 0
        %5580 = vmatpush.bf16.xpose.msra.mxu0 0
        %5581 = vmatpush.bf16.xpose.msra.mxu0 0
        %5582 = vmatpush.bf16.xpose.msra.mxu0 0
        %5583 = vmatpush.bf16.xpose.msra.mxu0 0
        %5584 = vmatpush.bf16.xpose.msra.mxu0 0
        %5585 = vmatpush.bf16.xpose.msra.mxu0 %v1409
        %5586 = vmatmul.bf16.gmra.mxu0 %v3366
        %v5587 = vpop.f32.mrf.mxu0
        %v5588 = vadd.f32 %v5574, %v5587
        %v5589 = vpop.f32.mrf.mxu0
        %v5590 = vadd.f32 %v5576, %v5589
        %5591 = vdwg.mxu0
        %5592 = vmatpush.bf16.xpose.msra.mxu0 0
        %5593 = vmatpush.bf16.xpose.msra.mxu0 0
        %5594 = vmatpush.bf16.xpose.msra.mxu0 0
        %5595 = vmatpush.bf16.xpose.msra.mxu0 0
        %5596 = vmatpush.bf16.xpose.msra.mxu0 0
        %5597 = vmatpush.bf16.xpose.msra.mxu0 0
        %5598 = vmatpush.bf16.xpose.msra.mxu0 0
        %5599 = vmatpush.bf16.xpose.msra.mxu0 %v1410
        %5600 = vmatmul.bf16.gmra.mxu0 %v3367
        %v5601 = vpop.f32.mrf.mxu0
        %v5602 = vadd.f32 %v5588, %v5601
        %v5603 = vpop.f32.mrf.mxu0
        %v5604 = vadd.f32 %v5590, %v5603
        %5605 = vdwg.mxu0
        %5606 = vmatpush.bf16.xpose.msra.mxu0 0
        %5607 = vmatpush.bf16.xpose.msra.mxu0 0
        %5608 = vmatpush.bf16.xpose.msra.mxu0 0
        %5609 = vmatpush.bf16.xpose.msra.mxu0 0
        %5610 = vmatpush.bf16.xpose.msra.mxu0 0
        %5611 = vmatpush.bf16.xpose.msra.mxu0 0
        %5612 = vmatpush.bf16.xpose.msra.mxu0 0
        %5613 = vmatpush.bf16.xpose.msra.mxu0 %v1411
        %5614 = vmatmul.bf16.gmra.mxu0 %v3368
        %v5615 = vpop.f32.mrf.mxu0
        %v5616 = vadd.f32 %v5602, %v5615
        %v5617 = vpop.f32.mrf.mxu0
        %v5618 = vadd.f32 %v5604, %v5617
        %5619 = vdwg.mxu0
        %5620 = vmatpush.bf16.xpose.msra.mxu0 0
        %5621 = vmatpush.bf16.xpose.msra.mxu0 0
        %5622 = vmatpush.bf16.xpose.msra.mxu0 0
        %5623 = vmatpush.bf16.xpose.msra.mxu0 0
        %5624 = vmatpush.bf16.xpose.msra.mxu0 0
        %5625 = vmatpush.bf16.xpose.msra.mxu0 0
        %5626 = vmatpush.bf16.xpose.msra.mxu0 0
        %5627 = vmatpush.bf16.xpose.msra.mxu0 %v1412
        %5628 = vmatmul.bf16.gmra.mxu0 %v3369
        %v5629 = vpop.f32.mrf.mxu0
        %v5630 = vadd.f32 %v5616, %v5629
        %v5631 = vpop.f32.mrf.mxu0
        %v5632 = vadd.f32 %v5618, %v5631
        %5633 = vdwg.mxu0
        %5634 = vmatpush.bf16.xpose.msra.mxu0 0
        %5635 = vmatpush.bf16.xpose.msra.mxu0 0
        %5636 = vmatpush.bf16.xpose.msra.mxu0 0
        %5637 = vmatpush.bf16.xpose.msra.mxu0 0
        %5638 = vmatpush.bf16.xpose.msra.mxu0 0
        %5639 = vmatpush.bf16.xpose.msra.mxu0 0
        %5640 = vmatpush.bf16.xpose.msra.mxu0 0
        %5641 = vmatpush.bf16.xpose.msra.mxu0 %v1413
        %5642 = vmatmul.bf16.gmra.mxu0 %v3370
        %v5643 = vpop.f32.mrf.mxu0
        %v5644 = vadd.f32 %v5630, %v5643
        %v5645 = vpop.f32.mrf.mxu0
        %v5646 = vadd.f32 %v5632, %v5645
        %5647 = vdwg.mxu0
        %5648 = vmatpush.bf16.xpose.msra.mxu0 0
        %5649 = vmatpush.bf16.xpose.msra.mxu0 0
        %5650 = vmatpush.bf16.xpose.msra.mxu0 0
        %5651 = vmatpush.bf16.xpose.msra.mxu0 0
        %5652 = vmatpush.bf16.xpose.msra.mxu0 0
        %5653 = vmatpush.bf16.xpose.msra.mxu0 0
        %5654 = vmatpush.bf16.xpose.msra.mxu0 0
        %5655 = vmatpush.bf16.xpose.msra.mxu0 %v1414
        %5656 = vmatmul.bf16.gmra.mxu0 %v3371
        %v5657 = vpop.f32.mrf.mxu0
        %v5658 = vadd.f32 %v5644, %v5657
        %v5659 = vpop.f32.mrf.mxu0
        %v5660 = vadd.f32 %v5646, %v5659
        %5661 = vdwg.mxu0
        %5662 = vmatpush.bf16.xpose.msra.mxu0 0
        %5663 = vmatpush.bf16.xpose.msra.mxu0 0
        %5664 = vmatpush.bf16.xpose.msra.mxu0 0
        %5665 = vmatpush.bf16.xpose.msra.mxu0 0
        %5666 = vmatpush.bf16.xpose.msra.mxu0 0
        %5667 = vmatpush.bf16.xpose.msra.mxu0 0
        %5668 = vmatpush.bf16.xpose.msra.mxu0 0
        %5669 = vmatpush.bf16.xpose.msra.mxu0 %v1415
        %5670 = vmatmul.bf16.gmra.mxu0 %v3372
        %v5671 = vpop.f32.mrf.mxu0
        %v5672 = vadd.f32 %v5658, %v5671
        %v5673 = vpop.f32.mrf.mxu0
        %v5674 = vadd.f32 %v5660, %v5673
        %5675 = vdwg.mxu0
        %5676 = vmatpush.bf16.xpose.msra.mxu0 0
        %5677 = vmatpush.bf16.xpose.msra.mxu0 0
        %5678 = vmatpush.bf16.xpose.msra.mxu0 0
        %5679 = vmatpush.bf16.xpose.msra.mxu0 0
        %5680 = vmatpush.bf16.xpose.msra.mxu0 0
        %5681 = vmatpush.bf16.xpose.msra.mxu0 0
        %5682 = vmatpush.bf16.xpose.msra.mxu0 0
        %5683 = vmatpush.bf16.xpose.msra.mxu0 %v1416
        %5684 = vmatmul.bf16.gmra.mxu0 %v3373
        %v5685 = vpop.f32.mrf.mxu0
        %v5686 = vadd.f32 %v5672, %v5685
        %v5687 = vpop.f32.mrf.mxu0
        %v5688 = vadd.f32 %v5674, %v5687
        %5689 = vdwg.mxu0
        %5690 = vmatpush.bf16.xpose.msra.mxu0 0
        %5691 = vmatpush.bf16.xpose.msra.mxu0 0
        %5692 = vmatpush.bf16.xpose.msra.mxu0 0
        %5693 = vmatpush.bf16.xpose.msra.mxu0 0
        %5694 = vmatpush.bf16.xpose.msra.mxu0 0
        %5695 = vmatpush.bf16.xpose.msra.mxu0 0
        %5696 = vmatpush.bf16.xpose.msra.mxu0 0
        %5697 = vmatpush.bf16.xpose.msra.mxu0 %v1417
        %5698 = vmatmul.bf16.gmra.mxu0 %v3374
        %v5699 = vpop.f32.mrf.mxu0
        %v5700 = vadd.f32 %v5686, %v5699
        %v5701 = vpop.f32.mrf.mxu0
        %v5702 = vadd.f32 %v5688, %v5701
        %5703 = vdwg.mxu0
        %5704 = vmatpush.bf16.xpose.msra.mxu0 0
        %5705 = vmatpush.bf16.xpose.msra.mxu0 0
        %5706 = vmatpush.bf16.xpose.msra.mxu0 0
        %5707 = vmatpush.bf16.xpose.msra.mxu0 0
        %5708 = vmatpush.bf16.xpose.msra.mxu0 0
        %5709 = vmatpush.bf16.xpose.msra.mxu0 0
        %5710 = vmatpush.bf16.xpose.msra.mxu0 0
        %5711 = vmatpush.bf16.xpose.msra.mxu0 %v1418
        %5712 = vmatmul.bf16.gmra.mxu0 %v3375
        %v5713 = vpop.f32.mrf.mxu0
        %v5714 = vadd.f32 %v5700, %v5713
        %v5715 = vpop.f32.mrf.mxu0
        %v5716 = vadd.f32 %v5702, %v5715
        %5717 = vdwg.mxu0
        %5718 = vmatpush.bf16.xpose.msra.mxu0 0
        %5719 = vmatpush.bf16.xpose.msra.mxu0 0
        %5720 = vmatpush.bf16.xpose.msra.mxu0 0
        %5721 = vmatpush.bf16.xpose.msra.mxu0 0
        %5722 = vmatpush.bf16.xpose.msra.mxu0 0
        %5723 = vmatpush.bf16.xpose.msra.mxu0 0
        %5724 = vmatpush.bf16.xpose.msra.mxu0 0
        %5725 = vmatpush.bf16.xpose.msra.mxu0 %v1419
        %5726 = vmatmul.bf16.gmra.mxu0 %v3376
        %v5727 = vpop.f32.mrf.mxu0
        %v5728 = vadd.f32 %v5714, %v5727
        %v5729 = vpop.f32.mrf.mxu0
        %v5730 = vadd.f32 %v5716, %v5729
        %5731 = vdwg.mxu0
        %5732 = vmatpush.bf16.xpose.msra.mxu0 0
        %5733 = vmatpush.bf16.xpose.msra.mxu0 0
        %5734 = vmatpush.bf16.xpose.msra.mxu0 0
        %5735 = vmatpush.bf16.xpose.msra.mxu0 0
        %5736 = vmatpush.bf16.xpose.msra.mxu0 0
        %5737 = vmatpush.bf16.xpose.msra.mxu0 0
        %5738 = vmatpush.bf16.xpose.msra.mxu0 0
        %5739 = vmatpush.bf16.xpose.msra.mxu0 %v1420
        %5740 = vmatmul.bf16.gmra.mxu0 %v3377
        %v5741 = vpop.f32.mrf.mxu0
        %v5742 = vadd.f32 %v5728, %v5741
        %v5743 = vpop.f32.mrf.mxu0
        %v5744 = vadd.f32 %v5730, %v5743
        %5745 = vdwg.mxu0
        %5746 = vmatpush.bf16.xpose.msra.mxu0 0
        %5747 = vmatpush.bf16.xpose.msra.mxu0 0
        %5748 = vmatpush.bf16.xpose.msra.mxu0 0
        %5749 = vmatpush.bf16.xpose.msra.mxu0 0
        %5750 = vmatpush.bf16.xpose.msra.mxu0 0
        %5751 = vmatpush.bf16.xpose.msra.mxu0 0
        %5752 = vmatpush.bf16.xpose.msra.mxu0 0
        %5753 = vmatpush.bf16.xpose.msra.mxu0 %v1421
        %5754 = vmatmul.bf16.gmra.mxu0 %v3378
        %v5755 = vpop.f32.mrf.mxu0
        %v5756 = vadd.f32 %v5742, %v5755
        %v5757 = vpop.f32.mrf.mxu0
        %v5758 = vadd.f32 %v5744, %v5757
        %5759 = vdwg.mxu0
        %5760 = vmatpush.bf16.xpose.msra.mxu0 0
        %5761 = vmatpush.bf16.xpose.msra.mxu0 0
        %5762 = vmatpush.bf16.xpose.msra.mxu0 0
        %5763 = vmatpush.bf16.xpose.msra.mxu0 0
        %5764 = vmatpush.bf16.xpose.msra.mxu0 0
        %5765 = vmatpush.bf16.xpose.msra.mxu0 0
        %5766 = vmatpush.bf16.xpose.msra.mxu0 0
        %5767 = vmatpush.bf16.xpose.msra.mxu0 %v1422
        %5768 = vmatmul.bf16.gmra.mxu0 %v3379
        %v5769 = vpop.f32.mrf.mxu0
        %v5770 = vadd.f32 %v5756, %v5769
        %v5771 = vpop.f32.mrf.mxu0
        %v5772 = vadd.f32 %v5758, %v5771
        %5773 = vdwg.mxu0
        %5774 = vmatpush.bf16.xpose.msra.mxu0 0
        %5775 = vmatpush.bf16.xpose.msra.mxu0 0
        %5776 = vmatpush.bf16.xpose.msra.mxu0 0
        %5777 = vmatpush.bf16.xpose.msra.mxu0 0
        %5778 = vmatpush.bf16.xpose.msra.mxu0 0
        %5779 = vmatpush.bf16.xpose.msra.mxu0 0
        %5780 = vmatpush.bf16.xpose.msra.mxu0 0
        %5781 = vmatpush.bf16.xpose.msra.mxu0 %v1423
        %5782 = vmatmul.bf16.gmra.mxu0 %v3380
        %v5783 = vpop.f32.mrf.mxu0
        %v5784 = vadd.f32 %v5770, %v5783
        %v5785 = vpop.f32.mrf.mxu0
        %v5786 = vadd.f32 %v5772, %v5785
        %5787 = vdwg.mxu0
        %5788 = vmatpush.bf16.xpose.msra.mxu0 0
        %5789 = vmatpush.bf16.xpose.msra.mxu0 0
        %5790 = vmatpush.bf16.xpose.msra.mxu0 0
        %5791 = vmatpush.bf16.xpose.msra.mxu0 0
        %5792 = vmatpush.bf16.xpose.msra.mxu0 0
        %5793 = vmatpush.bf16.xpose.msra.mxu0 0
        %5794 = vmatpush.bf16.xpose.msra.mxu0 0
        %5795 = vmatpush.bf16.xpose.msra.mxu0 %v1424
        %5796 = vmatmul.bf16.gmra.mxu0 %v3381
        %v5797 = vpop.f32.mrf.mxu0
        %v5798 = vadd.f32 %v5784, %v5797
        %v5799 = vpop.f32.mrf.mxu0
        %v5800 = vadd.f32 %v5786, %v5799
        %5801 = vdwg.mxu0
        %5802 = vmatpush.bf16.xpose.msra.mxu0 0
        %5803 = vmatpush.bf16.xpose.msra.mxu0 0
        %5804 = vmatpush.bf16.xpose.msra.mxu0 0
        %5805 = vmatpush.bf16.xpose.msra.mxu0 0
        %5806 = vmatpush.bf16.xpose.msra.mxu0 0
        %5807 = vmatpush.bf16.xpose.msra.mxu0 0
        %5808 = vmatpush.bf16.xpose.msra.mxu0 0
        %5809 = vmatpush.bf16.xpose.msra.mxu0 %v1425
        %5810 = vmatmul.bf16.gmra.mxu0 %v3382
        %v5811 = vpop.f32.mrf.mxu0
        %v5812 = vadd.f32 %v5798, %v5811
        %v5813 = vpop.f32.mrf.mxu0
        %v5814 = vadd.f32 %v5800, %v5813
        %5815 = vdwg.mxu0
        %5816 = vmatpush.bf16.xpose.msra.mxu0 0
        %5817 = vmatpush.bf16.xpose.msra.mxu0 0
        %5818 = vmatpush.bf16.xpose.msra.mxu0 0
        %5819 = vmatpush.bf16.xpose.msra.mxu0 0
        %5820 = vmatpush.bf16.xpose.msra.mxu0 0
        %5821 = vmatpush.bf16.xpose.msra.mxu0 0
        %5822 = vmatpush.bf16.xpose.msra.mxu0 0
        %5823 = vmatpush.bf16.xpose.msra.mxu0 %v1426
        %5824 = vmatmul.bf16.gmra.mxu0 %v3383
        %v5825 = vpop.f32.mrf.mxu0
        %v5826 = vadd.f32 %v5812, %v5825
        %v5827 = vpop.f32.mrf.mxu0
        %v5828 = vadd.f32 %v5814, %v5827
        %5829 = vdwg.mxu0
        %5830 = vmatpush.bf16.xpose.msra.mxu0 0
        %5831 = vmatpush.bf16.xpose.msra.mxu0 0
        %5832 = vmatpush.bf16.xpose.msra.mxu0 0
        %5833 = vmatpush.bf16.xpose.msra.mxu0 0
        %5834 = vmatpush.bf16.xpose.msra.mxu0 0
        %5835 = vmatpush.bf16.xpose.msra.mxu0 0
        %5836 = vmatpush.bf16.xpose.msra.mxu0 0
        %5837 = vmatpush.bf16.xpose.msra.mxu0 %v1427
        %5838 = vmatmul.bf16.gmra.mxu0 %v3384
        %v5839 = vpop.f32.mrf.mxu0
        %v5840 = vadd.f32 %v5826, %v5839
        %v5841 = vpop.f32.mrf.mxu0
        %v5842 = vadd.f32 %v5828, %v5841
        %5843 = vdwg.mxu0
        %5844 = vmatpush.bf16.xpose.msra.mxu0 0
        %5845 = vmatpush.bf16.xpose.msra.mxu0 0
        %5846 = vmatpush.bf16.xpose.msra.mxu0 0
        %5847 = vmatpush.bf16.xpose.msra.mxu0 0
        %5848 = vmatpush.bf16.xpose.msra.mxu0 0
        %5849 = vmatpush.bf16.xpose.msra.mxu0 0
        %5850 = vmatpush.bf16.xpose.msra.mxu0 0
        %5851 = vmatpush.bf16.xpose.msra.mxu0 %v1428
        %5852 = vmatmul.bf16.gmra.mxu0 %v3385
        %v5853 = vpop.f32.mrf.mxu0
        %v5854 = vadd.f32 %v5840, %v5853
        %v5855 = vpop.f32.mrf.mxu0
        %v5856 = vadd.f32 %v5842, %v5855
        %5857 = vdwg.mxu0
        %5858 = vmatpush.bf16.xpose.msra.mxu0 0
        %5859 = vmatpush.bf16.xpose.msra.mxu0 0
        %5860 = vmatpush.bf16.xpose.msra.mxu0 0
        %5861 = vmatpush.bf16.xpose.msra.mxu0 0
        %5862 = vmatpush.bf16.xpose.msra.mxu0 0
        %5863 = vmatpush.bf16.xpose.msra.mxu0 0
        %5864 = vmatpush.bf16.xpose.msra.mxu0 0
        %5865 = vmatpush.bf16.xpose.msra.mxu0 %v1429
        %5866 = vmatmul.bf16.gmra.mxu0 %v3386
        %v5867 = vpop.f32.mrf.mxu0
        %v5868 = vadd.f32 %v5854, %v5867
        %v5869 = vpop.f32.mrf.mxu0
        %v5870 = vadd.f32 %v5856, %v5869
        %5871 = vdwg.mxu0
        %5872 = vmatpush.bf16.xpose.msra.mxu0 0
        %5873 = vmatpush.bf16.xpose.msra.mxu0 0
        %5874 = vmatpush.bf16.xpose.msra.mxu0 0
        %5875 = vmatpush.bf16.xpose.msra.mxu0 0
        %5876 = vmatpush.bf16.xpose.msra.mxu0 0
        %5877 = vmatpush.bf16.xpose.msra.mxu0 0
        %5878 = vmatpush.bf16.xpose.msra.mxu0 0
        %5879 = vmatpush.bf16.xpose.msra.mxu0 %v1430
        %5880 = vmatmul.bf16.gmra.mxu0 %v3387
        %v5881 = vpop.f32.mrf.mxu0
        %v5882 = vadd.f32 %v5868, %v5881
        %v5883 = vpop.f32.mrf.mxu0
        %v5884 = vadd.f32 %v5870, %v5883
        %5885 = vdwg.mxu0
        %5886 = vmatpush.bf16.xpose.msra.mxu0 0
        %5887 = vmatpush.bf16.xpose.msra.mxu0 0
        %5888 = vmatpush.bf16.xpose.msra.mxu0 0
        %5889 = vmatpush.bf16.xpose.msra.mxu0 0
        %5890 = vmatpush.bf16.xpose.msra.mxu0 0
        %5891 = vmatpush.bf16.xpose.msra.mxu0 0
        %5892 = vmatpush.bf16.xpose.msra.mxu0 0
        %5893 = vmatpush.bf16.xpose.msra.mxu0 %v1431
        %5894 = vmatmul.bf16.gmra.mxu0 %v3388
        %v5895 = vpop.f32.mrf.mxu0
        %v5896 = vadd.f32 %v5882, %v5895
        %v5897 = vpop.f32.mrf.mxu0
        %v5898 = vadd.f32 %v5884, %v5897
        %5899 = vdwg.mxu0
        %5900 = vmatpush.bf16.xpose.msra.mxu0 0
        %5901 = vmatpush.bf16.xpose.msra.mxu0 0
        %5902 = vmatpush.bf16.xpose.msra.mxu0 0
        %5903 = vmatpush.bf16.xpose.msra.mxu0 0
        %5904 = vmatpush.bf16.xpose.msra.mxu0 0
        %5905 = vmatpush.bf16.xpose.msra.mxu0 0
        %5906 = vmatpush.bf16.xpose.msra.mxu0 0
        %5907 = vmatpush.bf16.xpose.msra.mxu0 %v1432
        %5908 = vmatmul.bf16.gmra.mxu0 %v3389
        %v5909 = vpop.f32.mrf.mxu0
        %v5910 = vadd.f32 %v5896, %v5909
        %v5911 = vpop.f32.mrf.mxu0
        %v5912 = vadd.f32 %v5898, %v5911
        %5913 = vdwg.mxu0
        %5914 = vmatpush.bf16.xpose.msra.mxu0 0
        %5915 = vmatpush.bf16.xpose.msra.mxu0 0
        %5916 = vmatpush.bf16.xpose.msra.mxu0 0
        %5917 = vmatpush.bf16.xpose.msra.mxu0 0
        %5918 = vmatpush.bf16.xpose.msra.mxu0 0
        %5919 = vmatpush.bf16.xpose.msra.mxu0 0
        %5920 = vmatpush.bf16.xpose.msra.mxu0 0
        %5921 = vmatpush.bf16.xpose.msra.mxu0 %v1433
        %5922 = vmatmul.bf16.gmra.mxu0 %v3390
        %v5923 = vpop.f32.mrf.mxu0
        %v5924 = vadd.f32 %v5910, %v5923
        %v5925 = vpop.f32.mrf.mxu0
        %v5926 = vadd.f32 %v5912, %v5925
        %5927 = vdwg.mxu0
        %5928 = vmatpush.bf16.xpose.msra.mxu0 0
        %5929 = vmatpush.bf16.xpose.msra.mxu0 0
        %5930 = vmatpush.bf16.xpose.msra.mxu0 0
        %5931 = vmatpush.bf16.xpose.msra.mxu0 0
        %5932 = vmatpush.bf16.xpose.msra.mxu0 0
        %5933 = vmatpush.bf16.xpose.msra.mxu0 0
        %5934 = vmatpush.bf16.xpose.msra.mxu0 0
        %5935 = vmatpush.bf16.xpose.msra.mxu0 %v1434
        %5936 = vmatmul.bf16.gmra.mxu0 %v3391
        %v5937 = vpop.f32.mrf.mxu0
        %v5938 = vadd.f32 %v5924, %v5937
        %v5939 = vpop.f32.mrf.mxu0
        %v5940 = vadd.f32 %v5926, %v5939
        %5941 = vdwg.mxu0
        %5942 = vmatpush.bf16.xpose.msra.mxu0 0
        %5943 = vmatpush.bf16.xpose.msra.mxu0 0
        %5944 = vmatpush.bf16.xpose.msra.mxu0 0
        %5945 = vmatpush.bf16.xpose.msra.mxu0 0
        %5946 = vmatpush.bf16.xpose.msra.mxu0 0
        %5947 = vmatpush.bf16.xpose.msra.mxu0 0
        %5948 = vmatpush.bf16.xpose.msra.mxu0 0
        %5949 = vmatpush.bf16.xpose.msra.mxu0 %v1435
        %5950 = vmatmul.bf16.gmra.mxu0 %v3392
        %v5951 = vpop.f32.mrf.mxu0
        %v5952 = vadd.f32 %v5938, %v5951
        %v5953 = vpop.f32.mrf.mxu0
        %v5954 = vadd.f32 %v5940, %v5953
        %5955 = vdwg.mxu0
        %5956 = vmatpush.bf16.xpose.msra.mxu0 0
        %5957 = vmatpush.bf16.xpose.msra.mxu0 0
        %5958 = vmatpush.bf16.xpose.msra.mxu0 0
        %5959 = vmatpush.bf16.xpose.msra.mxu0 0
        %5960 = vmatpush.bf16.xpose.msra.mxu0 0
        %5961 = vmatpush.bf16.xpose.msra.mxu0 0
        %5962 = vmatpush.bf16.xpose.msra.mxu0 0
        %5963 = vmatpush.bf16.xpose.msra.mxu0 %v1436
        %5964 = vmatmul.bf16.gmra.mxu0 %v3393
        %v5965 = vpop.f32.mrf.mxu0
        %v5966 = vadd.f32 %v5952, %v5965
        %v5967 = vpop.f32.mrf.mxu0
        %v5968 = vadd.f32 %v5954, %v5967
        %5969 = vdwg.mxu0
        %5970 = vmatpush.bf16.xpose.msra.mxu0 0
        %5971 = vmatpush.bf16.xpose.msra.mxu0 0
        %5972 = vmatpush.bf16.xpose.msra.mxu0 0
        %5973 = vmatpush.bf16.xpose.msra.mxu0 0
        %5974 = vmatpush.bf16.xpose.msra.mxu0 0
        %5975 = vmatpush.bf16.xpose.msra.mxu0 0
        %5976 = vmatpush.bf16.xpose.msra.mxu0 0
        %5977 = vmatpush.bf16.xpose.msra.mxu0 %v1437
        %5978 = vmatmul.bf16.gmra.mxu0 %v3394
        %v5979 = vpop.f32.mrf.mxu0
        %v5980 = vadd.f32 %v5966, %v5979
        %v5981 = vpop.f32.mrf.mxu0
        %v5982 = vadd.f32 %v5968, %v5981
        %5983 = vdwg.mxu0
        %5984 = vmatpush.bf16.xpose.msra.mxu0 0
        %5985 = vmatpush.bf16.xpose.msra.mxu0 0
        %5986 = vmatpush.bf16.xpose.msra.mxu0 0
        %5987 = vmatpush.bf16.xpose.msra.mxu0 0
        %5988 = vmatpush.bf16.xpose.msra.mxu0 0
        %5989 = vmatpush.bf16.xpose.msra.mxu0 0
        %5990 = vmatpush.bf16.xpose.msra.mxu0 0
        %5991 = vmatpush.bf16.xpose.msra.mxu0 %v1438
        %5992 = vmatmul.bf16.gmra.mxu0 %v3395
        %v5993 = vpop.f32.mrf.mxu0
        %v5994 = vadd.f32 %v5980, %v5993
        %v5995 = vpop.f32.mrf.mxu0
        %v5996 = vadd.f32 %v5982, %v5995
        %5997 = vdwg.mxu0
        %5998 = vmatpush.bf16.xpose.msra.mxu0 0
        %5999 = vmatpush.bf16.xpose.msra.mxu0 0
        %6000 = vmatpush.bf16.xpose.msra.mxu0 0
        %6001 = vmatpush.bf16.xpose.msra.mxu0 0
        %6002 = vmatpush.bf16.xpose.msra.mxu0 0
        %6003 = vmatpush.bf16.xpose.msra.mxu0 0
        %6004 = vmatpush.bf16.xpose.msra.mxu0 0
        %6005 = vmatpush.bf16.xpose.msra.mxu0 %v1439
        %6006 = vmatmul.bf16.gmra.mxu0 %v3396
        %v6007 = vpop.f32.mrf.mxu0
        %v6008 = vadd.f32 %v5994, %v6007
        %v6009 = vpop.f32.mrf.mxu0
        %v6010 = vadd.f32 %v5996, %v6009
        %6011 = vdwg.mxu0
        %6012 = vmatpush.bf16.xpose.msra.mxu0 0
        %6013 = vmatpush.bf16.xpose.msra.mxu0 0
        %6014 = vmatpush.bf16.xpose.msra.mxu0 0
        %6015 = vmatpush.bf16.xpose.msra.mxu0 0
        %6016 = vmatpush.bf16.xpose.msra.mxu0 0
        %6017 = vmatpush.bf16.xpose.msra.mxu0 0
        %6018 = vmatpush.bf16.xpose.msra.mxu0 0
        %6019 = vmatpush.bf16.xpose.msra.mxu0 %v1440
        %6020 = vmatmul.bf16.gmra.mxu0 %v3397
        %v6021 = vpop.f32.mrf.mxu0
        %v6022 = vadd.f32 %v6008, %v6021
        %v6023 = vpop.f32.mrf.mxu0
        %v6024 = vadd.f32 %v6010, %v6023
        %6025 = vdwg.mxu0
        %6026 = vmatpush.bf16.xpose.msra.mxu0 0
        %6027 = vmatpush.bf16.xpose.msra.mxu0 0
        %6028 = vmatpush.bf16.xpose.msra.mxu0 0
        %6029 = vmatpush.bf16.xpose.msra.mxu0 0
        %6030 = vmatpush.bf16.xpose.msra.mxu0 0
        %6031 = vmatpush.bf16.xpose.msra.mxu0 0
        %6032 = vmatpush.bf16.xpose.msra.mxu0 0
        %6033 = vmatpush.bf16.xpose.msra.mxu0 %v1441
        %6034 = vmatmul.bf16.gmra.mxu0 %v3398
        %v6035 = vpop.f32.mrf.mxu0
        %v6036 = vadd.f32 %v6022, %v6035
        %v6037 = vpop.f32.mrf.mxu0
        %v6038 = vadd.f32 %v6024, %v6037
        %6039 = vdwg.mxu0
        %6040 = vmatpush.bf16.xpose.msra.mxu0 0
        %6041 = vmatpush.bf16.xpose.msra.mxu0 0
        %6042 = vmatpush.bf16.xpose.msra.mxu0 0
        %6043 = vmatpush.bf16.xpose.msra.mxu0 0
        %6044 = vmatpush.bf16.xpose.msra.mxu0 0
        %6045 = vmatpush.bf16.xpose.msra.mxu0 0
        %6046 = vmatpush.bf16.xpose.msra.mxu0 0
        %6047 = vmatpush.bf16.xpose.msra.mxu0 %v1442
        %6048 = vmatmul.bf16.gmra.mxu0 %v3399
        %v6049 = vpop.f32.mrf.mxu0
        %v6050 = vadd.f32 %v6036, %v6049
        %v6051 = vpop.f32.mrf.mxu0
        %v6052 = vadd.f32 %v6038, %v6051
        %6053 = vdwg.mxu0
        %6054 = vmatpush.bf16.xpose.msra.mxu0 0
        %6055 = vmatpush.bf16.xpose.msra.mxu0 0
        %6056 = vmatpush.bf16.xpose.msra.mxu0 0
        %6057 = vmatpush.bf16.xpose.msra.mxu0 0
        %6058 = vmatpush.bf16.xpose.msra.mxu0 0
        %6059 = vmatpush.bf16.xpose.msra.mxu0 0
        %6060 = vmatpush.bf16.xpose.msra.mxu0 0
        %6061 = vmatpush.bf16.xpose.msra.mxu0 %v1443
        %6062 = vmatmul.bf16.gmra.mxu0 %v3400
        %v6063 = vpop.f32.mrf.mxu0
        %v6064 = vadd.f32 %v6050, %v6063
        %v6065 = vpop.f32.mrf.mxu0
        %v6066 = vadd.f32 %v6052, %v6065
        %6067 = vdwg.mxu0
        %6068 = vmatpush.bf16.xpose.msra.mxu0 0
        %6069 = vmatpush.bf16.xpose.msra.mxu0 0
        %6070 = vmatpush.bf16.xpose.msra.mxu0 0
        %6071 = vmatpush.bf16.xpose.msra.mxu0 0
        %6072 = vmatpush.bf16.xpose.msra.mxu0 0
        %6073 = vmatpush.bf16.xpose.msra.mxu0 0
        %6074 = vmatpush.bf16.xpose.msra.mxu0 0
        %6075 = vmatpush.bf16.xpose.msra.mxu0 %v1444
        %6076 = vmatmul.bf16.gmra.mxu0 %v3401
        %v6077 = vpop.f32.mrf.mxu0
        %v6078 = vadd.f32 %v6064, %v6077
        %v6079 = vpop.f32.mrf.mxu0
        %v6080 = vadd.f32 %v6066, %v6079
        %6081 = vdwg.mxu0
        %6082 = vmatpush.bf16.xpose.msra.mxu0 0
        %6083 = vmatpush.bf16.xpose.msra.mxu0 0
        %6084 = vmatpush.bf16.xpose.msra.mxu0 0
        %6085 = vmatpush.bf16.xpose.msra.mxu0 0
        %6086 = vmatpush.bf16.xpose.msra.mxu0 0
        %6087 = vmatpush.bf16.xpose.msra.mxu0 0
        %6088 = vmatpush.bf16.xpose.msra.mxu0 0
        %6089 = vmatpush.bf16.xpose.msra.mxu0 %v1445
        %6090 = vmatmul.bf16.gmra.mxu0 %v3402
        %v6091 = vpop.f32.mrf.mxu0
        %v6092 = vadd.f32 %v6078, %v6091
        %v6093 = vpop.f32.mrf.mxu0
        %v6094 = vadd.f32 %v6080, %v6093
        %6095 = vdwg.mxu0
        %6096 = vmatpush.bf16.xpose.msra.mxu0 0
        %6097 = vmatpush.bf16.xpose.msra.mxu0 0
        %6098 = vmatpush.bf16.xpose.msra.mxu0 0
        %6099 = vmatpush.bf16.xpose.msra.mxu0 0
        %6100 = vmatpush.bf16.xpose.msra.mxu0 0
        %6101 = vmatpush.bf16.xpose.msra.mxu0 0
        %6102 = vmatpush.bf16.xpose.msra.mxu0 0
        %6103 = vmatpush.bf16.xpose.msra.mxu0 %v1446
        %6104 = vmatmul.bf16.gmra.mxu0 %v3403
        %v6105 = vpop.f32.mrf.mxu0
        %v6106 = vadd.f32 %v6092, %v6105
        %v6107 = vpop.f32.mrf.mxu0
        %v6108 = vadd.f32 %v6094, %v6107
        %6109 = vdwg.mxu0
        %6110 = vmatpush.bf16.xpose.msra.mxu0 0
        %6111 = vmatpush.bf16.xpose.msra.mxu0 0
        %6112 = vmatpush.bf16.xpose.msra.mxu0 0
        %6113 = vmatpush.bf16.xpose.msra.mxu0 0
        %6114 = vmatpush.bf16.xpose.msra.mxu0 0
        %6115 = vmatpush.bf16.xpose.msra.mxu0 0
        %6116 = vmatpush.bf16.xpose.msra.mxu0 0
        %6117 = vmatpush.bf16.xpose.msra.mxu0 %v1447
        %6118 = vmatmul.bf16.gmra.mxu0 %v3404
        %v6119 = vpop.f32.mrf.mxu0
        %v6120 = vadd.f32 %v6106, %v6119
        %v6121 = vpop.f32.mrf.mxu0
        %v6122 = vadd.f32 %v6108, %v6121
        %6123 = vdwg.mxu0
        %6124 = vmatpush.bf16.xpose.msra.mxu0 0
        %6125 = vmatpush.bf16.xpose.msra.mxu0 0
        %6126 = vmatpush.bf16.xpose.msra.mxu0 0
        %6127 = vmatpush.bf16.xpose.msra.mxu0 0
        %6128 = vmatpush.bf16.xpose.msra.mxu0 0
        %6129 = vmatpush.bf16.xpose.msra.mxu0 0
        %6130 = vmatpush.bf16.xpose.msra.mxu0 0
        %6131 = vmatpush.bf16.xpose.msra.mxu0 %v1448
        %6132 = vmatmul.bf16.gmra.mxu0 %v3405
        %v6133 = vpop.f32.mrf.mxu0
        %v6134 = vadd.f32 %v6120, %v6133
        %v6135 = vpop.f32.mrf.mxu0
        %v6136 = vadd.f32 %v6122, %v6135
        %6137 = vdwg.mxu0
        %6138 = vmatpush.bf16.xpose.msra.mxu0 0
        %6139 = vmatpush.bf16.xpose.msra.mxu0 0
        %6140 = vmatpush.bf16.xpose.msra.mxu0 0
        %6141 = vmatpush.bf16.xpose.msra.mxu0 0
        %6142 = vmatpush.bf16.xpose.msra.mxu0 0
        %6143 = vmatpush.bf16.xpose.msra.mxu0 0
        %6144 = vmatpush.bf16.xpose.msra.mxu0 0
        %6145 = vmatpush.bf16.xpose.msra.mxu0 %v1449
        %6146 = vmatmul.bf16.gmra.mxu0 %v3406
        %v6147 = vpop.f32.mrf.mxu0
        %v6148 = vadd.f32 %v6134, %v6147
        %v6149 = vpop.f32.mrf.mxu0
        %v6150 = vadd.f32 %v6136, %v6149
        %6151 = vdwg.mxu0
        %6152 = vmatpush.bf16.xpose.msra.mxu0 0
        %6153 = vmatpush.bf16.xpose.msra.mxu0 0
        %6154 = vmatpush.bf16.xpose.msra.mxu0 0
        %6155 = vmatpush.bf16.xpose.msra.mxu0 0
        %6156 = vmatpush.bf16.xpose.msra.mxu0 0
        %6157 = vmatpush.bf16.xpose.msra.mxu0 0
        %6158 = vmatpush.bf16.xpose.msra.mxu0 0
        %6159 = vmatpush.bf16.xpose.msra.mxu0 %v1450
        %6160 = vmatmul.bf16.gmra.mxu0 %v3407
        %v6161 = vpop.f32.mrf.mxu0
        %v6162 = vadd.f32 %v6148, %v6161
        %v6163 = vpop.f32.mrf.mxu0
        %v6164 = vadd.f32 %v6150, %v6163
        %6165 = vdwg.mxu0
        %6166 = vmatpush.bf16.xpose.msra.mxu0 0
        %6167 = vmatpush.bf16.xpose.msra.mxu0 0
        %6168 = vmatpush.bf16.xpose.msra.mxu0 0
        %6169 = vmatpush.bf16.xpose.msra.mxu0 0
        %6170 = vmatpush.bf16.xpose.msra.mxu0 0
        %6171 = vmatpush.bf16.xpose.msra.mxu0 0
        %6172 = vmatpush.bf16.xpose.msra.mxu0 0
        %6173 = vmatpush.bf16.xpose.msra.mxu0 %v1451
        %6174 = vmatmul.bf16.gmra.mxu0 %v3408
        %v6175 = vpop.f32.mrf.mxu0
        %v6176 = vadd.f32 %v6162, %v6175
        %v6177 = vpop.f32.mrf.mxu0
        %v6178 = vadd.f32 %v6164, %v6177
        %6179 = vdwg.mxu0
        %6180 = vmatpush.bf16.xpose.msra.mxu0 0
        %6181 = vmatpush.bf16.xpose.msra.mxu0 0
        %6182 = vmatpush.bf16.xpose.msra.mxu0 0
        %6183 = vmatpush.bf16.xpose.msra.mxu0 0
        %6184 = vmatpush.bf16.xpose.msra.mxu0 0
        %6185 = vmatpush.bf16.xpose.msra.mxu0 0
        %6186 = vmatpush.bf16.xpose.msra.mxu0 0
        %6187 = vmatpush.bf16.xpose.msra.mxu0 %v1452
        %6188 = vmatmul.bf16.gmra.mxu0 %v3409
        %v6189 = vpop.f32.mrf.mxu0
        %v6190 = vadd.f32 %v6176, %v6189
        %v6191 = vpop.f32.mrf.mxu0
        %v6192 = vadd.f32 %v6178, %v6191
        %6193 = vdwg.mxu0
        %6194 = vmatpush.bf16.xpose.msra.mxu0 0
        %6195 = vmatpush.bf16.xpose.msra.mxu0 0
        %6196 = vmatpush.bf16.xpose.msra.mxu0 0
        %6197 = vmatpush.bf16.xpose.msra.mxu0 0
        %6198 = vmatpush.bf16.xpose.msra.mxu0 0
        %6199 = vmatpush.bf16.xpose.msra.mxu0 0
        %6200 = vmatpush.bf16.xpose.msra.mxu0 0
        %6201 = vmatpush.bf16.xpose.msra.mxu0 %v1453
        %6202 = vmatmul.bf16.gmra.mxu0 %v3410
        %v6203 = vpop.f32.mrf.mxu0
        %v6204 = vadd.f32 %v6190, %v6203
        %v6205 = vpop.f32.mrf.mxu0
        %v6206 = vadd.f32 %v6192, %v6205
        %6207 = vdwg.mxu0
        %6208 = vmatpush.bf16.xpose.msra.mxu0 0
        %6209 = vmatpush.bf16.xpose.msra.mxu0 0
        %6210 = vmatpush.bf16.xpose.msra.mxu0 0
        %6211 = vmatpush.bf16.xpose.msra.mxu0 0
        %6212 = vmatpush.bf16.xpose.msra.mxu0 0
        %6213 = vmatpush.bf16.xpose.msra.mxu0 0
        %6214 = vmatpush.bf16.xpose.msra.mxu0 0
        %6215 = vmatpush.bf16.xpose.msra.mxu0 %v1454
        %6216 = vmatmul.bf16.gmra.mxu0 %v3411
        %v6217 = vpop.f32.mrf.mxu0
        %v6218 = vadd.f32 %v6204, %v6217
        %v6219 = vpop.f32.mrf.mxu0
        %v6220 = vadd.f32 %v6206, %v6219
        %6221 = vdwg.mxu0
        %6222 = vmatpush.bf16.xpose.msra.mxu0 0
        %6223 = vmatpush.bf16.xpose.msra.mxu0 0
        %6224 = vmatpush.bf16.xpose.msra.mxu0 0
        %6225 = vmatpush.bf16.xpose.msra.mxu0 0
        %6226 = vmatpush.bf16.xpose.msra.mxu0 0
        %6227 = vmatpush.bf16.xpose.msra.mxu0 0
        %6228 = vmatpush.bf16.xpose.msra.mxu0 0
        %6229 = vmatpush.bf16.xpose.msra.mxu0 %v1455
        %6230 = vmatmul.bf16.gmra.mxu0 %v3412
        %v6231 = vpop.f32.mrf.mxu0
        %v6232 = vadd.f32 %v6218, %v6231
        %v6233 = vpop.f32.mrf.mxu0
        %v6234 = vadd.f32 %v6220, %v6233
        %6235 = vdwg.mxu0
        %6236 = vmatpush.bf16.xpose.msra.mxu0 0
        %6237 = vmatpush.bf16.xpose.msra.mxu0 0
        %6238 = vmatpush.bf16.xpose.msra.mxu0 0
        %6239 = vmatpush.bf16.xpose.msra.mxu0 0
        %6240 = vmatpush.bf16.xpose.msra.mxu0 0
        %6241 = vmatpush.bf16.xpose.msra.mxu0 0
        %6242 = vmatpush.bf16.xpose.msra.mxu0 0
        %6243 = vmatpush.bf16.xpose.msra.mxu0 %v1456
        %6244 = vmatmul.bf16.gmra.mxu0 %v3413
        %v6245 = vpop.f32.mrf.mxu0
        %v6246 = vadd.f32 %v6232, %v6245
        %v6247 = vpop.f32.mrf.mxu0
        %v6248 = vadd.f32 %v6234, %v6247
        %6249 = vdwg.mxu0
        %6250 = vmatpush.bf16.xpose.msra.mxu0 0
        %6251 = vmatpush.bf16.xpose.msra.mxu0 0
        %6252 = vmatpush.bf16.xpose.msra.mxu0 0
        %6253 = vmatpush.bf16.xpose.msra.mxu0 0
        %6254 = vmatpush.bf16.xpose.msra.mxu0 0
        %6255 = vmatpush.bf16.xpose.msra.mxu0 0
        %6256 = vmatpush.bf16.xpose.msra.mxu0 0
        %6257 = vmatpush.bf16.xpose.msra.mxu0 %v1457
        %6258 = vmatmul.bf16.gmra.mxu0 %v3414
        %v6259 = vpop.f32.mrf.mxu0
        %v6260 = vadd.f32 %v6246, %v6259
        %v6261 = vpop.f32.mrf.mxu0
        %v6262 = vadd.f32 %v6248, %v6261
        %6263 = vdwg.mxu0
        %6264 = vmatpush.bf16.xpose.msra.mxu0 0
        %6265 = vmatpush.bf16.xpose.msra.mxu0 0
        %6266 = vmatpush.bf16.xpose.msra.mxu0 0
        %6267 = vmatpush.bf16.xpose.msra.mxu0 0
        %6268 = vmatpush.bf16.xpose.msra.mxu0 0
        %6269 = vmatpush.bf16.xpose.msra.mxu0 0
        %6270 = vmatpush.bf16.xpose.msra.mxu0 0
        %6271 = vmatpush.bf16.xpose.msra.mxu0 %v1458
        %6272 = vmatmul.bf16.gmra.mxu0 %v3415
        %v6273 = vpop.f32.mrf.mxu0
        %v6274 = vadd.f32 %v6260, %v6273
        %v6275 = vpop.f32.mrf.mxu0
        %v6276 = vadd.f32 %v6262, %v6275
        %6277 = vdwg.mxu0
        %6278 = vmatpush.bf16.xpose.msra.mxu0 0
        %6279 = vmatpush.bf16.xpose.msra.mxu0 0
        %6280 = vmatpush.bf16.xpose.msra.mxu0 0
        %6281 = vmatpush.bf16.xpose.msra.mxu0 0
        %6282 = vmatpush.bf16.xpose.msra.mxu0 0
        %6283 = vmatpush.bf16.xpose.msra.mxu0 0
        %6284 = vmatpush.bf16.xpose.msra.mxu0 0
        %6285 = vmatpush.bf16.xpose.msra.mxu0 %v1459
        %6286 = vmatmul.bf16.gmra.mxu0 %v3416
        %v6287 = vpop.f32.mrf.mxu0
        %v6288 = vadd.f32 %v6274, %v6287
        %v6289 = vpop.f32.mrf.mxu0
        %v6290 = vadd.f32 %v6276, %v6289
        %6291 = vdwg.mxu0
        %6292 = vmatpush.bf16.xpose.msra.mxu0 0
        %6293 = vmatpush.bf16.xpose.msra.mxu0 0
        %6294 = vmatpush.bf16.xpose.msra.mxu0 0
        %6295 = vmatpush.bf16.xpose.msra.mxu0 0
        %6296 = vmatpush.bf16.xpose.msra.mxu0 0
        %6297 = vmatpush.bf16.xpose.msra.mxu0 0
        %6298 = vmatpush.bf16.xpose.msra.mxu0 0
        %6299 = vmatpush.bf16.xpose.msra.mxu0 %v1460
        %6300 = vmatmul.bf16.gmra.mxu0 %v3417
        %v6301 = vpop.f32.mrf.mxu0
        %v6302 = vadd.f32 %v6288, %v6301
        %v6303 = vpop.f32.mrf.mxu0
        %v6304 = vadd.f32 %v6290, %v6303
        %6305 = vdwg.mxu0
        %6306 = vmatpush.bf16.xpose.msra.mxu0 0
        %6307 = vmatpush.bf16.xpose.msra.mxu0 0
        %6308 = vmatpush.bf16.xpose.msra.mxu0 0
        %6309 = vmatpush.bf16.xpose.msra.mxu0 0
        %6310 = vmatpush.bf16.xpose.msra.mxu0 0
        %6311 = vmatpush.bf16.xpose.msra.mxu0 0
        %6312 = vmatpush.bf16.xpose.msra.mxu0 0
        %6313 = vmatpush.bf16.xpose.msra.mxu0 %v1461
        %6314 = vmatmul.bf16.gmra.mxu0 %v3418
        %v6315 = vpop.f32.mrf.mxu0
        %v6316 = vadd.f32 %v6302, %v6315
        %v6317 = vpop.f32.mrf.mxu0
        %v6318 = vadd.f32 %v6304, %v6317
        %6319 = vdwg.mxu0
        %6320 = vmatpush.bf16.xpose.msra.mxu0 0
        %6321 = vmatpush.bf16.xpose.msra.mxu0 0
        %6322 = vmatpush.bf16.xpose.msra.mxu0 0
        %6323 = vmatpush.bf16.xpose.msra.mxu0 0
        %6324 = vmatpush.bf16.xpose.msra.mxu0 0
        %6325 = vmatpush.bf16.xpose.msra.mxu0 0
        %6326 = vmatpush.bf16.xpose.msra.mxu0 0
        %6327 = vmatpush.bf16.xpose.msra.mxu0 %v1462
        %6328 = vmatmul.bf16.gmra.mxu0 %v3419
        %v6329 = vpop.f32.mrf.mxu0
        %v6330 = vadd.f32 %v6316, %v6329
        %v6331 = vpop.f32.mrf.mxu0
        %v6332 = vadd.f32 %v6318, %v6331
        %6333 = vdwg.mxu0
        %6334 = vmatpush.bf16.xpose.msra.mxu0 0
        %6335 = vmatpush.bf16.xpose.msra.mxu0 0
        %6336 = vmatpush.bf16.xpose.msra.mxu0 0
        %6337 = vmatpush.bf16.xpose.msra.mxu0 0
        %6338 = vmatpush.bf16.xpose.msra.mxu0 0
        %6339 = vmatpush.bf16.xpose.msra.mxu0 0
        %6340 = vmatpush.bf16.xpose.msra.mxu0 0
        %6341 = vmatpush.bf16.xpose.msra.mxu0 %v1463
        %6342 = vmatmul.bf16.gmra.mxu0 %v3420
        %v6343 = vpop.f32.mrf.mxu0
        %v6344 = vadd.f32 %v6330, %v6343
        %v6345 = vpop.f32.mrf.mxu0
        %v6346 = vadd.f32 %v6332, %v6345
        %6347 = vdwg.mxu0
        %6348 = vmatpush.bf16.xpose.msra.mxu0 0
        %6349 = vmatpush.bf16.xpose.msra.mxu0 0
        %6350 = vmatpush.bf16.xpose.msra.mxu0 0
        %6351 = vmatpush.bf16.xpose.msra.mxu0 0
        %6352 = vmatpush.bf16.xpose.msra.mxu0 0
        %6353 = vmatpush.bf16.xpose.msra.mxu0 0
        %6354 = vmatpush.bf16.xpose.msra.mxu0 0
        %6355 = vmatpush.bf16.xpose.msra.mxu0 %v1464
        %6356 = vmatmul.bf16.gmra.mxu0 %v3421
        %v6357 = vpop.f32.mrf.mxu0
        %v6358 = vadd.f32 %v6344, %v6357
        %v6359 = vpop.f32.mrf.mxu0
        %v6360 = vadd.f32 %v6346, %v6359
        %6361 = vdwg.mxu0
        %6362 = vmatpush.bf16.xpose.msra.mxu0 0
        %6363 = vmatpush.bf16.xpose.msra.mxu0 0
        %6364 = vmatpush.bf16.xpose.msra.mxu0 0
        %6365 = vmatpush.bf16.xpose.msra.mxu0 0
        %6366 = vmatpush.bf16.xpose.msra.mxu0 0
        %6367 = vmatpush.bf16.xpose.msra.mxu0 0
        %6368 = vmatpush.bf16.xpose.msra.mxu0 0
        %6369 = vmatpush.bf16.xpose.msra.mxu0 %v1465
        %6370 = vmatmul.bf16.gmra.mxu0 %v3422
        %v6371 = vpop.f32.mrf.mxu0
        %v6372 = vadd.f32 %v6358, %v6371
        %v6373 = vpop.f32.mrf.mxu0
        %v6374 = vadd.f32 %v6360, %v6373
        %6375 = vdwg.mxu0
        %6376 = vmatpush.bf16.xpose.msra.mxu0 0
        %6377 = vmatpush.bf16.xpose.msra.mxu0 0
        %6378 = vmatpush.bf16.xpose.msra.mxu0 0
        %6379 = vmatpush.bf16.xpose.msra.mxu0 0
        %6380 = vmatpush.bf16.xpose.msra.mxu0 0
        %6381 = vmatpush.bf16.xpose.msra.mxu0 0
        %6382 = vmatpush.bf16.xpose.msra.mxu0 0
        %6383 = vmatpush.bf16.xpose.msra.mxu0 %v1466
        %6384 = vmatmul.bf16.gmra.mxu0 %v3423
        %v6385 = vpop.f32.mrf.mxu0
        %v6386 = vadd.f32 %v6372, %v6385
        %v6387 = vpop.f32.mrf.mxu0
        %v6388 = vadd.f32 %v6374, %v6387
        %6389 = vdwg.mxu0
        %6390 = vmatpush.bf16.xpose.msra.mxu0 0
        %6391 = vmatpush.bf16.xpose.msra.mxu0 0
        %6392 = vmatpush.bf16.xpose.msra.mxu0 0
        %6393 = vmatpush.bf16.xpose.msra.mxu0 0
        %6394 = vmatpush.bf16.xpose.msra.mxu0 0
        %6395 = vmatpush.bf16.xpose.msra.mxu0 0
        %6396 = vmatpush.bf16.xpose.msra.mxu0 0
        %6397 = vmatpush.bf16.xpose.msra.mxu0 %v1467
        %6398 = vmatmul.bf16.gmra.mxu0 %v3424
        %v6399 = vpop.f32.mrf.mxu0
        %v6400 = vadd.f32 %v6386, %v6399
        %v6401 = vpop.f32.mrf.mxu0
        %v6402 = vadd.f32 %v6388, %v6401
        %6403 = vdwg.mxu0
        %6404 = vmatpush.bf16.xpose.msra.mxu0 0
        %6405 = vmatpush.bf16.xpose.msra.mxu0 0
        %6406 = vmatpush.bf16.xpose.msra.mxu0 0
        %6407 = vmatpush.bf16.xpose.msra.mxu0 0
        %6408 = vmatpush.bf16.xpose.msra.mxu0 0
        %6409 = vmatpush.bf16.xpose.msra.mxu0 0
        %6410 = vmatpush.bf16.xpose.msra.mxu0 0
        %6411 = vmatpush.bf16.xpose.msra.mxu0 %v1468
        %6412 = vmatmul.bf16.gmra.mxu0 %v3425
        %v6413 = vpop.f32.mrf.mxu0
        %v6414 = vadd.f32 %v6400, %v6413
        %v6415 = vpop.f32.mrf.mxu0
        %v6416 = vadd.f32 %v6402, %v6415
        %6417 = vdwg.mxu0
        %6418 = vmatpush.bf16.xpose.msra.mxu0 0
        %6419 = vmatpush.bf16.xpose.msra.mxu0 0
        %6420 = vmatpush.bf16.xpose.msra.mxu0 0
        %6421 = vmatpush.bf16.xpose.msra.mxu0 0
        %6422 = vmatpush.bf16.xpose.msra.mxu0 0
        %6423 = vmatpush.bf16.xpose.msra.mxu0 0
        %6424 = vmatpush.bf16.xpose.msra.mxu0 0
        %6425 = vmatpush.bf16.xpose.msra.mxu0 %v1469
        %6426 = vmatmul.bf16.gmra.mxu0 %v3426
        %v6427 = vpop.f32.mrf.mxu0
        %v6428 = vadd.f32 %v6414, %v6427
        %v6429 = vpop.f32.mrf.mxu0
        %v6430 = vadd.f32 %v6416, %v6429
        %6431 = vdwg.mxu0
        %6432 = vmatpush.bf16.xpose.msra.mxu0 0
        %6433 = vmatpush.bf16.xpose.msra.mxu0 0
        %6434 = vmatpush.bf16.xpose.msra.mxu0 0
        %6435 = vmatpush.bf16.xpose.msra.mxu0 0
        %6436 = vmatpush.bf16.xpose.msra.mxu0 0
        %6437 = vmatpush.bf16.xpose.msra.mxu0 0
        %6438 = vmatpush.bf16.xpose.msra.mxu0 0
        %6439 = vmatpush.bf16.xpose.msra.mxu0 %v1470
        %6440 = vmatmul.bf16.gmra.mxu0 %v3427
        %v6441 = vpop.f32.mrf.mxu0
        %v6442 = vadd.f32 %v6428, %v6441
        %v6443 = vpop.f32.mrf.mxu0
        %v6444 = vadd.f32 %v6430, %v6443
        %6445 = vdwg.mxu0
        %6446 = vmatpush.bf16.xpose.msra.mxu0 0
        %6447 = vmatpush.bf16.xpose.msra.mxu0 0
        %6448 = vmatpush.bf16.xpose.msra.mxu0 0
        %6449 = vmatpush.bf16.xpose.msra.mxu0 0
        %6450 = vmatpush.bf16.xpose.msra.mxu0 0
        %6451 = vmatpush.bf16.xpose.msra.mxu0 0
        %6452 = vmatpush.bf16.xpose.msra.mxu0 0
        %6453 = vmatpush.bf16.xpose.msra.mxu0 %v1471
        %6454 = vmatmul.bf16.gmra.mxu0 %v3428
        %v6455 = vpop.f32.mrf.mxu0
        %v6456 = vadd.f32 %v6442, %v6455
        %v6457 = vpop.f32.mrf.mxu0
        %v6458 = vadd.f32 %v6444, %v6457
        %6459 = vdwg.mxu0
        %6460 = vmatpush.bf16.xpose.msra.mxu0 0
        %6461 = vmatpush.bf16.xpose.msra.mxu0 0
        %6462 = vmatpush.bf16.xpose.msra.mxu0 0
        %6463 = vmatpush.bf16.xpose.msra.mxu0 0
        %6464 = vmatpush.bf16.xpose.msra.mxu0 0
        %6465 = vmatpush.bf16.xpose.msra.mxu0 0
        %6466 = vmatpush.bf16.xpose.msra.mxu0 0
        %6467 = vmatpush.bf16.xpose.msra.mxu0 %v1472
        %6468 = vmatmul.bf16.gmra.mxu0 %v3429
        %v6469 = vpop.f32.mrf.mxu0
        %v6470 = vadd.f32 %v6456, %v6469
        %v6471 = vpop.f32.mrf.mxu0
        %v6472 = vadd.f32 %v6458, %v6471
        %6473 = vdwg.mxu0
        %6474 = vmatpush.bf16.xpose.msra.mxu0 0
        %6475 = vmatpush.bf16.xpose.msra.mxu0 0
        %6476 = vmatpush.bf16.xpose.msra.mxu0 0
        %6477 = vmatpush.bf16.xpose.msra.mxu0 0
        %6478 = vmatpush.bf16.xpose.msra.mxu0 0
        %6479 = vmatpush.bf16.xpose.msra.mxu0 0
        %6480 = vmatpush.bf16.xpose.msra.mxu0 0
        %6481 = vmatpush.bf16.xpose.msra.mxu0 %v1473
        %6482 = vmatmul.bf16.gmra.mxu0 %v3430
        %v6483 = vpop.f32.mrf.mxu0
        %v6484 = vadd.f32 %v6470, %v6483
        %v6485 = vpop.f32.mrf.mxu0
        %v6486 = vadd.f32 %v6472, %v6485
        %6487 = vdwg.mxu0
        %6488 = vmatpush.bf16.xpose.msra.mxu0 0
        %6489 = vmatpush.bf16.xpose.msra.mxu0 0
        %6490 = vmatpush.bf16.xpose.msra.mxu0 0
        %6491 = vmatpush.bf16.xpose.msra.mxu0 0
        %6492 = vmatpush.bf16.xpose.msra.mxu0 0
        %6493 = vmatpush.bf16.xpose.msra.mxu0 0
        %6494 = vmatpush.bf16.xpose.msra.mxu0 0
        %6495 = vmatpush.bf16.xpose.msra.mxu0 %v1474
        %6496 = vmatmul.bf16.gmra.mxu0 %v3431
        %v6497 = vpop.f32.mrf.mxu0
        %v6498 = vadd.f32 %v6484, %v6497
        %v6499 = vpop.f32.mrf.mxu0
        %v6500 = vadd.f32 %v6486, %v6499
        %6501 = vdwg.mxu0
        %6502 = vmatpush.bf16.xpose.msra.mxu0 0
        %6503 = vmatpush.bf16.xpose.msra.mxu0 0
        %6504 = vmatpush.bf16.xpose.msra.mxu0 0
        %6505 = vmatpush.bf16.xpose.msra.mxu0 0
        %6506 = vmatpush.bf16.xpose.msra.mxu0 0
        %6507 = vmatpush.bf16.xpose.msra.mxu0 0
        %6508 = vmatpush.bf16.xpose.msra.mxu0 0
        %6509 = vmatpush.bf16.xpose.msra.mxu0 %v1475
        %6510 = vmatmul.bf16.gmra.mxu0 %v3432
        %v6511 = vpop.f32.mrf.mxu0
        %v6512 = vadd.f32 %v6498, %v6511
        %v6513 = vpop.f32.mrf.mxu0
        %v6514 = vadd.f32 %v6500, %v6513
        %6515 = vdwg.mxu0
        %6516 = vmatpush.bf16.xpose.msra.mxu0 0
        %6517 = vmatpush.bf16.xpose.msra.mxu0 0
        %6518 = vmatpush.bf16.xpose.msra.mxu0 0
        %6519 = vmatpush.bf16.xpose.msra.mxu0 0
        %6520 = vmatpush.bf16.xpose.msra.mxu0 0
        %6521 = vmatpush.bf16.xpose.msra.mxu0 0
        %6522 = vmatpush.bf16.xpose.msra.mxu0 0
        %6523 = vmatpush.bf16.xpose.msra.mxu0 %v1476
        %6524 = vmatmul.bf16.gmra.mxu0 %v3433
        %v6525 = vpop.f32.mrf.mxu0
        %v6526 = vadd.f32 %v6512, %v6525
        %v6527 = vpop.f32.mrf.mxu0
        %v6528 = vadd.f32 %v6514, %v6527
        %6529 = vdwg.mxu0
        %6530 = vmatpush.bf16.xpose.msra.mxu0 0
        %6531 = vmatpush.bf16.xpose.msra.mxu0 0
        %6532 = vmatpush.bf16.xpose.msra.mxu0 0
        %6533 = vmatpush.bf16.xpose.msra.mxu0 0
        %6534 = vmatpush.bf16.xpose.msra.mxu0 0
        %6535 = vmatpush.bf16.xpose.msra.mxu0 0
        %6536 = vmatpush.bf16.xpose.msra.mxu0 0
        %6537 = vmatpush.bf16.xpose.msra.mxu0 %v1477
        %6538 = vmatmul.bf16.gmra.mxu0 %v3434
        %v6539 = vpop.f32.mrf.mxu0
        %v6540 = vadd.f32 %v6526, %v6539
        %v6541 = vpop.f32.mrf.mxu0
        %v6542 = vadd.f32 %v6528, %v6541
        %6543 = vdwg.mxu0
        %6544 = vmatpush.bf16.xpose.msra.mxu0 0
        %6545 = vmatpush.bf16.xpose.msra.mxu0 0
        %6546 = vmatpush.bf16.xpose.msra.mxu0 0
        %6547 = vmatpush.bf16.xpose.msra.mxu0 0
        %6548 = vmatpush.bf16.xpose.msra.mxu0 0
        %6549 = vmatpush.bf16.xpose.msra.mxu0 0
        %6550 = vmatpush.bf16.xpose.msra.mxu0 0
        %6551 = vmatpush.bf16.xpose.msra.mxu0 %v1478
        %6552 = vmatmul.bf16.gmra.mxu0 %v3435
        %v6553 = vpop.f32.mrf.mxu0
        %v6554 = vadd.f32 %v6540, %v6553
        %v6555 = vpop.f32.mrf.mxu0
        %v6556 = vadd.f32 %v6542, %v6555
        %6557 = vdwg.mxu0
        %6558 = vmatpush.bf16.xpose.msra.mxu0 0
        %6559 = vmatpush.bf16.xpose.msra.mxu0 0
        %6560 = vmatpush.bf16.xpose.msra.mxu0 0
        %6561 = vmatpush.bf16.xpose.msra.mxu0 0
        %6562 = vmatpush.bf16.xpose.msra.mxu0 0
        %6563 = vmatpush.bf16.xpose.msra.mxu0 0
        %6564 = vmatpush.bf16.xpose.msra.mxu0 0
        %6565 = vmatpush.bf16.xpose.msra.mxu0 %v1479
        %6566 = vmatmul.bf16.gmra.mxu0 %v3436
        %v6567 = vpop.f32.mrf.mxu0
        %v6568 = vadd.f32 %v6554, %v6567
        %v6569 = vpop.f32.mrf.mxu0
        %v6570 = vadd.f32 %v6556, %v6569
        %6571 = vdwg.mxu0
        %6572 = vmatpush.bf16.xpose.msra.mxu0 0
        %6573 = vmatpush.bf16.xpose.msra.mxu0 0
        %6574 = vmatpush.bf16.xpose.msra.mxu0 0
        %6575 = vmatpush.bf16.xpose.msra.mxu0 0
        %6576 = vmatpush.bf16.xpose.msra.mxu0 0
        %6577 = vmatpush.bf16.xpose.msra.mxu0 0
        %6578 = vmatpush.bf16.xpose.msra.mxu0 0
        %6579 = vmatpush.bf16.xpose.msra.mxu0 %v1480
        %6580 = vmatmul.bf16.gmra.mxu0 %v3437
        %v6581 = vpop.f32.mrf.mxu0
        %v6582 = vadd.f32 %v6568, %v6581
        %v6583 = vpop.f32.mrf.mxu0
        %v6584 = vadd.f32 %v6570, %v6583
        %6585 = vdwg.mxu0
        %6586 = vmatpush.bf16.xpose.msra.mxu0 0
        %6587 = vmatpush.bf16.xpose.msra.mxu0 0
        %6588 = vmatpush.bf16.xpose.msra.mxu0 0
        %6589 = vmatpush.bf16.xpose.msra.mxu0 0
        %6590 = vmatpush.bf16.xpose.msra.mxu0 0
        %6591 = vmatpush.bf16.xpose.msra.mxu0 0
        %6592 = vmatpush.bf16.xpose.msra.mxu0 0
        %6593 = vmatpush.bf16.xpose.msra.mxu0 %v1481
        %6594 = vmatmul.bf16.gmra.mxu0 %v3438
        %v6595 = vpop.f32.mrf.mxu0
        %v6596 = vadd.f32 %v6582, %v6595
        %v6597 = vpop.f32.mrf.mxu0
        %v6598 = vadd.f32 %v6584, %v6597
        %6599 = vdwg.mxu0
        %6600 = vmatpush.bf16.xpose.msra.mxu0 0
        %6601 = vmatpush.bf16.xpose.msra.mxu0 0
        %6602 = vmatpush.bf16.xpose.msra.mxu0 0
        %6603 = vmatpush.bf16.xpose.msra.mxu0 0
        %6604 = vmatpush.bf16.xpose.msra.mxu0 0
        %6605 = vmatpush.bf16.xpose.msra.mxu0 0
        %6606 = vmatpush.bf16.xpose.msra.mxu0 0
        %6607 = vmatpush.bf16.xpose.msra.mxu0 %v1482
        %6608 = vmatmul.bf16.gmra.mxu0 %v3439
        %v6609 = vpop.f32.mrf.mxu0
        %v6610 = vadd.f32 %v6596, %v6609
        %v6611 = vpop.f32.mrf.mxu0
        %v6612 = vadd.f32 %v6598, %v6611
        %6613 = vdwg.mxu0
        %6614 = vmatpush.bf16.xpose.msra.mxu0 0
        %6615 = vmatpush.bf16.xpose.msra.mxu0 0
        %6616 = vmatpush.bf16.xpose.msra.mxu0 0
        %6617 = vmatpush.bf16.xpose.msra.mxu0 0
        %6618 = vmatpush.bf16.xpose.msra.mxu0 0
        %6619 = vmatpush.bf16.xpose.msra.mxu0 0
        %6620 = vmatpush.bf16.xpose.msra.mxu0 0
        %6621 = vmatpush.bf16.xpose.msra.mxu0 %v1483
        %6622 = vmatmul.bf16.gmra.mxu0 %v3440
        %v6623 = vpop.f32.mrf.mxu0
        %v6624 = vadd.f32 %v6610, %v6623
        %v6625 = vpop.f32.mrf.mxu0
        %v6626 = vadd.f32 %v6612, %v6625
        %6627 = vdwg.mxu0
        %6628 = vmatpush.bf16.xpose.msra.mxu0 0
        %6629 = vmatpush.bf16.xpose.msra.mxu0 0
        %6630 = vmatpush.bf16.xpose.msra.mxu0 0
        %6631 = vmatpush.bf16.xpose.msra.mxu0 0
        %6632 = vmatpush.bf16.xpose.msra.mxu0 0
        %6633 = vmatpush.bf16.xpose.msra.mxu0 0
        %6634 = vmatpush.bf16.xpose.msra.mxu0 0
        %6635 = vmatpush.bf16.xpose.msra.mxu0 %v1484
        %6636 = vmatmul.bf16.gmra.mxu0 %v3441
        %v6637 = vpop.f32.mrf.mxu0
        %v6638 = vadd.f32 %v6624, %v6637
        %v6639 = vpop.f32.mrf.mxu0
        %v6640 = vadd.f32 %v6626, %v6639
        %6641 = vdwg.mxu0
        %6642 = vmatpush.bf16.xpose.msra.mxu0 0
        %6643 = vmatpush.bf16.xpose.msra.mxu0 0
        %6644 = vmatpush.bf16.xpose.msra.mxu0 0
        %6645 = vmatpush.bf16.xpose.msra.mxu0 0
        %6646 = vmatpush.bf16.xpose.msra.mxu0 0
        %6647 = vmatpush.bf16.xpose.msra.mxu0 0
        %6648 = vmatpush.bf16.xpose.msra.mxu0 0
        %6649 = vmatpush.bf16.xpose.msra.mxu0 %v1485
        %6650 = vmatmul.bf16.gmra.mxu0 %v3442
        %v6651 = vpop.f32.mrf.mxu0
        %v6652 = vadd.f32 %v6638, %v6651
        %v6653 = vpop.f32.mrf.mxu0
        %v6654 = vadd.f32 %v6640, %v6653
        %6655 = vdwg.mxu0
        %6656 = vmatpush.bf16.xpose.msra.mxu0 0
        %6657 = vmatpush.bf16.xpose.msra.mxu0 0
        %6658 = vmatpush.bf16.xpose.msra.mxu0 0
        %6659 = vmatpush.bf16.xpose.msra.mxu0 0
        %6660 = vmatpush.bf16.xpose.msra.mxu0 0
        %6661 = vmatpush.bf16.xpose.msra.mxu0 0
        %6662 = vmatpush.bf16.xpose.msra.mxu0 0
        %6663 = vmatpush.bf16.xpose.msra.mxu0 %v1486
        %6664 = vmatmul.bf16.gmra.mxu0 %v3443
        %v6665 = vpop.f32.mrf.mxu0
        %v6666 = vadd.f32 %v6652, %v6665
        %v6667 = vpop.f32.mrf.mxu0
        %v6668 = vadd.f32 %v6654, %v6667
        %6669 = vdwg.mxu0
        %6670 = vmatpush.bf16.xpose.msra.mxu0 0
        %6671 = vmatpush.bf16.xpose.msra.mxu0 0
        %6672 = vmatpush.bf16.xpose.msra.mxu0 0
        %6673 = vmatpush.bf16.xpose.msra.mxu0 0
        %6674 = vmatpush.bf16.xpose.msra.mxu0 0
        %6675 = vmatpush.bf16.xpose.msra.mxu0 0
        %6676 = vmatpush.bf16.xpose.msra.mxu0 0
        %6677 = vmatpush.bf16.xpose.msra.mxu0 %v1487
        %6678 = vmatmul.bf16.gmra.mxu0 %v3444
        %v6679 = vpop.f32.mrf.mxu0
        %v6680 = vadd.f32 %v6666, %v6679
        %v6681 = vpop.f32.mrf.mxu0
        %v6682 = vadd.f32 %v6668, %v6681
        %6683 = vdwg.mxu0
        %6684 = vmatpush.bf16.xpose.msra.mxu0 0
        %6685 = vmatpush.bf16.xpose.msra.mxu0 0
        %6686 = vmatpush.bf16.xpose.msra.mxu0 0
        %6687 = vmatpush.bf16.xpose.msra.mxu0 0
        %6688 = vmatpush.bf16.xpose.msra.mxu0 0
        %6689 = vmatpush.bf16.xpose.msra.mxu0 0
        %6690 = vmatpush.bf16.xpose.msra.mxu0 0
        %6691 = vmatpush.bf16.xpose.msra.mxu0 %v1488
        %6692 = vmatmul.bf16.gmra.mxu0 %v3445
        %v6693 = vpop.f32.mrf.mxu0
        %v6694 = vadd.f32 %v6680, %v6693
        %v6695 = vpop.f32.mrf.mxu0
        %v6696 = vadd.f32 %v6682, %v6695
        %6697 = vdwg.mxu0
        %6698 = vmatpush.bf16.xpose.msra.mxu0 0
        %6699 = vmatpush.bf16.xpose.msra.mxu0 0
        %6700 = vmatpush.bf16.xpose.msra.mxu0 0
        %6701 = vmatpush.bf16.xpose.msra.mxu0 0
        %6702 = vmatpush.bf16.xpose.msra.mxu0 0
        %6703 = vmatpush.bf16.xpose.msra.mxu0 0
        %6704 = vmatpush.bf16.xpose.msra.mxu0 0
        %6705 = vmatpush.bf16.xpose.msra.mxu0 %v1489
        %6706 = vmatmul.bf16.gmra.mxu0 %v3446
        %v6707 = vpop.f32.mrf.mxu0
        %v6708 = vadd.f32 %v6694, %v6707
        %v6709 = vpop.f32.mrf.mxu0
        %v6710 = vadd.f32 %v6696, %v6709
        %6711 = vdwg.mxu0
        %6712 = vmatpush.bf16.xpose.msra.mxu0 0
        %6713 = vmatpush.bf16.xpose.msra.mxu0 0
        %6714 = vmatpush.bf16.xpose.msra.mxu0 0
        %6715 = vmatpush.bf16.xpose.msra.mxu0 0
        %6716 = vmatpush.bf16.xpose.msra.mxu0 0
        %6717 = vmatpush.bf16.xpose.msra.mxu0 0
        %6718 = vmatpush.bf16.xpose.msra.mxu0 0
        %6719 = vmatpush.bf16.xpose.msra.mxu0 %v1490
        %6720 = vmatmul.bf16.gmra.mxu0 %v3447
        %v6721 = vpop.f32.mrf.mxu0
        %v6722 = vadd.f32 %v6708, %v6721
        %v6723 = vpop.f32.mrf.mxu0
        %v6724 = vadd.f32 %v6710, %v6723
        %6725 = vdwg.mxu0
        %6726 = vmatpush.bf16.xpose.msra.mxu0 0
        %6727 = vmatpush.bf16.xpose.msra.mxu0 0
        %6728 = vmatpush.bf16.xpose.msra.mxu0 0
        %6729 = vmatpush.bf16.xpose.msra.mxu0 0
        %6730 = vmatpush.bf16.xpose.msra.mxu0 0
        %6731 = vmatpush.bf16.xpose.msra.mxu0 0
        %6732 = vmatpush.bf16.xpose.msra.mxu0 0
        %6733 = vmatpush.bf16.xpose.msra.mxu0 %v1491
        %6734 = vmatmul.bf16.gmra.mxu0 %v3448
        %v6735 = vpop.f32.mrf.mxu0
        %v6736 = vadd.f32 %v6722, %v6735
        %v6737 = vpop.f32.mrf.mxu0
        %v6738 = vadd.f32 %v6724, %v6737
        %6739 = vdwg.mxu0
        %6740 = vmatpush.bf16.xpose.msra.mxu0 0
        %6741 = vmatpush.bf16.xpose.msra.mxu0 0
        %6742 = vmatpush.bf16.xpose.msra.mxu0 0
        %6743 = vmatpush.bf16.xpose.msra.mxu0 0
        %6744 = vmatpush.bf16.xpose.msra.mxu0 0
        %6745 = vmatpush.bf16.xpose.msra.mxu0 0
        %6746 = vmatpush.bf16.xpose.msra.mxu0 0
        %6747 = vmatpush.bf16.xpose.msra.mxu0 %v1492
        %6748 = vmatmul.bf16.gmra.mxu0 %v3449
        %v6749 = vpop.f32.mrf.mxu0
        %v6750 = vadd.f32 %v6736, %v6749
        %v6751 = vpop.f32.mrf.mxu0
        %v6752 = vadd.f32 %v6738, %v6751
        %6753 = vdwg.mxu0
        %6754 = vmatpush.bf16.xpose.msra.mxu0 0
        %6755 = vmatpush.bf16.xpose.msra.mxu0 0
        %6756 = vmatpush.bf16.xpose.msra.mxu0 0
        %6757 = vmatpush.bf16.xpose.msra.mxu0 0
        %6758 = vmatpush.bf16.xpose.msra.mxu0 0
        %6759 = vmatpush.bf16.xpose.msra.mxu0 0
        %6760 = vmatpush.bf16.xpose.msra.mxu0 0
        %6761 = vmatpush.bf16.xpose.msra.mxu0 %v1493
        %6762 = vmatmul.bf16.gmra.mxu0 %v3450
        %v6763 = vpop.f32.mrf.mxu0
        %v6764 = vadd.f32 %v6750, %v6763
        %v6765 = vpop.f32.mrf.mxu0
        %v6766 = vadd.f32 %v6752, %v6765
        %6767 = vdwg.mxu0
        %6768 = vmatpush.bf16.xpose.msra.mxu0 0
        %6769 = vmatpush.bf16.xpose.msra.mxu0 0
        %6770 = vmatpush.bf16.xpose.msra.mxu0 0
        %6771 = vmatpush.bf16.xpose.msra.mxu0 0
        %6772 = vmatpush.bf16.xpose.msra.mxu0 0
        %6773 = vmatpush.bf16.xpose.msra.mxu0 0
        %6774 = vmatpush.bf16.xpose.msra.mxu0 0
        %6775 = vmatpush.bf16.xpose.msra.mxu0 %v1494
        %6776 = vmatmul.bf16.gmra.mxu0 %v3451
        %v6777 = vpop.f32.mrf.mxu0
        %v6778 = vadd.f32 %v6764, %v6777
        %v6779 = vpop.f32.mrf.mxu0
        %v6780 = vadd.f32 %v6766, %v6779
        %6781 = vdwg.mxu0
        %6782 = vmatpush.bf16.xpose.msra.mxu0 0
        %6783 = vmatpush.bf16.xpose.msra.mxu0 0
        %6784 = vmatpush.bf16.xpose.msra.mxu0 0
        %6785 = vmatpush.bf16.xpose.msra.mxu0 0
        %6786 = vmatpush.bf16.xpose.msra.mxu0 0
        %6787 = vmatpush.bf16.xpose.msra.mxu0 0
        %6788 = vmatpush.bf16.xpose.msra.mxu0 0
        %6789 = vmatpush.bf16.xpose.msra.mxu0 %v1495
        %6790 = vmatmul.bf16.gmra.mxu0 %v3452
        %v6791 = vpop.f32.mrf.mxu0
        %v6792 = vadd.f32 %v6778, %v6791
        %v6793 = vpop.f32.mrf.mxu0
        %v6794 = vadd.f32 %v6780, %v6793
        %6795 = vdwg.mxu0
        %6796 = vmatpush.bf16.xpose.msra.mxu0 0
        %6797 = vmatpush.bf16.xpose.msra.mxu0 0
        %6798 = vmatpush.bf16.xpose.msra.mxu0 0
        %6799 = vmatpush.bf16.xpose.msra.mxu0 0
        %6800 = vmatpush.bf16.xpose.msra.mxu0 0
        %6801 = vmatpush.bf16.xpose.msra.mxu0 0
        %6802 = vmatpush.bf16.xpose.msra.mxu0 0
        %6803 = vmatpush.bf16.xpose.msra.mxu0 %v1496
        %6804 = vmatmul.bf16.gmra.mxu0 %v3453
        %v6805 = vpop.f32.mrf.mxu0
        %v6806 = vadd.f32 %v6792, %v6805
        %v6807 = vpop.f32.mrf.mxu0
        %v6808 = vadd.f32 %v6794, %v6807
        %6809 = vdwg.mxu0
        %6810 = vmatpush.bf16.xpose.msra.mxu0 0
        %6811 = vmatpush.bf16.xpose.msra.mxu0 0
        %6812 = vmatpush.bf16.xpose.msra.mxu0 0
        %6813 = vmatpush.bf16.xpose.msra.mxu0 0
        %6814 = vmatpush.bf16.xpose.msra.mxu0 0
        %6815 = vmatpush.bf16.xpose.msra.mxu0 0
        %6816 = vmatpush.bf16.xpose.msra.mxu0 0
        %6817 = vmatpush.bf16.xpose.msra.mxu0 %v1497
        %6818 = vmatmul.bf16.gmra.mxu0 %v3454
        %v6819 = vpop.f32.mrf.mxu0
        %v6820 = vadd.f32 %v6806, %v6819
        %v6821 = vpop.f32.mrf.mxu0
        %v6822 = vadd.f32 %v6808, %v6821
        %6823 = vdwg.mxu0
        %6824 = vmatpush.bf16.xpose.msra.mxu0 0
        %6825 = vmatpush.bf16.xpose.msra.mxu0 0
        %6826 = vmatpush.bf16.xpose.msra.mxu0 0
        %6827 = vmatpush.bf16.xpose.msra.mxu0 0
        %6828 = vmatpush.bf16.xpose.msra.mxu0 0
        %6829 = vmatpush.bf16.xpose.msra.mxu0 0
        %6830 = vmatpush.bf16.xpose.msra.mxu0 0
        %6831 = vmatpush.bf16.xpose.msra.mxu0 %v1498
        %6832 = vmatmul.bf16.gmra.mxu0 %v3455
        %v6833 = vpop.f32.mrf.mxu0
        %v6834 = vadd.f32 %v6820, %v6833
        %v6835 = vpop.f32.mrf.mxu0
        %v6836 = vadd.f32 %v6822, %v6835
        %6837 = vdwg.mxu0
        %6838 = vmatpush.bf16.xpose.msra.mxu0 0
        %6839 = vmatpush.bf16.xpose.msra.mxu0 0
        %6840 = vmatpush.bf16.xpose.msra.mxu0 0
        %6841 = vmatpush.bf16.xpose.msra.mxu0 0
        %6842 = vmatpush.bf16.xpose.msra.mxu0 0
        %6843 = vmatpush.bf16.xpose.msra.mxu0 0
        %6844 = vmatpush.bf16.xpose.msra.mxu0 0
        %6845 = vmatpush.bf16.xpose.msra.mxu0 %v1499
        %6846 = vmatmul.bf16.gmra.mxu0 %v3456
        %v6847 = vpop.f32.mrf.mxu0
        %v6848 = vadd.f32 %v6834, %v6847
        %v6849 = vpop.f32.mrf.mxu0
        %v6850 = vadd.f32 %v6836, %v6849
        %6851 = vdwg.mxu0
        %6852 = vmatpush.bf16.xpose.msra.mxu0 0
        %6853 = vmatpush.bf16.xpose.msra.mxu0 0
        %6854 = vmatpush.bf16.xpose.msra.mxu0 0
        %6855 = vmatpush.bf16.xpose.msra.mxu0 0
        %6856 = vmatpush.bf16.xpose.msra.mxu0 0
        %6857 = vmatpush.bf16.xpose.msra.mxu0 0
        %6858 = vmatpush.bf16.xpose.msra.mxu0 0
        %6859 = vmatpush.bf16.xpose.msra.mxu0 %v1500
        %6860 = vmatmul.bf16.gmra.mxu0 %v3457
        %v6861 = vpop.f32.mrf.mxu0
        %v6862 = vadd.f32 %v6848, %v6861
        %v6863 = vpop.f32.mrf.mxu0
        %v6864 = vadd.f32 %v6850, %v6863
        %6865 = vdwg.mxu0
        %6866 = vmatpush.bf16.xpose.msra.mxu0 0
        %6867 = vmatpush.bf16.xpose.msra.mxu0 0
        %6868 = vmatpush.bf16.xpose.msra.mxu0 0
        %6869 = vmatpush.bf16.xpose.msra.mxu0 0
        %6870 = vmatpush.bf16.xpose.msra.mxu0 0
        %6871 = vmatpush.bf16.xpose.msra.mxu0 0
        %6872 = vmatpush.bf16.xpose.msra.mxu0 0
        %6873 = vmatpush.bf16.xpose.msra.mxu0 %v1501
        %6874 = vmatmul.bf16.gmra.mxu0 %v3458
        %v6875 = vpop.f32.mrf.mxu0
        %v6876 = vadd.f32 %v6862, %v6875
        %v6877 = vpop.f32.mrf.mxu0
        %v6878 = vadd.f32 %v6864, %v6877
        %6879 = vdwg.mxu0
        %6880 = vmatpush.bf16.xpose.msra.mxu0 0
        %6881 = vmatpush.bf16.xpose.msra.mxu0 0
        %6882 = vmatpush.bf16.xpose.msra.mxu0 0
        %6883 = vmatpush.bf16.xpose.msra.mxu0 0
        %6884 = vmatpush.bf16.xpose.msra.mxu0 0
        %6885 = vmatpush.bf16.xpose.msra.mxu0 0
        %6886 = vmatpush.bf16.xpose.msra.mxu0 0
        %6887 = vmatpush.bf16.xpose.msra.mxu0 %v1502
        %6888 = vmatmul.bf16.gmra.mxu0 %v3459
        %v6889 = vpop.f32.mrf.mxu0
        %v6890 = vadd.f32 %v6876, %v6889
        %v6891 = vpop.f32.mrf.mxu0
        %v6892 = vadd.f32 %v6878, %v6891
        %6893 = vdwg.mxu0
        %6894 = vmatpush.bf16.xpose.msra.mxu0 0
        %6895 = vmatpush.bf16.xpose.msra.mxu0 0
        %6896 = vmatpush.bf16.xpose.msra.mxu0 0
        %6897 = vmatpush.bf16.xpose.msra.mxu0 0
        %6898 = vmatpush.bf16.xpose.msra.mxu0 0
        %6899 = vmatpush.bf16.xpose.msra.mxu0 0
        %6900 = vmatpush.bf16.xpose.msra.mxu0 0
        %6901 = vmatpush.bf16.xpose.msra.mxu0 %v1503
        %6902 = vmatmul.bf16.gmra.mxu0 %v3460
        %v6903 = vpop.f32.mrf.mxu0
        %v6904 = vadd.f32 %v6890, %v6903
        %v6905 = vpop.f32.mrf.mxu0
        %v6906 = vadd.f32 %v6892, %v6905
        %6907 = vdwg.mxu0
        %6908 = vmatpush.bf16.xpose.msra.mxu0 0
        %6909 = vmatpush.bf16.xpose.msra.mxu0 0
        %6910 = vmatpush.bf16.xpose.msra.mxu0 0
        %6911 = vmatpush.bf16.xpose.msra.mxu0 0
        %6912 = vmatpush.bf16.xpose.msra.mxu0 0
        %6913 = vmatpush.bf16.xpose.msra.mxu0 0
        %6914 = vmatpush.bf16.xpose.msra.mxu0 0
        %6915 = vmatpush.bf16.xpose.msra.mxu0 %v1504
        %6916 = vmatmul.bf16.gmra.mxu0 %v3461
        %v6917 = vpop.f32.mrf.mxu0
        %v6918 = vadd.f32 %v6904, %v6917
        %v6919 = vpop.f32.mrf.mxu0
        %v6920 = vadd.f32 %v6906, %v6919
        %6921 = vdwg.mxu0
        %6922 = vmatpush.bf16.xpose.msra.mxu0 0
        %6923 = vmatpush.bf16.xpose.msra.mxu0 0
        %6924 = vmatpush.bf16.xpose.msra.mxu0 0
        %6925 = vmatpush.bf16.xpose.msra.mxu0 0
        %6926 = vmatpush.bf16.xpose.msra.mxu0 0
        %6927 = vmatpush.bf16.xpose.msra.mxu0 0
        %6928 = vmatpush.bf16.xpose.msra.mxu0 0
        %6929 = vmatpush.bf16.xpose.msra.mxu0 %v1505
        %6930 = vmatmul.bf16.gmra.mxu0 %v3462
        %v6931 = vpop.f32.mrf.mxu0
        %v6932 = vadd.f32 %v6918, %v6931
        %v6933 = vpop.f32.mrf.mxu0
        %v6934 = vadd.f32 %v6920, %v6933
        %6935 = vdwg.mxu0
        %6936 = vmatpush.bf16.xpose.msra.mxu0 0
        %6937 = vmatpush.bf16.xpose.msra.mxu0 0
        %6938 = vmatpush.bf16.xpose.msra.mxu0 0
        %6939 = vmatpush.bf16.xpose.msra.mxu0 0
        %6940 = vmatpush.bf16.xpose.msra.mxu0 0
        %6941 = vmatpush.bf16.xpose.msra.mxu0 0
        %6942 = vmatpush.bf16.xpose.msra.mxu0 0
        %6943 = vmatpush.bf16.xpose.msra.mxu0 %v1506
        %6944 = vmatmul.bf16.gmra.mxu0 %v3463
        %v6945 = vpop.f32.mrf.mxu0
        %v6946 = vadd.f32 %v6932, %v6945
        %v6947 = vpop.f32.mrf.mxu0
        %v6948 = vadd.f32 %v6934, %v6947
        %6949 = vdwg.mxu0
        %6950 = vmatpush.bf16.xpose.msra.mxu0 0
        %6951 = vmatpush.bf16.xpose.msra.mxu0 0
        %6952 = vmatpush.bf16.xpose.msra.mxu0 0
        %6953 = vmatpush.bf16.xpose.msra.mxu0 0
        %6954 = vmatpush.bf16.xpose.msra.mxu0 0
        %6955 = vmatpush.bf16.xpose.msra.mxu0 0
        %6956 = vmatpush.bf16.xpose.msra.mxu0 0
        %6957 = vmatpush.bf16.xpose.msra.mxu0 %v1507
        %6958 = vmatmul.bf16.gmra.mxu0 %v3464
        %v6959 = vpop.f32.mrf.mxu0
        %v6960 = vadd.f32 %v6946, %v6959
        %v6961 = vpop.f32.mrf.mxu0
        %v6962 = vadd.f32 %v6948, %v6961
        %6963 = vdwg.mxu0
        %6964 = vmatpush.bf16.xpose.msra.mxu0 0
        %6965 = vmatpush.bf16.xpose.msra.mxu0 0
        %6966 = vmatpush.bf16.xpose.msra.mxu0 0
        %6967 = vmatpush.bf16.xpose.msra.mxu0 0
        %6968 = vmatpush.bf16.xpose.msra.mxu0 0
        %6969 = vmatpush.bf16.xpose.msra.mxu0 0
        %6970 = vmatpush.bf16.xpose.msra.mxu0 0
        %6971 = vmatpush.bf16.xpose.msra.mxu0 %v1508
        %6972 = vmatmul.bf16.gmra.mxu0 %v3465
        %v6973 = vpop.f32.mrf.mxu0
        %v6974 = vadd.f32 %v6960, %v6973
        %v6975 = vpop.f32.mrf.mxu0
        %v6976 = vadd.f32 %v6962, %v6975
        %6977 = vdwg.mxu0
        %6978 = vmatpush.bf16.xpose.msra.mxu0 0
        %6979 = vmatpush.bf16.xpose.msra.mxu0 0
        %6980 = vmatpush.bf16.xpose.msra.mxu0 0
        %6981 = vmatpush.bf16.xpose.msra.mxu0 0
        %6982 = vmatpush.bf16.xpose.msra.mxu0 0
        %6983 = vmatpush.bf16.xpose.msra.mxu0 0
        %6984 = vmatpush.bf16.xpose.msra.mxu0 0
        %6985 = vmatpush.bf16.xpose.msra.mxu0 %v1509
        %6986 = vmatmul.bf16.gmra.mxu0 %v3466
        %v6987 = vpop.f32.mrf.mxu0
        %v6988 = vadd.f32 %v6974, %v6987
        %v6989 = vpop.f32.mrf.mxu0
        %v6990 = vadd.f32 %v6976, %v6989
        %6991 = vdwg.mxu0
        %6992 = vmatpush.bf16.xpose.msra.mxu0 0
        %6993 = vmatpush.bf16.xpose.msra.mxu0 0
        %6994 = vmatpush.bf16.xpose.msra.mxu0 0
        %6995 = vmatpush.bf16.xpose.msra.mxu0 0
        %6996 = vmatpush.bf16.xpose.msra.mxu0 0
        %6997 = vmatpush.bf16.xpose.msra.mxu0 0
        %6998 = vmatpush.bf16.xpose.msra.mxu0 0
        %6999 = vmatpush.bf16.xpose.msra.mxu0 %v1510
        %7000 = vmatmul.bf16.gmra.mxu0 %v3467
        %v7001 = vpop.f32.mrf.mxu0
        %v7002 = vadd.f32 %v6988, %v7001
        %v7003 = vpop.f32.mrf.mxu0
        %v7004 = vadd.f32 %v6990, %v7003
        %7005 = vdwg.mxu0
        %7006 = vmatpush.bf16.xpose.msra.mxu0 0
        %7007 = vmatpush.bf16.xpose.msra.mxu0 0
        %7008 = vmatpush.bf16.xpose.msra.mxu0 0
        %7009 = vmatpush.bf16.xpose.msra.mxu0 0
        %7010 = vmatpush.bf16.xpose.msra.mxu0 0
        %7011 = vmatpush.bf16.xpose.msra.mxu0 0
        %7012 = vmatpush.bf16.xpose.msra.mxu0 0
        %7013 = vmatpush.bf16.xpose.msra.mxu0 %v1511
        %7014 = vmatmul.bf16.gmra.mxu0 %v3468
        %v7015 = vpop.f32.mrf.mxu0
        %v7016 = vadd.f32 %v7002, %v7015
        %v7017 = vpop.f32.mrf.mxu0
        %v7018 = vadd.f32 %v7004, %v7017
        %7019 = vdwg.mxu0
        %7020 = vmatpush.bf16.xpose.msra.mxu0 0
        %7021 = vmatpush.bf16.xpose.msra.mxu0 0
        %7022 = vmatpush.bf16.xpose.msra.mxu0 0
        %7023 = vmatpush.bf16.xpose.msra.mxu0 0
        %7024 = vmatpush.bf16.xpose.msra.mxu0 0
        %7025 = vmatpush.bf16.xpose.msra.mxu0 0
        %7026 = vmatpush.bf16.xpose.msra.mxu0 0
        %7027 = vmatpush.bf16.xpose.msra.mxu0 %v1512
        %7028 = vmatmul.bf16.gmra.mxu0 %v3469
        %v7029 = vpop.f32.mrf.mxu0
        %v7030 = vadd.f32 %v7016, %v7029
        %v7031 = vpop.f32.mrf.mxu0
        %v7032 = vadd.f32 %v7018, %v7031
        %7033 = vdwg.mxu0
        %7034 = vmatpush.bf16.xpose.msra.mxu0 0
        %7035 = vmatpush.bf16.xpose.msra.mxu0 0
        %7036 = vmatpush.bf16.xpose.msra.mxu0 0
        %7037 = vmatpush.bf16.xpose.msra.mxu0 0
        %7038 = vmatpush.bf16.xpose.msra.mxu0 0
        %7039 = vmatpush.bf16.xpose.msra.mxu0 0
        %7040 = vmatpush.bf16.xpose.msra.mxu0 0
        %7041 = vmatpush.bf16.xpose.msra.mxu0 %v1513
        %7042 = vmatmul.bf16.gmra.mxu0 %v3470
        %v7043 = vpop.f32.mrf.mxu0
        %v7044 = vadd.f32 %v7030, %v7043
        %v7045 = vpop.f32.mrf.mxu0
        %v7046 = vadd.f32 %v7032, %v7045
        %7047 = vdwg.mxu0
        %7048 = vmatpush.bf16.xpose.msra.mxu0 0
        %7049 = vmatpush.bf16.xpose.msra.mxu0 0
        %7050 = vmatpush.bf16.xpose.msra.mxu0 0
        %7051 = vmatpush.bf16.xpose.msra.mxu0 0
        %7052 = vmatpush.bf16.xpose.msra.mxu0 0
        %7053 = vmatpush.bf16.xpose.msra.mxu0 0
        %7054 = vmatpush.bf16.xpose.msra.mxu0 0
        %7055 = vmatpush.bf16.xpose.msra.mxu0 %v1514
        %7056 = vmatmul.bf16.gmra.mxu0 %v3471
        %v7057 = vpop.f32.mrf.mxu0
        %v7058 = vadd.f32 %v7044, %v7057
        %v7059 = vpop.f32.mrf.mxu0
        %v7060 = vadd.f32 %v7046, %v7059
        %7061 = vdwg.mxu0
        %7062 = vmatpush.bf16.xpose.msra.mxu0 0
        %7063 = vmatpush.bf16.xpose.msra.mxu0 0
        %7064 = vmatpush.bf16.xpose.msra.mxu0 0
        %7065 = vmatpush.bf16.xpose.msra.mxu0 0
        %7066 = vmatpush.bf16.xpose.msra.mxu0 0
        %7067 = vmatpush.bf16.xpose.msra.mxu0 0
        %7068 = vmatpush.bf16.xpose.msra.mxu0 0
        %7069 = vmatpush.bf16.xpose.msra.mxu0 %v1515
        %7070 = vmatmul.bf16.gmra.mxu0 %v3472
        %v7071 = vpop.f32.mrf.mxu0
        %v7072 = vadd.f32 %v7058, %v7071
        %v7073 = vpop.f32.mrf.mxu0
        %v7074 = vadd.f32 %v7060, %v7073
        %7075 = vdwg.mxu0
        %7076 = vmatpush.bf16.xpose.msra.mxu0 0
        %7077 = vmatpush.bf16.xpose.msra.mxu0 0
        %7078 = vmatpush.bf16.xpose.msra.mxu0 0
        %7079 = vmatpush.bf16.xpose.msra.mxu0 0
        %7080 = vmatpush.bf16.xpose.msra.mxu0 0
        %7081 = vmatpush.bf16.xpose.msra.mxu0 0
        %7082 = vmatpush.bf16.xpose.msra.mxu0 0
        %7083 = vmatpush.bf16.xpose.msra.mxu0 %v1516
        %7084 = vmatmul.bf16.gmra.mxu0 %v3473
        %v7085 = vpop.f32.mrf.mxu0
        %v7086 = vadd.f32 %v7072, %v7085
        %v7087 = vpop.f32.mrf.mxu0
        %v7088 = vadd.f32 %v7074, %v7087
        %7089 = vdwg.mxu0
        %7090 = vmatpush.bf16.xpose.msra.mxu0 0
        %7091 = vmatpush.bf16.xpose.msra.mxu0 0
        %7092 = vmatpush.bf16.xpose.msra.mxu0 0
        %7093 = vmatpush.bf16.xpose.msra.mxu0 0
        %7094 = vmatpush.bf16.xpose.msra.mxu0 0
        %7095 = vmatpush.bf16.xpose.msra.mxu0 0
        %7096 = vmatpush.bf16.xpose.msra.mxu0 0
        %7097 = vmatpush.bf16.xpose.msra.mxu0 %v1517
        %7098 = vmatmul.bf16.gmra.mxu0 %v3474
        %v7099 = vpop.f32.mrf.mxu0
        %v7100 = vadd.f32 %v7086, %v7099
        %v7101 = vpop.f32.mrf.mxu0
        %v7102 = vadd.f32 %v7088, %v7101
        %7103 = vdwg.mxu0
        %7104 = vmatpush.bf16.xpose.msra.mxu0 0
        %7105 = vmatpush.bf16.xpose.msra.mxu0 0
        %7106 = vmatpush.bf16.xpose.msra.mxu0 0
        %7107 = vmatpush.bf16.xpose.msra.mxu0 0
        %7108 = vmatpush.bf16.xpose.msra.mxu0 0
        %7109 = vmatpush.bf16.xpose.msra.mxu0 0
        %7110 = vmatpush.bf16.xpose.msra.mxu0 0
        %7111 = vmatpush.bf16.xpose.msra.mxu0 %v1518
        %7112 = vmatmul.bf16.gmra.mxu0 %v3475
        %v7113 = vpop.f32.mrf.mxu0
        %v7114 = vadd.f32 %v7100, %v7113
        %v7115 = vpop.f32.mrf.mxu0
        %v7116 = vadd.f32 %v7102, %v7115
        %7117 = vdwg.mxu0
        %7118 = vmatpush.bf16.xpose.msra.mxu0 0
        %7119 = vmatpush.bf16.xpose.msra.mxu0 0
        %7120 = vmatpush.bf16.xpose.msra.mxu0 0
        %7121 = vmatpush.bf16.xpose.msra.mxu0 0
        %7122 = vmatpush.bf16.xpose.msra.mxu0 0
        %7123 = vmatpush.bf16.xpose.msra.mxu0 0
        %7124 = vmatpush.bf16.xpose.msra.mxu0 0
        %7125 = vmatpush.bf16.xpose.msra.mxu0 %v1519
        %7126 = vmatmul.bf16.gmra.mxu0 %v3476
        %v7127 = vpop.f32.mrf.mxu0
        %v7128 = vadd.f32 %v7114, %v7127
        %v7129 = vpop.f32.mrf.mxu0
        %v7130 = vadd.f32 %v7116, %v7129
        %7131 = vdwg.mxu0
        %7132 = vmatpush.bf16.xpose.msra.mxu0 0
        %7133 = vmatpush.bf16.xpose.msra.mxu0 0
        %7134 = vmatpush.bf16.xpose.msra.mxu0 0
        %7135 = vmatpush.bf16.xpose.msra.mxu0 0
        %7136 = vmatpush.bf16.xpose.msra.mxu0 0
        %7137 = vmatpush.bf16.xpose.msra.mxu0 0
        %7138 = vmatpush.bf16.xpose.msra.mxu0 0
        %7139 = vmatpush.bf16.xpose.msra.mxu0 %v1520
        %7140 = vmatmul.bf16.gmra.mxu0 %v3477
        %v7141 = vpop.f32.mrf.mxu0
        %v7142 = vadd.f32 %v7128, %v7141
        %v7143 = vpop.f32.mrf.mxu0
        %v7144 = vadd.f32 %v7130, %v7143
        %7145 = vdwg.mxu0
        %7146 = vmatpush.bf16.xpose.msra.mxu0 0
        %7147 = vmatpush.bf16.xpose.msra.mxu0 0
        %7148 = vmatpush.bf16.xpose.msra.mxu0 0
        %7149 = vmatpush.bf16.xpose.msra.mxu0 0
        %7150 = vmatpush.bf16.xpose.msra.mxu0 0
        %7151 = vmatpush.bf16.xpose.msra.mxu0 0
        %7152 = vmatpush.bf16.xpose.msra.mxu0 0
        %7153 = vmatpush.bf16.xpose.msra.mxu0 %v1521
        %7154 = vmatmul.bf16.gmra.mxu0 %v3478
        %v7155 = vpop.f32.mrf.mxu0
        %v7156 = vadd.f32 %v7142, %v7155
        %v7157 = vpop.f32.mrf.mxu0
        %v7158 = vadd.f32 %v7144, %v7157
        %7159 = vdwg.mxu0
        %7160 = vmatpush.bf16.xpose.msra.mxu0 0
        %7161 = vmatpush.bf16.xpose.msra.mxu0 0
        %7162 = vmatpush.bf16.xpose.msra.mxu0 0
        %7163 = vmatpush.bf16.xpose.msra.mxu0 0
        %7164 = vmatpush.bf16.xpose.msra.mxu0 0
        %7165 = vmatpush.bf16.xpose.msra.mxu0 0
        %7166 = vmatpush.bf16.xpose.msra.mxu0 0
        %7167 = vmatpush.bf16.xpose.msra.mxu0 %v1522
        %7168 = vmatmul.bf16.gmra.mxu0 %v3479
        %v7169 = vpop.f32.mrf.mxu0
        %v7170 = vadd.f32 %v7156, %v7169
        %v7171 = vpop.f32.mrf.mxu0
        %v7172 = vadd.f32 %v7158, %v7171
        %7173 = vdwg.mxu0
        %7174 = vmatpush.bf16.xpose.msra.mxu0 0
        %7175 = vmatpush.bf16.xpose.msra.mxu0 0
        %7176 = vmatpush.bf16.xpose.msra.mxu0 0
        %7177 = vmatpush.bf16.xpose.msra.mxu0 0
        %7178 = vmatpush.bf16.xpose.msra.mxu0 0
        %7179 = vmatpush.bf16.xpose.msra.mxu0 0
        %7180 = vmatpush.bf16.xpose.msra.mxu0 0
        %7181 = vmatpush.bf16.xpose.msra.mxu0 %v1523
        %7182 = vmatmul.bf16.gmra.mxu0 %v3480
        %v7183 = vpop.f32.mrf.mxu0
        %v7184 = vadd.f32 %v7170, %v7183
        %v7185 = vpop.f32.mrf.mxu0
        %v7186 = vadd.f32 %v7172, %v7185
        %7187 = vdwg.mxu0
        %7188 = vmatpush.bf16.xpose.msra.mxu0 0
        %7189 = vmatpush.bf16.xpose.msra.mxu0 0
        %7190 = vmatpush.bf16.xpose.msra.mxu0 0
        %7191 = vmatpush.bf16.xpose.msra.mxu0 0
        %7192 = vmatpush.bf16.xpose.msra.mxu0 0
        %7193 = vmatpush.bf16.xpose.msra.mxu0 0
        %7194 = vmatpush.bf16.xpose.msra.mxu0 0
        %7195 = vmatpush.bf16.xpose.msra.mxu0 %v1524
        %7196 = vmatmul.bf16.gmra.mxu0 %v3481
        %v7197 = vpop.f32.mrf.mxu0
        %v7198 = vadd.f32 %v7184, %v7197
        %v7199 = vpop.f32.mrf.mxu0
        %v7200 = vadd.f32 %v7186, %v7199
        %7201 = vdwg.mxu0
        %7202 = vmatpush.bf16.xpose.msra.mxu0 0
        %7203 = vmatpush.bf16.xpose.msra.mxu0 0
        %7204 = vmatpush.bf16.xpose.msra.mxu0 0
        %7205 = vmatpush.bf16.xpose.msra.mxu0 0
        %7206 = vmatpush.bf16.xpose.msra.mxu0 0
        %7207 = vmatpush.bf16.xpose.msra.mxu0 0
        %7208 = vmatpush.bf16.xpose.msra.mxu0 0
        %7209 = vmatpush.bf16.xpose.msra.mxu0 %v1525
        %7210 = vmatmul.bf16.gmra.mxu0 %v3482
        %v7211 = vpop.f32.mrf.mxu0
        %v7212 = vadd.f32 %v7198, %v7211
        %v7213 = vpop.f32.mrf.mxu0
        %v7214 = vadd.f32 %v7200, %v7213
        %7215 = vdwg.mxu0
        %7216 = vmatpush.bf16.xpose.msra.mxu0 0
        %7217 = vmatpush.bf16.xpose.msra.mxu0 0
        %7218 = vmatpush.bf16.xpose.msra.mxu0 0
        %7219 = vmatpush.bf16.xpose.msra.mxu0 0
        %7220 = vmatpush.bf16.xpose.msra.mxu0 0
        %7221 = vmatpush.bf16.xpose.msra.mxu0 0
        %7222 = vmatpush.bf16.xpose.msra.mxu0 0
        %7223 = vmatpush.bf16.xpose.msra.mxu0 %v1526
        %7224 = vmatmul.bf16.gmra.mxu0 %v3483
        %v7225 = vpop.f32.mrf.mxu0
        %v7226 = vadd.f32 %v7212, %v7225
        %v7227 = vpop.f32.mrf.mxu0
        %v7228 = vadd.f32 %v7214, %v7227
        %7229 = vdwg.mxu0
        %7230 = vmatpush.bf16.xpose.msra.mxu0 0
        %7231 = vmatpush.bf16.xpose.msra.mxu0 0
        %7232 = vmatpush.bf16.xpose.msra.mxu0 0
        %7233 = vmatpush.bf16.xpose.msra.mxu0 0
        %7234 = vmatpush.bf16.xpose.msra.mxu0 0
        %7235 = vmatpush.bf16.xpose.msra.mxu0 0
        %7236 = vmatpush.bf16.xpose.msra.mxu0 0
        %7237 = vmatpush.bf16.xpose.msra.mxu0 %v1527
        %7238 = vmatmul.bf16.gmra.mxu0 %v3484
        %v7239 = vpop.f32.mrf.mxu0
        %v7240 = vadd.f32 %v7226, %v7239
        %v7241 = vpop.f32.mrf.mxu0
        %v7242 = vadd.f32 %v7228, %v7241
        %7243 = vdwg.mxu0
        %7244 = vmatpush.bf16.xpose.msra.mxu0 0
        %7245 = vmatpush.bf16.xpose.msra.mxu0 0
        %7246 = vmatpush.bf16.xpose.msra.mxu0 0
        %7247 = vmatpush.bf16.xpose.msra.mxu0 0
        %7248 = vmatpush.bf16.xpose.msra.mxu0 0
        %7249 = vmatpush.bf16.xpose.msra.mxu0 0
        %7250 = vmatpush.bf16.xpose.msra.mxu0 0
        %7251 = vmatpush.bf16.xpose.msra.mxu0 %v1528
        %7252 = vmatmul.bf16.gmra.mxu0 %v3485
        %v7253 = vpop.f32.mrf.mxu0
        %v7254 = vadd.f32 %v7240, %v7253
        %v7255 = vpop.f32.mrf.mxu0
        %v7256 = vadd.f32 %v7242, %v7255
        %7257 = vdwg.mxu0
        %7258 = vmatpush.bf16.xpose.msra.mxu0 0
        %7259 = vmatpush.bf16.xpose.msra.mxu0 0
        %7260 = vmatpush.bf16.xpose.msra.mxu0 0
        %7261 = vmatpush.bf16.xpose.msra.mxu0 0
        %7262 = vmatpush.bf16.xpose.msra.mxu0 0
        %7263 = vmatpush.bf16.xpose.msra.mxu0 0
        %7264 = vmatpush.bf16.xpose.msra.mxu0 0
        %7265 = vmatpush.bf16.xpose.msra.mxu0 %v1529
        %7266 = vmatmul.bf16.gmra.mxu0 %v3486
        %v7267 = vpop.f32.mrf.mxu0
        %v7268 = vadd.f32 %v7254, %v7267
        %v7269 = vpop.f32.mrf.mxu0
        %v7270 = vadd.f32 %v7256, %v7269
        %7271 = vdwg.mxu0
        %7272 = vmatpush.bf16.xpose.msra.mxu0 0
        %7273 = vmatpush.bf16.xpose.msra.mxu0 0
        %7274 = vmatpush.bf16.xpose.msra.mxu0 0
        %7275 = vmatpush.bf16.xpose.msra.mxu0 0
        %7276 = vmatpush.bf16.xpose.msra.mxu0 0
        %7277 = vmatpush.bf16.xpose.msra.mxu0 0
        %7278 = vmatpush.bf16.xpose.msra.mxu0 0
        %7279 = vmatpush.bf16.xpose.msra.mxu0 %v1530
        %7280 = vmatmul.bf16.gmra.mxu0 %v3487
        %v7281 = vpop.f32.mrf.mxu0
        %v7282 = vadd.f32 %v7268, %v7281
        %v7283 = vpop.f32.mrf.mxu0
        %v7284 = vadd.f32 %v7270, %v7283
        %7285 = vdwg.mxu0
        %7286 = vmatpush.bf16.xpose.msra.mxu0 0
        %7287 = vmatpush.bf16.xpose.msra.mxu0 0
        %7288 = vmatpush.bf16.xpose.msra.mxu0 0
        %7289 = vmatpush.bf16.xpose.msra.mxu0 0
        %7290 = vmatpush.bf16.xpose.msra.mxu0 0
        %7291 = vmatpush.bf16.xpose.msra.mxu0 0
        %7292 = vmatpush.bf16.xpose.msra.mxu0 0
        %7293 = vmatpush.bf16.xpose.msra.mxu0 %v1531
        %7294 = vmatmul.bf16.gmra.mxu0 %v3488
        %v7295 = vpop.f32.mrf.mxu0
        %v7296 = vadd.f32 %v7282, %v7295
        %v7297 = vpop.f32.mrf.mxu0
        %v7298 = vadd.f32 %v7284, %v7297
        %7299 = vdwg.mxu0
        %7300 = vmatpush.bf16.xpose.msra.mxu0 0
        %7301 = vmatpush.bf16.xpose.msra.mxu0 0
        %7302 = vmatpush.bf16.xpose.msra.mxu0 0
        %7303 = vmatpush.bf16.xpose.msra.mxu0 0
        %7304 = vmatpush.bf16.xpose.msra.mxu0 0
        %7305 = vmatpush.bf16.xpose.msra.mxu0 0
        %7306 = vmatpush.bf16.xpose.msra.mxu0 0
        %7307 = vmatpush.bf16.xpose.msra.mxu0 %v1532
        %7308 = vmatmul.bf16.gmra.mxu0 %v3489
        %v7309 = vpop.f32.mrf.mxu0
        %v7310 = vadd.f32 %v7296, %v7309
        %v7311 = vpop.f32.mrf.mxu0
        %v7312 = vadd.f32 %v7298, %v7311
        %7313 = vdwg.mxu0
        %7314 = vmatpush.bf16.xpose.msra.mxu0 0
        %7315 = vmatpush.bf16.xpose.msra.mxu0 0
        %7316 = vmatpush.bf16.xpose.msra.mxu0 0
        %7317 = vmatpush.bf16.xpose.msra.mxu0 0
        %7318 = vmatpush.bf16.xpose.msra.mxu0 0
        %7319 = vmatpush.bf16.xpose.msra.mxu0 0
        %7320 = vmatpush.bf16.xpose.msra.mxu0 0
        %7321 = vmatpush.bf16.xpose.msra.mxu0 %v1533
        %7322 = vmatmul.bf16.gmra.mxu0 %v3490
        %v7323 = vpop.f32.mrf.mxu0
        %v7324 = vadd.f32 %v7310, %v7323
        %v7325 = vpop.f32.mrf.mxu0
        %v7326 = vadd.f32 %v7312, %v7325
        %7327 = vdwg.mxu0
        %7328 = vmatpush.bf16.xpose.msra.mxu0 0
        %7329 = vmatpush.bf16.xpose.msra.mxu0 0
        %7330 = vmatpush.bf16.xpose.msra.mxu0 0
        %7331 = vmatpush.bf16.xpose.msra.mxu0 0
        %7332 = vmatpush.bf16.xpose.msra.mxu0 0
        %7333 = vmatpush.bf16.xpose.msra.mxu0 0
        %7334 = vmatpush.bf16.xpose.msra.mxu0 0
        %7335 = vmatpush.bf16.xpose.msra.mxu0 %v1534
        %7336 = vmatmul.bf16.gmra.mxu0 %v3491
        %v7337 = vpop.f32.mrf.mxu0
        %v7338 = vadd.f32 %v7324, %v7337
        %v7339 = vpop.f32.mrf.mxu0
        %v7340 = vadd.f32 %v7326, %v7339
        %7341 = vdwg.mxu0
        %7342 = vmatpush.bf16.xpose.msra.mxu0 0
        %7343 = vmatpush.bf16.xpose.msra.mxu0 0
        %7344 = vmatpush.bf16.xpose.msra.mxu0 0
        %7345 = vmatpush.bf16.xpose.msra.mxu0 0
        %7346 = vmatpush.bf16.xpose.msra.mxu0 0
        %7347 = vmatpush.bf16.xpose.msra.mxu0 0
        %7348 = vmatpush.bf16.xpose.msra.mxu0 0
        %7349 = vmatpush.bf16.xpose.msra.mxu0 %v1535
        %7350 = vmatmul.bf16.gmra.mxu0 %v3492
        %v7351 = vpop.f32.mrf.mxu0
        %v7352 = vadd.f32 %v7338, %v7351
        %v7353 = vpop.f32.mrf.mxu0
        %v7354 = vadd.f32 %v7340, %v7353
        %7355 = vdwg.mxu0
        %7356 = vmatpush.bf16.xpose.msra.mxu0 0
        %7357 = vmatpush.bf16.xpose.msra.mxu0 0
        %7358 = vmatpush.bf16.xpose.msra.mxu0 0
        %7359 = vmatpush.bf16.xpose.msra.mxu0 0
        %7360 = vmatpush.bf16.xpose.msra.mxu0 0
        %7361 = vmatpush.bf16.xpose.msra.mxu0 0
        %7362 = vmatpush.bf16.xpose.msra.mxu0 0
        %7363 = vmatpush.bf16.xpose.msra.mxu0 %v1536
        %7364 = vmatmul.bf16.gmra.mxu0 %v3493
        %v7365 = vpop.f32.mrf.mxu0
        %v7366 = vadd.f32 %v7352, %v7365
        %v7367 = vpop.f32.mrf.mxu0
        %v7368 = vadd.f32 %v7354, %v7367
        %7369 = vdwg.mxu0
        %7370 = vmatpush.bf16.xpose.msra.mxu0 0
        %7371 = vmatpush.bf16.xpose.msra.mxu0 0
        %7372 = vmatpush.bf16.xpose.msra.mxu0 0
        %7373 = vmatpush.bf16.xpose.msra.mxu0 0
        %7374 = vmatpush.bf16.xpose.msra.mxu0 0
        %7375 = vmatpush.bf16.xpose.msra.mxu0 0
        %7376 = vmatpush.bf16.xpose.msra.mxu0 0
        %7377 = vmatpush.bf16.xpose.msra.mxu0 %v1537
        %7378 = vmatmul.bf16.gmra.mxu0 %v3494
        %v7379 = vpop.f32.mrf.mxu0
        %v7380 = vadd.f32 %v7366, %v7379
        %v7381 = vpop.f32.mrf.mxu0
        %v7382 = vadd.f32 %v7368, %v7381
        %7383 = vdwg.mxu0
        %7384 = vmatpush.bf16.xpose.msra.mxu0 0
        %7385 = vmatpush.bf16.xpose.msra.mxu0 0
        %7386 = vmatpush.bf16.xpose.msra.mxu0 0
        %7387 = vmatpush.bf16.xpose.msra.mxu0 0
        %7388 = vmatpush.bf16.xpose.msra.mxu0 0
        %7389 = vmatpush.bf16.xpose.msra.mxu0 0
        %7390 = vmatpush.bf16.xpose.msra.mxu0 0
        %7391 = vmatpush.bf16.xpose.msra.mxu0 %v1538
        %7392 = vmatmul.bf16.gmra.mxu0 %v3495
        %v7393 = vpop.f32.mrf.mxu0
        %v7394 = vadd.f32 %v7380, %v7393
        %v7395 = vpop.f32.mrf.mxu0
        %v7396 = vadd.f32 %v7382, %v7395
        %7397 = vdwg.mxu0
        %7398 = vmatpush.bf16.xpose.msra.mxu0 0
        %7399 = vmatpush.bf16.xpose.msra.mxu0 0
        %7400 = vmatpush.bf16.xpose.msra.mxu0 0
        %7401 = vmatpush.bf16.xpose.msra.mxu0 0
        %7402 = vmatpush.bf16.xpose.msra.mxu0 0
        %7403 = vmatpush.bf16.xpose.msra.mxu0 0
        %7404 = vmatpush.bf16.xpose.msra.mxu0 0
        %7405 = vmatpush.bf16.xpose.msra.mxu0 %v1539
        %7406 = vmatmul.bf16.gmra.mxu0 %v3496
        %v7407 = vpop.f32.mrf.mxu0
        %v7408 = vadd.f32 %v7394, %v7407
        %v7409 = vpop.f32.mrf.mxu0
        %v7410 = vadd.f32 %v7396, %v7409
        %7411 = vdwg.mxu0
        %7412 = vmatpush.bf16.xpose.msra.mxu0 0
        %7413 = vmatpush.bf16.xpose.msra.mxu0 0
        %7414 = vmatpush.bf16.xpose.msra.mxu0 0
        %7415 = vmatpush.bf16.xpose.msra.mxu0 0
        %7416 = vmatpush.bf16.xpose.msra.mxu0 0
        %7417 = vmatpush.bf16.xpose.msra.mxu0 0
        %7418 = vmatpush.bf16.xpose.msra.mxu0 0
        %7419 = vmatpush.bf16.xpose.msra.mxu0 %v1540
        %7420 = vmatmul.bf16.gmra.mxu0 %v3497
        %v7421 = vpop.f32.mrf.mxu0
        %v7422 = vadd.f32 %v7408, %v7421
        %v7423 = vpop.f32.mrf.mxu0
        %v7424 = vadd.f32 %v7410, %v7423
        %7425 = vdwg.mxu0
        %7426 = vmatpush.bf16.xpose.msra.mxu0 0
        %7427 = vmatpush.bf16.xpose.msra.mxu0 0
        %7428 = vmatpush.bf16.xpose.msra.mxu0 0
        %7429 = vmatpush.bf16.xpose.msra.mxu0 0
        %7430 = vmatpush.bf16.xpose.msra.mxu0 0
        %7431 = vmatpush.bf16.xpose.msra.mxu0 0
        %7432 = vmatpush.bf16.xpose.msra.mxu0 0
        %7433 = vmatpush.bf16.xpose.msra.mxu0 %v1541
        %7434 = vmatmul.bf16.gmra.mxu0 %v3498
        %v7435 = vpop.f32.mrf.mxu0
        %v7436 = vadd.f32 %v7422, %v7435
        %v7437 = vpop.f32.mrf.mxu0
        %v7438 = vadd.f32 %v7424, %v7437
        %7439 = vdwg.mxu0
        %7440 = vmatpush.bf16.xpose.msra.mxu0 0
        %7441 = vmatpush.bf16.xpose.msra.mxu0 0
        %7442 = vmatpush.bf16.xpose.msra.mxu0 0
        %7443 = vmatpush.bf16.xpose.msra.mxu0 0
        %7444 = vmatpush.bf16.xpose.msra.mxu0 0
        %7445 = vmatpush.bf16.xpose.msra.mxu0 0
        %7446 = vmatpush.bf16.xpose.msra.mxu0 0
        %7447 = vmatpush.bf16.xpose.msra.mxu0 %v1542
        %7448 = vmatmul.bf16.gmra.mxu0 %v3499
        %v7449 = vpop.f32.mrf.mxu0
        %v7450 = vadd.f32 %v7436, %v7449
        %v7451 = vpop.f32.mrf.mxu0
        %v7452 = vadd.f32 %v7438, %v7451
        %7453 = vdwg.mxu0
        %7454 = vmatpush.bf16.xpose.msra.mxu0 0
        %7455 = vmatpush.bf16.xpose.msra.mxu0 0
        %7456 = vmatpush.bf16.xpose.msra.mxu0 0
        %7457 = vmatpush.bf16.xpose.msra.mxu0 0
        %7458 = vmatpush.bf16.xpose.msra.mxu0 0
        %7459 = vmatpush.bf16.xpose.msra.mxu0 0
        %7460 = vmatpush.bf16.xpose.msra.mxu0 0
        %7461 = vmatpush.bf16.xpose.msra.mxu0 %v1543
        %7462 = vmatmul.bf16.gmra.mxu0 %v3500
        %v7463 = vpop.f32.mrf.mxu0
        %v7464 = vadd.f32 %v7450, %v7463
        %v7465 = vpop.f32.mrf.mxu0
        %v7466 = vadd.f32 %v7452, %v7465
        %7467 = vdwg.mxu0
        %7468 = vmatpush.bf16.xpose.msra.mxu0 0
        %7469 = vmatpush.bf16.xpose.msra.mxu0 0
        %7470 = vmatpush.bf16.xpose.msra.mxu0 0
        %7471 = vmatpush.bf16.xpose.msra.mxu0 0
        %7472 = vmatpush.bf16.xpose.msra.mxu0 0
        %7473 = vmatpush.bf16.xpose.msra.mxu0 0
        %7474 = vmatpush.bf16.xpose.msra.mxu0 0
        %7475 = vmatpush.bf16.xpose.msra.mxu0 %v1544
        %7476 = vmatmul.bf16.gmra.mxu0 %v3501
        %v7477 = vpop.f32.mrf.mxu0
        %v7478 = vadd.f32 %v7464, %v7477
        %v7479 = vpop.f32.mrf.mxu0
        %v7480 = vadd.f32 %v7466, %v7479
        %7481 = vdwg.mxu0
        %7482 = vmatpush.bf16.xpose.msra.mxu0 0
        %7483 = vmatpush.bf16.xpose.msra.mxu0 0
        %7484 = vmatpush.bf16.xpose.msra.mxu0 0
        %7485 = vmatpush.bf16.xpose.msra.mxu0 0
        %7486 = vmatpush.bf16.xpose.msra.mxu0 0
        %7487 = vmatpush.bf16.xpose.msra.mxu0 0
        %7488 = vmatpush.bf16.xpose.msra.mxu0 0
        %7489 = vmatpush.bf16.xpose.msra.mxu0 %v1545
        %7490 = vmatmul.bf16.gmra.mxu0 %v3502
        %v7491 = vpop.f32.mrf.mxu0
        %v7492 = vadd.f32 %v7478, %v7491
        %v7493 = vpop.f32.mrf.mxu0
        %v7494 = vadd.f32 %v7480, %v7493
        %7495 = vdwg.mxu0
        %7496 = vmatpush.bf16.xpose.msra.mxu0 0
        %7497 = vmatpush.bf16.xpose.msra.mxu0 0
        %7498 = vmatpush.bf16.xpose.msra.mxu0 0
        %7499 = vmatpush.bf16.xpose.msra.mxu0 0
        %7500 = vmatpush.bf16.xpose.msra.mxu0 0
        %7501 = vmatpush.bf16.xpose.msra.mxu0 0
        %7502 = vmatpush.bf16.xpose.msra.mxu0 0
        %7503 = vmatpush.bf16.xpose.msra.mxu0 %v1546
        %7504 = vmatmul.bf16.gmra.mxu0 %v3503
        %v7505 = vpop.f32.mrf.mxu0
        %v7506 = vadd.f32 %v7492, %v7505
        %v7507 = vpop.f32.mrf.mxu0
        %v7508 = vadd.f32 %v7494, %v7507
        %7509 = vdwg.mxu0
        %7510 = vmatpush.bf16.xpose.msra.mxu0 0
        %7511 = vmatpush.bf16.xpose.msra.mxu0 0
        %7512 = vmatpush.bf16.xpose.msra.mxu0 0
        %7513 = vmatpush.bf16.xpose.msra.mxu0 0
        %7514 = vmatpush.bf16.xpose.msra.mxu0 0
        %7515 = vmatpush.bf16.xpose.msra.mxu0 0
        %7516 = vmatpush.bf16.xpose.msra.mxu0 0
        %7517 = vmatpush.bf16.xpose.msra.mxu0 %v1547
        %7518 = vmatmul.bf16.gmra.mxu0 %v3504
        %v7519 = vpop.f32.mrf.mxu0
        %v7520 = vadd.f32 %v7506, %v7519
        %v7521 = vpop.f32.mrf.mxu0
        %v7522 = vadd.f32 %v7508, %v7521
        %7523 = vdwg.mxu0
        %7524 = vmatpush.bf16.xpose.msra.mxu0 0
        %7525 = vmatpush.bf16.xpose.msra.mxu0 0
        %7526 = vmatpush.bf16.xpose.msra.mxu0 0
        %7527 = vmatpush.bf16.xpose.msra.mxu0 0
        %7528 = vmatpush.bf16.xpose.msra.mxu0 0
        %7529 = vmatpush.bf16.xpose.msra.mxu0 0
        %7530 = vmatpush.bf16.xpose.msra.mxu0 0
        %7531 = vmatpush.bf16.xpose.msra.mxu0 %v1548
        %7532 = vmatmul.bf16.gmra.mxu0 %v3505
        %v7533 = vpop.f32.mrf.mxu0
        %v7534 = vadd.f32 %v7520, %v7533
        %v7535 = vpop.f32.mrf.mxu0
        %v7536 = vadd.f32 %v7522, %v7535
        %7537 = vdwg.mxu0
        %7538 = vmatpush.bf16.xpose.msra.mxu0 0
        %7539 = vmatpush.bf16.xpose.msra.mxu0 0
        %7540 = vmatpush.bf16.xpose.msra.mxu0 0
        %7541 = vmatpush.bf16.xpose.msra.mxu0 0
        %7542 = vmatpush.bf16.xpose.msra.mxu0 0
        %7543 = vmatpush.bf16.xpose.msra.mxu0 0
        %7544 = vmatpush.bf16.xpose.msra.mxu0 0
        %7545 = vmatpush.bf16.xpose.msra.mxu0 %v1549
        %7546 = vmatmul.bf16.gmra.mxu0 %v3506
        %v7547 = vpop.f32.mrf.mxu0
        %v7548 = vadd.f32 %v7534, %v7547
        %v7549 = vpop.f32.mrf.mxu0
        %v7550 = vadd.f32 %v7536, %v7549
        %7551 = vdwg.mxu0
        %7552 = vmatpush.bf16.xpose.msra.mxu0 0
        %7553 = vmatpush.bf16.xpose.msra.mxu0 0
        %7554 = vmatpush.bf16.xpose.msra.mxu0 0
        %7555 = vmatpush.bf16.xpose.msra.mxu0 0
        %7556 = vmatpush.bf16.xpose.msra.mxu0 0
        %7557 = vmatpush.bf16.xpose.msra.mxu0 0
        %7558 = vmatpush.bf16.xpose.msra.mxu0 0
        %7559 = vmatpush.bf16.xpose.msra.mxu0 %v1550
        %7560 = vmatmul.bf16.gmra.mxu0 %v3507
        %v7561 = vpop.f32.mrf.mxu0
        %v7562 = vadd.f32 %v7548, %v7561
        %v7563 = vpop.f32.mrf.mxu0
        %v7564 = vadd.f32 %v7550, %v7563
        %7565 = vdwg.mxu0
        %7566 = vmatpush.bf16.xpose.msra.mxu0 0
        %7567 = vmatpush.bf16.xpose.msra.mxu0 0
        %7568 = vmatpush.bf16.xpose.msra.mxu0 0
        %7569 = vmatpush.bf16.xpose.msra.mxu0 0
        %7570 = vmatpush.bf16.xpose.msra.mxu0 0
        %7571 = vmatpush.bf16.xpose.msra.mxu0 0
        %7572 = vmatpush.bf16.xpose.msra.mxu0 0
        %7573 = vmatpush.bf16.xpose.msra.mxu0 %v1551
        %7574 = vmatmul.bf16.gmra.mxu0 %v3508
        %v7575 = vpop.f32.mrf.mxu0
        %v7576 = vadd.f32 %v7562, %v7575
        %v7577 = vpop.f32.mrf.mxu0
        %v7578 = vadd.f32 %v7564, %v7577
        %7579 = vdwg.mxu0
        %7580 = vmatpush.bf16.xpose.msra.mxu0 0
        %7581 = vmatpush.bf16.xpose.msra.mxu0 0
        %7582 = vmatpush.bf16.xpose.msra.mxu0 0
        %7583 = vmatpush.bf16.xpose.msra.mxu0 0
        %7584 = vmatpush.bf16.xpose.msra.mxu0 0
        %7585 = vmatpush.bf16.xpose.msra.mxu0 0
        %7586 = vmatpush.bf16.xpose.msra.mxu0 0
        %7587 = vmatpush.bf16.xpose.msra.mxu0 %v1552
        %7588 = vmatmul.bf16.gmra.mxu0 %v3509
        %v7589 = vpop.f32.mrf.mxu0
        %v7590 = vadd.f32 %v7576, %v7589
        %v7591 = vpop.f32.mrf.mxu0
        %v7592 = vadd.f32 %v7578, %v7591
        %7593 = vdwg.mxu0
        %7594 = vmatpush.bf16.xpose.msra.mxu0 0
        %7595 = vmatpush.bf16.xpose.msra.mxu0 0
        %7596 = vmatpush.bf16.xpose.msra.mxu0 0
        %7597 = vmatpush.bf16.xpose.msra.mxu0 0
        %7598 = vmatpush.bf16.xpose.msra.mxu0 0
        %7599 = vmatpush.bf16.xpose.msra.mxu0 0
        %7600 = vmatpush.bf16.xpose.msra.mxu0 0
        %7601 = vmatpush.bf16.xpose.msra.mxu0 %v1553
        %7602 = vmatmul.bf16.gmra.mxu0 %v3510
        %v7603 = vpop.f32.mrf.mxu0
        %v7604 = vadd.f32 %v7590, %v7603
        %v7605 = vpop.f32.mrf.mxu0
        %v7606 = vadd.f32 %v7592, %v7605
        %7607 = vdwg.mxu0
        %7608 = vmatpush.bf16.xpose.msra.mxu0 0
        %7609 = vmatpush.bf16.xpose.msra.mxu0 0
        %7610 = vmatpush.bf16.xpose.msra.mxu0 0
        %7611 = vmatpush.bf16.xpose.msra.mxu0 0
        %7612 = vmatpush.bf16.xpose.msra.mxu0 0
        %7613 = vmatpush.bf16.xpose.msra.mxu0 0
        %7614 = vmatpush.bf16.xpose.msra.mxu0 0
        %7615 = vmatpush.bf16.xpose.msra.mxu0 %v1554
        %7616 = vmatmul.bf16.gmra.mxu0 %v3511
        %v7617 = vpop.f32.mrf.mxu0
        %v7618 = vadd.f32 %v7604, %v7617
        %v7619 = vpop.f32.mrf.mxu0
        %v7620 = vadd.f32 %v7606, %v7619
        %7621 = vdwg.mxu0
        %7622 = vmatpush.bf16.xpose.msra.mxu0 0
        %7623 = vmatpush.bf16.xpose.msra.mxu0 0
        %7624 = vmatpush.bf16.xpose.msra.mxu0 0
        %7625 = vmatpush.bf16.xpose.msra.mxu0 0
        %7626 = vmatpush.bf16.xpose.msra.mxu0 0
        %7627 = vmatpush.bf16.xpose.msra.mxu0 0
        %7628 = vmatpush.bf16.xpose.msra.mxu0 0
        %7629 = vmatpush.bf16.xpose.msra.mxu0 %v1555
        %7630 = vmatmul.bf16.gmra.mxu0 %v3512
        %v7631 = vpop.f32.mrf.mxu0
        %v7632 = vadd.f32 %v7618, %v7631
        %v7633 = vpop.f32.mrf.mxu0
        %v7634 = vadd.f32 %v7620, %v7633
        %7635 = vdwg.mxu0
        %7636 = vmatpush.bf16.xpose.msra.mxu0 0
        %7637 = vmatpush.bf16.xpose.msra.mxu0 0
        %7638 = vmatpush.bf16.xpose.msra.mxu0 0
        %7639 = vmatpush.bf16.xpose.msra.mxu0 0
        %7640 = vmatpush.bf16.xpose.msra.mxu0 0
        %7641 = vmatpush.bf16.xpose.msra.mxu0 0
        %7642 = vmatpush.bf16.xpose.msra.mxu0 0
        %7643 = vmatpush.bf16.xpose.msra.mxu0 %v1556
        %7644 = vmatmul.bf16.gmra.mxu0 %v3513
        %v7645 = vpop.f32.mrf.mxu0
        %v7646 = vadd.f32 %v7632, %v7645
        %v7647 = vpop.f32.mrf.mxu0
        %v7648 = vadd.f32 %v7634, %v7647
        %7649 = vdwg.mxu0
        %7650 = vmatpush.bf16.xpose.msra.mxu0 0
        %7651 = vmatpush.bf16.xpose.msra.mxu0 0
        %7652 = vmatpush.bf16.xpose.msra.mxu0 0
        %7653 = vmatpush.bf16.xpose.msra.mxu0 0
        %7654 = vmatpush.bf16.xpose.msra.mxu0 0
        %7655 = vmatpush.bf16.xpose.msra.mxu0 0
        %7656 = vmatpush.bf16.xpose.msra.mxu0 0
        %7657 = vmatpush.bf16.xpose.msra.mxu0 %v1557
        %7658 = vmatmul.bf16.gmra.mxu0 %v3514
        %v7659 = vpop.f32.mrf.mxu0
        %v7660 = vadd.f32 %v7646, %v7659
        %v7661 = vpop.f32.mrf.mxu0
        %v7662 = vadd.f32 %v7648, %v7661
        %7663 = vdwg.mxu0
        %7664 = vmatpush.bf16.xpose.msra.mxu0 0
        %7665 = vmatpush.bf16.xpose.msra.mxu0 0
        %7666 = vmatpush.bf16.xpose.msra.mxu0 0
        %7667 = vmatpush.bf16.xpose.msra.mxu0 0
        %7668 = vmatpush.bf16.xpose.msra.mxu0 0
        %7669 = vmatpush.bf16.xpose.msra.mxu0 0
        %7670 = vmatpush.bf16.xpose.msra.mxu0 0
        %7671 = vmatpush.bf16.xpose.msra.mxu0 %v1558
        %7672 = vmatmul.bf16.gmra.mxu0 %v3515
        %v7673 = vpop.f32.mrf.mxu0
        %v7674 = vadd.f32 %v7660, %v7673
        %v7675 = vpop.f32.mrf.mxu0
        %v7676 = vadd.f32 %v7662, %v7675
        %7677 = vdwg.mxu0
        %7678 = vmatpush.bf16.xpose.msra.mxu0 0
        %7679 = vmatpush.bf16.xpose.msra.mxu0 0
        %7680 = vmatpush.bf16.xpose.msra.mxu0 0
        %7681 = vmatpush.bf16.xpose.msra.mxu0 0
        %7682 = vmatpush.bf16.xpose.msra.mxu0 0
        %7683 = vmatpush.bf16.xpose.msra.mxu0 0
        %7684 = vmatpush.bf16.xpose.msra.mxu0 0
        %7685 = vmatpush.bf16.xpose.msra.mxu0 %v1559
        %7686 = vmatmul.bf16.gmra.mxu0 %v3516
        %v7687 = vpop.f32.mrf.mxu0
        %v7688 = vadd.f32 %v7674, %v7687
        %v7689 = vpop.f32.mrf.mxu0
        %v7690 = vadd.f32 %v7676, %v7689
        %7691 = vdwg.mxu0
        %7692 = vmatpush.bf16.xpose.msra.mxu0 0
        %7693 = vmatpush.bf16.xpose.msra.mxu0 0
        %7694 = vmatpush.bf16.xpose.msra.mxu0 0
        %7695 = vmatpush.bf16.xpose.msra.mxu0 0
        %7696 = vmatpush.bf16.xpose.msra.mxu0 0
        %7697 = vmatpush.bf16.xpose.msra.mxu0 0
        %7698 = vmatpush.bf16.xpose.msra.mxu0 0
        %7699 = vmatpush.bf16.xpose.msra.mxu0 %v1560
        %7700 = vmatmul.bf16.gmra.mxu0 %v3517
        %v7701 = vpop.f32.mrf.mxu0
        %v7702 = vadd.f32 %v7688, %v7701
        %v7703 = vpop.f32.mrf.mxu0
        %v7704 = vadd.f32 %v7690, %v7703
        %7705 = vdwg.mxu0
        %7706 = vmatpush.bf16.xpose.msra.mxu0 0
        %7707 = vmatpush.bf16.xpose.msra.mxu0 0
        %7708 = vmatpush.bf16.xpose.msra.mxu0 0
        %7709 = vmatpush.bf16.xpose.msra.mxu0 0
        %7710 = vmatpush.bf16.xpose.msra.mxu0 0
        %7711 = vmatpush.bf16.xpose.msra.mxu0 0
        %7712 = vmatpush.bf16.xpose.msra.mxu0 0
        %7713 = vmatpush.bf16.xpose.msra.mxu0 %v1561
        %7714 = vmatmul.bf16.gmra.mxu0 %v3518
        %v7715 = vpop.f32.mrf.mxu0
        %v7716 = vadd.f32 %v7702, %v7715
        %v7717 = vpop.f32.mrf.mxu0
        %v7718 = vadd.f32 %v7704, %v7717
        %7719 = vdwg.mxu0
        %7720 = vmatpush.bf16.xpose.msra.mxu0 0
        %7721 = vmatpush.bf16.xpose.msra.mxu0 0
        %7722 = vmatpush.bf16.xpose.msra.mxu0 0
        %7723 = vmatpush.bf16.xpose.msra.mxu0 0
        %7724 = vmatpush.bf16.xpose.msra.mxu0 0
        %7725 = vmatpush.bf16.xpose.msra.mxu0 0
        %7726 = vmatpush.bf16.xpose.msra.mxu0 0
        %7727 = vmatpush.bf16.xpose.msra.mxu0 %v1562
        %7728 = vmatmul.bf16.gmra.mxu0 %v3519
        %v7729 = vpop.f32.mrf.mxu0
        %v7730 = vadd.f32 %v7716, %v7729
        %v7731 = vpop.f32.mrf.mxu0
        %v7732 = vadd.f32 %v7718, %v7731
        %7733 = vdwg.mxu0
        %7734 = vmatpush.bf16.xpose.msra.mxu0 0
        %7735 = vmatpush.bf16.xpose.msra.mxu0 0
        %7736 = vmatpush.bf16.xpose.msra.mxu0 0
        %7737 = vmatpush.bf16.xpose.msra.mxu0 0
        %7738 = vmatpush.bf16.xpose.msra.mxu0 0
        %7739 = vmatpush.bf16.xpose.msra.mxu0 0
        %7740 = vmatpush.bf16.xpose.msra.mxu0 0
        %7741 = vmatpush.bf16.xpose.msra.mxu0 %v1563
        %7742 = vmatmul.bf16.gmra.mxu0 %v3520
        %v7743 = vpop.f32.mrf.mxu0
        %v7744 = vadd.f32 %v7730, %v7743
        %v7745 = vpop.f32.mrf.mxu0
        %v7746 = vadd.f32 %v7732, %v7745
        %7747 = vdwg.mxu0
        %7748 = vmatpush.bf16.xpose.msra.mxu0 0
        %7749 = vmatpush.bf16.xpose.msra.mxu0 0
        %7750 = vmatpush.bf16.xpose.msra.mxu0 0
        %7751 = vmatpush.bf16.xpose.msra.mxu0 0
        %7752 = vmatpush.bf16.xpose.msra.mxu0 0
        %7753 = vmatpush.bf16.xpose.msra.mxu0 0
        %7754 = vmatpush.bf16.xpose.msra.mxu0 0
        %7755 = vmatpush.bf16.xpose.msra.mxu0 %v1564
        %7756 = vmatmul.bf16.gmra.mxu0 %v3521
        %v7757 = vpop.f32.mrf.mxu0
        %v7758 = vadd.f32 %v7744, %v7757
        %v7759 = vpop.f32.mrf.mxu0
        %v7760 = vadd.f32 %v7746, %v7759
        %7761 = vdwg.mxu0
        %7762 = vmatpush.bf16.xpose.msra.mxu0 0
        %7763 = vmatpush.bf16.xpose.msra.mxu0 0
        %7764 = vmatpush.bf16.xpose.msra.mxu0 0
        %7765 = vmatpush.bf16.xpose.msra.mxu0 0
        %7766 = vmatpush.bf16.xpose.msra.mxu0 0
        %7767 = vmatpush.bf16.xpose.msra.mxu0 0
        %7768 = vmatpush.bf16.xpose.msra.mxu0 0
        %7769 = vmatpush.bf16.xpose.msra.mxu0 %v1565
        %7770 = vmatmul.bf16.gmra.mxu0 %v3522
        %v7771 = vpop.f32.mrf.mxu0
        %v7772 = vadd.f32 %v7758, %v7771
        %v7773 = vpop.f32.mrf.mxu0
        %v7774 = vadd.f32 %v7760, %v7773
        %7775 = vdwg.mxu0
        %7776 = vmatpush.bf16.xpose.msra.mxu0 0
        %7777 = vmatpush.bf16.xpose.msra.mxu0 0
        %7778 = vmatpush.bf16.xpose.msra.mxu0 0
        %7779 = vmatpush.bf16.xpose.msra.mxu0 0
        %7780 = vmatpush.bf16.xpose.msra.mxu0 0
        %7781 = vmatpush.bf16.xpose.msra.mxu0 0
        %7782 = vmatpush.bf16.xpose.msra.mxu0 0
        %7783 = vmatpush.bf16.xpose.msra.mxu0 %v1566
        %7784 = vmatmul.bf16.gmra.mxu0 %v3523
        %v7785 = vpop.f32.mrf.mxu0
        %v7786 = vadd.f32 %v7772, %v7785
        %v7787 = vpop.f32.mrf.mxu0
        %v7788 = vadd.f32 %v7774, %v7787
        %7789 = vdwg.mxu0
        %7790 = vmatpush.bf16.xpose.msra.mxu0 0
        %7791 = vmatpush.bf16.xpose.msra.mxu0 0
        %7792 = vmatpush.bf16.xpose.msra.mxu0 0
        %7793 = vmatpush.bf16.xpose.msra.mxu0 0
        %7794 = vmatpush.bf16.xpose.msra.mxu0 0
        %7795 = vmatpush.bf16.xpose.msra.mxu0 0
        %7796 = vmatpush.bf16.xpose.msra.mxu0 0
        %7797 = vmatpush.bf16.xpose.msra.mxu0 %v1567
        %7798 = vmatmul.bf16.gmra.mxu0 %v3524
        %v7799 = vpop.f32.mrf.mxu0
        %v7800 = vadd.f32 %v7786, %v7799
        %v7801 = vpop.f32.mrf.mxu0
        %v7802 = vadd.f32 %v7788, %v7801
        %7803 = vdwg.mxu0
        %7804 = vmatpush.bf16.xpose.msra.mxu0 0
        %7805 = vmatpush.bf16.xpose.msra.mxu0 0
        %7806 = vmatpush.bf16.xpose.msra.mxu0 0
        %7807 = vmatpush.bf16.xpose.msra.mxu0 0
        %7808 = vmatpush.bf16.xpose.msra.mxu0 0
        %7809 = vmatpush.bf16.xpose.msra.mxu0 0
        %7810 = vmatpush.bf16.xpose.msra.mxu0 0
        %7811 = vmatpush.bf16.xpose.msra.mxu0 %v1568
        %7812 = vmatmul.bf16.gmra.mxu0 %v3525
        %v7813 = vpop.f32.mrf.mxu0
        %v7814 = vadd.f32 %v7800, %v7813
        %v7815 = vpop.f32.mrf.mxu0
        %v7816 = vadd.f32 %v7802, %v7815
        %7817 = vdwg.mxu0
        %7818 = vmatpush.bf16.xpose.msra.mxu0 0
        %7819 = vmatpush.bf16.xpose.msra.mxu0 0
        %7820 = vmatpush.bf16.xpose.msra.mxu0 0
        %7821 = vmatpush.bf16.xpose.msra.mxu0 0
        %7822 = vmatpush.bf16.xpose.msra.mxu0 0
        %7823 = vmatpush.bf16.xpose.msra.mxu0 0
        %7824 = vmatpush.bf16.xpose.msra.mxu0 0
        %7825 = vmatpush.bf16.xpose.msra.mxu0 %v1569
        %7826 = vmatmul.bf16.gmra.mxu0 %v3526
        %v7827 = vpop.f32.mrf.mxu0
        %v7828 = vadd.f32 %v7814, %v7827
        %v7829 = vpop.f32.mrf.mxu0
        %v7830 = vadd.f32 %v7816, %v7829
        %7831 = vdwg.mxu0
        %7832 = vmatpush.bf16.xpose.msra.mxu0 0
        %7833 = vmatpush.bf16.xpose.msra.mxu0 0
        %7834 = vmatpush.bf16.xpose.msra.mxu0 0
        %7835 = vmatpush.bf16.xpose.msra.mxu0 0
        %7836 = vmatpush.bf16.xpose.msra.mxu0 0
        %7837 = vmatpush.bf16.xpose.msra.mxu0 0
        %7838 = vmatpush.bf16.xpose.msra.mxu0 0
        %7839 = vmatpush.bf16.xpose.msra.mxu0 %v1570
        %7840 = vmatmul.bf16.gmra.mxu0 %v3527
        %v7841 = vpop.f32.mrf.mxu0
        %v7842 = vadd.f32 %v7828, %v7841
        %v7843 = vpop.f32.mrf.mxu0
        %v7844 = vadd.f32 %v7830, %v7843
        %7845 = vdwg.mxu0
        %7846 = vmatpush.bf16.xpose.msra.mxu0 0
        %7847 = vmatpush.bf16.xpose.msra.mxu0 0
        %7848 = vmatpush.bf16.xpose.msra.mxu0 0
        %7849 = vmatpush.bf16.xpose.msra.mxu0 0
        %7850 = vmatpush.bf16.xpose.msra.mxu0 0
        %7851 = vmatpush.bf16.xpose.msra.mxu0 0
        %7852 = vmatpush.bf16.xpose.msra.mxu0 0
        %7853 = vmatpush.bf16.xpose.msra.mxu0 %v1571
        %7854 = vmatmul.bf16.gmra.mxu0 %v3528
        %v7855 = vpop.f32.mrf.mxu0
        %v7856 = vadd.f32 %v7842, %v7855
        %v7857 = vpop.f32.mrf.mxu0
        %v7858 = vadd.f32 %v7844, %v7857
        %7859 = vdwg.mxu0
        %7860 = vmatpush.bf16.xpose.msra.mxu0 0
        %7861 = vmatpush.bf16.xpose.msra.mxu0 0
        %7862 = vmatpush.bf16.xpose.msra.mxu0 0
        %7863 = vmatpush.bf16.xpose.msra.mxu0 0
        %7864 = vmatpush.bf16.xpose.msra.mxu0 0
        %7865 = vmatpush.bf16.xpose.msra.mxu0 0
        %7866 = vmatpush.bf16.xpose.msra.mxu0 0
        %7867 = vmatpush.bf16.xpose.msra.mxu0 %v1572
        %7868 = vmatmul.bf16.gmra.mxu0 %v3529
        %v7869 = vpop.f32.mrf.mxu0
        %v7870 = vadd.f32 %v7856, %v7869
        %v7871 = vpop.f32.mrf.mxu0
        %v7872 = vadd.f32 %v7858, %v7871
        %7873 = vdwg.mxu0
        %7874 = vmatpush.bf16.xpose.msra.mxu0 0
        %7875 = vmatpush.bf16.xpose.msra.mxu0 0
        %7876 = vmatpush.bf16.xpose.msra.mxu0 0
        %7877 = vmatpush.bf16.xpose.msra.mxu0 0
        %7878 = vmatpush.bf16.xpose.msra.mxu0 0
        %7879 = vmatpush.bf16.xpose.msra.mxu0 0
        %7880 = vmatpush.bf16.xpose.msra.mxu0 0
        %7881 = vmatpush.bf16.xpose.msra.mxu0 %v1573
        %7882 = vmatmul.bf16.gmra.mxu0 %v3530
        %v7883 = vpop.f32.mrf.mxu0
        %v7884 = vadd.f32 %v7870, %v7883
        %v7885 = vpop.f32.mrf.mxu0
        %v7886 = vadd.f32 %v7872, %v7885
        %7887 = vdwg.mxu0
        %7888 = vmatpush.bf16.xpose.msra.mxu0 0
        %7889 = vmatpush.bf16.xpose.msra.mxu0 0
        %7890 = vmatpush.bf16.xpose.msra.mxu0 0
        %7891 = vmatpush.bf16.xpose.msra.mxu0 0
        %7892 = vmatpush.bf16.xpose.msra.mxu0 0
        %7893 = vmatpush.bf16.xpose.msra.mxu0 0
        %7894 = vmatpush.bf16.xpose.msra.mxu0 0
        %7895 = vmatpush.bf16.xpose.msra.mxu0 %v1574
        %7896 = vmatmul.bf16.gmra.mxu0 %v3531
        %v7897 = vpop.f32.mrf.mxu0
        %v7898 = vadd.f32 %v7884, %v7897
        %v7899 = vpop.f32.mrf.mxu0
        %v7900 = vadd.f32 %v7886, %v7899
        %7901 = vdwg.mxu0
        %7902 = vmatpush.bf16.xpose.msra.mxu0 0
        %7903 = vmatpush.bf16.xpose.msra.mxu0 0
        %7904 = vmatpush.bf16.xpose.msra.mxu0 0
        %7905 = vmatpush.bf16.xpose.msra.mxu0 0
        %7906 = vmatpush.bf16.xpose.msra.mxu0 0
        %7907 = vmatpush.bf16.xpose.msra.mxu0 0
        %7908 = vmatpush.bf16.xpose.msra.mxu0 0
        %7909 = vmatpush.bf16.xpose.msra.mxu0 %v1575
        %7910 = vmatmul.bf16.gmra.mxu0 %v3532
        %v7911 = vpop.f32.mrf.mxu0
        %v7912 = vadd.f32 %v7898, %v7911
        %v7913 = vpop.f32.mrf.mxu0
        %v7914 = vadd.f32 %v7900, %v7913
        %7915 = vdwg.mxu0
        %7916 = vmatpush.bf16.xpose.msra.mxu0 0
        %7917 = vmatpush.bf16.xpose.msra.mxu0 0
        %7918 = vmatpush.bf16.xpose.msra.mxu0 0
        %7919 = vmatpush.bf16.xpose.msra.mxu0 0
        %7920 = vmatpush.bf16.xpose.msra.mxu0 0
        %7921 = vmatpush.bf16.xpose.msra.mxu0 0
        %7922 = vmatpush.bf16.xpose.msra.mxu0 0
        %7923 = vmatpush.bf16.xpose.msra.mxu0 %v1576
        %7924 = vmatmul.bf16.gmra.mxu0 %v3533
        %v7925 = vpop.f32.mrf.mxu0
        %v7926 = vadd.f32 %v7912, %v7925
        %v7927 = vpop.f32.mrf.mxu0
        %v7928 = vadd.f32 %v7914, %v7927
        %7929 = vdwg.mxu0
        %7930 = vmatpush.bf16.xpose.msra.mxu0 0
        %7931 = vmatpush.bf16.xpose.msra.mxu0 0
        %7932 = vmatpush.bf16.xpose.msra.mxu0 0
        %7933 = vmatpush.bf16.xpose.msra.mxu0 0
        %7934 = vmatpush.bf16.xpose.msra.mxu0 0
        %7935 = vmatpush.bf16.xpose.msra.mxu0 0
        %7936 = vmatpush.bf16.xpose.msra.mxu0 0
        %7937 = vmatpush.bf16.xpose.msra.mxu0 %v1577
        %7938 = vmatmul.bf16.gmra.mxu0 %v3534
        %v7939 = vpop.f32.mrf.mxu0
        %v7940 = vadd.f32 %v7926, %v7939
        %v7941 = vpop.f32.mrf.mxu0
        %v7942 = vadd.f32 %v7928, %v7941
        %7943 = vdwg.mxu0
        %7944 = vmatpush.bf16.xpose.msra.mxu0 0
        %7945 = vmatpush.bf16.xpose.msra.mxu0 0
        %7946 = vmatpush.bf16.xpose.msra.mxu0 0
        %7947 = vmatpush.bf16.xpose.msra.mxu0 0
        %7948 = vmatpush.bf16.xpose.msra.mxu0 0
        %7949 = vmatpush.bf16.xpose.msra.mxu0 0
        %7950 = vmatpush.bf16.xpose.msra.mxu0 0
        %7951 = vmatpush.bf16.xpose.msra.mxu0 %v1578
        %7952 = vmatmul.bf16.gmra.mxu0 %v3535
        %v7953 = vpop.f32.mrf.mxu0
        %v7954 = vadd.f32 %v7940, %v7953
        %v7955 = vpop.f32.mrf.mxu0
        %v7956 = vadd.f32 %v7942, %v7955
        %7957 = vdwg.mxu0
        %7958 = vmatpush.bf16.xpose.msra.mxu0 0
        %7959 = vmatpush.bf16.xpose.msra.mxu0 0
        %7960 = vmatpush.bf16.xpose.msra.mxu0 0
        %7961 = vmatpush.bf16.xpose.msra.mxu0 0
        %7962 = vmatpush.bf16.xpose.msra.mxu0 0
        %7963 = vmatpush.bf16.xpose.msra.mxu0 0
        %7964 = vmatpush.bf16.xpose.msra.mxu0 0
        %7965 = vmatpush.bf16.xpose.msra.mxu0 %v1579
        %7966 = vmatmul.bf16.gmra.mxu0 %v3536
        %v7967 = vpop.f32.mrf.mxu0
        %v7968 = vadd.f32 %v7954, %v7967
        %v7969 = vpop.f32.mrf.mxu0
        %v7970 = vadd.f32 %v7956, %v7969
        %7971 = vdwg.mxu0
        %7972 = vmatpush.bf16.xpose.msra.mxu0 0
        %7973 = vmatpush.bf16.xpose.msra.mxu0 0
        %7974 = vmatpush.bf16.xpose.msra.mxu0 0
        %7975 = vmatpush.bf16.xpose.msra.mxu0 0
        %7976 = vmatpush.bf16.xpose.msra.mxu0 0
        %7977 = vmatpush.bf16.xpose.msra.mxu0 0
        %7978 = vmatpush.bf16.xpose.msra.mxu0 0
        %7979 = vmatpush.bf16.xpose.msra.mxu0 %v1580
        %7980 = vmatmul.bf16.gmra.mxu0 %v3537
        %v7981 = vpop.f32.mrf.mxu0
        %v7982 = vadd.f32 %v7968, %v7981
        %v7983 = vpop.f32.mrf.mxu0
        %v7984 = vadd.f32 %v7970, %v7983
        %7985 = vdwg.mxu0
        %7986 = vmatpush.bf16.xpose.msra.mxu0 0
        %7987 = vmatpush.bf16.xpose.msra.mxu0 0
        %7988 = vmatpush.bf16.xpose.msra.mxu0 0
        %7989 = vmatpush.bf16.xpose.msra.mxu0 0
        %7990 = vmatpush.bf16.xpose.msra.mxu0 0
        %7991 = vmatpush.bf16.xpose.msra.mxu0 0
        %7992 = vmatpush.bf16.xpose.msra.mxu0 0
        %7993 = vmatpush.bf16.xpose.msra.mxu0 %v1581
        %7994 = vmatmul.bf16.gmra.mxu0 %v3538
        %v7995 = vpop.f32.mrf.mxu0
        %v7996 = vadd.f32 %v7982, %v7995
        %v7997 = vpop.f32.mrf.mxu0
        %v7998 = vadd.f32 %v7984, %v7997
        %7999 = vdwg.mxu0
        %8000 = vmatpush.bf16.xpose.msra.mxu0 0
        %8001 = vmatpush.bf16.xpose.msra.mxu0 0
        %8002 = vmatpush.bf16.xpose.msra.mxu0 0
        %8003 = vmatpush.bf16.xpose.msra.mxu0 0
        %8004 = vmatpush.bf16.xpose.msra.mxu0 0
        %8005 = vmatpush.bf16.xpose.msra.mxu0 0
        %8006 = vmatpush.bf16.xpose.msra.mxu0 0
        %8007 = vmatpush.bf16.xpose.msra.mxu0 %v1582
        %8008 = vmatmul.bf16.gmra.mxu0 %v3539
        %v8009 = vpop.f32.mrf.mxu0
        %v8010 = vadd.f32 %v7996, %v8009
        %v8011 = vpop.f32.mrf.mxu0
        %v8012 = vadd.f32 %v7998, %v8011
        %8013 = vdwg.mxu0
        %8014 = vmatpush.bf16.xpose.msra.mxu0 0
        %8015 = vmatpush.bf16.xpose.msra.mxu0 0
        %8016 = vmatpush.bf16.xpose.msra.mxu0 0
        %8017 = vmatpush.bf16.xpose.msra.mxu0 0
        %8018 = vmatpush.bf16.xpose.msra.mxu0 0
        %8019 = vmatpush.bf16.xpose.msra.mxu0 0
        %8020 = vmatpush.bf16.xpose.msra.mxu0 0
        %8021 = vmatpush.bf16.xpose.msra.mxu0 %v1583
        %8022 = vmatmul.bf16.gmra.mxu0 %v3540
        %v8023 = vpop.f32.mrf.mxu0
        %v8024 = vadd.f32 %v8010, %v8023
        %v8025 = vpop.f32.mrf.mxu0
        %v8026 = vadd.f32 %v8012, %v8025
        %8027 = vdwg.mxu0
        %8028 = vmatpush.bf16.xpose.msra.mxu0 0
        %8029 = vmatpush.bf16.xpose.msra.mxu0 0
        %8030 = vmatpush.bf16.xpose.msra.mxu0 0
        %8031 = vmatpush.bf16.xpose.msra.mxu0 0
        %8032 = vmatpush.bf16.xpose.msra.mxu0 0
        %8033 = vmatpush.bf16.xpose.msra.mxu0 0
        %8034 = vmatpush.bf16.xpose.msra.mxu0 0
        %8035 = vmatpush.bf16.xpose.msra.mxu0 %v1584
        %8036 = vmatmul.bf16.gmra.mxu0 %v3541
        %v8037 = vpop.f32.mrf.mxu0
        %v8038 = vadd.f32 %v8024, %v8037
        %v8039 = vpop.f32.mrf.mxu0
        %v8040 = vadd.f32 %v8026, %v8039
        %8041 = vdwg.mxu0
        %8042 = vmatpush.bf16.xpose.msra.mxu0 0
        %8043 = vmatpush.bf16.xpose.msra.mxu0 0
        %8044 = vmatpush.bf16.xpose.msra.mxu0 0
        %8045 = vmatpush.bf16.xpose.msra.mxu0 0
        %8046 = vmatpush.bf16.xpose.msra.mxu0 0
        %8047 = vmatpush.bf16.xpose.msra.mxu0 0
        %8048 = vmatpush.bf16.xpose.msra.mxu0 0
        %8049 = vmatpush.bf16.xpose.msra.mxu0 %v1585
        %8050 = vmatmul.bf16.gmra.mxu0 %v3542
        %v8051 = vpop.f32.mrf.mxu0
        %v8052 = vadd.f32 %v8038, %v8051
        %v8053 = vpop.f32.mrf.mxu0
        %v8054 = vadd.f32 %v8040, %v8053
        %8055 = vdwg.mxu0
        %8056 = vmatpush.bf16.xpose.msra.mxu0 0
        %8057 = vmatpush.bf16.xpose.msra.mxu0 0
        %8058 = vmatpush.bf16.xpose.msra.mxu0 0
        %8059 = vmatpush.bf16.xpose.msra.mxu0 0
        %8060 = vmatpush.bf16.xpose.msra.mxu0 0
        %8061 = vmatpush.bf16.xpose.msra.mxu0 0
        %8062 = vmatpush.bf16.xpose.msra.mxu0 0
        %8063 = vmatpush.bf16.xpose.msra.mxu0 %v1586
        %8064 = vmatmul.bf16.gmra.mxu0 %v3543
        %v8065 = vpop.f32.mrf.mxu0
        %v8066 = vadd.f32 %v8052, %v8065
        %v8067 = vpop.f32.mrf.mxu0
        %v8068 = vadd.f32 %v8054, %v8067
        %8069 = vdwg.mxu0
        %8070 = vmatpush.bf16.xpose.msra.mxu0 0
        %8071 = vmatpush.bf16.xpose.msra.mxu0 0
        %8072 = vmatpush.bf16.xpose.msra.mxu0 0
        %8073 = vmatpush.bf16.xpose.msra.mxu0 0
        %8074 = vmatpush.bf16.xpose.msra.mxu0 0
        %8075 = vmatpush.bf16.xpose.msra.mxu0 0
        %8076 = vmatpush.bf16.xpose.msra.mxu0 0
        %8077 = vmatpush.bf16.xpose.msra.mxu0 %v1587
        %8078 = vmatmul.bf16.gmra.mxu0 %v3544
        %v8079 = vpop.f32.mrf.mxu0
        %v8080 = vadd.f32 %v8066, %v8079
        %v8081 = vpop.f32.mrf.mxu0
        %v8082 = vadd.f32 %v8068, %v8081
        %8083 = vdwg.mxu0
        %8084 = vmatpush.bf16.xpose.msra.mxu0 0
        %8085 = vmatpush.bf16.xpose.msra.mxu0 0
        %8086 = vmatpush.bf16.xpose.msra.mxu0 0
        %8087 = vmatpush.bf16.xpose.msra.mxu0 0
        %8088 = vmatpush.bf16.xpose.msra.mxu0 0
        %8089 = vmatpush.bf16.xpose.msra.mxu0 0
        %8090 = vmatpush.bf16.xpose.msra.mxu0 0
        %8091 = vmatpush.bf16.xpose.msra.mxu0 %v1588
        %8092 = vmatmul.bf16.gmra.mxu0 %v3545
        %v8093 = vpop.f32.mrf.mxu0
        %v8094 = vadd.f32 %v8080, %v8093
        %v8095 = vpop.f32.mrf.mxu0
        %v8096 = vadd.f32 %v8082, %v8095
        %8097 = vdwg.mxu0
        %8098 = vmatpush.bf16.xpose.msra.mxu0 0
        %8099 = vmatpush.bf16.xpose.msra.mxu0 0
        %8100 = vmatpush.bf16.xpose.msra.mxu0 0
        %8101 = vmatpush.bf16.xpose.msra.mxu0 0
        %8102 = vmatpush.bf16.xpose.msra.mxu0 0
        %8103 = vmatpush.bf16.xpose.msra.mxu0 0
        %8104 = vmatpush.bf16.xpose.msra.mxu0 0
        %8105 = vmatpush.bf16.xpose.msra.mxu0 %v1589
        %8106 = vmatmul.bf16.gmra.mxu0 %v3546
        %v8107 = vpop.f32.mrf.mxu0
        %v8108 = vadd.f32 %v8094, %v8107
        %v8109 = vpop.f32.mrf.mxu0
        %v8110 = vadd.f32 %v8096, %v8109
        %8111 = vdwg.mxu0
        %8112 = vmatpush.bf16.xpose.msra.mxu0 0
        %8113 = vmatpush.bf16.xpose.msra.mxu0 0
        %8114 = vmatpush.bf16.xpose.msra.mxu0 0
        %8115 = vmatpush.bf16.xpose.msra.mxu0 0
        %8116 = vmatpush.bf16.xpose.msra.mxu0 0
        %8117 = vmatpush.bf16.xpose.msra.mxu0 0
        %8118 = vmatpush.bf16.xpose.msra.mxu0 0
        %8119 = vmatpush.bf16.xpose.msra.mxu0 %v1590
        %8120 = vmatmul.bf16.gmra.mxu0 %v3547
        %v8121 = vpop.f32.mrf.mxu0
        %v8122 = vadd.f32 %v8108, %v8121
        %v8123 = vpop.f32.mrf.mxu0
        %v8124 = vadd.f32 %v8110, %v8123
        %8125 = vdwg.mxu0
        %8126 = vmatpush.bf16.xpose.msra.mxu0 0
        %8127 = vmatpush.bf16.xpose.msra.mxu0 0
        %8128 = vmatpush.bf16.xpose.msra.mxu0 0
        %8129 = vmatpush.bf16.xpose.msra.mxu0 0
        %8130 = vmatpush.bf16.xpose.msra.mxu0 0
        %8131 = vmatpush.bf16.xpose.msra.mxu0 0
        %8132 = vmatpush.bf16.xpose.msra.mxu0 0
        %8133 = vmatpush.bf16.xpose.msra.mxu0 %v1591
        %8134 = vmatmul.bf16.gmra.mxu0 %v3548
        %v8135 = vpop.f32.mrf.mxu0
        %v8136 = vadd.f32 %v8122, %v8135
        %v8137 = vpop.f32.mrf.mxu0
        %v8138 = vadd.f32 %v8124, %v8137
        %8139 = vdwg.mxu0
        %8140 = vmatpush.bf16.xpose.msra.mxu0 0
        %8141 = vmatpush.bf16.xpose.msra.mxu0 0
        %8142 = vmatpush.bf16.xpose.msra.mxu0 0
        %8143 = vmatpush.bf16.xpose.msra.mxu0 0
        %8144 = vmatpush.bf16.xpose.msra.mxu0 0
        %8145 = vmatpush.bf16.xpose.msra.mxu0 0
        %8146 = vmatpush.bf16.xpose.msra.mxu0 0
        %8147 = vmatpush.bf16.xpose.msra.mxu0 %v1592
        %8148 = vmatmul.bf16.gmra.mxu0 %v3549
        %v8149 = vpop.f32.mrf.mxu0
        %v8150 = vadd.f32 %v8136, %v8149
        %v8151 = vpop.f32.mrf.mxu0
        %v8152 = vadd.f32 %v8138, %v8151
        %8153 = vdwg.mxu0
        %8154 = vmatpush.bf16.xpose.msra.mxu0 0
        %8155 = vmatpush.bf16.xpose.msra.mxu0 0
        %8156 = vmatpush.bf16.xpose.msra.mxu0 0
        %8157 = vmatpush.bf16.xpose.msra.mxu0 0
        %8158 = vmatpush.bf16.xpose.msra.mxu0 0
        %8159 = vmatpush.bf16.xpose.msra.mxu0 0
        %8160 = vmatpush.bf16.xpose.msra.mxu0 0
        %8161 = vmatpush.bf16.xpose.msra.mxu0 %v1593
        %8162 = vmatmul.bf16.gmra.mxu0 %v3550
        %v8163 = vpop.f32.mrf.mxu0
        %v8164 = vadd.f32 %v8150, %v8163
        %v8165 = vpop.f32.mrf.mxu0
        %v8166 = vadd.f32 %v8152, %v8165
        %8167 = vdwg.mxu0
        %8168 = vmatpush.bf16.xpose.msra.mxu0 0
        %8169 = vmatpush.bf16.xpose.msra.mxu0 0
        %8170 = vmatpush.bf16.xpose.msra.mxu0 0
        %8171 = vmatpush.bf16.xpose.msra.mxu0 0
        %8172 = vmatpush.bf16.xpose.msra.mxu0 0
        %8173 = vmatpush.bf16.xpose.msra.mxu0 0
        %8174 = vmatpush.bf16.xpose.msra.mxu0 0
        %8175 = vmatpush.bf16.xpose.msra.mxu0 %v1594
        %8176 = vmatmul.bf16.gmra.mxu0 %v3551
        %v8177 = vpop.f32.mrf.mxu0
        %v8178 = vadd.f32 %v8164, %v8177
        %v8179 = vpop.f32.mrf.mxu0
        %v8180 = vadd.f32 %v8166, %v8179
        %8181 = vdwg.mxu0
        %8182 = vmatpush.bf16.xpose.msra.mxu0 0
        %8183 = vmatpush.bf16.xpose.msra.mxu0 0
        %8184 = vmatpush.bf16.xpose.msra.mxu0 0
        %8185 = vmatpush.bf16.xpose.msra.mxu0 0
        %8186 = vmatpush.bf16.xpose.msra.mxu0 0
        %8187 = vmatpush.bf16.xpose.msra.mxu0 0
        %8188 = vmatpush.bf16.xpose.msra.mxu0 0
        %8189 = vmatpush.bf16.xpose.msra.mxu0 %v1595
        %8190 = vmatmul.bf16.gmra.mxu0 %v3552
        %v8191 = vpop.f32.mrf.mxu0
        %v8192 = vadd.f32 %v8178, %v8191
        %v8193 = vpop.f32.mrf.mxu0
        %v8194 = vadd.f32 %v8180, %v8193
        %8195 = vdwg.mxu0
        %8196 = vmatpush.bf16.xpose.msra.mxu0 0
        %8197 = vmatpush.bf16.xpose.msra.mxu0 0
        %8198 = vmatpush.bf16.xpose.msra.mxu0 0
        %8199 = vmatpush.bf16.xpose.msra.mxu0 0
        %8200 = vmatpush.bf16.xpose.msra.mxu0 0
        %8201 = vmatpush.bf16.xpose.msra.mxu0 0
        %8202 = vmatpush.bf16.xpose.msra.mxu0 0
        %8203 = vmatpush.bf16.xpose.msra.mxu0 %v1596
        %8204 = vmatmul.bf16.gmra.mxu0 %v3553
        %v8205 = vpop.f32.mrf.mxu0
        %v8206 = vadd.f32 %v8192, %v8205
        %v8207 = vpop.f32.mrf.mxu0
        %v8208 = vadd.f32 %v8194, %v8207
        %8209 = vdwg.mxu0
        %8210 = vmatpush.bf16.xpose.msra.mxu0 0
        %8211 = vmatpush.bf16.xpose.msra.mxu0 0
        %8212 = vmatpush.bf16.xpose.msra.mxu0 0
        %8213 = vmatpush.bf16.xpose.msra.mxu0 0
        %8214 = vmatpush.bf16.xpose.msra.mxu0 0
        %8215 = vmatpush.bf16.xpose.msra.mxu0 0
        %8216 = vmatpush.bf16.xpose.msra.mxu0 0
        %8217 = vmatpush.bf16.xpose.msra.mxu0 %v1597
        %8218 = vmatmul.bf16.gmra.mxu0 %v3554
        %v8219 = vpop.f32.mrf.mxu0
        %v8220 = vadd.f32 %v8206, %v8219
        %v8221 = vpop.f32.mrf.mxu0
        %v8222 = vadd.f32 %v8208, %v8221
        %8223 = vdwg.mxu0
        %8224 = vmatpush.bf16.xpose.msra.mxu0 0
        %8225 = vmatpush.bf16.xpose.msra.mxu0 0
        %8226 = vmatpush.bf16.xpose.msra.mxu0 0
        %8227 = vmatpush.bf16.xpose.msra.mxu0 0
        %8228 = vmatpush.bf16.xpose.msra.mxu0 0
        %8229 = vmatpush.bf16.xpose.msra.mxu0 0
        %8230 = vmatpush.bf16.xpose.msra.mxu0 0
        %8231 = vmatpush.bf16.xpose.msra.mxu0 %v1598
        %8232 = vmatmul.bf16.gmra.mxu0 %v3555
        %v8233 = vpop.f32.mrf.mxu0
        %v8234 = vadd.f32 %v8220, %v8233
        %v8235 = vpop.f32.mrf.mxu0
        %v8236 = vadd.f32 %v8222, %v8235
        %8237 = vdwg.mxu0
        %8238 = vmatpush.bf16.xpose.msra.mxu0 0
        %8239 = vmatpush.bf16.xpose.msra.mxu0 0
        %8240 = vmatpush.bf16.xpose.msra.mxu0 0
        %8241 = vmatpush.bf16.xpose.msra.mxu0 0
        %8242 = vmatpush.bf16.xpose.msra.mxu0 0
        %8243 = vmatpush.bf16.xpose.msra.mxu0 0
        %8244 = vmatpush.bf16.xpose.msra.mxu0 0
        %8245 = vmatpush.bf16.xpose.msra.mxu0 %v1599
        %8246 = vmatmul.bf16.gmra.mxu0 %v3556
        %v8247 = vpop.f32.mrf.mxu0
        %v8248 = vadd.f32 %v8234, %v8247
        %v8249 = vpop.f32.mrf.mxu0
        %v8250 = vadd.f32 %v8236, %v8249
        %8251 = vdwg.mxu0
        %8252 = vmatpush.bf16.xpose.msra.mxu0 0
        %8253 = vmatpush.bf16.xpose.msra.mxu0 0
        %8254 = vmatpush.bf16.xpose.msra.mxu0 0
        %8255 = vmatpush.bf16.xpose.msra.mxu0 0
        %8256 = vmatpush.bf16.xpose.msra.mxu0 0
        %8257 = vmatpush.bf16.xpose.msra.mxu0 0
        %8258 = vmatpush.bf16.xpose.msra.mxu0 0
        %8259 = vmatpush.bf16.xpose.msra.mxu0 %v1600
        %8260 = vmatmul.bf16.gmra.mxu0 %v3557
        %v8261 = vpop.f32.mrf.mxu0
        %v8262 = vadd.f32 %v8248, %v8261
        %v8263 = vpop.f32.mrf.mxu0
        %v8264 = vadd.f32 %v8250, %v8263
        %8265 = vdwg.mxu0
        %8266 = vmatpush.bf16.xpose.msra.mxu0 0
        %8267 = vmatpush.bf16.xpose.msra.mxu0 0
        %8268 = vmatpush.bf16.xpose.msra.mxu0 0
        %8269 = vmatpush.bf16.xpose.msra.mxu0 0
        %8270 = vmatpush.bf16.xpose.msra.mxu0 0
        %8271 = vmatpush.bf16.xpose.msra.mxu0 0
        %8272 = vmatpush.bf16.xpose.msra.mxu0 0
        %8273 = vmatpush.bf16.xpose.msra.mxu0 %v1601
        %8274 = vmatmul.bf16.gmra.mxu0 %v3558
        %v8275 = vpop.f32.mrf.mxu0
        %v8276 = vadd.f32 %v8262, %v8275
        %v8277 = vpop.f32.mrf.mxu0
        %v8278 = vadd.f32 %v8264, %v8277
        %8279 = vdwg.mxu0
        %8280 = vmatpush.bf16.xpose.msra.mxu0 0
        %8281 = vmatpush.bf16.xpose.msra.mxu0 0
        %8282 = vmatpush.bf16.xpose.msra.mxu0 0
        %8283 = vmatpush.bf16.xpose.msra.mxu0 0
        %8284 = vmatpush.bf16.xpose.msra.mxu0 0
        %8285 = vmatpush.bf16.xpose.msra.mxu0 0
        %8286 = vmatpush.bf16.xpose.msra.mxu0 0
        %8287 = vmatpush.bf16.xpose.msra.mxu0 %v1602
        %8288 = vmatmul.bf16.gmra.mxu0 %v3559
        %v8289 = vpop.f32.mrf.mxu0
        %v8290 = vadd.f32 %v8276, %v8289
        %v8291 = vpop.f32.mrf.mxu0
        %v8292 = vadd.f32 %v8278, %v8291
        %8293 = vdwg.mxu0
        %8294 = vmatpush.bf16.xpose.msra.mxu0 0
        %8295 = vmatpush.bf16.xpose.msra.mxu0 0
        %8296 = vmatpush.bf16.xpose.msra.mxu0 0
        %8297 = vmatpush.bf16.xpose.msra.mxu0 0
        %8298 = vmatpush.bf16.xpose.msra.mxu0 0
        %8299 = vmatpush.bf16.xpose.msra.mxu0 0
        %8300 = vmatpush.bf16.xpose.msra.mxu0 0
        %8301 = vmatpush.bf16.xpose.msra.mxu0 %v1603
        %8302 = vmatmul.bf16.gmra.mxu0 %v3560
        %v8303 = vpop.f32.mrf.mxu0
        %v8304 = vadd.f32 %v8290, %v8303
        %v8305 = vpop.f32.mrf.mxu0
        %v8306 = vadd.f32 %v8292, %v8305
        %8307 = vdwg.mxu0
        %8308 = vmatpush.bf16.xpose.msra.mxu0 0
        %8309 = vmatpush.bf16.xpose.msra.mxu0 0
        %8310 = vmatpush.bf16.xpose.msra.mxu0 0
        %8311 = vmatpush.bf16.xpose.msra.mxu0 0
        %8312 = vmatpush.bf16.xpose.msra.mxu0 0
        %8313 = vmatpush.bf16.xpose.msra.mxu0 0
        %8314 = vmatpush.bf16.xpose.msra.mxu0 0
        %8315 = vmatpush.bf16.xpose.msra.mxu0 %v1604
        %8316 = vmatmul.bf16.gmra.mxu0 %v3561
        %v8317 = vpop.f32.mrf.mxu0
        %v8318 = vadd.f32 %v8304, %v8317
        %v8319 = vpop.f32.mrf.mxu0
        %v8320 = vadd.f32 %v8306, %v8319
        %8321 = vdwg.mxu0
        %8322 = vmatpush.bf16.xpose.msra.mxu0 0
        %8323 = vmatpush.bf16.xpose.msra.mxu0 0
        %8324 = vmatpush.bf16.xpose.msra.mxu0 0
        %8325 = vmatpush.bf16.xpose.msra.mxu0 0
        %8326 = vmatpush.bf16.xpose.msra.mxu0 0
        %8327 = vmatpush.bf16.xpose.msra.mxu0 0
        %8328 = vmatpush.bf16.xpose.msra.mxu0 0
        %8329 = vmatpush.bf16.xpose.msra.mxu0 %v1605
        %8330 = vmatmul.bf16.gmra.mxu0 %v3562
        %v8331 = vpop.f32.mrf.mxu0
        %v8332 = vadd.f32 %v8318, %v8331
        %v8333 = vpop.f32.mrf.mxu0
        %v8334 = vadd.f32 %v8320, %v8333
        %8335 = vdwg.mxu0
        %8336 = vmatpush.bf16.xpose.msra.mxu0 0
        %8337 = vmatpush.bf16.xpose.msra.mxu0 0
        %8338 = vmatpush.bf16.xpose.msra.mxu0 0
        %8339 = vmatpush.bf16.xpose.msra.mxu0 0
        %8340 = vmatpush.bf16.xpose.msra.mxu0 0
        %8341 = vmatpush.bf16.xpose.msra.mxu0 0
        %8342 = vmatpush.bf16.xpose.msra.mxu0 0
        %8343 = vmatpush.bf16.xpose.msra.mxu0 %v1606
        %8344 = vmatmul.bf16.gmra.mxu0 %v3563
        %v8345 = vpop.f32.mrf.mxu0
        %v8346 = vadd.f32 %v8332, %v8345
        %v8347 = vpop.f32.mrf.mxu0
        %v8348 = vadd.f32 %v8334, %v8347
        %8349 = vdwg.mxu0
        %8350 = vmatpush.bf16.xpose.msra.mxu0 0
        %8351 = vmatpush.bf16.xpose.msra.mxu0 0
        %8352 = vmatpush.bf16.xpose.msra.mxu0 0
        %8353 = vmatpush.bf16.xpose.msra.mxu0 0
        %8354 = vmatpush.bf16.xpose.msra.mxu0 0
        %8355 = vmatpush.bf16.xpose.msra.mxu0 0
        %8356 = vmatpush.bf16.xpose.msra.mxu0 0
        %8357 = vmatpush.bf16.xpose.msra.mxu0 %v1607
        %8358 = vmatmul.bf16.gmra.mxu0 %v3564
        %v8359 = vpop.f32.mrf.mxu0
        %v8360 = vadd.f32 %v8346, %v8359
        %v8361 = vpop.f32.mrf.mxu0
        %v8362 = vadd.f32 %v8348, %v8361
        %8363 = vdwg.mxu0
        %8364 = vmatpush.bf16.xpose.msra.mxu0 0
        %8365 = vmatpush.bf16.xpose.msra.mxu0 0
        %8366 = vmatpush.bf16.xpose.msra.mxu0 0
        %8367 = vmatpush.bf16.xpose.msra.mxu0 0
        %8368 = vmatpush.bf16.xpose.msra.mxu0 0
        %8369 = vmatpush.bf16.xpose.msra.mxu0 0
        %8370 = vmatpush.bf16.xpose.msra.mxu0 0
        %8371 = vmatpush.bf16.xpose.msra.mxu0 %v1608
        %8372 = vmatmul.bf16.gmra.mxu0 %v3565
        %v8373 = vpop.f32.mrf.mxu0
        %v8374 = vadd.f32 %v8360, %v8373
        %v8375 = vpop.f32.mrf.mxu0
        %v8376 = vadd.f32 %v8362, %v8375
        %8377 = vdwg.mxu0
        %8378 = vmatpush.bf16.xpose.msra.mxu0 0
        %8379 = vmatpush.bf16.xpose.msra.mxu0 0
        %8380 = vmatpush.bf16.xpose.msra.mxu0 0
        %8381 = vmatpush.bf16.xpose.msra.mxu0 0
        %8382 = vmatpush.bf16.xpose.msra.mxu0 0
        %8383 = vmatpush.bf16.xpose.msra.mxu0 0
        %8384 = vmatpush.bf16.xpose.msra.mxu0 0
        %8385 = vmatpush.bf16.xpose.msra.mxu0 %v1609
        %8386 = vmatmul.bf16.gmra.mxu0 %v3566
        %v8387 = vpop.f32.mrf.mxu0
        %v8388 = vadd.f32 %v8374, %v8387
        %v8389 = vpop.f32.mrf.mxu0
        %v8390 = vadd.f32 %v8376, %v8389
        %8391 = vdwg.mxu0
        %8392 = vmatpush.bf16.xpose.msra.mxu0 0
        %8393 = vmatpush.bf16.xpose.msra.mxu0 0
        %8394 = vmatpush.bf16.xpose.msra.mxu0 0
        %8395 = vmatpush.bf16.xpose.msra.mxu0 0
        %8396 = vmatpush.bf16.xpose.msra.mxu0 0
        %8397 = vmatpush.bf16.xpose.msra.mxu0 0
        %8398 = vmatpush.bf16.xpose.msra.mxu0 0
        %8399 = vmatpush.bf16.xpose.msra.mxu0 %v1610
        %8400 = vmatmul.bf16.gmra.mxu0 %v3567
        %v8401 = vpop.f32.mrf.mxu0
        %v8402 = vadd.f32 %v8388, %v8401
        %v8403 = vpop.f32.mrf.mxu0
        %v8404 = vadd.f32 %v8390, %v8403
        %8405 = vdwg.mxu0
        %8406 = vmatpush.bf16.xpose.msra.mxu0 0
        %8407 = vmatpush.bf16.xpose.msra.mxu0 0
        %8408 = vmatpush.bf16.xpose.msra.mxu0 0
        %8409 = vmatpush.bf16.xpose.msra.mxu0 0
        %8410 = vmatpush.bf16.xpose.msra.mxu0 0
        %8411 = vmatpush.bf16.xpose.msra.mxu0 0
        %8412 = vmatpush.bf16.xpose.msra.mxu0 0
        %8413 = vmatpush.bf16.xpose.msra.mxu0 %v1611
        %8414 = vmatmul.bf16.gmra.mxu0 %v3568
        %v8415 = vpop.f32.mrf.mxu0
        %v8416 = vadd.f32 %v8402, %v8415
        %v8417 = vpop.f32.mrf.mxu0
        %v8418 = vadd.f32 %v8404, %v8417
        %8419 = vdwg.mxu0
        %8420 = vmatpush.bf16.xpose.msra.mxu0 0
        %8421 = vmatpush.bf16.xpose.msra.mxu0 0
        %8422 = vmatpush.bf16.xpose.msra.mxu0 0
        %8423 = vmatpush.bf16.xpose.msra.mxu0 0
        %8424 = vmatpush.bf16.xpose.msra.mxu0 0
        %8425 = vmatpush.bf16.xpose.msra.mxu0 0
        %8426 = vmatpush.bf16.xpose.msra.mxu0 0
        %8427 = vmatpush.bf16.xpose.msra.mxu0 %v1612
        %8428 = vmatmul.bf16.gmra.mxu0 %v3569
        %v8429 = vpop.f32.mrf.mxu0
        %v8430 = vadd.f32 %v8416, %v8429
        %v8431 = vpop.f32.mrf.mxu0
        %v8432 = vadd.f32 %v8418, %v8431
        %8433 = vdwg.mxu0
        %8434 = vmatpush.bf16.xpose.msra.mxu0 0
        %8435 = vmatpush.bf16.xpose.msra.mxu0 0
        %8436 = vmatpush.bf16.xpose.msra.mxu0 0
        %8437 = vmatpush.bf16.xpose.msra.mxu0 0
        %8438 = vmatpush.bf16.xpose.msra.mxu0 0
        %8439 = vmatpush.bf16.xpose.msra.mxu0 0
        %8440 = vmatpush.bf16.xpose.msra.mxu0 0
        %8441 = vmatpush.bf16.xpose.msra.mxu0 %v1613
        %8442 = vmatmul.bf16.gmra.mxu0 %v3570
        %v8443 = vpop.f32.mrf.mxu0
        %v8444 = vadd.f32 %v8430, %v8443
        %v8445 = vpop.f32.mrf.mxu0
        %v8446 = vadd.f32 %v8432, %v8445
        %8447 = vdwg.mxu0
        %8448 = vmatpush.bf16.xpose.msra.mxu0 0
        %8449 = vmatpush.bf16.xpose.msra.mxu0 0
        %8450 = vmatpush.bf16.xpose.msra.mxu0 0
        %8451 = vmatpush.bf16.xpose.msra.mxu0 0
        %8452 = vmatpush.bf16.xpose.msra.mxu0 0
        %8453 = vmatpush.bf16.xpose.msra.mxu0 0
        %8454 = vmatpush.bf16.xpose.msra.mxu0 0
        %8455 = vmatpush.bf16.xpose.msra.mxu0 %v1614
        %8456 = vmatmul.bf16.gmra.mxu0 %v3571
        %v8457 = vpop.f32.mrf.mxu0
        %v8458 = vadd.f32 %v8444, %v8457
        %v8459 = vpop.f32.mrf.mxu0
        %v8460 = vadd.f32 %v8446, %v8459
        %8461 = vdwg.mxu0
        %8462 = vmatpush.bf16.xpose.msra.mxu0 0
        %8463 = vmatpush.bf16.xpose.msra.mxu0 0
        %8464 = vmatpush.bf16.xpose.msra.mxu0 0
        %8465 = vmatpush.bf16.xpose.msra.mxu0 0
        %8466 = vmatpush.bf16.xpose.msra.mxu0 0
        %8467 = vmatpush.bf16.xpose.msra.mxu0 0
        %8468 = vmatpush.bf16.xpose.msra.mxu0 0
        %8469 = vmatpush.bf16.xpose.msra.mxu0 %v1615
        %8470 = vmatmul.bf16.gmra.mxu0 %v3572
        %v8471 = vpop.f32.mrf.mxu0
        %v8472 = vadd.f32 %v8458, %v8471
        %v8473 = vpop.f32.mrf.mxu0
        %v8474 = vadd.f32 %v8460, %v8473
        %8475 = vdwg.mxu0
        %8476 = vmatpush.bf16.xpose.msra.mxu0 0
        %8477 = vmatpush.bf16.xpose.msra.mxu0 0
        %8478 = vmatpush.bf16.xpose.msra.mxu0 0
        %8479 = vmatpush.bf16.xpose.msra.mxu0 0
        %8480 = vmatpush.bf16.xpose.msra.mxu0 0
        %8481 = vmatpush.bf16.xpose.msra.mxu0 0
        %8482 = vmatpush.bf16.xpose.msra.mxu0 0
        %8483 = vmatpush.bf16.xpose.msra.mxu0 %v1616
        %8484 = vmatmul.bf16.gmra.mxu0 %v3573
        %v8485 = vpop.f32.mrf.mxu0
        %v8486 = vadd.f32 %v8472, %v8485
        %v8487 = vpop.f32.mrf.mxu0
        %v8488 = vadd.f32 %v8474, %v8487
        %8489 = vdwg.mxu0
        %8490 = vmatpush.bf16.xpose.msra.mxu0 0
        %8491 = vmatpush.bf16.xpose.msra.mxu0 0
        %8492 = vmatpush.bf16.xpose.msra.mxu0 0
        %8493 = vmatpush.bf16.xpose.msra.mxu0 0
        %8494 = vmatpush.bf16.xpose.msra.mxu0 0
        %8495 = vmatpush.bf16.xpose.msra.mxu0 0
        %8496 = vmatpush.bf16.xpose.msra.mxu0 0
        %8497 = vmatpush.bf16.xpose.msra.mxu0 %v1617
        %8498 = vmatmul.bf16.gmra.mxu0 %v3574
        %v8499 = vpop.f32.mrf.mxu0
        %v8500 = vadd.f32 %v8486, %v8499
        %v8501 = vpop.f32.mrf.mxu0
        %v8502 = vadd.f32 %v8488, %v8501
        %8503 = vdwg.mxu0
        %8504 = vmatpush.bf16.xpose.msra.mxu0 0
        %8505 = vmatpush.bf16.xpose.msra.mxu0 0
        %8506 = vmatpush.bf16.xpose.msra.mxu0 0
        %8507 = vmatpush.bf16.xpose.msra.mxu0 0
        %8508 = vmatpush.bf16.xpose.msra.mxu0 0
        %8509 = vmatpush.bf16.xpose.msra.mxu0 0
        %8510 = vmatpush.bf16.xpose.msra.mxu0 0
        %8511 = vmatpush.bf16.xpose.msra.mxu0 %v1618
        %8512 = vmatmul.bf16.gmra.mxu0 %v3575
        %v8513 = vpop.f32.mrf.mxu0
        %v8514 = vadd.f32 %v8500, %v8513
        %v8515 = vpop.f32.mrf.mxu0
        %v8516 = vadd.f32 %v8502, %v8515
        %8517 = vdwg.mxu0
        %8518 = vmatpush.bf16.xpose.msra.mxu0 0
        %8519 = vmatpush.bf16.xpose.msra.mxu0 0
        %8520 = vmatpush.bf16.xpose.msra.mxu0 0
        %8521 = vmatpush.bf16.xpose.msra.mxu0 0
        %8522 = vmatpush.bf16.xpose.msra.mxu0 0
        %8523 = vmatpush.bf16.xpose.msra.mxu0 0
        %8524 = vmatpush.bf16.xpose.msra.mxu0 0
        %8525 = vmatpush.bf16.xpose.msra.mxu0 %v1619
        %8526 = vmatmul.bf16.gmra.mxu0 %v3576
        %v8527 = vpop.f32.mrf.mxu0
        %v8528 = vadd.f32 %v8514, %v8527
        %v8529 = vpop.f32.mrf.mxu0
        %v8530 = vadd.f32 %v8516, %v8529
        %8531 = vdwg.mxu0
        %8532 = vmatpush.bf16.xpose.msra.mxu0 0
        %8533 = vmatpush.bf16.xpose.msra.mxu0 0
        %8534 = vmatpush.bf16.xpose.msra.mxu0 0
        %8535 = vmatpush.bf16.xpose.msra.mxu0 0
        %8536 = vmatpush.bf16.xpose.msra.mxu0 0
        %8537 = vmatpush.bf16.xpose.msra.mxu0 0
        %8538 = vmatpush.bf16.xpose.msra.mxu0 0
        %8539 = vmatpush.bf16.xpose.msra.mxu0 %v1620
        %8540 = vmatmul.bf16.gmra.mxu0 %v3577
        %v8541 = vpop.f32.mrf.mxu0
        %v8542 = vadd.f32 %v8528, %v8541
        %v8543 = vpop.f32.mrf.mxu0
        %v8544 = vadd.f32 %v8530, %v8543
        %8545 = vdwg.mxu0
        %8546 = vmatpush.bf16.xpose.msra.mxu0 0
        %8547 = vmatpush.bf16.xpose.msra.mxu0 0
        %8548 = vmatpush.bf16.xpose.msra.mxu0 0
        %8549 = vmatpush.bf16.xpose.msra.mxu0 0
        %8550 = vmatpush.bf16.xpose.msra.mxu0 0
        %8551 = vmatpush.bf16.xpose.msra.mxu0 0
        %8552 = vmatpush.bf16.xpose.msra.mxu0 0
        %8553 = vmatpush.bf16.xpose.msra.mxu0 %v1621
        %8554 = vmatmul.bf16.gmra.mxu0 %v3578
        %v8555 = vpop.f32.mrf.mxu0
        %v8556 = vadd.f32 %v8542, %v8555
        %v8557 = vpop.f32.mrf.mxu0
        %v8558 = vadd.f32 %v8544, %v8557
        %8559 = vdwg.mxu0
        %8560 = vmatpush.bf16.xpose.msra.mxu0 0
        %8561 = vmatpush.bf16.xpose.msra.mxu0 0
        %8562 = vmatpush.bf16.xpose.msra.mxu0 0
        %8563 = vmatpush.bf16.xpose.msra.mxu0 0
        %8564 = vmatpush.bf16.xpose.msra.mxu0 0
        %8565 = vmatpush.bf16.xpose.msra.mxu0 0
        %8566 = vmatpush.bf16.xpose.msra.mxu0 0
        %8567 = vmatpush.bf16.xpose.msra.mxu0 %v1622
        %8568 = vmatmul.bf16.gmra.mxu0 %v3579
        %v8569 = vpop.f32.mrf.mxu0
        %v8570 = vadd.f32 %v8556, %v8569
        %v8571 = vpop.f32.mrf.mxu0
        %v8572 = vadd.f32 %v8558, %v8571
        %8573 = vdwg.mxu0
        %8574 = vmatpush.bf16.xpose.msra.mxu0 0
        %8575 = vmatpush.bf16.xpose.msra.mxu0 0
        %8576 = vmatpush.bf16.xpose.msra.mxu0 0
        %8577 = vmatpush.bf16.xpose.msra.mxu0 0
        %8578 = vmatpush.bf16.xpose.msra.mxu0 0
        %8579 = vmatpush.bf16.xpose.msra.mxu0 0
        %8580 = vmatpush.bf16.xpose.msra.mxu0 0
        %8581 = vmatpush.bf16.xpose.msra.mxu0 %v1623
        %8582 = vmatmul.bf16.gmra.mxu0 %v3580
        %v8583 = vpop.f32.mrf.mxu0
        %v8584 = vadd.f32 %v8570, %v8583
        %v8585 = vpop.f32.mrf.mxu0
        %v8586 = vadd.f32 %v8572, %v8585
        %8587 = vdwg.mxu0
        %8588 = vmatpush.bf16.xpose.msra.mxu0 0
        %8589 = vmatpush.bf16.xpose.msra.mxu0 0
        %8590 = vmatpush.bf16.xpose.msra.mxu0 0
        %8591 = vmatpush.bf16.xpose.msra.mxu0 0
        %8592 = vmatpush.bf16.xpose.msra.mxu0 0
        %8593 = vmatpush.bf16.xpose.msra.mxu0 0
        %8594 = vmatpush.bf16.xpose.msra.mxu0 0
        %8595 = vmatpush.bf16.xpose.msra.mxu0 %v1624
        %8596 = vmatmul.bf16.gmra.mxu0 %v3581
        %v8597 = vpop.f32.mrf.mxu0
        %v8598 = vadd.f32 %v8584, %v8597
        %v8599 = vpop.f32.mrf.mxu0
        %v8600 = vadd.f32 %v8586, %v8599
        %8601 = vdwg.mxu0
        %8602 = vmatpush.bf16.xpose.msra.mxu0 0
        %8603 = vmatpush.bf16.xpose.msra.mxu0 0
        %8604 = vmatpush.bf16.xpose.msra.mxu0 0
        %8605 = vmatpush.bf16.xpose.msra.mxu0 0
        %8606 = vmatpush.bf16.xpose.msra.mxu0 0
        %8607 = vmatpush.bf16.xpose.msra.mxu0 0
        %8608 = vmatpush.bf16.xpose.msra.mxu0 0
        %8609 = vmatpush.bf16.xpose.msra.mxu0 %v1625
        %8610 = vmatmul.bf16.gmra.mxu0 %v3582
        %v8611 = vpop.f32.mrf.mxu0
        %v8612 = vadd.f32 %v8598, %v8611
        %v8613 = vpop.f32.mrf.mxu0
        %v8614 = vadd.f32 %v8600, %v8613
        %8615 = vdwg.mxu0
        %8616 = vmatpush.bf16.xpose.msra.mxu0 0
        %8617 = vmatpush.bf16.xpose.msra.mxu0 0
        %8618 = vmatpush.bf16.xpose.msra.mxu0 0
        %8619 = vmatpush.bf16.xpose.msra.mxu0 0
        %8620 = vmatpush.bf16.xpose.msra.mxu0 0
        %8621 = vmatpush.bf16.xpose.msra.mxu0 0
        %8622 = vmatpush.bf16.xpose.msra.mxu0 0
        %8623 = vmatpush.bf16.xpose.msra.mxu0 %v1626
        %8624 = vmatmul.bf16.gmra.mxu0 %v3583
        %v8625 = vpop.f32.mrf.mxu0
        %v8626 = vadd.f32 %v8612, %v8625
        %v8627 = vpop.f32.mrf.mxu0
        %v8628 = vadd.f32 %v8614, %v8627
        %8629 = vdwg.mxu0
        %8630 = vmatpush.bf16.xpose.msra.mxu0 0
        %8631 = vmatpush.bf16.xpose.msra.mxu0 0
        %8632 = vmatpush.bf16.xpose.msra.mxu0 0
        %8633 = vmatpush.bf16.xpose.msra.mxu0 0
        %8634 = vmatpush.bf16.xpose.msra.mxu0 0
        %8635 = vmatpush.bf16.xpose.msra.mxu0 0
        %8636 = vmatpush.bf16.xpose.msra.mxu0 0
        %8637 = vmatpush.bf16.xpose.msra.mxu0 %v1627
        %8638 = vmatmul.bf16.gmra.mxu0 %v3584
        %v8639 = vpop.f32.mrf.mxu0
        %v8640 = vadd.f32 %v8626, %v8639
        %v8641 = vpop.f32.mrf.mxu0
        %v8642 = vadd.f32 %v8628, %v8641
        %8643 = vdwg.mxu0
        %8644 = vmatpush.bf16.xpose.msra.mxu0 0
        %8645 = vmatpush.bf16.xpose.msra.mxu0 0
        %8646 = vmatpush.bf16.xpose.msra.mxu0 0
        %8647 = vmatpush.bf16.xpose.msra.mxu0 0
        %8648 = vmatpush.bf16.xpose.msra.mxu0 0
        %8649 = vmatpush.bf16.xpose.msra.mxu0 0
        %8650 = vmatpush.bf16.xpose.msra.mxu0 0
        %8651 = vmatpush.bf16.xpose.msra.mxu0 %v1628
        %8652 = vmatmul.bf16.gmra.mxu0 %v3585
        %v8653 = vpop.f32.mrf.mxu0
        %v8654 = vadd.f32 %v8640, %v8653
        %v8655 = vpop.f32.mrf.mxu0
        %v8656 = vadd.f32 %v8642, %v8655
        %8657 = vdwg.mxu0
        %8658 = vmatpush.bf16.xpose.msra.mxu0 0
        %8659 = vmatpush.bf16.xpose.msra.mxu0 0
        %8660 = vmatpush.bf16.xpose.msra.mxu0 0
        %8661 = vmatpush.bf16.xpose.msra.mxu0 0
        %8662 = vmatpush.bf16.xpose.msra.mxu0 0
        %8663 = vmatpush.bf16.xpose.msra.mxu0 0
        %8664 = vmatpush.bf16.xpose.msra.mxu0 0
        %8665 = vmatpush.bf16.xpose.msra.mxu0 %v1629
        %8666 = vmatmul.bf16.gmra.mxu0 %v3586
        %v8667 = vpop.f32.mrf.mxu0
        %v8668 = vadd.f32 %v8654, %v8667
        %v8669 = vpop.f32.mrf.mxu0
        %v8670 = vadd.f32 %v8656, %v8669
        %8671 = vdwg.mxu0
        %8672 = vmatpush.bf16.xpose.msra.mxu0 0
        %8673 = vmatpush.bf16.xpose.msra.mxu0 0
        %8674 = vmatpush.bf16.xpose.msra.mxu0 0
        %8675 = vmatpush.bf16.xpose.msra.mxu0 0
        %8676 = vmatpush.bf16.xpose.msra.mxu0 0
        %8677 = vmatpush.bf16.xpose.msra.mxu0 0
        %8678 = vmatpush.bf16.xpose.msra.mxu0 0
        %8679 = vmatpush.bf16.xpose.msra.mxu0 %v1630
        %8680 = vmatmul.bf16.gmra.mxu0 %v3587
        %v8681 = vpop.f32.mrf.mxu0
        %v8682 = vadd.f32 %v8668, %v8681
        %v8683 = vpop.f32.mrf.mxu0
        %v8684 = vadd.f32 %v8670, %v8683
        %8685 = vdwg.mxu0
        %8686 = vmatpush.bf16.xpose.msra.mxu0 0
        %8687 = vmatpush.bf16.xpose.msra.mxu0 0
        %8688 = vmatpush.bf16.xpose.msra.mxu0 0
        %8689 = vmatpush.bf16.xpose.msra.mxu0 0
        %8690 = vmatpush.bf16.xpose.msra.mxu0 0
        %8691 = vmatpush.bf16.xpose.msra.mxu0 0
        %8692 = vmatpush.bf16.xpose.msra.mxu0 0
        %8693 = vmatpush.bf16.xpose.msra.mxu0 %v1631
        %8694 = vmatmul.bf16.gmra.mxu0 %v3588
        %v8695 = vpop.f32.mrf.mxu0
        %v8696 = vadd.f32 %v8682, %v8695
        %v8697 = vpop.f32.mrf.mxu0
        %v8698 = vadd.f32 %v8684, %v8697
        %8699 = vdwg.mxu0
        %8700 = vmatpush.bf16.xpose.msra.mxu0 0
        %8701 = vmatpush.bf16.xpose.msra.mxu0 0
        %8702 = vmatpush.bf16.xpose.msra.mxu0 0
        %8703 = vmatpush.bf16.xpose.msra.mxu0 0
        %8704 = vmatpush.bf16.xpose.msra.mxu0 0
        %8705 = vmatpush.bf16.xpose.msra.mxu0 0
        %8706 = vmatpush.bf16.xpose.msra.mxu0 0
        %8707 = vmatpush.bf16.xpose.msra.mxu0 %v1632
        %8708 = vmatmul.bf16.gmra.mxu0 %v3589
        %v8709 = vpop.f32.mrf.mxu0
        %v8710 = vadd.f32 %v8696, %v8709
        %v8711 = vpop.f32.mrf.mxu0
        %v8712 = vadd.f32 %v8698, %v8711
        %8713 = vdwg.mxu0
        %8714 = vmatpush.bf16.xpose.msra.mxu0 0
        %8715 = vmatpush.bf16.xpose.msra.mxu0 0
        %8716 = vmatpush.bf16.xpose.msra.mxu0 0
        %8717 = vmatpush.bf16.xpose.msra.mxu0 0
        %8718 = vmatpush.bf16.xpose.msra.mxu0 0
        %8719 = vmatpush.bf16.xpose.msra.mxu0 0
        %8720 = vmatpush.bf16.xpose.msra.mxu0 0
        %8721 = vmatpush.bf16.xpose.msra.mxu0 %v1633
        %8722 = vmatmul.bf16.gmra.mxu0 %v3590
        %v8723 = vpop.f32.mrf.mxu0
        %v8724 = vadd.f32 %v8710, %v8723
        %v8725 = vpop.f32.mrf.mxu0
        %v8726 = vadd.f32 %v8712, %v8725
        %8727 = vdwg.mxu0
        %8728 = vmatpush.bf16.xpose.msra.mxu0 0
        %8729 = vmatpush.bf16.xpose.msra.mxu0 0
        %8730 = vmatpush.bf16.xpose.msra.mxu0 0
        %8731 = vmatpush.bf16.xpose.msra.mxu0 0
        %8732 = vmatpush.bf16.xpose.msra.mxu0 0
        %8733 = vmatpush.bf16.xpose.msra.mxu0 0
        %8734 = vmatpush.bf16.xpose.msra.mxu0 0
        %8735 = vmatpush.bf16.xpose.msra.mxu0 %v1634
        %8736 = vmatmul.bf16.gmra.mxu0 %v3591
        %v8737 = vpop.f32.mrf.mxu0
        %v8738 = vadd.f32 %v8724, %v8737
        %v8739 = vpop.f32.mrf.mxu0
        %v8740 = vadd.f32 %v8726, %v8739
        %8741 = vdwg.mxu0
        %8742 = vmatpush.bf16.xpose.msra.mxu0 0
        %8743 = vmatpush.bf16.xpose.msra.mxu0 0
        %8744 = vmatpush.bf16.xpose.msra.mxu0 0
        %8745 = vmatpush.bf16.xpose.msra.mxu0 0
        %8746 = vmatpush.bf16.xpose.msra.mxu0 0
        %8747 = vmatpush.bf16.xpose.msra.mxu0 0
        %8748 = vmatpush.bf16.xpose.msra.mxu0 0
        %8749 = vmatpush.bf16.xpose.msra.mxu0 %v1635
        %8750 = vmatmul.bf16.gmra.mxu0 %v3592
        %v8751 = vpop.f32.mrf.mxu0
        %v8752 = vadd.f32 %v8738, %v8751
        %v8753 = vpop.f32.mrf.mxu0
        %v8754 = vadd.f32 %v8740, %v8753
        %8755 = vdwg.mxu0
        %8756 = vmatpush.bf16.xpose.msra.mxu0 0
        %8757 = vmatpush.bf16.xpose.msra.mxu0 0
        %8758 = vmatpush.bf16.xpose.msra.mxu0 0
        %8759 = vmatpush.bf16.xpose.msra.mxu0 0
        %8760 = vmatpush.bf16.xpose.msra.mxu0 0
        %8761 = vmatpush.bf16.xpose.msra.mxu0 0
        %8762 = vmatpush.bf16.xpose.msra.mxu0 0
        %8763 = vmatpush.bf16.xpose.msra.mxu0 %v1636
        %8764 = vmatmul.bf16.gmra.mxu0 %v3593
        %v8765 = vpop.f32.mrf.mxu0
        %v8766 = vadd.f32 %v8752, %v8765
        %v8767 = vpop.f32.mrf.mxu0
        %v8768 = vadd.f32 %v8754, %v8767
        %8769 = vdwg.mxu0
        %8770 = vmatpush.bf16.xpose.msra.mxu0 0
        %8771 = vmatpush.bf16.xpose.msra.mxu0 0
        %8772 = vmatpush.bf16.xpose.msra.mxu0 0
        %8773 = vmatpush.bf16.xpose.msra.mxu0 0
        %8774 = vmatpush.bf16.xpose.msra.mxu0 0
        %8775 = vmatpush.bf16.xpose.msra.mxu0 0
        %8776 = vmatpush.bf16.xpose.msra.mxu0 0
        %8777 = vmatpush.bf16.xpose.msra.mxu0 %v1637
        %8778 = vmatmul.bf16.gmra.mxu0 %v3594
        %v8779 = vpop.f32.mrf.mxu0
        %v8780 = vadd.f32 %v8766, %v8779
        %v8781 = vpop.f32.mrf.mxu0
        %v8782 = vadd.f32 %v8768, %v8781
        %8783 = vdwg.mxu0
        %8784 = vmatpush.bf16.xpose.msra.mxu0 0
        %8785 = vmatpush.bf16.xpose.msra.mxu0 0
        %8786 = vmatpush.bf16.xpose.msra.mxu0 0
        %8787 = vmatpush.bf16.xpose.msra.mxu0 0
        %8788 = vmatpush.bf16.xpose.msra.mxu0 0
        %8789 = vmatpush.bf16.xpose.msra.mxu0 0
        %8790 = vmatpush.bf16.xpose.msra.mxu0 0
        %8791 = vmatpush.bf16.xpose.msra.mxu0 %v1638
        %8792 = vmatmul.bf16.gmra.mxu0 %v3595
        %v8793 = vpop.f32.mrf.mxu0
        %v8794 = vadd.f32 %v8780, %v8793
        %v8795 = vpop.f32.mrf.mxu0
        %v8796 = vadd.f32 %v8782, %v8795
        %8797 = vdwg.mxu0
        %8798 = vmatpush.bf16.xpose.msra.mxu0 0
        %8799 = vmatpush.bf16.xpose.msra.mxu0 0
        %8800 = vmatpush.bf16.xpose.msra.mxu0 0
        %8801 = vmatpush.bf16.xpose.msra.mxu0 0
        %8802 = vmatpush.bf16.xpose.msra.mxu0 0
        %8803 = vmatpush.bf16.xpose.msra.mxu0 0
        %8804 = vmatpush.bf16.xpose.msra.mxu0 0
        %8805 = vmatpush.bf16.xpose.msra.mxu0 %v1639
        %8806 = vmatmul.bf16.gmra.mxu0 %v3596
        %v8807 = vpop.f32.mrf.mxu0
        %v8808 = vadd.f32 %v8794, %v8807
        %v8809 = vpop.f32.mrf.mxu0
        %v8810 = vadd.f32 %v8796, %v8809
        %8811 = vdwg.mxu0
        %8812 = vmatpush.bf16.xpose.msra.mxu0 0
        %8813 = vmatpush.bf16.xpose.msra.mxu0 0
        %8814 = vmatpush.bf16.xpose.msra.mxu0 0
        %8815 = vmatpush.bf16.xpose.msra.mxu0 0
        %8816 = vmatpush.bf16.xpose.msra.mxu0 0
        %8817 = vmatpush.bf16.xpose.msra.mxu0 0
        %8818 = vmatpush.bf16.xpose.msra.mxu0 0
        %8819 = vmatpush.bf16.xpose.msra.mxu0 %v1640
        %8820 = vmatmul.bf16.gmra.mxu0 %v3597
        %v8821 = vpop.f32.mrf.mxu0
        %v8822 = vadd.f32 %v8808, %v8821
        %v8823 = vpop.f32.mrf.mxu0
        %v8824 = vadd.f32 %v8810, %v8823
        %8825 = vdwg.mxu0
        %8826 = vmatpush.bf16.xpose.msra.mxu0 0
        %8827 = vmatpush.bf16.xpose.msra.mxu0 0
        %8828 = vmatpush.bf16.xpose.msra.mxu0 0
        %8829 = vmatpush.bf16.xpose.msra.mxu0 0
        %8830 = vmatpush.bf16.xpose.msra.mxu0 0
        %8831 = vmatpush.bf16.xpose.msra.mxu0 0
        %8832 = vmatpush.bf16.xpose.msra.mxu0 0
        %8833 = vmatpush.bf16.xpose.msra.mxu0 %v1641
        %8834 = vmatmul.bf16.gmra.mxu0 %v3598
        %v8835 = vpop.f32.mrf.mxu0
        %v8836 = vadd.f32 %v8822, %v8835
        %v8837 = vpop.f32.mrf.mxu0
        %v8838 = vadd.f32 %v8824, %v8837
        %8839 = vdwg.mxu0
        %8840 = vmatpush.bf16.xpose.msra.mxu0 0
        %8841 = vmatpush.bf16.xpose.msra.mxu0 0
        %8842 = vmatpush.bf16.xpose.msra.mxu0 0
        %8843 = vmatpush.bf16.xpose.msra.mxu0 0
        %8844 = vmatpush.bf16.xpose.msra.mxu0 0
        %8845 = vmatpush.bf16.xpose.msra.mxu0 0
        %8846 = vmatpush.bf16.xpose.msra.mxu0 0
        %8847 = vmatpush.bf16.xpose.msra.mxu0 %v1642
        %8848 = vmatmul.bf16.gmra.mxu0 %v3599
        %v8849 = vpop.f32.mrf.mxu0
        %v8850 = vadd.f32 %v8836, %v8849
        %v8851 = vpop.f32.mrf.mxu0
        %v8852 = vadd.f32 %v8838, %v8851
        %8853 = vdwg.mxu0
        %8854 = vmatpush.bf16.xpose.msra.mxu0 0
        %8855 = vmatpush.bf16.xpose.msra.mxu0 0
        %8856 = vmatpush.bf16.xpose.msra.mxu0 0
        %8857 = vmatpush.bf16.xpose.msra.mxu0 0
        %8858 = vmatpush.bf16.xpose.msra.mxu0 0
        %8859 = vmatpush.bf16.xpose.msra.mxu0 0
        %8860 = vmatpush.bf16.xpose.msra.mxu0 0
        %8861 = vmatpush.bf16.xpose.msra.mxu0 %v1643
        %8862 = vmatmul.bf16.gmra.mxu0 %v3600
        %v8863 = vpop.f32.mrf.mxu0
        %v8864 = vadd.f32 %v8850, %v8863
        %v8865 = vpop.f32.mrf.mxu0
        %v8866 = vadd.f32 %v8852, %v8865
        %8867 = vdwg.mxu0
        %8868 = vmatpush.bf16.xpose.msra.mxu0 0
        %8869 = vmatpush.bf16.xpose.msra.mxu0 0
        %8870 = vmatpush.bf16.xpose.msra.mxu0 0
        %8871 = vmatpush.bf16.xpose.msra.mxu0 0
        %8872 = vmatpush.bf16.xpose.msra.mxu0 0
        %8873 = vmatpush.bf16.xpose.msra.mxu0 0
        %8874 = vmatpush.bf16.xpose.msra.mxu0 0
        %8875 = vmatpush.bf16.xpose.msra.mxu0 %v1644
        %8876 = vmatmul.bf16.gmra.mxu0 %v3601
        %v8877 = vpop.f32.mrf.mxu0
        %v8878 = vadd.f32 %v8864, %v8877
        %v8879 = vpop.f32.mrf.mxu0
        %v8880 = vadd.f32 %v8866, %v8879
        %8881 = vdwg.mxu0
        %8882 = vmatpush.bf16.xpose.msra.mxu0 0
        %8883 = vmatpush.bf16.xpose.msra.mxu0 0
        %8884 = vmatpush.bf16.xpose.msra.mxu0 0
        %8885 = vmatpush.bf16.xpose.msra.mxu0 0
        %8886 = vmatpush.bf16.xpose.msra.mxu0 0
        %8887 = vmatpush.bf16.xpose.msra.mxu0 0
        %8888 = vmatpush.bf16.xpose.msra.mxu0 0
        %8889 = vmatpush.bf16.xpose.msra.mxu0 %v1645
        %8890 = vmatmul.bf16.gmra.mxu0 %v3602
        %v8891 = vpop.f32.mrf.mxu0
        %v8892 = vadd.f32 %v8878, %v8891
        %v8893 = vpop.f32.mrf.mxu0
        %v8894 = vadd.f32 %v8880, %v8893
        %8895 = vdwg.mxu0
        %8896 = vmatpush.bf16.xpose.msra.mxu0 0
        %8897 = vmatpush.bf16.xpose.msra.mxu0 0
        %8898 = vmatpush.bf16.xpose.msra.mxu0 0
        %8899 = vmatpush.bf16.xpose.msra.mxu0 0
        %8900 = vmatpush.bf16.xpose.msra.mxu0 0
        %8901 = vmatpush.bf16.xpose.msra.mxu0 0
        %8902 = vmatpush.bf16.xpose.msra.mxu0 0
        %8903 = vmatpush.bf16.xpose.msra.mxu0 %v1646
        %8904 = vmatmul.bf16.gmra.mxu0 %v3603
        %v8905 = vpop.f32.mrf.mxu0
        %v8906 = vadd.f32 %v8892, %v8905
        %v8907 = vpop.f32.mrf.mxu0
        %v8908 = vadd.f32 %v8894, %v8907
        %8909 = vdwg.mxu0
        %8910 = vmatpush.bf16.xpose.msra.mxu0 0
        %8911 = vmatpush.bf16.xpose.msra.mxu0 0
        %8912 = vmatpush.bf16.xpose.msra.mxu0 0
        %8913 = vmatpush.bf16.xpose.msra.mxu0 0
        %8914 = vmatpush.bf16.xpose.msra.mxu0 0
        %8915 = vmatpush.bf16.xpose.msra.mxu0 0
        %8916 = vmatpush.bf16.xpose.msra.mxu0 0
        %8917 = vmatpush.bf16.xpose.msra.mxu0 %v1647
        %8918 = vmatmul.bf16.gmra.mxu0 %v3604
        %v8919 = vpop.f32.mrf.mxu0
        %v8920 = vadd.f32 %v8906, %v8919
        %v8921 = vpop.f32.mrf.mxu0
        %v8922 = vadd.f32 %v8908, %v8921
        %8923 = vdwg.mxu0
        %8924 = vmatpush.bf16.xpose.msra.mxu0 0
        %8925 = vmatpush.bf16.xpose.msra.mxu0 0
        %8926 = vmatpush.bf16.xpose.msra.mxu0 0
        %8927 = vmatpush.bf16.xpose.msra.mxu0 0
        %8928 = vmatpush.bf16.xpose.msra.mxu0 0
        %8929 = vmatpush.bf16.xpose.msra.mxu0 0
        %8930 = vmatpush.bf16.xpose.msra.mxu0 0
        %8931 = vmatpush.bf16.xpose.msra.mxu0 %v1648
        %8932 = vmatmul.bf16.gmra.mxu0 %v3605
        %v8933 = vpop.f32.mrf.mxu0
        %v8934 = vadd.f32 %v8920, %v8933
        %v8935 = vpop.f32.mrf.mxu0
        %v8936 = vadd.f32 %v8922, %v8935
        %8937 = vdwg.mxu0
        %8938 = vmatpush.bf16.xpose.msra.mxu0 0
        %8939 = vmatpush.bf16.xpose.msra.mxu0 0
        %8940 = vmatpush.bf16.xpose.msra.mxu0 0
        %8941 = vmatpush.bf16.xpose.msra.mxu0 0
        %8942 = vmatpush.bf16.xpose.msra.mxu0 0
        %8943 = vmatpush.bf16.xpose.msra.mxu0 0
        %8944 = vmatpush.bf16.xpose.msra.mxu0 0
        %8945 = vmatpush.bf16.xpose.msra.mxu0 %v1649
        %8946 = vmatmul.bf16.gmra.mxu0 %v3606
        %v8947 = vpop.f32.mrf.mxu0
        %v8948 = vadd.f32 %v8934, %v8947
        %v8949 = vpop.f32.mrf.mxu0
        %v8950 = vadd.f32 %v8936, %v8949
        %8951 = vdwg.mxu0
        %8952 = vmatpush.bf16.xpose.msra.mxu0 0
        %8953 = vmatpush.bf16.xpose.msra.mxu0 0
        %8954 = vmatpush.bf16.xpose.msra.mxu0 0
        %8955 = vmatpush.bf16.xpose.msra.mxu0 0
        %8956 = vmatpush.bf16.xpose.msra.mxu0 0
        %8957 = vmatpush.bf16.xpose.msra.mxu0 0
        %8958 = vmatpush.bf16.xpose.msra.mxu0 0
        %8959 = vmatpush.bf16.xpose.msra.mxu0 %v1650
        %8960 = vmatmul.bf16.gmra.mxu0 %v3607
        %v8961 = vpop.f32.mrf.mxu0
        %v8962 = vadd.f32 %v8948, %v8961
        %v8963 = vpop.f32.mrf.mxu0
        %v8964 = vadd.f32 %v8950, %v8963
        %8965 = vdwg.mxu0
        %8966 = vmatpush.bf16.xpose.msra.mxu0 0
        %8967 = vmatpush.bf16.xpose.msra.mxu0 0
        %8968 = vmatpush.bf16.xpose.msra.mxu0 0
        %8969 = vmatpush.bf16.xpose.msra.mxu0 0
        %8970 = vmatpush.bf16.xpose.msra.mxu0 0
        %8971 = vmatpush.bf16.xpose.msra.mxu0 0
        %8972 = vmatpush.bf16.xpose.msra.mxu0 0
        %8973 = vmatpush.bf16.xpose.msra.mxu0 %v1651
        %8974 = vmatmul.bf16.gmra.mxu0 %v3608
        %v8975 = vpop.f32.mrf.mxu0
        %v8976 = vadd.f32 %v8962, %v8975
        %v8977 = vpop.f32.mrf.mxu0
        %v8978 = vadd.f32 %v8964, %v8977
        %8979 = vdwg.mxu0
        %8980 = vmatpush.bf16.xpose.msra.mxu0 0
        %8981 = vmatpush.bf16.xpose.msra.mxu0 0
        %8982 = vmatpush.bf16.xpose.msra.mxu0 0
        %8983 = vmatpush.bf16.xpose.msra.mxu0 0
        %8984 = vmatpush.bf16.xpose.msra.mxu0 0
        %8985 = vmatpush.bf16.xpose.msra.mxu0 0
        %8986 = vmatpush.bf16.xpose.msra.mxu0 0
        %8987 = vmatpush.bf16.xpose.msra.mxu0 %v1652
        %8988 = vmatmul.bf16.gmra.mxu0 %v3609
        %v8989 = vpop.f32.mrf.mxu0
        %v8990 = vadd.f32 %v8976, %v8989
        %v8991 = vpop.f32.mrf.mxu0
        %v8992 = vadd.f32 %v8978, %v8991
        %8993 = vdwg.mxu0
        %8994 = vmatpush.bf16.xpose.msra.mxu0 0
        %8995 = vmatpush.bf16.xpose.msra.mxu0 0
        %8996 = vmatpush.bf16.xpose.msra.mxu0 0
        %8997 = vmatpush.bf16.xpose.msra.mxu0 0
        %8998 = vmatpush.bf16.xpose.msra.mxu0 0
        %8999 = vmatpush.bf16.xpose.msra.mxu0 0
        %9000 = vmatpush.bf16.xpose.msra.mxu0 0
        %9001 = vmatpush.bf16.xpose.msra.mxu0 %v1653
        %9002 = vmatmul.bf16.gmra.mxu0 %v3610
        %v9003 = vpop.f32.mrf.mxu0
        %v9004 = vadd.f32 %v8990, %v9003
        %v9005 = vpop.f32.mrf.mxu0
        %v9006 = vadd.f32 %v8992, %v9005
        %9007 = vdwg.mxu0
        %9008 = vmatpush.bf16.xpose.msra.mxu0 0
        %9009 = vmatpush.bf16.xpose.msra.mxu0 0
        %9010 = vmatpush.bf16.xpose.msra.mxu0 0
        %9011 = vmatpush.bf16.xpose.msra.mxu0 0
        %9012 = vmatpush.bf16.xpose.msra.mxu0 0
        %9013 = vmatpush.bf16.xpose.msra.mxu0 0
        %9014 = vmatpush.bf16.xpose.msra.mxu0 0
        %9015 = vmatpush.bf16.xpose.msra.mxu0 %v1654
        %9016 = vmatmul.bf16.gmra.mxu0 %v3611
        %v9017 = vpop.f32.mrf.mxu0
        %v9018 = vadd.f32 %v9004, %v9017
        %v9019 = vpop.f32.mrf.mxu0
        %v9020 = vadd.f32 %v9006, %v9019
        %9021 = vdwg.mxu0
        %9022 = vmatpush.bf16.xpose.msra.mxu0 0
        %9023 = vmatpush.bf16.xpose.msra.mxu0 0
        %9024 = vmatpush.bf16.xpose.msra.mxu0 0
        %9025 = vmatpush.bf16.xpose.msra.mxu0 0
        %9026 = vmatpush.bf16.xpose.msra.mxu0 0
        %9027 = vmatpush.bf16.xpose.msra.mxu0 0
        %9028 = vmatpush.bf16.xpose.msra.mxu0 0
        %9029 = vmatpush.bf16.xpose.msra.mxu0 %v1655
        %9030 = vmatmul.bf16.gmra.mxu0 %v3612
        %v9031 = vpop.f32.mrf.mxu0
        %v9032 = vadd.f32 %v9018, %v9031
        %v9033 = vpop.f32.mrf.mxu0
        %v9034 = vadd.f32 %v9020, %v9033
        %9035 = vdwg.mxu0
        %9036 = vmatpush.bf16.xpose.msra.mxu0 0
        %9037 = vmatpush.bf16.xpose.msra.mxu0 0
        %9038 = vmatpush.bf16.xpose.msra.mxu0 0
        %9039 = vmatpush.bf16.xpose.msra.mxu0 0
        %9040 = vmatpush.bf16.xpose.msra.mxu0 0
        %9041 = vmatpush.bf16.xpose.msra.mxu0 0
        %9042 = vmatpush.bf16.xpose.msra.mxu0 0
        %9043 = vmatpush.bf16.xpose.msra.mxu0 %v1656
        %9044 = vmatmul.bf16.gmra.mxu0 %v3613
        %v9045 = vpop.f32.mrf.mxu0
        %v9046 = vadd.f32 %v9032, %v9045
        %v9047 = vpop.f32.mrf.mxu0
        %v9048 = vadd.f32 %v9034, %v9047
        %9049 = vdwg.mxu0
        %9050 = vmatpush.bf16.xpose.msra.mxu0 0
        %9051 = vmatpush.bf16.xpose.msra.mxu0 0
        %9052 = vmatpush.bf16.xpose.msra.mxu0 0
        %9053 = vmatpush.bf16.xpose.msra.mxu0 0
        %9054 = vmatpush.bf16.xpose.msra.mxu0 0
        %9055 = vmatpush.bf16.xpose.msra.mxu0 0
        %9056 = vmatpush.bf16.xpose.msra.mxu0 0
        %9057 = vmatpush.bf16.xpose.msra.mxu0 %v1657
        %9058 = vmatmul.bf16.gmra.mxu0 %v3614
        %v9059 = vpop.f32.mrf.mxu0
        %v9060 = vadd.f32 %v9046, %v9059
        %v9061 = vpop.f32.mrf.mxu0
        %v9062 = vadd.f32 %v9048, %v9061
        %9063 = vdwg.mxu0
        %9064 = vmatpush.bf16.xpose.msra.mxu0 0
        %9065 = vmatpush.bf16.xpose.msra.mxu0 0
        %9066 = vmatpush.bf16.xpose.msra.mxu0 0
        %9067 = vmatpush.bf16.xpose.msra.mxu0 0
        %9068 = vmatpush.bf16.xpose.msra.mxu0 0
        %9069 = vmatpush.bf16.xpose.msra.mxu0 0
        %9070 = vmatpush.bf16.xpose.msra.mxu0 0
        %9071 = vmatpush.bf16.xpose.msra.mxu0 %v1658
        %9072 = vmatmul.bf16.gmra.mxu0 %v3615
        %v9073 = vpop.f32.mrf.mxu0
        %v9074 = vadd.f32 %v9060, %v9073
        %v9075 = vpop.f32.mrf.mxu0
        %v9076 = vadd.f32 %v9062, %v9075
        %9077 = vdwg.mxu0
        %9078 = vmatpush.bf16.xpose.msra.mxu0 0
        %9079 = vmatpush.bf16.xpose.msra.mxu0 0
        %9080 = vmatpush.bf16.xpose.msra.mxu0 0
        %9081 = vmatpush.bf16.xpose.msra.mxu0 0
        %9082 = vmatpush.bf16.xpose.msra.mxu0 0
        %9083 = vmatpush.bf16.xpose.msra.mxu0 0
        %9084 = vmatpush.bf16.xpose.msra.mxu0 0
        %9085 = vmatpush.bf16.xpose.msra.mxu0 %v1659
        %9086 = vmatmul.bf16.gmra.mxu0 %v3616
        %v9087 = vpop.f32.mrf.mxu0
        %v9088 = vadd.f32 %v9074, %v9087
        %v9089 = vpop.f32.mrf.mxu0
        %v9090 = vadd.f32 %v9076, %v9089
        %9091 = vdwg.mxu0
        %9092 = vmatpush.bf16.xpose.msra.mxu0 0
        %9093 = vmatpush.bf16.xpose.msra.mxu0 0
        %9094 = vmatpush.bf16.xpose.msra.mxu0 0
        %9095 = vmatpush.bf16.xpose.msra.mxu0 0
        %9096 = vmatpush.bf16.xpose.msra.mxu0 0
        %9097 = vmatpush.bf16.xpose.msra.mxu0 0
        %9098 = vmatpush.bf16.xpose.msra.mxu0 0
        %9099 = vmatpush.bf16.xpose.msra.mxu0 %v1660
        %9100 = vmatmul.bf16.gmra.mxu0 %v3617
        %v9101 = vpop.f32.mrf.mxu0
        %v9102 = vadd.f32 %v9088, %v9101
        %v9103 = vpop.f32.mrf.mxu0
        %v9104 = vadd.f32 %v9090, %v9103
        %9105 = vdwg.mxu0
        %9106 = vmatpush.bf16.xpose.msra.mxu0 0
        %9107 = vmatpush.bf16.xpose.msra.mxu0 0
        %9108 = vmatpush.bf16.xpose.msra.mxu0 0
        %9109 = vmatpush.bf16.xpose.msra.mxu0 0
        %9110 = vmatpush.bf16.xpose.msra.mxu0 0
        %9111 = vmatpush.bf16.xpose.msra.mxu0 0
        %9112 = vmatpush.bf16.xpose.msra.mxu0 0
        %9113 = vmatpush.bf16.xpose.msra.mxu0 %v1661
        %9114 = vmatmul.bf16.gmra.mxu0 %v3618
        %v9115 = vpop.f32.mrf.mxu0
        %v9116 = vadd.f32 %v9102, %v9115
        %v9117 = vpop.f32.mrf.mxu0
        %v9118 = vadd.f32 %v9104, %v9117
        %9119 = vdwg.mxu0
        %9120 = vmatpush.bf16.xpose.msra.mxu0 0
        %9121 = vmatpush.bf16.xpose.msra.mxu0 0
        %9122 = vmatpush.bf16.xpose.msra.mxu0 0
        %9123 = vmatpush.bf16.xpose.msra.mxu0 0
        %9124 = vmatpush.bf16.xpose.msra.mxu0 0
        %9125 = vmatpush.bf16.xpose.msra.mxu0 0
        %9126 = vmatpush.bf16.xpose.msra.mxu0 0
        %9127 = vmatpush.bf16.xpose.msra.mxu0 %v1662
        %9128 = vmatmul.bf16.gmra.mxu0 %v3619
        %v9129 = vpop.f32.mrf.mxu0
        %v9130 = vadd.f32 %v9116, %v9129
        %v9131 = vpop.f32.mrf.mxu0
        %v9132 = vadd.f32 %v9118, %v9131
        %9133 = vdwg.mxu0
        %9134 = vmatpush.bf16.xpose.msra.mxu0 0
        %9135 = vmatpush.bf16.xpose.msra.mxu0 0
        %9136 = vmatpush.bf16.xpose.msra.mxu0 0
        %9137 = vmatpush.bf16.xpose.msra.mxu0 0
        %9138 = vmatpush.bf16.xpose.msra.mxu0 0
        %9139 = vmatpush.bf16.xpose.msra.mxu0 0
        %9140 = vmatpush.bf16.xpose.msra.mxu0 0
        %9141 = vmatpush.bf16.xpose.msra.mxu0 %v1663
        %9142 = vmatmul.bf16.gmra.mxu0 %v3620
        %v9143 = vpop.f32.mrf.mxu0
        %v9144 = vadd.f32 %v9130, %v9143
        %v9145 = vpop.f32.mrf.mxu0
        %v9146 = vadd.f32 %v9132, %v9145
        %9147 = vdwg.mxu0
        %9148 = vmatpush.bf16.xpose.msra.mxu0 0
        %9149 = vmatpush.bf16.xpose.msra.mxu0 0
        %9150 = vmatpush.bf16.xpose.msra.mxu0 0
        %9151 = vmatpush.bf16.xpose.msra.mxu0 0
        %9152 = vmatpush.bf16.xpose.msra.mxu0 0
        %9153 = vmatpush.bf16.xpose.msra.mxu0 0
        %9154 = vmatpush.bf16.xpose.msra.mxu0 0
        %9155 = vmatpush.bf16.xpose.msra.mxu0 %v1664
        %9156 = vmatmul.bf16.gmra.mxu0 %v3621
        %v9157 = vpop.f32.mrf.mxu0
        %v9158 = vadd.f32 %v9144, %v9157
        %v9159 = vpop.f32.mrf.mxu0
        %v9160 = vadd.f32 %v9146, %v9159
        %9161 = vdwg.mxu0
        %9162 = vmatpush.bf16.xpose.msra.mxu0 0
        %9163 = vmatpush.bf16.xpose.msra.mxu0 0
        %9164 = vmatpush.bf16.xpose.msra.mxu0 0
        %9165 = vmatpush.bf16.xpose.msra.mxu0 0
        %9166 = vmatpush.bf16.xpose.msra.mxu0 0
        %9167 = vmatpush.bf16.xpose.msra.mxu0 0
        %9168 = vmatpush.bf16.xpose.msra.mxu0 0
        %9169 = vmatpush.bf16.xpose.msra.mxu0 %v1665
        %9170 = vmatmul.bf16.gmra.mxu0 %v3622
        %v9171 = vpop.f32.mrf.mxu0
        %v9172 = vadd.f32 %v9158, %v9171
        %v9173 = vpop.f32.mrf.mxu0
        %v9174 = vadd.f32 %v9160, %v9173
        %9175 = vdwg.mxu0
        %9176 = vmatpush.bf16.xpose.msra.mxu0 0
        %9177 = vmatpush.bf16.xpose.msra.mxu0 0
        %9178 = vmatpush.bf16.xpose.msra.mxu0 0
        %9179 = vmatpush.bf16.xpose.msra.mxu0 0
        %9180 = vmatpush.bf16.xpose.msra.mxu0 0
        %9181 = vmatpush.bf16.xpose.msra.mxu0 0
        %9182 = vmatpush.bf16.xpose.msra.mxu0 0
        %9183 = vmatpush.bf16.xpose.msra.mxu0 %v1666
        %9184 = vmatmul.bf16.gmra.mxu0 %v3623
        %v9185 = vpop.f32.mrf.mxu0
        %v9186 = vadd.f32 %v9172, %v9185
        %v9187 = vpop.f32.mrf.mxu0
        %v9188 = vadd.f32 %v9174, %v9187
        %9189 = vdwg.mxu0
        %9190 = vmatpush.bf16.xpose.msra.mxu0 0
        %9191 = vmatpush.bf16.xpose.msra.mxu0 0
        %9192 = vmatpush.bf16.xpose.msra.mxu0 0
        %9193 = vmatpush.bf16.xpose.msra.mxu0 0
        %9194 = vmatpush.bf16.xpose.msra.mxu0 0
        %9195 = vmatpush.bf16.xpose.msra.mxu0 0
        %9196 = vmatpush.bf16.xpose.msra.mxu0 0
        %9197 = vmatpush.bf16.xpose.msra.mxu0 %v1667
        %9198 = vmatmul.bf16.gmra.mxu0 %v3624
        %v9199 = vpop.f32.mrf.mxu0
        %v9200 = vadd.f32 %v9186, %v9199
        %v9201 = vpop.f32.mrf.mxu0
        %v9202 = vadd.f32 %v9188, %v9201
        %9203 = vdwg.mxu0
        %9204 = vmatpush.bf16.xpose.msra.mxu0 0
        %9205 = vmatpush.bf16.xpose.msra.mxu0 0
        %9206 = vmatpush.bf16.xpose.msra.mxu0 0
        %9207 = vmatpush.bf16.xpose.msra.mxu0 0
        %9208 = vmatpush.bf16.xpose.msra.mxu0 0
        %9209 = vmatpush.bf16.xpose.msra.mxu0 0
        %9210 = vmatpush.bf16.xpose.msra.mxu0 0
        %9211 = vmatpush.bf16.xpose.msra.mxu0 %v1668
        %9212 = vmatmul.bf16.gmra.mxu0 %v3625
        %v9213 = vpop.f32.mrf.mxu0
        %v9214 = vadd.f32 %v9200, %v9213
        %v9215 = vpop.f32.mrf.mxu0
        %v9216 = vadd.f32 %v9202, %v9215
        %9217 = vdwg.mxu0
        %9218 = vmatpush.bf16.xpose.msra.mxu0 0
        %9219 = vmatpush.bf16.xpose.msra.mxu0 0
        %9220 = vmatpush.bf16.xpose.msra.mxu0 0
        %9221 = vmatpush.bf16.xpose.msra.mxu0 0
        %9222 = vmatpush.bf16.xpose.msra.mxu0 0
        %9223 = vmatpush.bf16.xpose.msra.mxu0 0
        %9224 = vmatpush.bf16.xpose.msra.mxu0 0
        %9225 = vmatpush.bf16.xpose.msra.mxu0 %v1669
        %9226 = vmatmul.bf16.gmra.mxu0 %v3626
        %v9227 = vpop.f32.mrf.mxu0
        %v9228 = vadd.f32 %v9214, %v9227
        %v9229 = vpop.f32.mrf.mxu0
        %v9230 = vadd.f32 %v9216, %v9229
        %9231 = vdwg.mxu0
        %9232 = vmatpush.bf16.xpose.msra.mxu0 0
        %9233 = vmatpush.bf16.xpose.msra.mxu0 0
        %9234 = vmatpush.bf16.xpose.msra.mxu0 0
        %9235 = vmatpush.bf16.xpose.msra.mxu0 0
        %9236 = vmatpush.bf16.xpose.msra.mxu0 0
        %9237 = vmatpush.bf16.xpose.msra.mxu0 0
        %9238 = vmatpush.bf16.xpose.msra.mxu0 0
        %9239 = vmatpush.bf16.xpose.msra.mxu0 %v1670
        %9240 = vmatmul.bf16.gmra.mxu0 %v3627
        %v9241 = vpop.f32.mrf.mxu0
        %v9242 = vadd.f32 %v9228, %v9241
        %v9243 = vpop.f32.mrf.mxu0
        %v9244 = vadd.f32 %v9230, %v9243
        %9245 = vdwg.mxu0
        %9246 = vmatpush.bf16.xpose.msra.mxu0 0
        %9247 = vmatpush.bf16.xpose.msra.mxu0 0
        %9248 = vmatpush.bf16.xpose.msra.mxu0 0
        %9249 = vmatpush.bf16.xpose.msra.mxu0 0
        %9250 = vmatpush.bf16.xpose.msra.mxu0 0
        %9251 = vmatpush.bf16.xpose.msra.mxu0 0
        %9252 = vmatpush.bf16.xpose.msra.mxu0 0
        %9253 = vmatpush.bf16.xpose.msra.mxu0 %v1671
        %9254 = vmatmul.bf16.gmra.mxu0 %v3628
        %v9255 = vpop.f32.mrf.mxu0
        %v9256 = vadd.f32 %v9242, %v9255
        %v9257 = vpop.f32.mrf.mxu0
        %v9258 = vadd.f32 %v9244, %v9257
        %9259 = vdwg.mxu0
        %9260 = vmatpush.bf16.xpose.msra.mxu0 0
        %9261 = vmatpush.bf16.xpose.msra.mxu0 0
        %9262 = vmatpush.bf16.xpose.msra.mxu0 0
        %9263 = vmatpush.bf16.xpose.msra.mxu0 0
        %9264 = vmatpush.bf16.xpose.msra.mxu0 0
        %9265 = vmatpush.bf16.xpose.msra.mxu0 0
        %9266 = vmatpush.bf16.xpose.msra.mxu0 0
        %9267 = vmatpush.bf16.xpose.msra.mxu0 %v1672
        %9268 = vmatmul.bf16.gmra.mxu0 %v3629
        %v9269 = vpop.f32.mrf.mxu0
        %v9270 = vadd.f32 %v9256, %v9269
        %v9271 = vpop.f32.mrf.mxu0
        %v9272 = vadd.f32 %v9258, %v9271
        %9273 = vdwg.mxu0
        %9274 = vmatpush.bf16.xpose.msra.mxu0 0
        %9275 = vmatpush.bf16.xpose.msra.mxu0 0
        %9276 = vmatpush.bf16.xpose.msra.mxu0 0
        %9277 = vmatpush.bf16.xpose.msra.mxu0 0
        %9278 = vmatpush.bf16.xpose.msra.mxu0 0
        %9279 = vmatpush.bf16.xpose.msra.mxu0 0
        %9280 = vmatpush.bf16.xpose.msra.mxu0 0
        %9281 = vmatpush.bf16.xpose.msra.mxu0 %v1673
        %9282 = vmatmul.bf16.gmra.mxu0 %v3630
        %v9283 = vpop.f32.mrf.mxu0
        %v9284 = vadd.f32 %v9270, %v9283
        %v9285 = vpop.f32.mrf.mxu0
        %v9286 = vadd.f32 %v9272, %v9285
        %9287 = vdwg.mxu0
        %9288 = vmatpush.bf16.xpose.msra.mxu0 0
        %9289 = vmatpush.bf16.xpose.msra.mxu0 0
        %9290 = vmatpush.bf16.xpose.msra.mxu0 0
        %9291 = vmatpush.bf16.xpose.msra.mxu0 0
        %9292 = vmatpush.bf16.xpose.msra.mxu0 0
        %9293 = vmatpush.bf16.xpose.msra.mxu0 0
        %9294 = vmatpush.bf16.xpose.msra.mxu0 0
        %9295 = vmatpush.bf16.xpose.msra.mxu0 %v1674
        %9296 = vmatmul.bf16.gmra.mxu0 %v3631
        %v9297 = vpop.f32.mrf.mxu0
        %v9298 = vadd.f32 %v9284, %v9297
        %v9299 = vpop.f32.mrf.mxu0
        %v9300 = vadd.f32 %v9286, %v9299
        %9301 = vdwg.mxu0
        %9302 = vmatpush.bf16.xpose.msra.mxu0 0
        %9303 = vmatpush.bf16.xpose.msra.mxu0 0
        %9304 = vmatpush.bf16.xpose.msra.mxu0 0
        %9305 = vmatpush.bf16.xpose.msra.mxu0 0
        %9306 = vmatpush.bf16.xpose.msra.mxu0 0
        %9307 = vmatpush.bf16.xpose.msra.mxu0 0
        %9308 = vmatpush.bf16.xpose.msra.mxu0 0
        %9309 = vmatpush.bf16.xpose.msra.mxu0 %v1675
        %9310 = vmatmul.bf16.gmra.mxu0 %v3632
        %v9311 = vpop.f32.mrf.mxu0
        %v9312 = vadd.f32 %v9298, %v9311
        %v9313 = vpop.f32.mrf.mxu0
        %v9314 = vadd.f32 %v9300, %v9313
        %9315 = vdwg.mxu0
        %9316 = vmatpush.bf16.xpose.msra.mxu0 0
        %9317 = vmatpush.bf16.xpose.msra.mxu0 0
        %9318 = vmatpush.bf16.xpose.msra.mxu0 0
        %9319 = vmatpush.bf16.xpose.msra.mxu0 0
        %9320 = vmatpush.bf16.xpose.msra.mxu0 0
        %9321 = vmatpush.bf16.xpose.msra.mxu0 0
        %9322 = vmatpush.bf16.xpose.msra.mxu0 0
        %9323 = vmatpush.bf16.xpose.msra.mxu0 %v1676
        %9324 = vmatmul.bf16.gmra.mxu0 %v3633
        %v9325 = vpop.f32.mrf.mxu0
        %v9326 = vadd.f32 %v9312, %v9325
        %v9327 = vpop.f32.mrf.mxu0
        %v9328 = vadd.f32 %v9314, %v9327
        %9329 = vdwg.mxu0
        %9330 = vmatpush.bf16.xpose.msra.mxu0 0
        %9331 = vmatpush.bf16.xpose.msra.mxu0 0
        %9332 = vmatpush.bf16.xpose.msra.mxu0 0
        %9333 = vmatpush.bf16.xpose.msra.mxu0 0
        %9334 = vmatpush.bf16.xpose.msra.mxu0 0
        %9335 = vmatpush.bf16.xpose.msra.mxu0 0
        %9336 = vmatpush.bf16.xpose.msra.mxu0 0
        %9337 = vmatpush.bf16.xpose.msra.mxu0 %v1677
        %9338 = vmatmul.bf16.gmra.mxu0 %v3634
        %v9339 = vpop.f32.mrf.mxu0
        %v9340 = vadd.f32 %v9326, %v9339
        %v9341 = vpop.f32.mrf.mxu0
        %v9342 = vadd.f32 %v9328, %v9341
        %9343 = vdwg.mxu0
        %9344 = vmatpush.bf16.xpose.msra.mxu0 0
        %9345 = vmatpush.bf16.xpose.msra.mxu0 0
        %9346 = vmatpush.bf16.xpose.msra.mxu0 0
        %9347 = vmatpush.bf16.xpose.msra.mxu0 0
        %9348 = vmatpush.bf16.xpose.msra.mxu0 0
        %9349 = vmatpush.bf16.xpose.msra.mxu0 0
        %9350 = vmatpush.bf16.xpose.msra.mxu0 0
        %9351 = vmatpush.bf16.xpose.msra.mxu0 %v1678
        %9352 = vmatmul.bf16.gmra.mxu0 %v3635
        %v9353 = vpop.f32.mrf.mxu0
        %v9354 = vadd.f32 %v9340, %v9353
        %v9355 = vpop.f32.mrf.mxu0
        %v9356 = vadd.f32 %v9342, %v9355
        %9357 = vdwg.mxu0
        %9358 = vmatpush.bf16.xpose.msra.mxu0 0
        %9359 = vmatpush.bf16.xpose.msra.mxu0 0
        %9360 = vmatpush.bf16.xpose.msra.mxu0 0
        %9361 = vmatpush.bf16.xpose.msra.mxu0 0
        %9362 = vmatpush.bf16.xpose.msra.mxu0 0
        %9363 = vmatpush.bf16.xpose.msra.mxu0 0
        %9364 = vmatpush.bf16.xpose.msra.mxu0 0
        %9365 = vmatpush.bf16.xpose.msra.mxu0 %v1679
        %9366 = vmatmul.bf16.gmra.mxu0 %v3636
        %v9367 = vpop.f32.mrf.mxu0
        %v9368 = vadd.f32 %v9354, %v9367
        %v9369 = vpop.f32.mrf.mxu0
        %v9370 = vadd.f32 %v9356, %v9369
        %9371 = vdwg.mxu0
        %9372 = vmatpush.bf16.xpose.msra.mxu0 0
        %9373 = vmatpush.bf16.xpose.msra.mxu0 0
        %9374 = vmatpush.bf16.xpose.msra.mxu0 0
        %9375 = vmatpush.bf16.xpose.msra.mxu0 0
        %9376 = vmatpush.bf16.xpose.msra.mxu0 0
        %9377 = vmatpush.bf16.xpose.msra.mxu0 0
        %9378 = vmatpush.bf16.xpose.msra.mxu0 0
        %9379 = vmatpush.bf16.xpose.msra.mxu0 %v1680
        %9380 = vmatmul.bf16.gmra.mxu0 %v3637
        %v9381 = vpop.f32.mrf.mxu0
        %v9382 = vadd.f32 %v9368, %v9381
        %v9383 = vpop.f32.mrf.mxu0
        %v9384 = vadd.f32 %v9370, %v9383
        %9385 = vdwg.mxu0
        %9386 = vmatpush.bf16.xpose.msra.mxu0 0
        %9387 = vmatpush.bf16.xpose.msra.mxu0 0
        %9388 = vmatpush.bf16.xpose.msra.mxu0 0
        %9389 = vmatpush.bf16.xpose.msra.mxu0 0
        %9390 = vmatpush.bf16.xpose.msra.mxu0 0
        %9391 = vmatpush.bf16.xpose.msra.mxu0 0
        %9392 = vmatpush.bf16.xpose.msra.mxu0 0
        %9393 = vmatpush.bf16.xpose.msra.mxu0 %v1681
        %9394 = vmatmul.bf16.gmra.mxu0 %v3638
        %v9395 = vpop.f32.mrf.mxu0
        %v9396 = vadd.f32 %v9382, %v9395
        %v9397 = vpop.f32.mrf.mxu0
        %v9398 = vadd.f32 %v9384, %v9397
        %9399 = vdwg.mxu0
        %9400 = vmatpush.bf16.xpose.msra.mxu0 0
        %9401 = vmatpush.bf16.xpose.msra.mxu0 0
        %9402 = vmatpush.bf16.xpose.msra.mxu0 0
        %9403 = vmatpush.bf16.xpose.msra.mxu0 0
        %9404 = vmatpush.bf16.xpose.msra.mxu0 0
        %9405 = vmatpush.bf16.xpose.msra.mxu0 0
        %9406 = vmatpush.bf16.xpose.msra.mxu0 0
        %9407 = vmatpush.bf16.xpose.msra.mxu0 %v1682
        %9408 = vmatmul.bf16.gmra.mxu0 %v3639
        %v9409 = vpop.f32.mrf.mxu0
        %v9410 = vadd.f32 %v9396, %v9409
        %v9411 = vpop.f32.mrf.mxu0
        %v9412 = vadd.f32 %v9398, %v9411
        %9413 = vdwg.mxu0
        %9414 = vmatpush.bf16.xpose.msra.mxu0 0
        %9415 = vmatpush.bf16.xpose.msra.mxu0 0
        %9416 = vmatpush.bf16.xpose.msra.mxu0 0
        %9417 = vmatpush.bf16.xpose.msra.mxu0 0
        %9418 = vmatpush.bf16.xpose.msra.mxu0 0
        %9419 = vmatpush.bf16.xpose.msra.mxu0 0
        %9420 = vmatpush.bf16.xpose.msra.mxu0 0
        %9421 = vmatpush.bf16.xpose.msra.mxu0 %v1683
        %9422 = vmatmul.bf16.gmra.mxu0 %v3640
        %v9423 = vpop.f32.mrf.mxu0
        %v9424 = vadd.f32 %v9410, %v9423
        %v9425 = vpop.f32.mrf.mxu0
        %v9426 = vadd.f32 %v9412, %v9425
        %9427 = vdwg.mxu0
        %9428 = vmatpush.bf16.xpose.msra.mxu0 0
        %9429 = vmatpush.bf16.xpose.msra.mxu0 0
        %9430 = vmatpush.bf16.xpose.msra.mxu0 0
        %9431 = vmatpush.bf16.xpose.msra.mxu0 0
        %9432 = vmatpush.bf16.xpose.msra.mxu0 0
        %9433 = vmatpush.bf16.xpose.msra.mxu0 0
        %9434 = vmatpush.bf16.xpose.msra.mxu0 0
        %9435 = vmatpush.bf16.xpose.msra.mxu0 %v1684
        %9436 = vmatmul.bf16.gmra.mxu0 %v3641
        %v9437 = vpop.f32.mrf.mxu0
        %v9438 = vadd.f32 %v9424, %v9437
        %v9439 = vpop.f32.mrf.mxu0
        %v9440 = vadd.f32 %v9426, %v9439
        %9441 = vdwg.mxu0
        %9442 = vmatpush.bf16.xpose.msra.mxu0 0
        %9443 = vmatpush.bf16.xpose.msra.mxu0 0
        %9444 = vmatpush.bf16.xpose.msra.mxu0 0
        %9445 = vmatpush.bf16.xpose.msra.mxu0 0
        %9446 = vmatpush.bf16.xpose.msra.mxu0 0
        %9447 = vmatpush.bf16.xpose.msra.mxu0 0
        %9448 = vmatpush.bf16.xpose.msra.mxu0 0
        %9449 = vmatpush.bf16.xpose.msra.mxu0 %v1685
        %9450 = vmatmul.bf16.gmra.mxu0 %v3642
        %v9451 = vpop.f32.mrf.mxu0
        %v9452 = vadd.f32 %v9438, %v9451
        %v9453 = vpop.f32.mrf.mxu0
        %v9454 = vadd.f32 %v9440, %v9453
        %9455 = vdwg.mxu0
        %9456 = vmatpush.bf16.xpose.msra.mxu0 0
        %9457 = vmatpush.bf16.xpose.msra.mxu0 0
        %9458 = vmatpush.bf16.xpose.msra.mxu0 0
        %9459 = vmatpush.bf16.xpose.msra.mxu0 0
        %9460 = vmatpush.bf16.xpose.msra.mxu0 0
        %9461 = vmatpush.bf16.xpose.msra.mxu0 0
        %9462 = vmatpush.bf16.xpose.msra.mxu0 0
        %9463 = vmatpush.bf16.xpose.msra.mxu0 %v1686
        %9464 = vmatmul.bf16.gmra.mxu0 %v3643
        %v9465 = vpop.f32.mrf.mxu0
        %v9466 = vadd.f32 %v9452, %v9465
        %v9467 = vpop.f32.mrf.mxu0
        %v9468 = vadd.f32 %v9454, %v9467
        %9469 = vdwg.mxu0
        %9470 = vmatpush.bf16.xpose.msra.mxu0 0
        %9471 = vmatpush.bf16.xpose.msra.mxu0 0
        %9472 = vmatpush.bf16.xpose.msra.mxu0 0
        %9473 = vmatpush.bf16.xpose.msra.mxu0 0
        %9474 = vmatpush.bf16.xpose.msra.mxu0 0
        %9475 = vmatpush.bf16.xpose.msra.mxu0 0
        %9476 = vmatpush.bf16.xpose.msra.mxu0 0
        %9477 = vmatpush.bf16.xpose.msra.mxu0 %v1687
        %9478 = vmatmul.bf16.gmra.mxu0 %v3644
        %v9479 = vpop.f32.mrf.mxu0
        %v9480 = vadd.f32 %v9466, %v9479
        %v9481 = vpop.f32.mrf.mxu0
        %v9482 = vadd.f32 %v9468, %v9481
        %9483 = vdwg.mxu0
        %9484 = vmatpush.bf16.xpose.msra.mxu0 0
        %9485 = vmatpush.bf16.xpose.msra.mxu0 0
        %9486 = vmatpush.bf16.xpose.msra.mxu0 0
        %9487 = vmatpush.bf16.xpose.msra.mxu0 0
        %9488 = vmatpush.bf16.xpose.msra.mxu0 0
        %9489 = vmatpush.bf16.xpose.msra.mxu0 0
        %9490 = vmatpush.bf16.xpose.msra.mxu0 0
        %9491 = vmatpush.bf16.xpose.msra.mxu0 %v1688
        %9492 = vmatmul.bf16.gmra.mxu0 %v3645
        %v9493 = vpop.f32.mrf.mxu0
        %v9494 = vadd.f32 %v9480, %v9493
        %v9495 = vpop.f32.mrf.mxu0
        %v9496 = vadd.f32 %v9482, %v9495
        %9497 = vdwg.mxu0
        %9498 = vmatpush.bf16.xpose.msra.mxu0 0
        %9499 = vmatpush.bf16.xpose.msra.mxu0 0
        %9500 = vmatpush.bf16.xpose.msra.mxu0 0
        %9501 = vmatpush.bf16.xpose.msra.mxu0 0
        %9502 = vmatpush.bf16.xpose.msra.mxu0 0
        %9503 = vmatpush.bf16.xpose.msra.mxu0 0
        %9504 = vmatpush.bf16.xpose.msra.mxu0 0
        %9505 = vmatpush.bf16.xpose.msra.mxu0 %v1689
        %9506 = vmatmul.bf16.gmra.mxu0 %v3646
        %v9507 = vpop.f32.mrf.mxu0
        %v9508 = vadd.f32 %v9494, %v9507
        %v9509 = vpop.f32.mrf.mxu0
        %v9510 = vadd.f32 %v9496, %v9509
        %9511 = vdwg.mxu0
        %vm9512 = vcmask 15360
        %9513 = vst.msk [vmem:[%s207] sm:$0xff] %vm9512, %v9508
        %vm9514 = vcmask 9216
        %9515 = vst.msk [vmem:[%s207 + $0x8] sm:$0x3] %vm9514, %v9510
        %p9516 = scmp.lt.s32.totalorder %s19, 1
        %s9517 = scalar_select %p9516, %s19, 1
        %s9518 = smul.addr %s9517, 2
        %s9519 = smul.addr %s9518, 8
        %s9520 = scalar_lea.vmem %s2, %s9519
        // Predicated region
        $region41: #{linear_forward.1} parent=27 // pred_check
          %p9521 = pneg %p89
        $region42: #{linear_forward.1} parent=27 // pred_check_branch
          %9523 = sbr.rel (%p9521) target = $region44
        $region43: #{linear_forward.1} parent=27 // pred_region
          _
        $region44: #{linear_forward.1} parent=27 // pred_fallthru
          _
      $region28: #{linear_forward.1} parent=5 // pred_fallthru
        _
      %p9524 = scmp.le.s32.totalorder 2, %s14
      // Predicated region
      $region45: #{linear_forward.1} parent=5 // pred_check
        %p9525 = pneg %p9524
      $region46: #{linear_forward.1} parent=5 // pred_check_branch
        %9527 = sbr.rel (%p9525) target = $region48
      $region47: #{linear_forward.1} parent=5 // pred_region
        %s9528 = ssub.s32 %s14, 2
        // Predicated region
        $region49: #{linear_forward.1} parent=47 // pred_check
          %p9529 = pneg %p95
        $region50: #{linear_forward.1} parent=47 // pred_check_branch
          %9531 = sbr.rel (%p9529) target = $region52
        $region51: #{linear_forward.1} parent=47 // pred_region
          %p9532 = scmp.lt.s32.totalorder %s20, 1
          %s9533 = scalar_select %p9532, %s20, 1
          %s9534 = smul.addr %s9533, 2
          %s9535 = smul.addr %s9534, 8
          %s9536 = scalar_lea.vmem %s2, %s9535
        $region52: #{linear_forward.1} parent=47 // pred_fallthru
          _
      $region48: #{linear_forward.1} parent=5 // pred_fallthru
        _
    $region6: #{linear_forward.1} parent=1 // loop_footer
      %s18 = sadd.s32 1, %s14
    $region7: #{linear_forward.1} parent=1 // loop_footer_branch
      %13 = sbr.rel target = $region3
    $region8: #{linear_forward.1} parent=1 // loop_exit
      _
    %9537 = vsyncpa [#allocation3], 1
    %s9538 = scalar_lea.sflag [#allocation3], 1
    %9539 = vsyncpa %s9538, 1
    %9540 = vsyncpa [#allocation5], 1
    %s9541 = scalar_lea.sflag [#allocation5], 1
    %9542 = vsyncpa %s9541, 1

</llo_original>
